<compile_context>
chip_gen: v6e
topology: v6e:2x2x1
jax: 0.10.0
libtpu: 0.0.40
codegen_flags: <defaults>
</compile_context>

<pallas_src>
import functools

import jax
import jax.numpy as jnp
from jax.experimental import pallas as pl
from jax.experimental.pallas import tpu as pltpu

_MM_DTYPE = jnp.bfloat16   # MXU operand dtype (accumulation is always f32)


def _round_up(x, m):
    return ((x + m - 1) // m) * m


# ----------------------------- Pallas kernels -----------------------------

def ln_linear_kernel(*refs, apply_gelu, has_bias):
    # Fused LayerNorm (full K) + Linear (K -> tn tile) [+ bias] [+ GELU].
    # LN result is cached in a VMEM scratch and reused across all N tiles of this M tile.
    if has_bias:
        x_ref, g_ref, b_ref, w_ref, bias_ref, o_ref, y_ref = refs
    else:
        x_ref, g_ref, b_ref, w_ref, o_ref, y_ref = refs
        bias_ref = None

    @pl.when(pl.program_id(1) == 0)
    def _():
        x = x_ref[...].astype(jnp.float32)
        mean = jnp.mean(x, axis=-1, keepdims=True)
        xc = x - mean
        var = jnp.mean(xc * xc, axis=-1, keepdims=True)
        y = xc * jax.lax.rsqrt(var + 1e-5)
        y = y * g_ref[...].astype(jnp.float32) + b_ref[...].astype(jnp.float32)
        y_ref[...] = y.astype(y_ref.dtype)

    acc = jnp.dot(y_ref[...], w_ref[...].astype(y_ref.dtype),
                  preferred_element_type=jnp.float32)
    if has_bias:
        acc = acc + bias_ref[...].astype(jnp.float32)
    if apply_gelu:
        # TODO(synk): torch nn.GELU default is exact (erf); tanh approximation used here.
        acc = jax.nn.gelu(acc, approximate=True)
    o_ref[...] = acc.astype(o_ref.dtype)


def proj2_residual_kernel(x1_ref, x2_ref, w1_ref, w2_ref, b_ref, res_ref, o_ref):
    # proj(concat([x1, x2], -1)) + bias + residual, with the channel concat folded into
    # two matmuls against the two row-halves of the projection weight.
    acc = jnp.dot(x1_ref[...].astype(_MM_DTYPE), w1_ref[...].astype(_MM_DTYPE),
                  preferred_element_type=jnp.float32)
    acc = acc + jnp.dot(x2_ref[...].astype(_MM_DTYPE), w2_ref[...].astype(_MM_DTYPE),
                        preferred_element_type=jnp.float32)
    acc = acc + b_ref[...].astype(jnp.float32) + res_ref[...].astype(jnp.float32)
    o_ref[...] = acc.astype(o_ref.dtype)


def linear_residual_kernel(x_ref, w_ref, b_ref, res_ref, o_ref, acc_ref):
    # Linear + bias + residual, K-tiled with an f32 VMEM accumulator.
    @pl.when(pl.program_id(2) == 0)
    def _():
        acc_ref[...] = jnp.zeros_like(acc_ref)
    acc_ref[...] += jnp.dot(x_ref[...].astype(_MM_DTYPE), w_ref[...].astype(_MM_DTYPE),
                            preferred_element_type=jnp.float32)

    @pl.when(pl.program_id(2) == pl.num_programs(2) - 1)
    def _():
        o_ref[...] = (acc_ref[...] + b_ref[...].astype(jnp.float32)
                      + res_ref[...].astype(jnp.float32)).astype(o_ref.dtype)


def dwconv3x3_kernel(x_ref, w_ref, b_ref, o_ref):
    # Depthwise 3x3 conv, stride 1, pad 1 (== nn.Conv2d(C, C, 3, 1, 1, groups=C)), NHWC.
    # x_ref: (1, H+2, W+2, C) zero-padded; w_ref: (3, 3, C); b_ref: (1, C); o_ref: (1, H, W, C)
    H, W, C = o_ref.shape[1], o_ref.shape[2], o_ref.shape[3]
    acc = jnp.zeros((H, W, C), jnp.float32)
    for dh in range(3):
        rows = x_ref[0, dh:dh + H, :, :].astype(jnp.float32)   # (H, W+2, C) row-slab load
        for dw in range(3):
            # TODO(synk): pltpu.roll on the W (sublane) axis would keep the tap shifts on
            # the XLU; plain slices kept for lowering robustness.
            acc = acc + rows[:, dw:dw + W, :] * w_ref[dh, dw, :].astype(jnp.float32)
    o_ref[...] = (acc + b_ref[0, :].astype(jnp.float32))[None].astype(o_ref.dtype)


def _mh_window_attention(q, k, v, lepe, *, scale, nh, hd):
    # q/k/v/lepe: (G, wlen, nh*hd) -> f32 (G, wlen, nh*hd); softmax math in f32,
    # MXU operands in bf16, EUP reciprocal for the normalization.
    qh = q.astype(_MM_DTYPE)
    kh = k.astype(_MM_DTYPE)
    vh = v.astype(_MM_DTYPE)
    lepe32 = lepe.astype(jnp.float32)
    outs = []
    for h in range(nh):                       # static unroll; hd is small (sub-vreg slices)
        lo, hi = h * hd, (h + 1) * hd
        s = jnp.einsum("gqd,gkd->gqk", qh[..., lo:hi], kh[..., lo:hi],
                       preferred_element_type=jnp.float32) * scale
        s = s - jnp.max(s, axis=-1, keepdims=True)
        p = jnp.exp(s)
        p = p * pl.reciprocal(jnp.sum(p, axis=-1, keepdims=True), approx=True)
        oh = jnp.einsum("gqk,gkd->gqd", p.astype(_MM_DTYPE), vh[..., lo:hi],
                        preferred_element_type=jnp.float32)
        outs.append(oh + lepe32[..., lo:hi])
    # single lane-dense result (no per-head partial stores)
    return jnp.concatenate(outs, axis=-1)


def window_attn_kernel(q_ref, k_ref, v_ref, lepe_ref, o_ref, *, scale, nh, hd):
    # Contiguous-window branch: refs are (gb, wlen, nh*hd).
    out = _mh_window_attention(q_ref[...], k_ref[...], v_ref[...], lepe_ref[...],
                               scale=scale, nh=nh, hd=hd)
    o_ref[...] = out.astype(o_ref.dtype)


def stripe_attn_kernel(q_ref, k_ref, v_ref, lepe_ref, o_ref, *, scale, nh, hd, w_sp):
    # Vertical-stripe branch: refs are (nH, w_sp, nh*hd) — the strided HBM gather was done
    # by the BlockSpec DMA; here we only flatten the stripe (w-major order, consistent
    # across q/k/v/lepe and the output, so attention results are identical per position).
    def flat(ref):
        return jnp.concatenate([ref[:, w, :] for w in range(w_sp)], axis=0)[None]
    out = _mh_window_attention(flat(q_ref), flat(k_ref), flat(v_ref), flat(lepe_ref),
                               scale=scale, nh=nh, hd=hd)
    o_ref[...] = out[0].astype(o_ref.dtype)


# ----------------------------- tiling helpers -----------------------------

def _pick_n_tile(N):
    if N <= 512:
        return N
    for t in (512, 384, 256, 128):
        if N % t == 0:
            return t
    return N


def _pick_k_tile(K):
    if K <= 512:
        return K
    for t in (512, 256, 128):
        if K % t == 0:
            return t
    return K


def _pick_group(G, wlen, cb, itemsize, budget=16 * 1024 * 1024):
    # Largest window-batch (<=32) dividing G, inside a VMEM budget, preferring >=4 grid
    # steps so both v7x TensorCores keep pipelining overlap after megacore sharding.
    best_any, best_par = 1, 0
    for t in range(1, min(32, G) + 1):
        if G % t:
            continue
        est = t * wlen * (10 * cb * itemsize + 8 * wlen)
        if est > budget:
            continue
        best_any = t
        if G // t >= 4:
            best_par = t
    return best_par if best_par else best_any


def _pick_tm(M):
    return 256 if M >= 256 else _round_up(M, 8)


# ----------------------------- kernel wrappers -----------------------------

def ln_linear(x, gamma, beta, w, bias, *, gelu=False):
    M, K = x.shape
    N = w.shape[-1]
    tm = _pick_tm(M)
    Mp = _round_up(M, tm)
    if Mp != M:
        x = jnp.pad(x, ((0, Mp - M), (0, 0)))
    tn = _pick_n_tile(N)
    has_bias = bias is not None
    kern = functools.partial(ln_linear_kernel, apply_gelu=gelu, has_bias=has_bias)
    in_specs = [pl.BlockSpec((tm, K), lambda i, j: (i, 0)),
                pl.BlockSpec((1, K), lambda i, j: (0, 0)),
                pl.BlockSpec((1, K), lambda i, j: (0, 0)),
                pl.BlockSpec((K, tn), lambda i, j: (0, j))]
    args = [x, gamma.reshape(1, K), beta.reshape(1, K), w]
    if has_bias:
        in_specs.append(pl.BlockSpec((1, tn), lambda i, j: (0, j)))
        args.append(bias.reshape(1, N))
    out = pl.pallas_call(
        kern,
        out_shape=jax.ShapeDtypeStruct((Mp, N), x.dtype),
        grid=(Mp // tm, N // tn),
        in_specs=in_specs,
        out_specs=pl.BlockSpec((tm, tn), lambda i, j: (i, j)),
        scratch_shapes=[pltpu.VMEM((tm, K), _MM_DTYPE)],
        compiler_params=pltpu.CompilerParams(
            dimension_semantics=("parallel", "arbitrary")),
    )(*args)
    return out[:M] if Mp != M else out


def ln_linear_multi(x, gamma, beta, w):
    # LayerNorm + Linear whose weight is pre-split along the output axis: w (P, K, Co),
    # output (P, M, Co).  Downstream kernels select components via a leading-axis index.
    M, K = x.shape
    P, _, Co = w.shape
    tm = _pick_tm(M)
    Mp = _round_up(M, tm)
    if Mp != M:
        x = jnp.pad(x, ((0, Mp - M), (0, 0)))
    kern = functools.partial(ln_linear_kernel, apply_gelu=False, has_bias=False)
    out = pl.pallas_call(
        kern,
        out_shape=jax.ShapeDtypeStruct((P, Mp, Co), x.dtype),
        grid=(Mp // tm, P),
        in_specs=[pl.BlockSpec((tm, K), lambda i, j: (i, 0)),
                  pl.BlockSpec((1, K), lambda i, j: (0, 0)),
                  pl.BlockSpec((1, K), lambda i, j: (0, 0)),
                  pl.BlockSpec((None, K, Co), lambda i, j: (j, 0, 0))],
        out_specs=pl.BlockSpec((None, tm, Co), lambda i, j: (j, i, 0)),
        scratch_shapes=[pltpu.VMEM((tm, K), _MM_DTYPE)],
        compiler_params=pltpu.CompilerParams(
            dimension_semantics=("parallel", "arbitrary")),
    )(x, gamma.reshape(1, K), beta.reshape(1, K), w)
    return out[:, :M] if Mp != M else out


def proj2_residual(x1, x2, w2, bias, res):
    # out = x1 @ w2[0] + x2 @ w2[1] + bias + res     (w2: (2, Cb, N))
    M, Cb = x1.shape
    N = w2.shape[-1]
    tm = _pick_tm(M)
    Mp = _round_up(M, tm)
    if Mp != M:
        x1 = jnp.pad(x1, ((0, Mp - M), (0, 0)))
        x2 = jnp.pad(x2, ((0, Mp - M), (0, 0)))
        res = jnp.pad(res, ((0, Mp - M), (0, 0)))
    tn = _pick_n_tile(N)
    out = pl.pallas_call(
        proj2_residual_kernel,
        out_shape=jax.ShapeDtypeStruct((Mp, N), res.dtype),
        grid=(Mp // tm, N // tn),
        in_specs=[pl.BlockSpec((tm, Cb), lambda i, j: (i, 0)),
                  pl.BlockSpec((tm, Cb), lambda i, j: (i, 0)),
                  pl.BlockSpec((None, Cb, tn), lambda i, j: (0, 0, j)),
                  pl.BlockSpec((None, Cb, tn), lambda i, j: (1, 0, j)),
                  pl.BlockSpec((1, tn), lambda i, j: (0, j)),
                  pl.BlockSpec((tm, tn), lambda i, j: (i, j))],
        out_specs=pl.BlockSpec((tm, tn), lambda i, j: (i, j)),
        compiler_params=pltpu.CompilerParams(
            dimension_semantics=("parallel", "parallel")),
    )(x1, x2, w2, w2, bias.reshape(1, N), res)
    return out[:M] if Mp != M else out


def linear_residual(x, w, bias, res):
    M, K = x.shape
    N = w.shape[1]
    tm = _pick_tm(M)
    Mp = _round_up(M, tm)
    if Mp != M:
        x = jnp.pad(x, ((0, Mp - M), (0, 0)))
        res = jnp.pad(res, ((0, Mp - M), (0, 0)))
    tn = _pick_n_tile(N)
    tk = _pick_k_tile(K)
    out = pl.pallas_call(
        linear_residual_kernel,
        out_shape=jax.ShapeDtypeStruct((Mp, N), res.dtype),
        grid=(Mp // tm, N // tn, K // tk),
        in_specs=[pl.BlockSpec((tm, tk), lambda i, j, k: (i, k)),
                  pl.BlockSpec((tk, tn), lambda i, j, k: (k, j)),
                  pl.BlockSpec((1, tn), lambda i, j, k: (0, j)),
                  pl.BlockSpec((tm, tn), lambda i, j, k: (i, j))],
        out_specs=pl.BlockSpec((tm, tn), lambda i, j, k: (i, j)),
        scratch_shapes=[pltpu.VMEM((tm, tn), jnp.float32)],
        compiler_params=pltpu.CompilerParams(
            dimension_semantics=("parallel", "parallel", "arbitrary")),
    )(x, w, bias.reshape(1, N), res)
    return out[:M] if Mp != M else out


def depthwise_conv3x3(x_nhwc, w_hwc, b_c):
    B, H, W, C = x_nhwc.shape
    xp = jnp.pad(x_nhwc, ((0, 0), (1, 1), (1, 1), (0, 0)))
    # TODO(synk): for very large feature maps on v7x (64 MiB VMEM), tile rows with a
    # 1-row halo and drop the HBM jnp.pad; kept whole-image for lowering robustness.
    return pl.pallas_call(
        dwconv3x3_kernel,
        out_shape=jax.ShapeDtypeStruct((B, H, W, C), x_nhwc.dtype),
        grid=(B,),
        in_specs=[pl.BlockSpec((1, H + 2, W + 2, C), lambda b: (b, 0, 0, 0)),
                  pl.BlockSpec((3, 3, C), lambda b: (0, 0, 0)),
                  pl.BlockSpec((1, C), lambda b: (0, 0))],
        out_specs=pl.BlockSpec((1, H, W, C), lambda b: (b, 0, 0, 0)),
        compiler_params=pltpu.CompilerParams(dimension_semantics=("parallel",)),
    )(xp, w_hwc, b_c.reshape(1, C))


def window_attention_grouped(qkv5, lepe, q_idx, k_idx, v_idx, *, scale, nh, hd):
    # Contiguous windows: qkv5 (5, G, wlen, Cb) read in place with leading-axis component
    # selection; lepe (G, wlen, Cb).
    _, G, wlen, Cb = qkv5.shape
    gb = _pick_group(G, wlen, Cb, qkv5.dtype.itemsize)
    kern = functools.partial(window_attn_kernel, scale=scale, nh=nh, hd=hd)

    def qspec(c):
        return pl.BlockSpec((None, gb, wlen, Cb), lambda g, c=c: (c, g, 0, 0))

    spec = pl.BlockSpec((gb, wlen, Cb), lambda g: (g, 0, 0))
    return pl.pallas_call(
        kern,
        out_shape=jax.ShapeDtypeStruct((G, wlen, Cb), qkv5.dtype),
        grid=(G // gb,),
        in_specs=[qspec(q_idx), qspec(k_idx), qspec(v_idx), spec],
        out_specs=spec,
        compiler_params=pltpu.CompilerParams(dimension_semantics=("parallel",)),
    )(qkv5, qkv5, qkv5, lepe)


def window_attention_separate(qw, kw, vw, lw, *, scale, nh, hd):
    # Fallback path: explicit (G, wlen, Cb) windows produced at JAX level.
    G, wlen, Cb = qw.shape
    gb = _pick_group(G, wlen, Cb, qw.dtype.itemsize)
    kern = functools.partial(window_attn_kernel, scale=scale, nh=nh, hd=hd)
    spec = pl.BlockSpec((gb, wlen, Cb), lambda g: (g, 0, 0))
    return pl.pallas_call(
        kern,
        out_shape=jax.ShapeDtypeStruct((G, wlen, Cb), qw.dtype),
        grid=(G // gb,),
        in_specs=[spec, spec, spec, spec],
        out_specs=spec,
        compiler_params=pltpu.CompilerParams(dimension_semantics=("parallel",)),
    )(qw, kw, vw, lw)


def stripe_attention(qkv5_img, lepe_img, q_idx, k_idx, v_idx, *, split, scale, nh, hd):
    # Vertical stripes read directly from the images via strided block DMAs.
    # qkv5_img: (5, B, nH, nWinW, split, Cb); lepe_img: (B, nH, nWinW, split, Cb)
    _, B, nH, nWinW, _, Cb = qkv5_img.shape
    wlen = split * nH
    kern = functools.partial(stripe_attn_kernel, scale=scale, nh=nh, hd=hd, w_sp=split)

    def qspec(c):
        return pl.BlockSpec((None, None, nH, None, split, Cb),
                            lambda b, wi, c=c: (c, b, 0, wi, 0, 0))

    lspec = pl.BlockSpec((None, nH, None, split, Cb), lambda b, wi: (b, 0, wi, 0, 0))
    ospec = pl.BlockSpec((None, None, wlen, Cb), lambda b, wi: (b, wi, 0, 0))
    return pl.pallas_call(
        kern,
        out_shape=jax.ShapeDtypeStruct((B, nWinW, wlen, Cb), qkv5_img.dtype),
        grid=(B, nWinW),
        in_specs=[qspec(q_idx), qspec(k_idx), qspec(v_idx), lspec],
        out_specs=ospec,
        compiler_params=pltpu.CompilerParams(
            dimension_semantics=("parallel", "parallel")),
    )(qkv5_img, qkv5_img, qkv5_img, lepe_img)


# ----------------------------- branch glue -----------------------------

def eda_branch0(qkv5, lepe_img, B, nH, nW, split, nh, scale):
    # idx == 0: vertical stripes (H_sp = nH, W_sp = split).
    Cb = qkv5.shape[-1]
    hd = Cb // nh
    nWinW = nW // split
    wlen = nH * split

    if nH % 8 == 0:
        qkv5_img = qkv5.reshape(5, B, nH, nWinW, split, Cb)        # free view
        lepe5 = lepe_img.reshape(B, nH, nWinW, split, Cb)          # free view
        out = stripe_attention(qkv5_img, lepe5, 0, 1, 4,
                               split=split, scale=scale, nh=nh, hd=hd)
        # un-permute the (w, h)-major window order back to image (h, w) rows: 1 HBM pass
        out = out.reshape(B, nWinW, split, nH, Cb)
        out = jnp.transpose(out, (0, 3, 1, 2, 4)).reshape(B, nH * nW, Cb)
        return out

    # Fallback for awkward shapes (nH not sublane-aligned): JAX-level windowing.
    q0 = qkv5[0].reshape(B, nH, nWinW, split, Cb)
    k0 = qkv5[1].reshape(B, nH, nWinW, split, Cb)
    v0 = qkv5[4].reshape(B, nH, nWinW, split, Cb)
    l0 = lepe_img.reshape(B, nH, nWinW, split, Cb)

    def to_windows(a):
        a = jnp.transpose(a, (0, 2, 1, 3, 4))                      # (B, nWinW, nH, split, Cb)
        return a.reshape(-1, wlen, Cb)

    out = window_attention_separate(to_windows(q0), to_windows(k0), to_windows(v0),
                                    to_windows(l0), scale=scale, nh=nh, hd=hd)
    out = out.reshape(B, nWinW, nH, split, Cb)
    out = jnp.transpose(out, (0, 2, 1, 3, 4)).reshape(B, nH * nW, Cb)
    return out


def eda_branch1(qkv5, lepe_img, B, nH, nW, split, nh, scale):
    # idx == 1: horizontal stripes (H_sp = split, W_sp = nW); windows are contiguous rows.
    Cb = qkv5.shape[-1]
    hd = Cb // nh
    nWinH = nH // split
    wlen = split * nW
    G = B * nWinH
    qkv5w = qkv5.reshape(5, G, wlen, Cb)                           # free view
    lw = lepe_img.reshape(G, wlen, Cb)                             # free view
    out = window_attention_grouped(qkv5w, lw, 2, 3, 4, scale=scale, nh=nh, hd=hd)
    return out.reshape(B, nH * nW, Cb)


# ----------------------------- full module forward -----------------------------

def anisotropic_attention_forward(x, params, *, num_heads, split_size):
    # TODO(synk): only the branch_num == 2 (non-last-stage) configuration is implemented,
    # matching the provided module instantiation; dropout / DropPath are identity.
    B, C, H, W = x.shape
    xt = jnp.transpose(x, (0, 2, 3, 1))                            # single NCHW -> NHWC
    pad_r = (split_size - W % split_size) % split_size
    pad_b = (split_size - H % split_size) % split_size
    if pad_r or pad_b:
        xt = jnp.pad(xt, ((0, 0), (0, pad_b), (0, pad_r), (0, 0)))
    nH, nW = xt.shape[1], xt.shape[2]
    L = nH * nW
    xf = xt.reshape(B * L, C)

    Cb = C // 2
    nh = num_heads // 2
    hd = Cb // nh
    scale = hd ** (-0.5)

    # fused norm1 + qkv (Linear(dim -> 2.5*dim), bias=False); output pre-split as
    # (5, B*L, Cb): [q0, k0, q1, k1, v]
    qkv5 = ln_linear_multi(xf, params["norm1_g"], params["norm1_b"], params["qkv_w"])

    # LePE depthwise convs (one per branch) on the shared v image (NHWC)
    v_img = qkv5[4].reshape(B, nH, nW, Cb)
    lepe0 = depthwise_conv3x3(v_img, params["getv0_w"], params["getv0_b"])
    lepe1 = depthwise_conv3x3(v_img, params["getv1_w"], params["getv1_b"])

    x1 = eda_branch0(qkv5, lepe0, B, nH, nW, split_size, nh, scale)   # (B, L, Cb)
    x2 = eda_branch1(qkv5, lepe1, B, nH, nW, split_size, nh, scale)   # (B, L, Cb)

    # proj + residual (drop_path = Identity), channel concat folded into two matmuls
    xf = proj2_residual(x1.reshape(B * L, Cb), x2.reshape(B * L, Cb),
                        params["proj_w"], params["proj_b"], xf)

    # MLP block: fused norm2 + fc1 + GELU, then K-tiled fc2 + residual
    hmid = ln_linear(xf, params["norm2_g"], params["norm2_b"],
                     params["fc1_w"], params["fc1_b"], gelu=True)
    xf = linear_residual(hmid, params["fc2_w"], params["fc2_b"], xf)

    out = xf.reshape(B, nH, nW, C)
    if pad_r or pad_b:
        out = out[:, :H, :W, :]
    return jnp.transpose(out, (0, 3, 1, 2))                        # back to NCHW


# ----------------------------- deterministic parameter setup -----------------------------

def make_params(key, dim, mlp_ratio=4.0):
    Cb = dim // 2
    hidden = int(dim * mlp_ratio)
    ks = jax.random.split(key, 15)
    n = lambda k, shape, s=0.1: s * jax.random.normal(k, shape, jnp.float32)
    return {
        "norm1_g": 1.0 + n(ks[0], (dim,)),
        "norm1_b": n(ks[1], (dim,)),
        # qkv weight stored pre-split over the 5 output chunks: y_j = LN(x) @ qkv_w[j]
        "qkv_w": n(ks[2], (5, dim, Cb)),
        "getv0_w": n(ks[3], (3, 3, Cb)),                          # depthwise (kh, kw, C)
        "getv0_b": n(ks[4], (Cb,)),
        "getv1_w": n(ks[5], (3, 3, Cb)),
        "getv1_b": n(ks[6], (Cb,)),
        # proj weight stored pre-split over input halves: y = x1 @ w[0] + x2 @ w[1]
        "proj_w": n(ks[7], (2, Cb, dim)),
        "proj_b": n(ks[8], (dim,)),
        "norm2_g": 1.0 + n(ks[9], (dim,)),
        "norm2_b": n(ks[10], (dim,)),
        "fc1_w": n(ks[11], (dim, hidden)),
        "fc1_b": n(ks[12], (hidden,)),
        "fc2_w": n(ks[13], (hidden, dim)),
        "fc2_b": n(ks[14], (dim,)),
    }


if __name__ == "__main__":
    dim = 32          # channels C
    num_heads = 4
    split_size = 4
    B, H, W = 2, 8, 8

    key = jax.random.PRNGKey(0)
    kx, kp = jax.random.split(key)
    params = make_params(kp, dim)
    x = jax.random.normal(kx, (B, dim, H, W), jnp.float32)

    fwd = jax.jit(functools.partial(anisotropic_attention_forward,
                                    num_heads=num_heads, split_size=split_size))
    out = jax.block_until_ready(fwd(x, params))

    assert out.shape == (B, dim, H, W)
    assert bool(jnp.all(jnp.isfinite(out)))
    print("KERNEL_OK")
</pallas_src>

<mosaic_0001>
module attributes {stable_mosaic.version = 11 : i64} {
  func.func @ln_linear_kernel(%arg0: i32, %arg1: i32, %arg2: memref<128x32xf32, #tpu.memory_space<vmem>>, %arg3: memref<1x32xf32, #tpu.memory_space<vmem>>, %arg4: memref<1x32xf32, #tpu.memory_space<vmem>>, %arg5: memref<1x32x16xf32, #tpu.memory_space<vmem>>, %arg6: memref<1x128x16xf32, #tpu.memory_space<vmem>>, %arg7: memref<128x32xbf16, #tpu.memory_space<vmem>>) attributes {dimension_semantics = [#tpu.dimension_semantics<parallel>, #tpu.dimension_semantics<arbitrary>], iteration_bounds = array<i64: 1, 5>, scalar_prefetch = 0 : i64, scratch_operands = 1 : i64, tpu.core_type = #tpu.core_type<tc>, window_params = [{transform_indices = @transform_0, window_bounds = array<i64: 128, 32>}, {pipeline_mode = #tpu.pipeline_mode<synchronous>, transform_indices = @transform_1, window_bounds = array<i64: 1, 32>}, {pipeline_mode = #tpu.pipeline_mode<synchronous>, transform_indices = @transform_2, window_bounds = array<i64: 1, 32>}, {transform_indices = @transform_3, window_bounds = array<i64: 1, 32, 16>}, {transform_indices = @transform_4, window_bounds = array<i64: 1, 128, 16>}]} {
    %c0_i32 = arith.constant 0 : i32
    %0 = arith.cmpi eq, %arg1, %c0_i32 : i32
    %1 = arith.extui %0 : i1 to i32
    %c0_i32_0 = arith.constant 0 : i32
    %2 = arith.cmpi ne, %1, %c0_i32_0 : i32
    scf.if %2 {
      %c0_8 = arith.constant 0 : index
      %c0_9 = arith.constant 0 : index
      %11 = vector.load %arg2[%c0_8, %c0_9] : memref<128x32xf32, #tpu.memory_space<vmem>>, vector<128x32xf32>
      %cst_10 = arith.constant dense<0.000000e+00> : vector<128xf32>
      %12 = vector.multi_reduction <add>, %11, %cst_10 [1] : vector<128x32xf32> to vector<128xf32>
      %13 = vector.shape_cast %12 : vector<128xf32> to vector<128x1xf32>
      %cst_11 = arith.constant 3.200000e+01 : f32
      %14 = vector.broadcast %cst_11 : f32 to vector<128x1xf32>
      %15 = arith.divf %13, %14 : vector<128x1xf32>
      %16 = vector.broadcast %15 : vector<128x1xf32> to vector<128x32xf32>
      %17 = arith.subf %11, %16 : vector<128x32xf32>
      %18 = arith.mulf %17, %17 : vector<128x32xf32>
      %cst_12 = arith.constant dense<0.000000e+00> : vector<128xf32>
      %19 = vector.multi_reduction <add>, %18, %cst_12 [1] : vector<128x32xf32> to vector<128xf32>
      %20 = vector.shape_cast %19 : vector<128xf32> to vector<128x1xf32>
      %cst_13 = arith.constant 3.200000e+01 : f32
      %21 = vector.broadcast %cst_13 : f32 to vector<128x1xf32>
      %22 = arith.divf %20, %21 : vector<128x1xf32>
      %cst_14 = arith.constant 9.99999974E-6 : f32
      %23 = vector.broadcast %cst_14 : f32 to vector<128x1xf32>
      %24 = arith.addf %22, %23 : vector<128x1xf32>
      %25 = math.rsqrt %24 : vector<128x1xf32>
      %26 = vector.broadcast %25 : vector<128x1xf32> to vector<128x32xf32>
      %27 = arith.mulf %17, %26 : vector<128x32xf32>
      %c0_15 = arith.constant 0 : index
      %c0_16 = arith.constant 0 : index
      %28 = vector.load %arg3[%c0_15, %c0_16] : memref<1x32xf32, #tpu.memory_space<vmem>>, vector<1x32xf32>
      %29 = vector.broadcast %28 : vector<1x32xf32> to vector<128x32xf32>
      %30 = arith.mulf %27, %29 : vector<128x32xf32>
      %c0_17 = arith.constant 0 : index
      %c0_18 = arith.constant 0 : index
      %31 = vector.load %arg4[%c0_17, %c0_18] : memref<1x32xf32, #tpu.memory_space<vmem>>, vector<1x32xf32>
      %32 = vector.broadcast %31 : vector<1x32xf32> to vector<128x32xf32>
      %33 = arith.addf %30, %32 : vector<128x32xf32>
      %34 = arith.truncf %33 : vector<128x32xf32> to vector<128x32xbf16>
      %c0_19 = arith.constant 0 : index
      %c0_20 = arith.constant 0 : index
      %35 = vector.load %arg7[%c0_19, %c0_20] : memref<128x32xbf16, #tpu.memory_space<vmem>>, vector<128x32xbf16>
      tpu.vector_store %arg7[%c0_19, %c0_20], %34 {strides = array<i32>} : memref<128x32xbf16, #tpu.memory_space<vmem>>, vector<128x32xbf16>,
    } else {
    }
    %c0 = arith.constant 0 : index
    %c0_1 = arith.constant 0 : index
    %3 = vector.load %arg7[%c0, %c0_1] : memref<128x32xbf16, #tpu.memory_space<vmem>>, vector<128x32xbf16>
    %c0_2 = arith.constant 0 : index
    %c0_3 = arith.constant 0 : index
    %c0_4 = arith.constant 0 : index
    %4 = vector.load %arg5[%c0_2, %c0_3, %c0_4] : memref<1x32x16xf32, #tpu.memory_space<vmem>>, vector<1x32x16xf32>
    %5 = vector.shape_cast %4 : vector<1x32x16xf32> to vector<32x16xf32>
    %6 = arith.truncf %5 : vector<32x16xf32> to vector<32x16xbf16>
    %cst = arith.constant dense<0.000000e+00> : vector<128x16xf32>
    %7 = tpu.matmul %3, %6, %cst {dimension_numbers = #tpu.dot_dimension_numbers<[1], [0], [0], [1], [0, 0, 1, 1], [], []>} : vector<128x32xbf16>, vector<32x16xbf16>, vector<128x16xf32> -> vector<128x16xf32>
    %c0_5 = arith.constant 0 : index
    %c0_6 = arith.constant 0 : index
    %c0_7 = arith.constant 0 : index
    %8 = vector.load %arg6[%c0_5, %c0_6, %c0_7] : memref<1x128x16xf32, #tpu.memory_space<vmem>>, vector<1x128x16xf32>
    %9 = vector.shape_cast %8 : vector<1x128x16xf32> to vector<128x16xf32>
    %10 = vector.shape_cast %7 : vector<128x16xf32> to vector<1x128x16xf32>
    tpu.vector_store %arg6[%c0_5, %c0_6, %c0_7], %10 {strides = array<i32>} : memref<1x128x16xf32, #tpu.memory_space<vmem>>, vector<1x128x16xf32>,
    return
  }
  func.func @transform_0(%arg0: i32, %arg1: i32) -> (i32, i32) {
    %c0_i32 = arith.constant 0 : i32
    %c0_i32_0 = arith.constant 0 : i32
    return %arg0, %c0_i32 : i32, i32
  }
  func.func @transform_1(%arg0: i32, %arg1: i32) -> (i32, i32) {
    %c0_i32 = arith.constant 0 : i32
    %c0_i32_0 = arith.constant 0 : i32
    %c0_i32_1 = arith.constant 0 : i32
    return %c0_i32, %c0_i32_0 : i32, i32
  }
  func.func @transform_2(%arg0: i32, %arg1: i32) -> (i32, i32) {
    %c0_i32 = arith.constant 0 : i32
    %c0_i32_0 = arith.constant 0 : i32
    %c0_i32_1 = arith.constant 0 : i32
    return %c0_i32, %c0_i32_0 : i32, i32
  }
  func.func @transform_3(%arg0: i32, %arg1: i32) -> (i32, i32, i32) {
    %c0_i32 = arith.constant 0 : i32
    %c0_i32_0 = arith.constant 0 : i32
    %c0_i32_1 = arith.constant 0 : i32
    return %arg1, %c0_i32, %c0_i32_0 : i32, i32, i32
  }
  func.func @transform_4(%arg0: i32, %arg1: i32) -> (i32, i32, i32) {
    %c0_i32 = arith.constant 0 : i32
    %c0_i32_0 = arith.constant 0 : i32
    return %arg1, %arg0, %c0_i32 : i32, i32, i32
  }
}

module attributes {stable_mosaic.version = 11 : i64} {
  func.func @dwconv3x3_kernel(%arg0: i32, %arg1: memref<1x10x10x16xf32, #tpu.memory_space<vmem>>, %arg2: memref<3x3x16xf32, #tpu.memory_space<vmem>>, %arg3: memref<1x16xf32, #tpu.memory_space<vmem>>, %arg4: memref<1x8x8x16xf32, #tpu.memory_space<vmem>>) attributes {dimension_semantics = [#tpu.dimension_semantics<parallel>], iteration_bounds = array<i64: 2>, scalar_prefetch = 0 : i64, scratch_operands = 0 : i64, tpu.core_type = #tpu.core_type<tc>, window_params = [{transform_indices = @transform_0, window_bounds = array<i64: 1, 10, 10, 16>}, {pipeline_mode = #tpu.pipeline_mode<synchronous>, transform_indices = @transform_1, window_bounds = array<i64: 3, 3, 16>}, {pipeline_mode = #tpu.pipeline_mode<synchronous>, transform_indices = @transform_2, window_bounds = array<i64: 1, 16>}, {transform_indices = @transform_3, window_bounds = array<i64: 1, 8, 8, 16>}]} {
    %cst = arith.constant 0.000000e+00 : f32
    %0 = vector.broadcast %cst : f32 to vector<8x8x16xf32>
    %c0 = arith.constant 0 : index
    %c0_0 = arith.constant 0 : index
    %c0_1 = arith.constant 0 : index
    %c0_2 = arith.constant 0 : index
    %1 = vector.load %arg1[%c0, %c0_0, %c0_1, %c0_2] : memref<1x10x10x16xf32, #tpu.memory_space<vmem>>, vector<1x8x10x16xf32>
    %2 = vector.shape_cast %1 : vector<1x8x10x16xf32> to vector<8x10x16xf32>
    %3 = vector.extract_strided_slice %2 {offsets = [0, 0, 0], sizes = [8, 8, 16], strides = [1, 1, 1]} : vector<8x10x16xf32> to vector<8x8x16xf32>
    %c0_3 = arith.constant 0 : index
    %c0_4 = arith.constant 0 : index
    %c0_5 = arith.constant 0 : index
    %4 = vector.load %arg2[%c0_3, %c0_4, %c0_5] : memref<3x3x16xf32, #tpu.memory_space<vmem>>, vector<1x1x16xf32>
    %5 = vector.shape_cast %4 : vector<1x1x16xf32> to vector<16xf32>
    %6 = vector.shape_cast %5 : vector<16xf32> to vector<1x1x16xf32>
    %7 = vector.broadcast %6 : vector<1x1x16xf32> to vector<8x8x16xf32>
    %8 = arith.mulf %3, %7 : vector<8x8x16xf32>
    %9 = arith.addf %0, %8 : vector<8x8x16xf32>
    %10 = vector.extract_strided_slice %2 {offsets = [0, 1, 0], sizes = [8, 8, 16], strides = [1, 1, 1]} : vector<8x10x16xf32> to vector<8x8x16xf32>
    %c0_6 = arith.constant 0 : index
    %c1 = arith.constant 1 : index
    %c0_7 = arith.constant 0 : index
    %11 = vector.load %arg2[%c0_6, %c1, %c0_7] : memref<3x3x16xf32, #tpu.memory_space<vmem>>, vector<1x1x16xf32>
    %12 = vector.shape_cast %11 : vector<1x1x16xf32> to vector<16xf32>
    %13 = vector.shape_cast %12 : vector<16xf32> to vector<1x1x16xf32>
    %14 = vector.broadcast %13 : vector<1x1x16xf32> to vector<8x8x16xf32>
    %15 = arith.mulf %10, %14 : vector<8x8x16xf32>
    %16 = arith.addf %9, %15 : vector<8x8x16xf32>
    %17 = vector.extract_strided_slice %2 {offsets = [0, 2, 0], sizes = [8, 8, 16], strides = [1, 1, 1]} : vector<8x10x16xf32> to vector<8x8x16xf32>
    %c0_8 = arith.constant 0 : index
    %c2 = arith.constant 2 : index
    %c0_9 = arith.constant 0 : index
    %18 = vector.load %arg2[%c0_8, %c2, %c0_9] : memref<3x3x16xf32, #tpu.memory_space<vmem>>, vector<1x1x16xf32>
    %19 = vector.shape_cast %18 : vector<1x1x16xf32> to vector<16xf32>
    %20 = vector.shape_cast %19 : vector<16xf32> to vector<1x1x16xf32>
    %21 = vector.broadcast %20 : vector<1x1x16xf32> to vector<8x8x16xf32>
    %22 = arith.mulf %17, %21 : vector<8x8x16xf32>
    %23 = arith.addf %16, %22 : vector<8x8x16xf32>
    %c0_10 = arith.constant 0 : index
    %c1_11 = arith.constant 1 : index
    %c0_12 = arith.constant 0 : index
    %c0_13 = arith.constant 0 : index
    %24 = vector.load %arg1[%c0_10, %c1_11, %c0_12, %c0_13] : memref<1x10x10x16xf32, #tpu.memory_space<vmem>>, vector<1x8x10x16xf32>
    %25 = vector.shape_cast %24 : vector<1x8x10x16xf32> to vector<8x10x16xf32>
    %26 = vector.extract_strided_slice %25 {offsets = [0, 0, 0], sizes = [8, 8, 16], strides = [1, 1, 1]} : vector<8x10x16xf32> to vector<8x8x16xf32>
    %c1_14 = arith.constant 1 : index
    %c0_15 = arith.constant 0 : index
    %c0_16 = arith.constant 0 : index
    %27 = vector.load %arg2[%c1_14, %c0_15, %c0_16] : memref<3x3x16xf32, #tpu.memory_space<vmem>>, vector<1x1x16xf32>
    %28 = vector.shape_cast %27 : vector<1x1x16xf32> to vector<16xf32>
    %29 = vector.shape_cast %28 : vector<16xf32> to vector<1x1x16xf32>
    %30 = vector.broadcast %29 : vector<1x1x16xf32> to vector<8x8x16xf32>
    %31 = arith.mulf %26, %30 : vector<8x8x16xf32>
    %32 = arith.addf %23, %31 : vector<8x8x16xf32>
    %33 = vector.extract_strided_slice %25 {offsets = [0, 1, 0], sizes = [8, 8, 16], strides = [1, 1, 1]} : vector<8x10x16xf32> to vector<8x8x16xf32>
    %c1_17 = arith.constant 1 : index
    %c1_18 = arith.constant 1 : index
    %c0_19 = arith.constant 0 : index
    %34 = vector.load %arg2[%c1_17, %c1_18, %c0_19] : memref<3x3x16xf32, #tpu.memory_space<vmem>>, vector<1x1x16xf32>
    %35 = vector.shape_cast %34 : vector<1x1x16xf32> to vector<16xf32>
    %36 = vector.shape_cast %35 : vector<16xf32> to vector<1x1x16xf32>
    %37 = vector.broadcast %36 : vector<1x1x16xf32> to vector<8x8x16xf32>
    %38 = arith.mulf %33, %37 : vector<8x8x16xf32>
    %39 = arith.addf %32, %38 : vector<8x8x16xf32>
    %40 = vector.extract_strided_slice %25 {offsets = [0, 2, 0], sizes = [8, 8, 16], strides = [1, 1, 1]} : vector<8x10x16xf32> to vector<8x8x16xf32>
    %c1_20 = arith.constant 1 : index
    %c2_21 = arith.constant 2 : index
    %c0_22 = arith.constant 0 : index
    %41 = vector.load %arg2[%c1_20, %c2_21, %c0_22] : memref<3x3x16xf32, #tpu.memory_space<vmem>>, vector<1x1x16xf32>
    %42 = vector.shape_cast %41 : vector<1x1x16xf32> to vector<16xf32>
    %43 = vector.shape_cast %42 : vector<16xf32> to vector<1x1x16xf32>
    %44 = vector.broadcast %43 : vector<1x1x16xf32> to vector<8x8x16xf32>
    %45 = arith.mulf %40, %44 : vector<8x8x16xf32>
    %46 = arith.addf %39, %45 : vector<8x8x16xf32>
    %c0_23 = arith.constant 0 : index
    %c2_24 = arith.constant 2 : index
    %c0_25 = arith.constant 0 : index
    %c0_26 = arith.constant 0 : index
    %47 = vector.load %arg1[%c0_23, %c2_24, %c0_25, %c0_26] : memref<1x10x10x16xf32, #tpu.memory_space<vmem>>, vector<1x8x10x16xf32>
    %48 = vector.shape_cast %47 : vector<1x8x10x16xf32> to vector<8x10x16xf32>
    %49 = vector.extract_strided_slice %48 {offsets = [0, 0, 0], sizes = [8, 8, 16], strides = [1, 1, 1]} : vector<8x10x16xf32> to vector<8x8x16xf32>
    %c2_27 = arith.constant 2 : index
    %c0_28 = arith.constant 0 : index
    %c0_29 = arith.constant 0 : index
    %50 = vector.load %arg2[%c2_27, %c0_28, %c0_29] : memref<3x3x16xf32, #tpu.memory_space<vmem>>, vector<1x1x16xf32>
    %51 = vector.shape_cast %50 : vector<1x1x16xf32> to vector<16xf32>
    %52 = vector.shape_cast %51 : vector<16xf32> to vector<1x1x16xf32>
    %53 = vector.broadcast %52 : vector<1x1x16xf32> to vector<8x8x16xf32>
    %54 = arith.mulf %49, %53 : vector<8x8x16xf32>
    %55 = arith.addf %46, %54 : vector<8x8x16xf32>
    %56 = vector.extract_strided_slice %48 {offsets = [0, 1, 0], sizes = [8, 8, 16], strides = [1, 1, 1]} : vector<8x10x16xf32> to vector<8x8x16xf32>
    %c2_30 = arith.constant 2 : index
    %c1_31 = arith.constant 1 : index
    %c0_32 = arith.constant 0 : index
    %57 = vector.load %arg2[%c2_30, %c1_31, %c0_32] : memref<3x3x16xf32, #tpu.memory_space<vmem>>, vector<1x1x16xf32>
    %58 = vector.shape_cast %57 : vector<1x1x16xf32> to vector<16xf32>
    %59 = vector.shape_cast %58 : vector<16xf32> to vector<1x1x16xf32>
    %60 = vector.broadcast %59 : vector<1x1x16xf32> to vector<8x8x16xf32>
    %61 = arith.mulf %56, %60 : vector<8x8x16xf32>
    %62 = arith.addf %55, %61 : vector<8x8x16xf32>
    %63 = vector.extract_strided_slice %48 {offsets = [0, 2, 0], sizes = [8, 8, 16], strides = [1, 1, 1]} : vector<8x10x16xf32> to vector<8x8x16xf32>
    %c2_33 = arith.constant 2 : index
    %c2_34 = arith.constant 2 : index
    %c0_35 = arith.constant 0 : index
    %64 = vector.load %arg2[%c2_33, %c2_34, %c0_35] : memref<3x3x16xf32, #tpu.memory_space<vmem>>, vector<1x1x16xf32>
    %65 = vector.shape_cast %64 : vector<1x1x16xf32> to vector<16xf32>
    %66 = vector.shape_cast %65 : vector<16xf32> to vector<1x1x16xf32>
    %67 = vector.broadcast %66 : vector<1x1x16xf32> to vector<8x8x16xf32>
    %68 = arith.mulf %63, %67 : vector<8x8x16xf32>
    %69 = arith.addf %62, %68 : vector<8x8x16xf32>
    %c0_36 = arith.constant 0 : index
    %c0_37 = arith.constant 0 : index
    %70 = vector.load %arg3[%c0_36, %c0_37] : memref<1x16xf32, #tpu.memory_space<vmem>>, vector<1x16xf32>
    %71 = vector.shape_cast %70 : vector<1x16xf32> to vector<16xf32>
    %72 = vector.shape_cast %71 : vector<16xf32> to vector<1x1x16xf32>
    %73 = vector.broadcast %72 : vector<1x1x16xf32> to vector<8x8x16xf32>
    %74 = arith.addf %69, %73 : vector<8x8x16xf32>
    %75 = vector.shape_cast %74 : vector<8x8x16xf32> to vector<1x8x8x16xf32>
    %c0_38 = arith.constant 0 : index
    %c0_39 = arith.constant 0 : index
    %c0_40 = arith.constant 0 : index
    %c0_41 = arith.constant 0 : index
    %76 = vector.load %arg4[%c0_38, %c0_39, %c0_40, %c0_41] : memref<1x8x8x16xf32, #tpu.memory_space<vmem>>, vector<1x8x8x16xf32>
    tpu.vector_store %arg4[%c0_38, %c0_39, %c0_40, %c0_41], %75 {strides = array<i32>} : memref<1x8x8x16xf32, #tpu.memory_space<vmem>>, vector<1x8x8x16xf32>,
    return
  }
  func.func @transform_0(%arg0: i32) -> (i32, i32, i32, i32) {
    %c0_i32 = arith.constant 0 : i32
    %c0_i32_0 = arith.constant 0 : i32
    %c0_i32_1 = arith.constant 0 : i32
    %c0_i32_2 = arith.constant 0 : i32
    return %arg0, %c0_i32, %c0_i32_0, %c0_i32_1 : i32, i32, i32, i32
  }
  func.func @transform_1(%arg0: i32) -> (i32, i32, i32) {
    %c0_i32 = arith.constant 0 : i32
    %c0_i32_0 = arith.constant 0 : i32
    %c0_i32_1 = arith.constant 0 : i32
    %c0_i32_2 = arith.constant 0 : i32
    return %c0_i32, %c0_i32_0, %c0_i32_1 : i32, i32, i32
  }
  func.func @transform_2(%arg0: i32) -> (i32, i32) {
    %c0_i32 = arith.constant 0 : i32
    %c0_i32_0 = arith.constant 0 : i32
    %c0_i32_1 = arith.constant 0 : i32
    return %c0_i32, %c0_i32_0 : i32, i32
  }
  func.func @transform_3(%arg0: i32) -> (i32, i32, i32, i32) {
    %c0_i32 = arith.constant 0 : i32
    %c0_i32_0 = arith.constant 0 : i32
    %c0_i32_1 = arith.constant 0 : i32
    %c0_i32_2 = arith.constant 0 : i32
    return %arg0, %c0_i32, %c0_i32_0, %c0_i32_1 : i32, i32, i32, i32
  }
}

module attributes {stable_mosaic.version = 11 : i64} {
  func.func @window_attn_kernel(%arg0: i32, %arg1: memref<1x1x32x16xf32, #tpu.memory_space<vmem>>, %arg2: memref<1x1x32x16xf32, #tpu.memory_space<vmem>>, %arg3: memref<1x1x32x16xf32, #tpu.memory_space<vmem>>, %arg4: memref<1x32x16xf32, #tpu.memory_space<vmem>>, %arg5: memref<1x32x16xf32, #tpu.memory_space<vmem>>) attributes {dimension_semantics = [#tpu.dimension_semantics<parallel>], iteration_bounds = array<i64: 4>, scalar_prefetch = 0 : i64, scratch_operands = 0 : i64, tpu.core_type = #tpu.core_type<tc>, window_params = [{transform_indices = @transform_0, window_bounds = array<i64: 1, 1, 32, 16>}, {transform_indices = @transform_1, window_bounds = array<i64: 1, 1, 32, 16>}, {transform_indices = @transform_2, window_bounds = array<i64: 1, 1, 32, 16>}, {transform_indices = @transform_3, window_bounds = array<i64: 1, 32, 16>}, {transform_indices = @transform_4, window_bounds = array<i64: 1, 32, 16>}]} {
    %c0 = arith.constant 0 : index
    %c0_0 = arith.constant 0 : index
    %c0_1 = arith.constant 0 : index
    %c0_2 = arith.constant 0 : index
    %0 = vector.load %arg1[%c0, %c0_0, %c0_1, %c0_2] : memref<1x1x32x16xf32, #tpu.memory_space<vmem>>, vector<1x1x32x16xf32>
    %1 = vector.shape_cast %0 : vector<1x1x32x16xf32> to vector<1x32x16xf32>
    %c0_3 = arith.constant 0 : index
    %c0_4 = arith.constant 0 : index
    %c0_5 = arith.constant 0 : index
    %c0_6 = arith.constant 0 : index
    %2 = vector.load %arg2[%c0_3, %c0_4, %c0_5, %c0_6] : memref<1x1x32x16xf32, #tpu.memory_space<vmem>>, vector<1x1x32x16xf32>
    %3 = vector.shape_cast %2 : vector<1x1x32x16xf32> to vector<1x32x16xf32>
    %c0_7 = arith.constant 0 : index
    %c0_8 = arith.constant 0 : index
    %c0_9 = arith.constant 0 : index
    %c0_10 = arith.constant 0 : index
    %4 = vector.load %arg3[%c0_7, %c0_8, %c0_9, %c0_10] : memref<1x1x32x16xf32, #tpu.memory_space<vmem>>, vector<1x1x32x16xf32>
    %5 = vector.shape_cast %4 : vector<1x1x32x16xf32> to vector<1x32x16xf32>
    %c0_11 = arith.constant 0 : index
    %c0_12 = arith.constant 0 : index
    %c0_13 = arith.constant 0 : index
    %6 = vector.load %arg4[%c0_11, %c0_12, %c0_13] : memref<1x32x16xf32, #tpu.memory_space<vmem>>, vector<1x32x16xf32>
    %7 = arith.truncf %1 : vector<1x32x16xf32> to vector<1x32x16xbf16>
    %8 = arith.truncf %3 : vector<1x32x16xf32> to vector<1x32x16xbf16>
    %9 = arith.truncf %5 : vector<1x32x16xf32> to vector<1x32x16xbf16>
    %10 = vector.extract_strided_slice %7 {offsets = [0, 0, 0], sizes = [1, 32, 8], strides = [1, 1, 1]} : vector<1x32x16xbf16> to vector<1x32x8xbf16>
    %11 = vector.extract_strided_slice %8 {offsets = [0, 0, 0], sizes = [1, 32, 8], strides = [1, 1, 1]} : vector<1x32x16xbf16> to vector<1x32x8xbf16>
    "tpu.trace_start"() <{level = 10 : i32, message = "gqd,gkd->gqk"}> : () -> ()
    %cst = arith.constant dense<0.000000e+00> : vector<1x32x32xf32>
    %12 = tpu.matmul %10, %11, %cst {dimension_numbers = #tpu.dot_dimension_numbers<[2], [2], [1], [1], [0, 0, 0, 1, 1, 1], [0], [0]>} : vector<1x32x8xbf16>, vector<1x32x8xbf16>, vector<1x32x32xf32> -> vector<1x32x32xf32>
    "tpu.trace_stop"() : () -> ()
    %cst_14 = arith.constant 0.353553385 : f32
    %13 = vector.broadcast %cst_14 : f32 to vector<1x32x32xf32>
    %14 = arith.mulf %12, %13 : vector<1x32x32xf32>
    %cst_15 = arith.constant dense<0xFF800000> : vector<1x32xf32>
    %15 = vector.multi_reduction <maximumf>, %14, %cst_15 [2] : vector<1x32x32xf32> to vector<1x32xf32>
    %16 = vector.shape_cast %15 : vector<1x32xf32> to vector<1x32x1xf32>
    %17 = vector.broadcast %16 : vector<1x32x1xf32> to vector<1x32x32xf32>
    %18 = arith.subf %14, %17 : vector<1x32x32xf32>
    %19 = math.exp %18 : vector<1x32x32xf32>
    %cst_16 = arith.constant dense<0.000000e+00> : vector<1x32xf32>
    %20 = vector.multi_reduction <add>, %19, %cst_16 [2] : vector<1x32x32xf32> to vector<1x32xf32>
    %21 = vector.shape_cast %20 : vector<1x32xf32> to vector<1x32x1xf32>
    %22 = tpu.reciprocal %21 {approx = true} : vector<1x32x1xf32> -> vector<1x32x1xf32>
    %23 = vector.broadcast %22 : vector<1x32x1xf32> to vector<1x32x32xf32>
    %24 = arith.mulf %19, %23 : vector<1x32x32xf32>
    %25 = arith.truncf %24 : vector<1x32x32xf32> to vector<1x32x32xbf16>
    %26 = vector.extract_strided_slice %9 {offsets = [0, 0, 0], sizes = [1, 32, 8], strides = [1, 1, 1]} : vector<1x32x16xbf16> to vector<1x32x8xbf16>
    "tpu.trace_start"() <{level = 10 : i32, message = "gqk,gkd->gqd"}> : () -> ()
    %cst_17 = arith.constant dense<0.000000e+00> : vector<1x32x8xf32>
    %27 = tpu.matmul %25, %26, %cst_17 {dimension_numbers = #tpu.dot_dimension_numbers<[2], [1], [1], [2], [0, 0, 0, 1, 1, 2], [0], [0]>} : vector<1x32x32xbf16>, vector<1x32x8xbf16>, vector<1x32x8xf32> -> vector<1x32x8xf32>
    "tpu.trace_stop"() : () -> ()
    %28 = vector.extract_strided_slice %6 {offsets = [0, 0, 0], sizes = [1, 32, 8], strides = [1, 1, 1]} : vector<1x32x16xf32> to vector<1x32x8xf32>
    %29 = arith.addf %27, %28 : vector<1x32x8xf32>
    %30 = vector.extract_strided_slice %7 {offsets = [0, 0, 8], sizes = [1, 32, 8], strides = [1, 1, 1]} : vector<1x32x16xbf16> to vector<1x32x8xbf16>
    %31 = vector.extract_strided_slice %8 {offsets = [0, 0, 8], sizes = [1, 32, 8], strides = [1, 1, 1]} : vector<1x32x16xbf16> to vector<1x32x8xbf16>
    "tpu.trace_start"() <{level = 10 : i32, message = "gqd,gkd->gqk"}> : () -> ()
    %cst_18 = arith.constant dense<0.000000e+00> : vector<1x32x32xf32>
    %32 = tpu.matmul %30, %31, %cst_18 {dimension_numbers = #tpu.dot_dimension_numbers<[2], [2], [1], [1], [0, 0, 0, 1, 1, 1], [0], [0]>} : vector<1x32x8xbf16>, vector<1x32x8xbf16>, vector<1x32x32xf32> -> vector<1x32x32xf32>
    "tpu.trace_stop"() : () -> ()
    %cst_19 = arith.constant 0.353553385 : f32
    %33 = vector.broadcast %cst_19 : f32 to vector<1x32x32xf32>
    %34 = arith.mulf %32, %33 : vector<1x32x32xf32>
    %cst_20 = arith.constant dense<0xFF800000> : vector<1x32xf32>
    %35 = vector.multi_reduction <maximumf>, %34, %cst_20 [2] : vector<1x32x32xf32> to vector<1x32xf32>
    %36 = vector.shape_cast %35 : vector<1x32xf32> to vector<1x32x1xf32>
    %37 = vector.broadcast %36 : vector<1x32x1xf32> to vector<1x32x32xf32>
    %38 = arith.subf %34, %37 : vector<1x32x32xf32>
    %39 = math.exp %38 : vector<1x32x32xf32>
    %cst_21 = arith.constant dense<0.000000e+00> : vector<1x32xf32>
    %40 = vector.multi_reduction <add>, %39, %cst_21 [2] : vector<1x32x32xf32> to vector<1x32xf32>
    %41 = vector.shape_cast %40 : vector<1x32xf32> to vector<1x32x1xf32>
    %42 = tpu.reciprocal %41 {approx = true} : vector<1x32x1xf32> -> vector<1x32x1xf32>
    %43 = vector.broadcast %42 : vector<1x32x1xf32> to vector<1x32x32xf32>
    %44 = arith.mulf %39, %43 : vector<1x32x32xf32>
    %45 = arith.truncf %44 : vector<1x32x32xf32> to vector<1x32x32xbf16>
    %46 = vector.extract_strided_slice %9 {offsets = [0, 0, 8], sizes = [1, 32, 8], strides = [1, 1, 1]} : vector<1x32x16xbf16> to vector<1x32x8xbf16>
    "tpu.trace_start"() <{level = 10 : i32, message = "gqk,gkd->gqd"}> : () -> ()
    %cst_22 = arith.constant dense<0.000000e+00> : vector<1x32x8xf32>
    %47 = tpu.matmul %45, %46, %cst_22 {dimension_numbers = #tpu.dot_dimension_numbers<[2], [1], [1], [2], [0, 0, 0, 1, 1, 2], [0], [0]>} : vector<1x32x32xbf16>, vector<1x32x8xbf16>, vector<1x32x8xf32> -> vector<1x32x8xf32>
    "tpu.trace_stop"() : () -> ()
    %48 = vector.extract_strided_slice %6 {offsets = [0, 0, 8], sizes = [1, 32, 8], strides = [1, 1, 1]} : vector<1x32x16xf32> to vector<1x32x8xf32>
    %49 = arith.addf %47, %48 : vector<1x32x8xf32>
    %50 = tpu.concatenate %29, %49 in 2 : vector<1x32x8xf32>, vector<1x32x8xf32> -> vector<1x32x16xf32>
    %c0_23 = arith.constant 0 : index
    %c0_24 = arith.constant 0 : index
    %c0_25 = arith.constant 0 : index
    %51 = vector.load %arg5[%c0_23, %c0_24, %c0_25] : memref<1x32x16xf32, #tpu.memory_space<vmem>>, vector<1x32x16xf32>
    tpu.vector_store %arg5[%c0_23, %c0_24, %c0_25], %50 {strides = array<i32>} : memref<1x32x16xf32, #tpu.memory_space<vmem>>, vector<1x32x16xf32>,
    return
  }
  func.func @transform_0(%arg0: i32) -> (i32, i32, i32, i32) {
    %c2_i32 = arith.constant 2 : i32
    %c0_i32 = arith.constant 0 : i32
    %c0_i32_0 = arith.constant 0 : i32
    %c0_i32_1 = arith.constant 0 : i32
    return %c2_i32, %arg0, %c0_i32, %c0_i32_0 : i32, i32, i32, i32
  }
  func.func @transform_1(%arg0: i32) -> (i32, i32, i32, i32) {
    %c3_i32 = arith.constant 3 : i32
    %c0_i32 = arith.constant 0 : i32
    %c0_i32_0 = arith.constant 0 : i32
    %c0_i32_1 = arith.constant 0 : i32
    return %c3_i32, %arg0, %c0_i32, %c0_i32_0 : i32, i32, i32, i32
  }
  func.func @transform_2(%arg0: i32) -> (i32, i32, i32, i32) {
    %c4_i32 = arith.constant 4 : i32
    %c0_i32 = arith.constant 0 : i32
    %c0_i32_0 = arith.constant 0 : i32
    %c0_i32_1 = arith.constant 0 : i32
    return %c4_i32, %arg0, %c0_i32, %c0_i32_0 : i32, i32, i32, i32
  }
  func.func @transform_3(%arg0: i32) -> (i32, i32, i32) {
    %c0_i32 = arith.constant 0 : i32
    %c0_i32_0 = arith.constant 0 : i32
    %c0_i32_1 = arith.constant 0 : i32
    return %arg0, %c0_i32, %c0_i32_0 : i32, i32, i32
  }
  func.func @transform_4(%arg0: i32) -> (i32, i32, i32) {
    %c0_i32 = arith.constant 0 : i32
    %c0_i32_0 = arith.constant 0 : i32
    %c0_i32_1 = arith.constant 0 : i32
    return %arg0, %c0_i32, %c0_i32_0 : i32, i32, i32
  }
}

module attributes {stable_mosaic.version = 11 : i64} {
  func.func @stripe_attn_kernel(%arg0: i32, %arg1: i32, %arg2: memref<1x1x8x1x4x16xf32, #tpu.memory_space<vmem>>, %arg3: memref<1x1x8x1x4x16xf32, #tpu.memory_space<vmem>>, %arg4: memref<1x1x8x1x4x16xf32, #tpu.memory_space<vmem>>, %arg5: memref<1x8x1x4x16xf32, #tpu.memory_space<vmem>>, %arg6: memref<1x1x32x16xf32, #tpu.memory_space<vmem>>) attributes {dimension_semantics = [#tpu.dimension_semantics<parallel>, #tpu.dimension_semantics<parallel>], iteration_bounds = array<i64: 2, 2>, scalar_prefetch = 0 : i64, scratch_operands = 0 : i64, tpu.core_type = #tpu.core_type<tc>, window_params = [{transform_indices = @transform_0, window_bounds = array<i64: 1, 1, 8, 1, 4, 16>}, {transform_indices = @transform_1, window_bounds = array<i64: 1, 1, 8, 1, 4, 16>}, {transform_indices = @transform_2, window_bounds = array<i64: 1, 1, 8, 1, 4, 16>}, {transform_indices = @transform_3, window_bounds = array<i64: 1, 8, 1, 4, 16>}, {transform_indices = @transform_4, window_bounds = array<i64: 1, 1, 32, 16>}]} {
    %c0 = arith.constant 0 : index
    %c0_0 = arith.constant 0 : index
    %c0_1 = arith.constant 0 : index
    %c0_2 = arith.constant 0 : index
    %c0_3 = arith.constant 0 : index
    %c0_4 = arith.constant 0 : index
    %0 = vector.load %arg2[%c0, %c0_0, %c0_1, %c0_2, %c0_3, %c0_4] : memref<1x1x8x1x4x16xf32, #tpu.memory_space<vmem>>, vector<1x1x8x1x1x16xf32>
    %1 = vector.shape_cast %0 : vector<1x1x8x1x1x16xf32> to vector<8x16xf32>
    %c0_5 = arith.constant 0 : index
    %c0_6 = arith.constant 0 : index
    %c0_7 = arith.constant 0 : index
    %c0_8 = arith.constant 0 : index
    %c1 = arith.constant 1 : index
    %c0_9 = arith.constant 0 : index
    %2 = vector.load %arg2[%c0_5, %c0_6, %c0_7, %c0_8, %c1, %c0_9] : memref<1x1x8x1x4x16xf32, #tpu.memory_space<vmem>>, vector<1x1x8x1x1x16xf32>
    %3 = vector.shape_cast %2 : vector<1x1x8x1x1x16xf32> to vector<8x16xf32>
    %c0_10 = arith.constant 0 : index
    %c0_11 = arith.constant 0 : index
    %c0_12 = arith.constant 0 : index
    %c0_13 = arith.constant 0 : index
    %c2 = arith.constant 2 : index
    %c0_14 = arith.constant 0 : index
    %4 = vector.load %arg2[%c0_10, %c0_11, %c0_12, %c0_13, %c2, %c0_14] : memref<1x1x8x1x4x16xf32, #tpu.memory_space<vmem>>, vector<1x1x8x1x1x16xf32>
    %5 = vector.shape_cast %4 : vector<1x1x8x1x1x16xf32> to vector<8x16xf32>
    %c0_15 = arith.constant 0 : index
    %c0_16 = arith.constant 0 : index
    %c0_17 = arith.constant 0 : index
    %c0_18 = arith.constant 0 : index
    %c3 = arith.constant 3 : index
    %c0_19 = arith.constant 0 : index
    %6 = vector.load %arg2[%c0_15, %c0_16, %c0_17, %c0_18, %c3, %c0_19] : memref<1x1x8x1x4x16xf32, #tpu.memory_space<vmem>>, vector<1x1x8x1x1x16xf32>
    %7 = vector.shape_cast %6 : vector<1x1x8x1x1x16xf32> to vector<8x16xf32>
    %8 = tpu.concatenate %1, %3, %5, %7 in 0 : vector<8x16xf32>, vector<8x16xf32>, vector<8x16xf32>, vector<8x16xf32> -> vector<32x16xf32>
    %9 = vector.shape_cast %8 : vector<32x16xf32> to vector<1x32x16xf32>
    %c0_20 = arith.constant 0 : index
    %c0_21 = arith.constant 0 : index
    %c0_22 = arith.constant 0 : index
    %c0_23 = arith.constant 0 : index
    %c0_24 = arith.constant 0 : index
    %c0_25 = arith.constant 0 : index
    %10 = vector.load %arg3[%c0_20, %c0_21, %c0_22, %c0_23, %c0_24, %c0_25] : memref<1x1x8x1x4x16xf32, #tpu.memory_space<vmem>>, vector<1x1x8x1x1x16xf32>
    %11 = vector.shape_cast %10 : vector<1x1x8x1x1x16xf32> to vector<8x16xf32>
    %c0_26 = arith.constant 0 : index
    %c0_27 = arith.constant 0 : index
    %c0_28 = arith.constant 0 : index
    %c0_29 = arith.constant 0 : index
    %c1_30 = arith.constant 1 : index
    %c0_31 = arith.constant 0 : index
    %12 = vector.load %arg3[%c0_26, %c0_27, %c0_28, %c0_29, %c1_30, %c0_31] : memref<1x1x8x1x4x16xf32, #tpu.memory_space<vmem>>, vector<1x1x8x1x1x16xf32>
    %13 = vector.shape_cast %12 : vector<1x1x8x1x1x16xf32> to vector<8x16xf32>
    %c0_32 = arith.constant 0 : index
    %c0_33 = arith.constant 0 : index
    %c0_34 = arith.constant 0 : index
    %c0_35 = arith.constant 0 : index
    %c2_36 = arith.constant 2 : index
    %c0_37 = arith.constant 0 : index
    %14 = vector.load %arg3[%c0_32, %c0_33, %c0_34, %c0_35, %c2_36, %c0_37] : memref<1x1x8x1x4x16xf32, #tpu.memory_space<vmem>>, vector<1x1x8x1x1x16xf32>
    %15 = vector.shape_cast %14 : vector<1x1x8x1x1x16xf32> to vector<8x16xf32>
    %c0_38 = arith.constant 0 : index
    %c0_39 = arith.constant 0 : index
    %c0_40 = arith.constant 0 : index
    %c0_41 = arith.constant 0 : index
    %c3_42 = arith.constant 3 : index
    %c0_43 = arith.constant 0 : index
    %16 = vector.load %arg3[%c0_38, %c0_39, %c0_40, %c0_41, %c3_42, %c0_43] : memref<1x1x8x1x4x16xf32, #tpu.memory_space<vmem>>, vector<1x1x8x1x1x16xf32>
    %17 = vector.shape_cast %16 : vector<1x1x8x1x1x16xf32> to vector<8x16xf32>
    %18 = tpu.concatenate %11, %13, %15, %17 in 0 : vector<8x16xf32>, vector<8x16xf32>, vector<8x16xf32>, vector<8x16xf32> -> vector<32x16xf32>
    %19 = vector.shape_cast %18 : vector<32x16xf32> to vector<1x32x16xf32>
    %c0_44 = arith.constant 0 : index
    %c0_45 = arith.constant 0 : index
    %c0_46 = arith.constant 0 : index
    %c0_47 = arith.constant 0 : index
    %c0_48 = arith.constant 0 : index
    %c0_49 = arith.constant 0 : index
    %20 = vector.load %arg4[%c0_44, %c0_45, %c0_46, %c0_47, %c0_48, %c0_49] : memref<1x1x8x1x4x16xf32, #tpu.memory_space<vmem>>, vector<1x1x8x1x1x16xf32>
    %21 = vector.shape_cast %20 : vector<1x1x8x1x1x16xf32> to vector<8x16xf32>
    %c0_50 = arith.constant 0 : index
    %c0_51 = arith.constant 0 : index
    %c0_52 = arith.constant 0 : index
    %c0_53 = arith.constant 0 : index
    %c1_54 = arith.constant 1 : index
    %c0_55 = arith.constant 0 : index
    %22 = vector.load %arg4[%c0_50, %c0_51, %c0_52, %c0_53, %c1_54, %c0_55] : memref<1x1x8x1x4x16xf32, #tpu.memory_space<vmem>>, vector<1x1x8x1x1x16xf32>
    %23 = vector.shape_cast %22 : vector<1x1x8x1x1x16xf32> to vector<8x16xf32>
    %c0_56 = arith.constant 0 : index
    %c0_57 = arith.constant 0 : index
    %c0_58 = arith.constant 0 : index
    %c0_59 = arith.constant 0 : index
    %c2_60 = arith.constant 2 : index
    %c0_61 = arith.constant 0 : index
    %24 = vector.load %arg4[%c0_56, %c0_57, %c0_58, %c0_59, %c2_60, %c0_61] : memref<1x1x8x1x4x16xf32, #tpu.memory_space<vmem>>, vector<1x1x8x1x1x16xf32>
    %25 = vector.shape_cast %24 : vector<1x1x8x1x1x16xf32> to vector<8x16xf32>
    %c0_62 = arith.constant 0 : index
    %c0_63 = arith.constant 0 : index
    %c0_64 = arith.constant 0 : index
    %c0_65 = arith.constant 0 : index
    %c3_66 = arith.constant 3 : index
    %c0_67 = arith.constant 0 : index
    %26 = vector.load %arg4[%c0_62, %c0_63, %c0_64, %c0_65, %c3_66, %c0_67] : memref<1x1x8x1x4x16xf32, #tpu.memory_space<vmem>>, vector<1x1x8x1x1x16xf32>
    %27 = vector.shape_cast %26 : vector<1x1x8x1x1x16xf32> to vector<8x16xf32>
    %28 = tpu.concatenate %21, %23, %25, %27 in 0 : vector<8x16xf32>, vector<8x16xf32>, vector<8x16xf32>, vector<8x16xf32> -> vector<32x16xf32>
    %29 = vector.shape_cast %28 : vector<32x16xf32> to vector<1x32x16xf32>
    %c0_68 = arith.constant 0 : index
    %c0_69 = arith.constant 0 : index
    %c0_70 = arith.constant 0 : index
    %c0_71 = arith.constant 0 : index
    %c0_72 = arith.constant 0 : index
    %30 = vector.load %arg5[%c0_68, %c0_69, %c0_70, %c0_71, %c0_72] : memref<1x8x1x4x16xf32, #tpu.memory_space<vmem>>, vector<1x8x1x1x16xf32>
    %31 = vector.shape_cast %30 : vector<1x8x1x1x16xf32> to vector<8x16xf32>
    %c0_73 = arith.constant 0 : index
    %c0_74 = arith.constant 0 : index
    %c0_75 = arith.constant 0 : index
    %c1_76 = arith.constant 1 : index
    %c0_77 = arith.constant 0 : index
    %32 = vector.load %arg5[%c0_73, %c0_74, %c0_75, %c1_76, %c0_77] : memref<1x8x1x4x16xf32, #tpu.memory_space<vmem>>, vector<1x8x1x1x16xf32>
    %33 = vector.shape_cast %32 : vector<1x8x1x1x16xf32> to vector<8x16xf32>
    %c0_78 = arith.constant 0 : index
    %c0_79 = arith.constant 0 : index
    %c0_80 = arith.constant 0 : index
    %c2_81 = arith.constant 2 : index
    %c0_82 = arith.constant 0 : index
    %34 = vector.load %arg5[%c0_78, %c0_79, %c0_80, %c2_81, %c0_82] : memref<1x8x1x4x16xf32, #tpu.memory_space<vmem>>, vector<1x8x1x1x16xf32>
    %35 = vector.shape_cast %34 : vector<1x8x1x1x16xf32> to vector<8x16xf32>
    %c0_83 = arith.constant 0 : index
    %c0_84 = arith.constant 0 : index
    %c0_85 = arith.constant 0 : index
    %c3_86 = arith.constant 3 : index
    %c0_87 = arith.constant 0 : index
    %36 = vector.load %arg5[%c0_83, %c0_84, %c0_85, %c3_86, %c0_87] : memref<1x8x1x4x16xf32, #tpu.memory_space<vmem>>, vector<1x8x1x1x16xf32>
    %37 = vector.shape_cast %36 : vector<1x8x1x1x16xf32> to vector<8x16xf32>
    %38 = tpu.concatenate %31, %33, %35, %37 in 0 : vector<8x16xf32>, vector<8x16xf32>, vector<8x16xf32>, vector<8x16xf32> -> vector<32x16xf32>
    %39 = vector.shape_cast %38 : vector<32x16xf32> to vector<1x32x16xf32>
    %40 = arith.truncf %9 : vector<1x32x16xf32> to vector<1x32x16xbf16>
    %41 = arith.truncf %19 : vector<1x32x16xf32> to vector<1x32x16xbf16>
    %42 = arith.truncf %29 : vector<1x32x16xf32> to vector<1x32x16xbf16>
    %43 = vector.extract_strided_slice %40 {offsets = [0, 0, 0], sizes = [1, 32, 8], strides = [1, 1, 1]} : vector<1x32x16xbf16> to vector<1x32x8xbf16>
    %44 = vector.extract_strided_slice %41 {offsets = [0, 0, 0], sizes = [1, 32, 8], strides = [1, 1, 1]} : vector<1x32x16xbf16> to vector<1x32x8xbf16>
    "tpu.trace_start"() <{level = 10 : i32, message = "gqd,gkd->gqk"}> : () -> ()
    %cst = arith.constant dense<0.000000e+00> : vector<1x32x32xf32>
    %45 = tpu.matmul %43, %44, %cst {dimension_numbers = #tpu.dot_dimension_numbers<[2], [2], [1], [1], [0, 0, 0, 1, 1, 1], [0], [0]>} : vector<1x32x8xbf16>, vector<1x32x8xbf16>, vector<1x32x32xf32> -> vector<1x32x32xf32>
    "tpu.trace_stop"() : () -> ()
    %cst_88 = arith.constant 0.353553385 : f32
    %46 = vector.broadcast %cst_88 : f32 to vector<1x32x32xf32>
    %47 = arith.mulf %45, %46 : vector<1x32x32xf32>
    %cst_89 = arith.constant dense<0xFF800000> : vector<1x32xf32>
    %48 = vector.multi_reduction <maximumf>, %47, %cst_89 [2] : vector<1x32x32xf32> to vector<1x32xf32>
    %49 = vector.shape_cast %48 : vector<1x32xf32> to vector<1x32x1xf32>
    %50 = vector.broadcast %49 : vector<1x32x1xf32> to vector<1x32x32xf32>
    %51 = arith.subf %47, %50 : vector<1x32x32xf32>
    %52 = math.exp %51 : vector<1x32x32xf32>
    %cst_90 = arith.constant dense<0.000000e+00> : vector<1x32xf32>
    %53 = vector.multi_reduction <add>, %52, %cst_90 [2] : vector<1x32x32xf32> to vector<1x32xf32>
    %54 = vector.shape_cast %53 : vector<1x32xf32> to vector<1x32x1xf32>
    %55 = tpu.reciprocal %54 {approx = true} : vector<1x32x1xf32> -> vector<1x32x1xf32>
    %56 = vector.broadcast %55 : vector<1x32x1xf32> to vector<1x32x32xf32>
    %57 = arith.mulf %52, %56 : vector<1x32x32xf32>
    %58 = arith.truncf %57 : vector<1x32x32xf32> to vector<1x32x32xbf16>
    %59 = vector.extract_strided_slice %42 {offsets = [0, 0, 0], sizes = [1, 32, 8], strides = [1, 1, 1]} : vector<1x32x16xbf16> to vector<1x32x8xbf16>
    "tpu.trace_start"() <{level = 10 : i32, message = "gqk,gkd->gqd"}> : () -> ()
    %cst_91 = arith.constant dense<0.000000e+00> : vector<1x32x8xf32>
    %60 = tpu.matmul %58, %59, %cst_91 {dimension_numbers = #tpu.dot_dimension_numbers<[2], [1], [1], [2], [0, 0, 0, 1, 1, 2], [0], [0]>} : vector<1x32x32xbf16>, vector<1x32x8xbf16>, vector<1x32x8xf32> -> vector<1x32x8xf32>
    "tpu.trace_stop"() : () -> ()
    %61 = vector.extract_strided_slice %39 {offsets = [0, 0, 0], sizes = [1, 32, 8], strides = [1, 1, 1]} : vector<1x32x16xf32> to vector<1x32x8xf32>
    %62 = arith.addf %60, %61 : vector<1x32x8xf32>
    %63 = vector.extract_strided_slice %40 {offsets = [0, 0, 8], sizes = [1, 32, 8], strides = [1, 1, 1]} : vector<1x32x16xbf16> to vector<1x32x8xbf16>
    %64 = vector.extract_strided_slice %41 {offsets = [0, 0, 8], sizes = [1, 32, 8], strides = [1, 1, 1]} : vector<1x32x16xbf16> to vector<1x32x8xbf16>
    "tpu.trace_start"() <{level = 10 : i32, message = "gqd,gkd->gqk"}> : () -> ()
    %cst_92 = arith.constant dense<0.000000e+00> : vector<1x32x32xf32>
    %65 = tpu.matmul %63, %64, %cst_92 {dimension_numbers = #tpu.dot_dimension_numbers<[2], [2], [1], [1], [0, 0, 0, 1, 1, 1], [0], [0]>} : vector<1x32x8xbf16>, vector<1x32x8xbf16>, vector<1x32x32xf32> -> vector<1x32x32xf32>
    "tpu.trace_stop"() : () -> ()
    %cst_93 = arith.constant 0.353553385 : f32
    %66 = vector.broadcast %cst_93 : f32 to vector<1x32x32xf32>
    %67 = arith.mulf %65, %66 : vector<1x32x32xf32>
    %cst_94 = arith.constant dense<0xFF800000> : vector<1x32xf32>
    %68 = vector.multi_reduction <maximumf>, %67, %cst_94 [2] : vector<1x32x32xf32> to vector<1x32xf32>
    %69 = vector.shape_cast %68 : vector<1x32xf32> to vector<1x32x1xf32>
    %70 = vector.broadcast %69 : vector<1x32x1xf32> to vector<1x32x32xf32>
    %71 = arith.subf %67, %70 : vector<1x32x32xf32>
    %72 = math.exp %71 : vector<1x32x32xf32>
    %cst_95 = arith.constant dense<0.000000e+00> : vector<1x32xf32>
    %73 = vector.multi_reduction <add>, %72, %cst_95 [2] : vector<1x32x32xf32> to vector<1x32xf32>
    %74 = vector.shape_cast %73 : vector<1x32xf32> to vector<1x32x1xf32>
    %75 = tpu.reciprocal %74 {approx = true} : vector<1x32x1xf32> -> vector<1x32x1xf32>
    %76 = vector.broadcast %75 : vector<1x32x1xf32> to vector<1x32x32xf32>
    %77 = arith.mulf %72, %76 : vector<1x32x32xf32>
    %78 = arith.truncf %77 : vector<1x32x32xf32> to vector<1x32x32xbf16>
    %79 = vector.extract_strided_slice %42 {offsets = [0, 0, 8], sizes = [1, 32, 8], strides = [1, 1, 1]} : vector<1x32x16xbf16> to vector<1x32x8xbf16>
    "tpu.trace_start"() <{level = 10 : i32, message = "gqk,gkd->gqd"}> : () -> ()
    %cst_96 = arith.constant dense<0.000000e+00> : vector<1x32x8xf32>
    %80 = tpu.matmul %78, %79, %cst_96 {dimension_numbers = #tpu.dot_dimension_numbers<[2], [1], [1], [2], [0, 0, 0, 1, 1, 2], [0], [0]>} : vector<1x32x32xbf16>, vector<1x32x8xbf16>, vector<1x32x8xf32> -> vector<1x32x8xf32>
    "tpu.trace_stop"() : () -> ()
    %81 = vector.extract_strided_slice %39 {offsets = [0, 0, 8], sizes = [1, 32, 8], strides = [1, 1, 1]} : vector<1x32x16xf32> to vector<1x32x8xf32>
    %82 = arith.addf %80, %81 : vector<1x32x8xf32>
    %83 = tpu.concatenate %62, %82 in 2 : vector<1x32x8xf32>, vector<1x32x8xf32> -> vector<1x32x16xf32>
    %84 = vector.shape_cast %83 : vector<1x32x16xf32> to vector<32x16xf32>
    %c0_97 = arith.constant 0 : index
    %c0_98 = arith.constant 0 : index
    %c0_99 = arith.constant 0 : index
    %c0_100 = arith.constant 0 : index
    %85 = vector.load %arg6[%c0_97, %c0_98, %c0_99, %c0_100] : memref<1x1x32x16xf32, #tpu.memory_space<vmem>>, vector<1x1x32x16xf32>
    %86 = vector.shape_cast %85 : vector<1x1x32x16xf32> to vector<32x16xf32>
    %87 = vector.shape_cast %84 : vector<32x16xf32> to vector<1x1x32x16xf32>
    tpu.vector_store %arg6[%c0_97, %c0_98, %c0_99, %c0_100], %87 {strides = array<i32>} : memref<1x1x32x16xf32, #tpu.memory_space<vmem>>, vector<1x1x32x16xf32>,
    return
  }
  func.func @transform_0(%arg0: i32, %arg1: i32) -> (i32, i32, i32, i32, i32, i32) {
    %c0_i32 = arith.constant 0 : i32
    %c0_i32_0 = arith.constant 0 : i32
    %c0_i32_1 = arith.constant 0 : i32
    %c0_i32_2 = arith.constant 0 : i32
    %c0_i32_3 = arith.constant 0 : i32
    return %c0_i32, %arg0, %c0_i32_0, %arg1, %c0_i32_1, %c0_i32_2 : i32, i32, i32, i32, i32, i32
  }
  func.func @transform_1(%arg0: i32, %arg1: i32) -> (i32, i32, i32, i32, i32, i32) {
    %c1_i32 = arith.constant 1 : i32
    %c0_i32 = arith.constant 0 : i32
    %c0_i32_0 = arith.constant 0 : i32
    %c0_i32_1 = arith.constant 0 : i32
    %c0_i32_2 = arith.constant 0 : i32
    return %c1_i32, %arg0, %c0_i32, %arg1, %c0_i32_0, %c0_i32_1 : i32, i32, i32, i32, i32, i32
  }
  func.func @transform_2(%arg0: i32, %arg1: i32) -> (i32, i32, i32, i32, i32, i32) {
    %c4_i32 = arith.constant 4 : i32
    %c0_i32 = arith.constant 0 : i32
    %c0_i32_0 = arith.constant 0 : i32
    %c0_i32_1 = arith.constant 0 : i32
    %c0_i32_2 = arith.constant 0 : i32
    return %c4_i32, %arg0, %c0_i32, %arg1, %c0_i32_0, %c0_i32_1 : i32, i32, i32, i32, i32, i32
  }
  func.func @transform_3(%arg0: i32, %arg1: i32) -> (i32, i32, i32, i32, i32) {
    %c0_i32 = arith.constant 0 : i32
    %c0_i32_0 = arith.constant 0 : i32
    %c0_i32_1 = arith.constant 0 : i32
    %c0_i32_2 = arith.constant 0 : i32
    return %arg0, %c0_i32, %arg1, %c0_i32_0, %c0_i32_1 : i32, i32, i32, i32, i32
  }
  func.func @transform_4(%arg0: i32, %arg1: i32) -> (i32, i32, i32, i32) {
    %c0_i32 = arith.constant 0 : i32
    %c0_i32_0 = arith.constant 0 : i32
    %c0_i32_1 = arith.constant 0 : i32
    return %arg0, %arg1, %c0_i32, %c0_i32_0 : i32, i32, i32, i32
  }
}

module attributes {stable_mosaic.version = 11 : i64} {
  func.func @proj2_residual_kernel(%arg0: i32, %arg1: i32, %arg2: memref<128x16xf32, #tpu.memory_space<vmem>>, %arg3: memref<128x16xf32, #tpu.memory_space<vmem>>, %arg4: memref<1x16x32xf32, #tpu.memory_space<vmem>>, %arg5: memref<1x16x32xf32, #tpu.memory_space<vmem>>, %arg6: memref<1x32xf32, #tpu.memory_space<vmem>>, %arg7: memref<128x32xf32, #tpu.memory_space<vmem>>, %arg8: memref<128x32xf32, #tpu.memory_space<vmem>>) attributes {dimension_semantics = [#tpu.dimension_semantics<parallel>, #tpu.dimension_semantics<parallel>], iteration_bounds = array<i64: 1, 1>, scalar_prefetch = 0 : i64, scratch_operands = 0 : i64, tpu.core_type = #tpu.core_type<tc>, window_params = [{transform_indices = @transform_0, window_bounds = array<i64: 128, 16>}, {transform_indices = @transform_1, window_bounds = array<i64: 128, 16>}, {transform_indices = @transform_2, window_bounds = array<i64: 1, 16, 32>}, {transform_indices = @transform_3, window_bounds = array<i64: 1, 16, 32>}, {transform_indices = @transform_4, window_bounds = array<i64: 1, 32>}, {transform_indices = @transform_5, window_bounds = array<i64: 128, 32>}, {transform_indices = @transform_6, window_bounds = array<i64: 128, 32>}]} {
    %c0 = arith.constant 0 : index
    %c0_0 = arith.constant 0 : index
    %0 = vector.load %arg2[%c0, %c0_0] : memref<128x16xf32, #tpu.memory_space<vmem>>, vector<128x16xf32>
    %1 = arith.truncf %0 : vector<128x16xf32> to vector<128x16xbf16>
    %c0_1 = arith.constant 0 : index
    %c0_2 = arith.constant 0 : index
    %c0_3 = arith.constant 0 : index
    %2 = vector.load %arg4[%c0_1, %c0_2, %c0_3] : memref<1x16x32xf32, #tpu.memory_space<vmem>>, vector<1x16x32xf32>
    %3 = vector.shape_cast %2 : vector<1x16x32xf32> to vector<16x32xf32>
    %4 = arith.truncf %3 : vector<16x32xf32> to vector<16x32xbf16>
    %cst = arith.constant dense<0.000000e+00> : vector<128x32xf32>
    %5 = tpu.matmul %1, %4, %cst {dimension_numbers = #tpu.dot_dimension_numbers<[1], [0], [0], [1], [0, 0, 1, 1], [], []>} : vector<128x16xbf16>, vector<16x32xbf16>, vector<128x32xf32> -> vector<128x32xf32>
    %c0_4 = arith.constant 0 : index
    %c0_5 = arith.constant 0 : index
    %6 = vector.load %arg3[%c0_4, %c0_5] : memref<128x16xf32, #tpu.memory_space<vmem>>, vector<128x16xf32>
    %7 = arith.truncf %6 : vector<128x16xf32> to vector<128x16xbf16>
    %c0_6 = arith.constant 0 : index
    %c0_7 = arith.constant 0 : index
    %c0_8 = arith.constant 0 : index
    %8 = vector.load %arg5[%c0_6, %c0_7, %c0_8] : memref<1x16x32xf32, #tpu.memory_space<vmem>>, vector<1x16x32xf32>
    %9 = vector.shape_cast %8 : vector<1x16x32xf32> to vector<16x32xf32>
    %10 = arith.truncf %9 : vector<16x32xf32> to vector<16x32xbf16>
    %cst_9 = arith.constant dense<0.000000e+00> : vector<128x32xf32>
    %11 = tpu.matmul %7, %10, %cst_9 {dimension_numbers = #tpu.dot_dimension_numbers<[1], [0], [0], [1], [0, 0, 1, 1], [], []>} : vector<128x16xbf16>, vector<16x32xbf16>, vector<128x32xf32> -> vector<128x32xf32>
    %12 = arith.addf %5, %11 : vector<128x32xf32>
    %c0_10 = arith.constant 0 : index
    %c0_11 = arith.constant 0 : index
    %13 = vector.load %arg6[%c0_10, %c0_11] : memref<1x32xf32, #tpu.memory_space<vmem>>, vector<1x32xf32>
    %14 = vector.broadcast %13 : vector<1x32xf32> to vector<128x32xf32>
    %15 = arith.addf %12, %14 : vector<128x32xf32>
    %c0_12 = arith.constant 0 : index
    %c0_13 = arith.constant 0 : index
    %16 = vector.load %arg7[%c0_12, %c0_13] : memref<128x32xf32, #tpu.memory_space<vmem>>, vector<128x32xf32>
    %17 = arith.addf %15, %16 : vector<128x32xf32>
    %c0_14 = arith.constant 0 : index
    %c0_15 = arith.constant 0 : index
    %18 = vector.load %arg8[%c0_14, %c0_15] : memref<128x32xf32, #tpu.memory_space<vmem>>, vector<128x32xf32>
    tpu.vector_store %arg8[%c0_14, %c0_15], %17 {strides = array<i32>} : memref<128x32xf32, #tpu.memory_space<vmem>>, vector<128x32xf32>,
    return
  }
  func.func @transform_0(%arg0: i32, %arg1: i32) -> (i32, i32) {
    %c0_i32 = arith.constant 0 : i32
    %c0_i32_0 = arith.constant 0 : i32
    return %arg0, %c0_i32 : i32, i32
  }
  func.func @transform_1(%arg0: i32, %arg1: i32) -> (i32, i32) {
    %c0_i32 = arith.constant 0 : i32
    %c0_i32_0 = arith.constant 0 : i32
    return %arg0, %c0_i32 : i32, i32
  }
  func.func @transform_2(%arg0: i32, %arg1: i32) -> (i32, i32, i32) {
    %c0_i32 = arith.constant 0 : i32
    %c0_i32_0 = arith.constant 0 : i32
    %c0_i32_1 = arith.constant 0 : i32
    return %c0_i32, %c0_i32_0, %arg1 : i32, i32, i32
  }
  func.func @transform_3(%arg0: i32, %arg1: i32) -> (i32, i32, i32) {
    %c1_i32 = arith.constant 1 : i32
    %c0_i32 = arith.constant 0 : i32
    %c0_i32_0 = arith.constant 0 : i32
    return %c1_i32, %c0_i32, %arg1 : i32, i32, i32
  }
  func.func @transform_4(%arg0: i32, %arg1: i32) -> (i32, i32) {
    %c0_i32 = arith.constant 0 : i32
    %c0_i32_0 = arith.constant 0 : i32
    return %c0_i32, %arg1 : i32, i32
  }
  func.func @transform_5(%arg0: i32, %arg1: i32) -> (i32, i32) {
    %c0_i32 = arith.constant 0 : i32
    return %arg0, %arg1 : i32, i32
  }
  func.func @transform_6(%arg0: i32, %arg1: i32) -> (i32, i32) {
    %c0_i32 = arith.constant 0 : i32
    return %arg0, %arg1 : i32, i32
  }
}

module attributes {stable_mosaic.version = 11 : i64} {
  func.func @ln_linear_kernel(%arg0: i32, %arg1: i32, %arg2: memref<128x32xf32, #tpu.memory_space<vmem>>, %arg3: memref<1x32xf32, #tpu.memory_space<vmem>>, %arg4: memref<1x32xf32, #tpu.memory_space<vmem>>, %arg5: memref<32x128xf32, #tpu.memory_space<vmem>>, %arg6: memref<1x128xf32, #tpu.memory_space<vmem>>, %arg7: memref<128x128xf32, #tpu.memory_space<vmem>>, %arg8: memref<128x32xbf16, #tpu.memory_space<vmem>>) attributes {dimension_semantics = [#tpu.dimension_semantics<parallel>, #tpu.dimension_semantics<arbitrary>], iteration_bounds = array<i64: 1, 1>, scalar_prefetch = 0 : i64, scratch_operands = 1 : i64, tpu.core_type = #tpu.core_type<tc>, window_params = [{transform_indices = @transform_0, window_bounds = array<i64: 128, 32>}, {pipeline_mode = #tpu.pipeline_mode<synchronous>, transform_indices = @transform_1, window_bounds = array<i64: 1, 32>}, {pipeline_mode = #tpu.pipeline_mode<synchronous>, transform_indices = @transform_2, window_bounds = array<i64: 1, 32>}, {transform_indices = @transform_3, window_bounds = array<i64: 32, 128>}, {transform_indices = @transform_4, window_bounds = array<i64: 1, 128>}, {transform_indices = @transform_5, window_bounds = array<i64: 128, 128>}]} {
    %c0_i32 = arith.constant 0 : i32
    %0 = arith.cmpi eq, %arg1, %c0_i32 : i32
    %1 = arith.extui %0 : i1 to i32
    %c0_i32_0 = arith.constant 0 : i32
    %2 = arith.cmpi ne, %1, %c0_i32_0 : i32
    scf.if %2 {
      %c0_12 = arith.constant 0 : index
      %c0_13 = arith.constant 0 : index
      %24 = vector.load %arg2[%c0_12, %c0_13] : memref<128x32xf32, #tpu.memory_space<vmem>>, vector<128x32xf32>
      %cst_14 = arith.constant dense<0.000000e+00> : vector<128xf32>
      %25 = vector.multi_reduction <add>, %24, %cst_14 [1] : vector<128x32xf32> to vector<128xf32>
      %26 = vector.shape_cast %25 : vector<128xf32> to vector<128x1xf32>
      %cst_15 = arith.constant 3.200000e+01 : f32
      %27 = vector.broadcast %cst_15 : f32 to vector<128x1xf32>
      %28 = arith.divf %26, %27 : vector<128x1xf32>
      %29 = vector.broadcast %28 : vector<128x1xf32> to vector<128x32xf32>
      %30 = arith.subf %24, %29 : vector<128x32xf32>
      %31 = arith.mulf %30, %30 : vector<128x32xf32>
      %cst_16 = arith.constant dense<0.000000e+00> : vector<128xf32>
      %32 = vector.multi_reduction <add>, %31, %cst_16 [1] : vector<128x32xf32> to vector<128xf32>
      %33 = vector.shape_cast %32 : vector<128xf32> to vector<128x1xf32>
      %cst_17 = arith.constant 3.200000e+01 : f32
      %34 = vector.broadcast %cst_17 : f32 to vector<128x1xf32>
      %35 = arith.divf %33, %34 : vector<128x1xf32>
      %cst_18 = arith.constant 9.99999974E-6 : f32
      %36 = vector.broadcast %cst_18 : f32 to vector<128x1xf32>
      %37 = arith.addf %35, %36 : vector<128x1xf32>
      %38 = math.rsqrt %37 : vector<128x1xf32>
      %39 = vector.broadcast %38 : vector<128x1xf32> to vector<128x32xf32>
      %40 = arith.mulf %30, %39 : vector<128x32xf32>
      %c0_19 = arith.constant 0 : index
      %c0_20 = arith.constant 0 : index
      %41 = vector.load %arg3[%c0_19, %c0_20] : memref<1x32xf32, #tpu.memory_space<vmem>>, vector<1x32xf32>
      %42 = vector.broadcast %41 : vector<1x32xf32> to vector<128x32xf32>
      %43 = arith.mulf %40, %42 : vector<128x32xf32>
      %c0_21 = arith.constant 0 : index
      %c0_22 = arith.constant 0 : index
      %44 = vector.load %arg4[%c0_21, %c0_22] : memref<1x32xf32, #tpu.memory_space<vmem>>, vector<1x32xf32>
      %45 = vector.broadcast %44 : vector<1x32xf32> to vector<128x32xf32>
      %46 = arith.addf %43, %45 : vector<128x32xf32>
      %47 = arith.truncf %46 : vector<128x32xf32> to vector<128x32xbf16>
      %c0_23 = arith.constant 0 : index
      %c0_24 = arith.constant 0 : index
      %48 = vector.load %arg8[%c0_23, %c0_24] : memref<128x32xbf16, #tpu.memory_space<vmem>>, vector<128x32xbf16>
      tpu.vector_store %arg8[%c0_23, %c0_24], %47 {strides = array<i32>} : memref<128x32xbf16, #tpu.memory_space<vmem>>, vector<128x32xbf16>,
    } else {
    }
    %c0 = arith.constant 0 : index
    %c0_1 = arith.constant 0 : index
    %3 = vector.load %arg8[%c0, %c0_1] : memref<128x32xbf16, #tpu.memory_space<vmem>>, vector<128x32xbf16>
    %c0_2 = arith.constant 0 : index
    %c0_3 = arith.constant 0 : index
    %4 = vector.load %arg5[%c0_2, %c0_3] : memref<32x128xf32, #tpu.memory_space<vmem>>, vector<32x128xf32>
    %5 = arith.truncf %4 : vector<32x128xf32> to vector<32x128xbf16>
    %cst = arith.constant dense<0.000000e+00> : vector<128x128xf32>
    %6 = tpu.matmul %3, %5, %cst {dimension_numbers = #tpu.dot_dimension_numbers<[1], [0], [0], [1], [0, 0, 1, 1], [], []>} : vector<128x32xbf16>, vector<32x128xbf16>, vector<128x128xf32> -> vector<128x128xf32>
    %c0_4 = arith.constant 0 : index
    %c0_5 = arith.constant 0 : index
    %7 = vector.load %arg6[%c0_4, %c0_5] : memref<1x128xf32, #tpu.memory_space<vmem>>, vector<1x128xf32>
    %8 = vector.broadcast %7 : vector<1x128xf32> to vector<128x128xf32>
    %9 = arith.addf %6, %8 : vector<128x128xf32>
    %10 = arith.mulf %9, %9 : vector<128x128xf32>
    %11 = arith.mulf %9, %10 : vector<128x128xf32>
    %cst_6 = arith.constant 4.471500e-02 : f32
    %12 = vector.broadcast %cst_6 : f32 to vector<128x128xf32>
    %13 = arith.mulf %12, %11 : vector<128x128xf32>
    %14 = arith.addf %9, %13 : vector<128x128xf32>
    %cst_7 = arith.constant 0.797884583 : f32
    %15 = vector.broadcast %cst_7 : f32 to vector<128x128xf32>
    %16 = arith.mulf %15, %14 : vector<128x128xf32>
    %17 = math.tanh %16 : vector<128x128xf32>
    %cst_8 = arith.constant 1.000000e+00 : f32
    %18 = vector.broadcast %cst_8 : f32 to vector<128x128xf32>
    %19 = arith.addf %18, %17 : vector<128x128xf32>
    %cst_9 = arith.constant 5.000000e-01 : f32
    %20 = vector.broadcast %cst_9 : f32 to vector<128x128xf32>
    %21 = arith.mulf %20, %19 : vector<128x128xf32>
    %22 = arith.mulf %9, %21 : vector<128x128xf32>
    %c0_10 = arith.constant 0 : index
    %c0_11 = arith.constant 0 : index
    %23 = vector.load %arg7[%c0_10, %c0_11] : memref<128x128xf32, #tpu.memory_space<vmem>>, vector<128x128xf32>
    tpu.vector_store %arg7[%c0_10, %c0_11], %22 {strides = array<i32>} : memref<128x128xf32, #tpu.memory_space<vmem>>, vector<128x128xf32>,
    return
  }
  func.func @transform_0(%arg0: i32, %arg1: i32) -> (i32, i32) {
    %c0_i32 = arith.constant 0 : i32
    %c0_i32_0 = arith.constant 0 : i32
    return %arg0, %c0_i32 : i32, i32
  }
  func.func @transform_1(%arg0: i32, %arg1: i32) -> (i32, i32) {
    %c0_i32 = arith.constant 0 : i32
    %c0_i32_0 = arith.constant 0 : i32
    %c0_i32_1 = arith.constant 0 : i32
    return %c0_i32, %c0_i32_0 : i32, i32
  }
  func.func @transform_2(%arg0: i32, %arg1: i32) -> (i32, i32) {
    %c0_i32 = arith.constant 0 : i32
    %c0_i32_0 = arith.constant 0 : i32
    %c0_i32_1 = arith.constant 0 : i32
    return %c0_i32, %c0_i32_0 : i32, i32
  }
  func.func @transform_3(%arg0: i32, %arg1: i32) -> (i32, i32) {
    %c0_i32 = arith.constant 0 : i32
    %c0_i32_0 = arith.constant 0 : i32
    return %c0_i32, %arg1 : i32, i32
  }
  func.func @transform_4(%arg0: i32, %arg1: i32) -> (i32, i32) {
    %c0_i32 = arith.constant 0 : i32
    %c0_i32_0 = arith.constant 0 : i32
    return %c0_i32, %arg1 : i32, i32
  }
  func.func @transform_5(%arg0: i32, %arg1: i32) -> (i32, i32) {
    %c0_i32 = arith.constant 0 : i32
    return %arg0, %arg1 : i32, i32
  }
}

module attributes {stable_mosaic.version = 11 : i64} {
  func.func @linear_residual_kernel(%arg0: i32, %arg1: i32, %arg2: i32, %arg3: memref<128x128xf32, #tpu.memory_space<vmem>>, %arg4: memref<128x32xf32, #tpu.memory_space<vmem>>, %arg5: memref<1x32xf32, #tpu.memory_space<vmem>>, %arg6: memref<128x32xf32, #tpu.memory_space<vmem>>, %arg7: memref<128x32xf32, #tpu.memory_space<vmem>>, %arg8: memref<128x32xf32, #tpu.memory_space<vmem>>) attributes {dimension_semantics = [#tpu.dimension_semantics<parallel>, #tpu.dimension_semantics<parallel>, #tpu.dimension_semantics<arbitrary>], iteration_bounds = array<i64: 1, 1, 1>, scalar_prefetch = 0 : i64, scratch_operands = 1 : i64, tpu.core_type = #tpu.core_type<tc>, window_params = [{transform_indices = @transform_0, window_bounds = array<i64: 128, 128>}, {transform_indices = @transform_1, window_bounds = array<i64: 128, 32>}, {transform_indices = @transform_2, window_bounds = array<i64: 1, 32>}, {transform_indices = @transform_3, window_bounds = array<i64: 128, 32>}, {transform_indices = @transform_4, window_bounds = array<i64: 128, 32>}]} {
    %c0_i32 = arith.constant 0 : i32
    %0 = arith.cmpi eq, %arg2, %c0_i32 : i32
    %1 = arith.extui %0 : i1 to i32
    %c0_i32_0 = arith.constant 0 : i32
    %2 = arith.cmpi ne, %1, %c0_i32_0 : i32
    scf.if %2 {
      %cst_10 = arith.constant 0.000000e+00 : f32
      %14 = vector.broadcast %cst_10 : f32 to vector<128x32xf32>
      %c0_11 = arith.constant 0 : index
      %c0_12 = arith.constant 0 : index
      %15 = vector.load %arg8[%c0_11, %c0_12] : memref<128x32xf32, #tpu.memory_space<vmem>>, vector<128x32xf32>
      tpu.vector_store %arg8[%c0_11, %c0_12], %14 {strides = array<i32>} : memref<128x32xf32, #tpu.memory_space<vmem>>, vector<128x32xf32>,
    } else {
    }
    %c0 = arith.constant 0 : index
    %c0_1 = arith.constant 0 : index
    %3 = vector.load %arg8[%c0, %c0_1] : memref<128x32xf32, #tpu.memory_space<vmem>>, vector<128x32xf32>
    %c0_2 = arith.constant 0 : index
    %c0_3 = arith.constant 0 : index
    %4 = vector.load %arg3[%c0_2, %c0_3] : memref<128x128xf32, #tpu.memory_space<vmem>>, vector<128x128xf32>
    %5 = arith.truncf %4 : vector<128x128xf32> to vector<128x128xbf16>
    %c0_4 = arith.constant 0 : index
    %c0_5 = arith.constant 0 : index
    %6 = vector.load %arg4[%c0_4, %c0_5] : memref<128x32xf32, #tpu.memory_space<vmem>>, vector<128x32xf32>
    %7 = arith.truncf %6 : vector<128x32xf32> to vector<128x32xbf16>
    %cst = arith.constant dense<0.000000e+00> : vector<128x32xf32>
    %8 = tpu.matmul %5, %7, %cst {dimension_numbers = #tpu.dot_dimension_numbers<[1], [0], [0], [1], [0, 0, 1, 1], [], []>} : vector<128x128xbf16>, vector<128x32xbf16>, vector<128x32xf32> -> vector<128x32xf32>
    %9 = arith.addf %3, %8 : vector<128x32xf32>
    %c0_6 = arith.constant 0 : index
    %c0_7 = arith.constant 0 : index
    %10 = vector.load %arg8[%c0_6, %c0_7] : memref<128x32xf32, #tpu.memory_space<vmem>>, vector<128x32xf32>
    tpu.vector_store %arg8[%c0_6, %c0_7], %9 {strides = array<i32>} : memref<128x32xf32, #tpu.memory_space<vmem>>, vector<128x32xf32>,
    %c0_i32_8 = arith.constant 0 : i32
    %11 = arith.cmpi eq, %arg2, %c0_i32_8 : i32
    %12 = arith.extui %11 : i1 to i32
    %c0_i32_9 = arith.constant 0 : i32
    %13 = arith.cmpi ne, %12, %c0_i32_9 : i32
    scf.if %13 {
      %c0_10 = arith.constant 0 : index
      %c0_11 = arith.constant 0 : index
      %14 = vector.load %arg8[%c0_10, %c0_11] : memref<128x32xf32, #tpu.memory_space<vmem>>, vector<128x32xf32>
      %c0_12 = arith.constant 0 : index
      %c0_13 = arith.constant 0 : index
      %15 = vector.load %arg5[%c0_12, %c0_13] : memref<1x32xf32, #tpu.memory_space<vmem>>, vector<1x32xf32>
      %16 = vector.broadcast %15 : vector<1x32xf32> to vector<128x32xf32>
      %17 = arith.addf %14, %16 : vector<128x32xf32>
      %c0_14 = arith.constant 0 : index
      %c0_15 = arith.constant 0 : index
      %18 = vector.load %arg6[%c0_14, %c0_15] : memref<128x32xf32, #tpu.memory_space<vmem>>, vector<128x32xf32>
      %19 = arith.addf %17, %18 : vector<128x32xf32>
      %c0_16 = arith.constant 0 : index
      %c0_17 = arith.constant 0 : index
      %20 = vector.load %arg7[%c0_16, %c0_17] : memref<128x32xf32, #tpu.memory_space<vmem>>, vector<128x32xf32>
      tpu.vector_store %arg7[%c0_16, %c0_17], %19 {strides = array<i32>} : memref<128x32xf32, #tpu.memory_space<vmem>>, vector<128x32xf32>,
    } else {
    }
    return
  }
  func.func @transform_0(%arg0: i32, %arg1: i32, %arg2: i32) -> (i32, i32) {
    %c0_i32 = arith.constant 0 : i32
    return %arg0, %arg2 : i32, i32
  }
  func.func @transform_1(%arg0: i32, %arg1: i32, %arg2: i32) -> (i32, i32) {
    %c0_i32 = arith.constant 0 : i32
    return %arg2, %arg1 : i32, i32
  }
  func.func @transform_2(%arg0: i32, %arg1: i32, %arg2: i32) -> (i32, i32) {
    %c0_i32 = arith.constant 0 : i32
    %c0_i32_0 = arith.constant 0 : i32
    return %c0_i32, %arg1 : i32, i32
  }
  func.func @transform_3(%arg0: i32, %arg1: i32, %arg2: i32) -> (i32, i32) {
    %c0_i32 = arith.constant 0 : i32
    return %arg0, %arg1 : i32, i32
  }
  func.func @transform_4(%arg0: i32, %arg1: i32, %arg2: i32) -> (i32, i32) {
    %c0_i32 = arith.constant 0 : i32
    return %arg0, %arg1 : i32, i32
  }
}

</mosaic_0001>

<llo_original>
// kernel: anisotropic_attention_forward.8
$region0: #{anisotropic_attention_forward.8}
  #allocation0 [shape = 'u32[]', space=smem, size = 0x4, offset = 0x4, fixed_abs, tag = 'smem constant byte address 0x4 - core index']
  #allocation1 [shape = 'u32[144,128]{1,0:T(1,128)}', space=vmem, size = 0x12000, scoped, tag = 'internal scratch']
  #allocation2 [shape = 'bf16[128,32]{1,0:T(8,128)(2,1)}', space=vmem, size = 0x8000, scoped, tag = 'scratch operand']
  %s0 = inlined_call_operand.vmem [shape: f32[128,32], index: 0, kind: input, shape index: {}]
  %s1 = inlined_call_operand.vmem [shape: f32[1,32], index: 1, kind: input, shape index: {}]
  %s2 = inlined_call_operand.vmem [shape: f32[1,32], index: 2, kind: input, shape index: {}]
  %s3 = inlined_call_operand.vmem [shape: f32[5,32,16], index: 3, kind: input, shape index: {}]
  %s4 = inlined_call_operand.vmem [shape: f32[5,128,16], index: 4, kind: output, shape index: {}]
  %s5 = sld [smem:[#allocation0]]
  $region53: #{anisotropic_attention_forward.8} parent=0
    _
  %s7 = ssub.s32 1, %s5
  %s8 = scalar_select 0, %s7, %s5
  loop: start=0, step=1, limit=7
  $region2: #{anisotropic_attention_forward.8} parent=0 // loop_pre_header
    _
  $region3: #{anisotropic_attention_forward.8} parent=0 // loop_header
    %s10 = sphi 0, %s14
    %p11 = scmp.ge.s32.totalorder %s10, 7
    %s17 = sphi 0, %s29
    %s18 = sphi 0, %s25
    %s19 = sphi 0, %s17
    %s20 = sphi 0, %s18
    %s21 = sphi 0, %s19
    %s22 = sphi 0, %s20
    %s32 = sphi 0, %s34
    %s35 = sphi 0, %s32
    %s36 = sphi 0, %s35
    %s52 = sphi 0, %s36
    %s56 = sphi 0, %s56
    %s58 = sphi 0, %s56
    %s59 = sphi 0, %s58
    %s73 = sphi 0, %s59
    %s77 = sphi 0, %s77
    %s79 = sphi 0, %s77
    %s80 = sphi 0, %s79
    %s94 = sphi 0, %s80
    %s100 = sphi 0, %s102
    %s103 = sphi 0, %s100
    %s104 = sphi 0, %s103
    %s120 = sphi 0, %s104
    %s128 = sphi 0, %s130
    %s131 = sphi 0, %s128
    %s132 = sphi 0, %s131
    %s148 = sphi 0, %s132
  $region4: #{anisotropic_attention_forward.8} parent=0 // loop_header_branch
    %13 = sbr.rel (%p11) target = $region8
  $region5: #{anisotropic_attention_forward.8} parent=0 // loop_body
    %s15 = ssub.s32 %s10, 1
    %s16 = ssub.s32 %s10, 2
    %s23 = sadd.s32 1, %s18
    %p24 = scmp.ge.s32.totalorder %s23, 5
    %s25 = scalar_select %p24, 0, %s23
    %s26 = sadd.s32 1, %s17
    %s27 = scalar_select %p24, %s26, %s17
    %p28 = scmp.ge.s32.totalorder %s27, 1
    %s29 = scalar_select %p28, 0, %s27
    %s30 = ssub.s32 %s17, %s29
    %p31 = scmp.eq.s32.totalorder %s30, 0
    %s33 = sadd.s32 %s32, 1
    %s34 = scalar_select %p31, %s32, %s33
    %p37 = pneg %p31
    %p38 = scmp.eq.s32.totalorder %s10, 4
    %p39 = por %p37, %p38
    %p40 = scmp.ne.s32.totalorder %s32, %s35
    %p41 = scmp.eq.s32.totalorder %s10, 0
    %p42 = por %p40, %p41
    %p43 = scmp.ne.s32.totalorder %s32, %s35
    %p44 = scmp.eq.s32.totalorder %s15, 4
    %p45 = por %p43, %p44
    %p46 = scmp.ne.s32.totalorder %s35, %s36
    %p47 = scmp.eq.s32.totalorder %s15, 0
    %p48 = por %p46, %p47
    %p49 = scmp.ne.s32.totalorder %s35, %s36
    %p50 = scmp.eq.s32.totalorder %s16, 4
    %p51 = por %p49, %p50
    %p53 = scmp.ne.s32.totalorder %s36, %s52
    %p54 = scmp.eq.s32.totalorder %s16, 0
    %p55 = por %p53, %p54
    %s57 = sadd.s32 %s56, 1
    %p60 = scmp.eq.s32.totalorder %s10, 4
    %p61 = scmp.ne.s32.totalorder %s56, %s58
    %p62 = scmp.eq.s32.totalorder %s10, 0
    %p63 = por %p61, %p62
    %p64 = scmp.ne.s32.totalorder %s56, %s58
    %p65 = scmp.eq.s32.totalorder %s15, 4
    %p66 = por %p64, %p65
    %p67 = scmp.ne.s32.totalorder %s58, %s59
    %p68 = scmp.eq.s32.totalorder %s15, 0
    %p69 = por %p67, %p68
    %p70 = scmp.ne.s32.totalorder %s58, %s59
    %p71 = scmp.eq.s32.totalorder %s16, 4
    %p72 = por %p70, %p71
    %p74 = scmp.ne.s32.totalorder %s59, %s73
    %p75 = scmp.eq.s32.totalorder %s16, 0
    %p76 = por %p74, %p75
    %s78 = sadd.s32 %s77, 1
    %p81 = scmp.eq.s32.totalorder %s10, 4
    %p82 = scmp.ne.s32.totalorder %s77, %s79
    %p83 = scmp.eq.s32.totalorder %s10, 0
    %p84 = por %p82, %p83
    %p85 = scmp.ne.s32.totalorder %s77, %s79
    %p86 = scmp.eq.s32.totalorder %s15, 4
    %p87 = por %p85, %p86
    %p88 = scmp.ne.s32.totalorder %s79, %s80
    %p89 = scmp.eq.s32.totalorder %s15, 0
    %p90 = por %p88, %p89
    %p91 = scmp.ne.s32.totalorder %s79, %s80
    %p92 = scmp.eq.s32.totalorder %s16, 4
    %p93 = por %p91, %p92
    %p95 = scmp.ne.s32.totalorder %s80, %s94
    %p96 = scmp.eq.s32.totalorder %s16, 0
    %p97 = por %p95, %p96
    %s98 = ssub.s32 %s18, %s25
    %p99 = scmp.eq.s32.totalorder %s98, 0
    %s101 = sadd.s32 %s100, 1
    %s102 = scalar_select %p99, %s100, %s101
    %p105 = pneg %p99
    %p106 = scmp.eq.s32.totalorder %s10, 4
    %p107 = por %p105, %p106
    %p108 = scmp.ne.s32.totalorder %s100, %s103
    %p109 = scmp.eq.s32.totalorder %s10, 0
    %p110 = por %p108, %p109
    %p111 = scmp.ne.s32.totalorder %s100, %s103
    %p112 = scmp.eq.s32.totalorder %s15, 4
    %p113 = por %p111, %p112
    %p114 = scmp.ne.s32.totalorder %s103, %s104
    %p115 = scmp.eq.s32.totalorder %s15, 0
    %p116 = por %p114, %p115
    %p117 = scmp.ne.s32.totalorder %s103, %s104
    %p118 = scmp.eq.s32.totalorder %s16, 4
    %p119 = por %p117, %p118
    %p121 = scmp.ne.s32.totalorder %s104, %s120
    %p122 = scmp.eq.s32.totalorder %s16, 0
    %p123 = por %p121, %p122
    %s124 = ssub.s32 %s18, %s25
    %s125 = ssub.s32 %s17, %s29
    %s126 = sor.u32 %s124, %s125
    %p127 = scmp.eq.s32.totalorder %s126, 0
    %s129 = sadd.s32 %s128, 1
    %s130 = scalar_select %p127, %s128, %s129
    %p133 = pneg %p127
    %p134 = scmp.eq.s32.totalorder %s10, 4
    %p135 = por %p133, %p134
    %p136 = scmp.ne.s32.totalorder %s128, %s131
    %p137 = scmp.eq.s32.totalorder %s10, 0
    %p138 = por %p136, %p137
    %p139 = scmp.ne.s32.totalorder %s128, %s131
    %p140 = scmp.eq.s32.totalorder %s15, 4
    %p141 = por %p139, %p140
    %p142 = scmp.ne.s32.totalorder %s131, %s132
    %p143 = scmp.eq.s32.totalorder %s15, 0
    %p144 = por %p142, %p143
    %p145 = scmp.ne.s32.totalorder %s131, %s132
    %p146 = scmp.eq.s32.totalorder %s16, 4
    %p147 = por %p145, %p146
    %p149 = scmp.ne.s32.totalorder %s132, %s148
    %p150 = scmp.eq.s32.totalorder %s16, 0
    %p151 = por %p149, %p150
    %p152 = scmp.le.s32.totalorder 1, %s10
    %p153 = scmp.lt.s32.totalorder %s10, 6
    %p154 = pnand %p152, %p153
    %p155 = pneg %p154
    // Predicated region
    $region9: #{anisotropic_attention_forward.8} parent=5 // pred_check
      _
    $region10: #{anisotropic_attention_forward.8} parent=5 // pred_check_branch
      %157 = sbr.rel (%p154) target = $region12
    $region11: #{anisotropic_attention_forward.8} parent=5 // pred_region
      %s158 = ssub.s32 %s10, 1
      // Predicated region
      $region13: #{anisotropic_attention_forward.8} parent=11 // pred_check
        %p159 = pneg %p48
      $region14: #{anisotropic_attention_forward.8} parent=11 // pred_check_branch
        %161 = sbr.rel (%p159) target = $region16
      $region15: #{anisotropic_attention_forward.8} parent=11 // pred_region
        %s162 = smul.u32 16, %s19
        %p163 = scmp.lt.s32.totalorder %s162, 15
        %s164 = scalar_select %p163, %s162, 15
        %s165 = smul.addr %s164, 8
        %s166 = scalar_lea.vmem %s0, %s165
        %s167 = smul.u32 16, %s19
      $region16: #{anisotropic_attention_forward.8} parent=11 // pred_fallthru
        _
      // Predicated region
      $region17: #{anisotropic_attention_forward.8} parent=11 // pred_check
        %p168 = pneg %p69
      $region18: #{anisotropic_attention_forward.8} parent=11 // pred_check_branch
        %170 = sbr.rel (%p168) target = $region20
      $region19: #{anisotropic_attention_forward.8} parent=11 // pred_region
        _
      $region20: #{anisotropic_attention_forward.8} parent=11 // pred_fallthru
        _
      // Predicated region
      $region21: #{anisotropic_attention_forward.8} parent=11 // pred_check
        %p171 = pneg %p90
      $region22: #{anisotropic_attention_forward.8} parent=11 // pred_check_branch
        %173 = sbr.rel (%p171) target = $region24
      $region23: #{anisotropic_attention_forward.8} parent=11 // pred_region
        _
      $region24: #{anisotropic_attention_forward.8} parent=11 // pred_fallthru
        _
    $region12: #{anisotropic_attention_forward.8} parent=5 // pred_fallthru
      _
    %p174 = scmp.lt.s32.totalorder %s10, 5
    // Predicated region
    $region25: #{anisotropic_attention_forward.8} parent=5 // pred_check
      %p175 = pneg %p174
    $region26: #{anisotropic_attention_forward.8} parent=5 // pred_check_branch
      %177 = sbr.rel (%p175) target = $region28
    $region27: #{anisotropic_attention_forward.8} parent=5 // pred_region
      // Predicated region
      $region29: #{anisotropic_attention_forward.8} parent=27 // pred_check
        %p178 = pneg %p110
      $region30: #{anisotropic_attention_forward.8} parent=27 // pred_check_branch
        %180 = sbr.rel (%p178) target = $region32
      $region31: #{anisotropic_attention_forward.8} parent=27 // pred_region
        %p181 = scmp.lt.s32.totalorder %s18, 4
        %s182 = scalar_select %p181, %s18, 4
        %s183 = smul.addr %s182, 4
        %s184 = smul.addr %s183, 8
        %s185 = scalar_lea.vmem %s3, %s184
      $region32: #{anisotropic_attention_forward.8} parent=27 // pred_fallthru
        _
    $region28: #{anisotropic_attention_forward.8} parent=5 // pred_fallthru
      _
    %p186 = scmp.le.s32.totalorder 1, %s10
    %p187 = scmp.lt.s32.totalorder %s10, 6
    %p188 = pnand %p186, %p187
    %p189 = pneg %p188
    // Predicated region
    $region33: #{anisotropic_attention_forward.8} parent=5 // pred_check
      _
    $region34: #{anisotropic_attention_forward.8} parent=5 // pred_check_branch
      %191 = sbr.rel (%p188) target = $region36
    $region35: #{anisotropic_attention_forward.8} parent=5 // pred_region
      %s192 = ssub.s32 %s10, 1
      %s193 = smul.u32 16, %s19
      %p194 = scmp.lt.s32.totalorder %s193, 15
      %s195 = scalar_select %p194, %s193, 15
      %s196 = smul.addr %s195, 8
      %s197 = scalar_lea.vmem %s0, %s196
      %p198 = pneg %p48
      %p199 = pneg %p45
      %p200 = pneg %p69
      %p201 = pneg %p66
      %p202 = pneg %p90
      %p203 = pneg %p87
      %p204 = scmp.lt.s32.totalorder %s20, 4
      %s205 = scalar_select %p204, %s20, 4
      %s206 = smul.addr %s205, 4
      %s207 = smul.addr %s206, 8
      %s208 = scalar_lea.vmem %s3, %s207
      %p209 = pneg %p116
      %p210 = pneg %p113
      %p211 = pneg %p144
      %p212 = pneg %p141
      %s213 = smul.u32 16, %s19
      %p214 = scmp.lt.s32.totalorder %s20, 4
      %s215 = scalar_select %p214, %s20, 4
      %p216 = scmp.lt.s32.totalorder %s213, 15
      %s217 = scalar_select %p216, %s213, 15
      %s218 = smul.addr %s215, 16
      %s219 = sadd.s32 %s217, %s218
      %s220 = smul.addr %s219, 8
      %s221 = scalar_lea.vmem %s4, %s220
      %s222 = smul.u32 16, %s19
      %p223 = scmp.lt.s32.totalorder %s222, 15
      %s224 = scalar_select %p223, %s222, 15
      %s225 = smul.addr %s224, 8
      %s226 = scalar_lea.vmem %s0, %s225
      %s227 = smul.u32 16, %s19
      %p228 = scmp.lt.s32.totalorder %s20, 4
      %s229 = scalar_select %p228, %s20, 4
      %s230 = smul.addr %s229, 4
      %s231 = smul.addr %s230, 8
      %s232 = scalar_lea.vmem %s3, %s231
      %s233 = smul.u32 16, %s19
      %p234 = scmp.lt.s32.totalorder %s20, 4
      %s235 = scalar_select %p234, %s20, 4
      %p236 = scmp.lt.s32.totalorder %s233, 15
      %s237 = scalar_select %p236, %s233, 15
      %s238 = smul.addr %s235, 16
      %s239 = sadd.s32 %s237, %s238
      %s240 = smul.addr %s239, 8
      %s241 = scalar_lea.vmem %s4, %s240
      %s242 = smul.u32 16, %s19
      %p244 = scmp.eq.s32.totalorder %s20, 0
      // Predicated region
      $region37: #{anisotropic_attention_forward.8} parent=35 // pred_check
        %p245 = pneg %p244
      $region38: #{anisotropic_attention_forward.8} parent=35 // pred_check_branch
        %247 = sbr.rel (%p245) target = $region40
      $region39: #{anisotropic_attention_forward.8} parent=35 // pred_region
        %v248 = vld [vmem:[%s226] sm:$0xff]
        %v249 = vld [vmem:[%s226 + $0x8] sm:$0xff]
        %v250 = vld [vmem:[%s226 + $0x10] sm:$0xff]
        %v251 = vld [vmem:[%s226 + $0x18] sm:$0xff]
        %v252 = vld [vmem:[%s226 + $0x20] sm:$0xff]
        %v253 = vld [vmem:[%s226 + $0x28] sm:$0xff]
        %v254 = vld [vmem:[%s226 + $0x30] sm:$0xff]
        %v255 = vld [vmem:[%s226 + $0x38] sm:$0xff]
        %v256 = vld [vmem:[%s226 + $0x40] sm:$0xff]
        %v257 = vld [vmem:[%s226 + $0x48] sm:$0xff]
        %v258 = vld [vmem:[%s226 + $0x50] sm:$0xff]
        %v259 = vld [vmem:[%s226 + $0x58] sm:$0xff]
        %v260 = vld [vmem:[%s226 + $0x60] sm:$0xff]
        %v261 = vld [vmem:[%s226 + $0x68] sm:$0xff]
        %v262 = vld [vmem:[%s226 + $0x70] sm:$0xff]
        %v263 = vld [vmem:[%s226 + $0x78] sm:$0xff]
        %vm264 = vcmask 261120
        %v265 = vsel %vm264, %v248, 0.0
        %266 = vadd.xlane.f32.xlu0 %v265
        %v267 = vpop.xlane.xlu0 %266
        %v268 = vsel %vm264, %v249, 0.0
        %269 = vadd.xlane.f32.xlu0 %v268
        %v270 = vpop.xlane.xlu0 %269
        %v271 = vsel %vm264, %v250, 0.0
        %272 = vadd.xlane.f32.xlu0 %v271
        %v273 = vpop.xlane.xlu0 %272
        %v274 = vsel %vm264, %v251, 0.0
        %275 = vadd.xlane.f32.xlu0 %v274
        %v276 = vpop.xlane.xlu0 %275
        %v277 = vsel %vm264, %v252, 0.0
        %278 = vadd.xlane.f32.xlu0 %v277
        %v279 = vpop.xlane.xlu0 %278
        %v280 = vsel %vm264, %v253, 0.0
        %281 = vadd.xlane.f32.xlu0 %v280
        %v282 = vpop.xlane.xlu0 %281
        %v283 = vsel %vm264, %v254, 0.0
        %284 = vadd.xlane.f32.xlu0 %v283
        %v285 = vpop.xlane.xlu0 %284
        %v286 = vsel %vm264, %v255, 0.0
        %287 = vadd.xlane.f32.xlu0 %v286
        %v288 = vpop.xlane.xlu0 %287
        %v289 = vsel %vm264, %v256, 0.0
        %290 = vadd.xlane.f32.xlu0 %v289
        %v291 = vpop.xlane.xlu0 %290
        %v292 = vsel %vm264, %v257, 0.0
        %293 = vadd.xlane.f32.xlu0 %v292
        %v294 = vpop.xlane.xlu0 %293
        %v295 = vsel %vm264, %v258, 0.0
        %296 = vadd.xlane.f32.xlu0 %v295
        %v297 = vpop.xlane.xlu0 %296
        %v298 = vsel %vm264, %v259, 0.0
        %299 = vadd.xlane.f32.xlu0 %v298
        %v300 = vpop.xlane.xlu0 %299
        %v301 = vsel %vm264, %v260, 0.0
        %302 = vadd.xlane.f32.xlu0 %v301
        %v303 = vpop.xlane.xlu0 %302
        %v304 = vsel %vm264, %v261, 0.0
        %305 = vadd.xlane.f32.xlu0 %v304
        %v306 = vpop.xlane.xlu0 %305
        %v307 = vsel %vm264, %v262, 0.0
        %308 = vadd.xlane.f32.xlu0 %v307
        %v309 = vpop.xlane.xlu0 %308
        %v310 = vsel %vm264, %v263, 0.0
        %311 = vadd.xlane.f32.xlu0 %v310
        %v312 = vpop.xlane.xlu0 %311
        %v313 = vrcp.pop 32.0
        %v314 = vmul.f32 %v267, %v313
        %v315 = vmul.f32 %v270, %v313
        %v316 = vmul.f32 %v273, %v313
        %v317 = vmul.f32 %v276, %v313
        %v318 = vmul.f32 %v279, %v313
        %v319 = vmul.f32 %v282, %v313
        %v320 = vmul.f32 %v285, %v313
        %v321 = vmul.f32 %v288, %v313
        %v322 = vmul.f32 %v291, %v313
        %v323 = vmul.f32 %v294, %v313
        %v324 = vmul.f32 %v297, %v313
        %v325 = vmul.f32 %v300, %v313
        %v326 = vmul.f32 %v303, %v313
        %v327 = vmul.f32 %v306, %v313
        %v328 = vmul.f32 %v309, %v313
        %v329 = vmul.f32 %v312, %v313
        %v330 = vsub.f32 %v248, %v314
        %v331 = vsub.f32 %v249, %v315
        %v332 = vsub.f32 %v250, %v316
        %v333 = vsub.f32 %v251, %v317
        %v334 = vsub.f32 %v252, %v318
        %v335 = vsub.f32 %v253, %v319
        %v336 = vsub.f32 %v254, %v320
        %v337 = vsub.f32 %v255, %v321
        %v338 = vsub.f32 %v256, %v322
        %v339 = vsub.f32 %v257, %v323
        %v340 = vsub.f32 %v258, %v324
        %v341 = vsub.f32 %v259, %v325
        %v342 = vsub.f32 %v260, %v326
        %v343 = vsub.f32 %v261, %v327
        %v344 = vsub.f32 %v262, %v328
        %v345 = vsub.f32 %v263, %v329
        %v346 = vmul.f32 %v330, %v330
        %v347 = vmul.f32 %v331, %v331
        %v348 = vmul.f32 %v332, %v332
        %v349 = vmul.f32 %v333, %v333
        %v350 = vmul.f32 %v334, %v334
        %v351 = vmul.f32 %v335, %v335
        %v352 = vmul.f32 %v336, %v336
        %v353 = vmul.f32 %v337, %v337
        %v354 = vmul.f32 %v338, %v338
        %v355 = vmul.f32 %v339, %v339
        %v356 = vmul.f32 %v340, %v340
        %v357 = vmul.f32 %v341, %v341
        %v358 = vmul.f32 %v342, %v342
        %v359 = vmul.f32 %v343, %v343
        %v360 = vmul.f32 %v344, %v344
        %v361 = vmul.f32 %v345, %v345
        %v362 = vsel %vm264, %v346, 0.0
        %363 = vadd.xlane.f32.xlu0 %v362
        %v364 = vpop.xlane.xlu0 %363
        %v365 = vsel %vm264, %v347, 0.0
        %366 = vadd.xlane.f32.xlu0 %v365
        %v367 = vpop.xlane.xlu0 %366
        %v368 = vsel %vm264, %v348, 0.0
        %369 = vadd.xlane.f32.xlu0 %v368
        %v370 = vpop.xlane.xlu0 %369
        %v371 = vsel %vm264, %v349, 0.0
        %372 = vadd.xlane.f32.xlu0 %v371
        %v373 = vpop.xlane.xlu0 %372
        %v374 = vsel %vm264, %v350, 0.0
        %375 = vadd.xlane.f32.xlu0 %v374
        %v376 = vpop.xlane.xlu0 %375
        %v377 = vsel %vm264, %v351, 0.0
        %378 = vadd.xlane.f32.xlu0 %v377
        %v379 = vpop.xlane.xlu0 %378
        %v380 = vsel %vm264, %v352, 0.0
        %381 = vadd.xlane.f32.xlu0 %v380
        %v382 = vpop.xlane.xlu0 %381
        %v383 = vsel %vm264, %v353, 0.0
        %384 = vadd.xlane.f32.xlu0 %v383
        %v385 = vpop.xlane.xlu0 %384
        %v386 = vsel %vm264, %v354, 0.0
        %387 = vadd.xlane.f32.xlu0 %v386
        %v388 = vpop.xlane.xlu0 %387
        %v389 = vsel %vm264, %v355, 0.0
        %390 = vadd.xlane.f32.xlu0 %v389
        %v391 = vpop.xlane.xlu0 %390
        %v392 = vsel %vm264, %v356, 0.0
        %393 = vadd.xlane.f32.xlu0 %v392
        %v394 = vpop.xlane.xlu0 %393
        %v395 = vsel %vm264, %v357, 0.0
        %396 = vadd.xlane.f32.xlu0 %v395
        %v397 = vpop.xlane.xlu0 %396
        %v398 = vsel %vm264, %v358, 0.0
        %399 = vadd.xlane.f32.xlu0 %v398
        %v400 = vpop.xlane.xlu0 %399
        %v401 = vsel %vm264, %v359, 0.0
        %402 = vadd.xlane.f32.xlu0 %v401
        %v403 = vpop.xlane.xlu0 %402
        %v404 = vsel %vm264, %v360, 0.0
        %405 = vadd.xlane.f32.xlu0 %v404
        %v406 = vpop.xlane.xlu0 %405
        %v407 = vsel %vm264, %v361, 0.0
        %408 = vadd.xlane.f32.xlu0 %v407
        %v409 = vpop.xlane.xlu0 %408
        %v410 = vmul.f32 %v364, %v313
        %v411 = vmul.f32 %v367, %v313
        %v412 = vmul.f32 %v370, %v313
        %v413 = vmul.f32 %v373, %v313
        %v414 = vmul.f32 %v376, %v313
        %v415 = vmul.f32 %v379, %v313
        %v416 = vmul.f32 %v382, %v313
        %v417 = vmul.f32 %v385, %v313
        %v418 = vmul.f32 %v388, %v313
        %v419 = vmul.f32 %v391, %v313
        %v420 = vmul.f32 %v394, %v313
        %v421 = vmul.f32 %v397, %v313
        %v422 = vmul.f32 %v400, %v313
        %v423 = vmul.f32 %v403, %v313
        %v424 = vmul.f32 %v406, %v313
        %v425 = vmul.f32 %v409, %v313
        %v426 = vadd.f32 %v410, 1e-05
        %v427 = vadd.f32 %v411, 1e-05
        %v428 = vadd.f32 %v412, 1e-05
        %v429 = vadd.f32 %v413, 1e-05
        %v430 = vadd.f32 %v414, 1e-05
        %v431 = vadd.f32 %v415, 1e-05
        %v432 = vadd.f32 %v416, 1e-05
        %v433 = vadd.f32 %v417, 1e-05
        %v434 = vadd.f32 %v418, 1e-05
        %v435 = vadd.f32 %v419, 1e-05
        %v436 = vadd.f32 %v420, 1e-05
        %v437 = vadd.f32 %v421, 1e-05
        %v438 = vadd.f32 %v422, 1e-05
        %v439 = vadd.f32 %v423, 1e-05
        %v440 = vadd.f32 %v424, 1e-05
        %v441 = vadd.f32 %v425, 1e-05
        %v442 = vrsqrt.pop %v426
        %v443 = vrsqrt.pop %v427
        %v444 = vrsqrt.pop %v428
        %v445 = vrsqrt.pop %v429
        %v446 = vrsqrt.pop %v430
        %v447 = vrsqrt.pop %v431
        %v448 = vrsqrt.pop %v432
        %v449 = vrsqrt.pop %v433
        %v450 = vrsqrt.pop %v434
        %v451 = vrsqrt.pop %v435
        %v452 = vrsqrt.pop %v436
        %v453 = vrsqrt.pop %v437
        %v454 = vrsqrt.pop %v438
        %v455 = vrsqrt.pop %v439
        %v456 = vrsqrt.pop %v440
        %v457 = vrsqrt.pop %v441
        %v458 = vmul.f32 %v330, %v442
        %v459 = vmul.f32 %v331, %v443
        %v460 = vmul.f32 %v332, %v444
        %v461 = vmul.f32 %v333, %v445
        %v462 = vmul.f32 %v334, %v446
        %v463 = vmul.f32 %v335, %v447
        %v464 = vmul.f32 %v336, %v448
        %v465 = vmul.f32 %v337, %v449
        %v466 = vmul.f32 %v338, %v450
        %v467 = vmul.f32 %v339, %v451
        %v468 = vmul.f32 %v340, %v452
        %v469 = vmul.f32 %v341, %v453
        %v470 = vmul.f32 %v342, %v454
        %v471 = vmul.f32 %v343, %v455
        %v472 = vmul.f32 %v344, %v456
        %v473 = vmul.f32 %v345, %v457
        %v474 = vld [vmem:[%s1] sm:$0x1]
        %v476 = vlaneseq
        %v477 = vshrl.u32 %v476, 7
        %v478 = vsub.s32 0, %v477
        %v479 = vrot.slane %v474, %v478
        %v481 = vmul.f32 %v458, %v479
        %v482 = vmul.f32 %v459, %v479
        %v483 = vmul.f32 %v460, %v479
        %v484 = vmul.f32 %v461, %v479
        %v485 = vmul.f32 %v462, %v479
        %v486 = vmul.f32 %v463, %v479
        %v487 = vmul.f32 %v464, %v479
        %v488 = vmul.f32 %v465, %v479
        %v489 = vmul.f32 %v466, %v479
        %v490 = vmul.f32 %v467, %v479
        %v491 = vmul.f32 %v468, %v479
        %v492 = vmul.f32 %v469, %v479
        %v493 = vmul.f32 %v470, %v479
        %v494 = vmul.f32 %v471, %v479
        %v495 = vmul.f32 %v472, %v479
        %v496 = vmul.f32 %v473, %v479
        %v497 = vld [vmem:[%s2] sm:$0x1]
        %v499 = vlaneseq
        %v500 = vshrl.u32 %v499, 7
        %v501 = vsub.s32 0, %v500
        %v502 = vrot.slane %v497, %v501
        %v504 = vadd.f32 %v481, %v502
        %v505 = vadd.f32 %v482, %v502
        %v506 = vadd.f32 %v483, %v502
        %v507 = vadd.f32 %v484, %v502
        %v508 = vadd.f32 %v485, %v502
        %v509 = vadd.f32 %v486, %v502
        %v510 = vadd.f32 %v487, %v502
        %v511 = vadd.f32 %v488, %v502
        %v512 = vadd.f32 %v489, %v502
        %v513 = vadd.f32 %v490, %v502
        %v514 = vadd.f32 %v491, %v502
        %v515 = vadd.f32 %v492, %v502
        %v516 = vadd.f32 %v493, %v502
        %v517 = vadd.f32 %v494, %v502
        %v518 = vadd.f32 %v495, %v502
        %v519 = vadd.f32 %v496, %v502
        %v520 = vpack.c.bf16 %v505, %v504
        %v521 = vpack.c.bf16 %v507, %v506
        %v522 = vpack.c.bf16 %v509, %v508
        %v523 = vpack.c.bf16 %v511, %v510
        %v524 = vpack.c.bf16 %v513, %v512
        %v525 = vpack.c.bf16 %v515, %v514
        %v526 = vpack.c.bf16 %v517, %v516
        %v527 = vpack.c.bf16 %v519, %v518
        %v536 = vunpack.c.l.b16 %v520
        %v537 = vunpack.c.h.b16 %v520
        %v538 = vunpack.c.l.b16 %v521
        %v539 = vunpack.c.h.b16 %v521
        %v540 = vunpack.c.l.b16 %v522
        %v541 = vunpack.c.h.b16 %v522
        %v542 = vunpack.c.l.b16 %v523
        %v543 = vunpack.c.h.b16 %v523
        %v544 = vunpack.c.l.b16 %v524
        %v545 = vunpack.c.h.b16 %v524
        %v546 = vunpack.c.l.b16 %v525
        %v547 = vunpack.c.h.b16 %v525
        %v548 = vunpack.c.l.b16 %v526
        %v549 = vunpack.c.h.b16 %v526
        %v550 = vunpack.c.l.b16 %v527
        %v551 = vunpack.c.h.b16 %v527
        %v552 = vpack.c.b16 %v536, %v536
        %v553 = vpack.c.b16 %v537, %v537
        %v554 = vpack.c.b16 %v538, %v538
        %v555 = vpack.c.b16 %v539, %v539
        %v556 = vpack.c.b16 %v540, %v540
        %v557 = vpack.c.b16 %v541, %v541
        %v558 = vpack.c.b16 %v542, %v542
        %v559 = vpack.c.b16 %v543, %v543
        %v560 = vpack.c.b16 %v544, %v544
        %v561 = vpack.c.b16 %v545, %v545
        %v562 = vpack.c.b16 %v546, %v546
        %v563 = vpack.c.b16 %v547, %v547
        %v564 = vpack.c.b16 %v548, %v548
        %v565 = vpack.c.b16 %v549, %v549
        %v566 = vpack.c.b16 %v550, %v550
        %v567 = vpack.c.b16 %v551, %v551
        %vm584 = vcmask 257024
        %585 = vst.msk [vmem:[#allocation2] sm:$0xf] %vm584, %v552
        %586 = vst.msk [vmem:[#allocation2 + $0x4] sm:$0xf] %vm584, %v553
        %587 = vst.msk [vmem:[#allocation2 + $0x8] sm:$0xf] %vm584, %v554
        %588 = vst.msk [vmem:[#allocation2 + $0xc] sm:$0xf] %vm584, %v555
        %589 = vst.msk [vmem:[#allocation2 + $0x10] sm:$0xf] %vm584, %v556
        %590 = vst.msk [vmem:[#allocation2 + $0x14] sm:$0xf] %vm584, %v557
        %591 = vst.msk [vmem:[#allocation2 + $0x18] sm:$0xf] %vm584, %v558
        %592 = vst.msk [vmem:[#allocation2 + $0x1c] sm:$0xf] %vm584, %v559
        %593 = vst.msk [vmem:[#allocation2 + $0x20] sm:$0xf] %vm584, %v560
        %594 = vst.msk [vmem:[#allocation2 + $0x24] sm:$0xf] %vm584, %v561
        %595 = vst.msk [vmem:[#allocation2 + $0x28] sm:$0xf] %vm584, %v562
        %596 = vst.msk [vmem:[#allocation2 + $0x2c] sm:$0xf] %vm584, %v563
        %597 = vst.msk [vmem:[#allocation2 + $0x30] sm:$0xf] %vm584, %v564
        %598 = vst.msk [vmem:[#allocation2 + $0x34] sm:$0xf] %vm584, %v565
        %599 = vst.msk [vmem:[#allocation2 + $0x38] sm:$0xf] %vm584, %v566
        %600 = vst.msk [vmem:[#allocation2 + $0x3c] sm:$0xf] %vm584, %v567
      $region40: #{anisotropic_attention_forward.8} parent=35 // pred_fallthru
        _
      %v601 = vld [vmem:[#allocation2] sm:$0xf]
      %v602 = vld [vmem:[#allocation2 + $0x4] sm:$0xf]
      %v603 = vld [vmem:[#allocation2 + $0x8] sm:$0xf]
      %v604 = vld [vmem:[#allocation2 + $0xc] sm:$0xf]
      %v605 = vld [vmem:[#allocation2 + $0x10] sm:$0xf]
      %v606 = vld [vmem:[#allocation2 + $0x14] sm:$0xf]
      %v607 = vld [vmem:[#allocation2 + $0x18] sm:$0xf]
      %v608 = vld [vmem:[#allocation2 + $0x1c] sm:$0xf]
      %v609 = vld [vmem:[#allocation2 + $0x20] sm:$0xf]
      %v610 = vld [vmem:[#allocation2 + $0x24] sm:$0xf]
      %v611 = vld [vmem:[#allocation2 + $0x28] sm:$0xf]
      %v612 = vld [vmem:[#allocation2 + $0x2c] sm:$0xf]
      %v613 = vld [vmem:[#allocation2 + $0x30] sm:$0xf]
      %v614 = vld [vmem:[#allocation2 + $0x34] sm:$0xf]
      %v615 = vld [vmem:[#allocation2 + $0x38] sm:$0xf]
      %v616 = vld [vmem:[#allocation2 + $0x3c] sm:$0xf]
      %v617 = vld [vmem:[%s232] sm:$0xff]
      %v618 = vld [vmem:[%s232 + $0x8] sm:$0xff]
      %v619 = vld [vmem:[%s232 + $0x10] sm:$0xff]
      %v620 = vld [vmem:[%s232 + $0x18] sm:$0xff]
      %v621 = vpack.c.bf16 %v618, %v617
      %v622 = vpack.c.bf16 %v620, %v619
      %v639 = vunpack.c.l.b16 %v601
      %v640 = vunpack.c.l.b16 %v602
      %v641 = vunpack.c.l.b16 %v603
      %v642 = vunpack.c.l.b16 %v604
      %v643 = vunpack.c.l.b16 %v605
      %v644 = vunpack.c.l.b16 %v606
      %v645 = vunpack.c.l.b16 %v607
      %v646 = vunpack.c.l.b16 %v608
      %v647 = vunpack.c.l.b16 %v609
      %v648 = vunpack.c.l.b16 %v610
      %v649 = vunpack.c.l.b16 %v611
      %v650 = vunpack.c.l.b16 %v612
      %v651 = vunpack.c.l.b16 %v613
      %v652 = vunpack.c.l.b16 %v614
      %v653 = vunpack.c.l.b16 %v615
      %v654 = vunpack.c.l.b16 %v616
      %v655 = vpack.c.b16 %v640, %v639
      %v656 = vpack.c.b16 %v642, %v641
      %v657 = vpack.c.b16 %v644, %v643
      %v658 = vpack.c.b16 %v646, %v645
      %v659 = vpack.c.b16 %v648, %v647
      %v660 = vpack.c.b16 %v650, %v649
      %v661 = vpack.c.b16 %v652, %v651
      %v662 = vpack.c.b16 %v654, %v653
      %vm663 = vcmask 261120
      %v665 = vsel %vm663, %v655, 0
      %v668 = vsel %vm663, %v656, 0
      %v671 = vsel %vm663, %v657, 0
      %v674 = vsel %vm663, %v658, 0
      %v677 = vsel %vm663, %v659, 0
      %v680 = vsel %vm663, %v660, 0
      %v683 = vsel %vm663, %v661, 0
      %v686 = vsel %vm663, %v662, 0
      %688 = vmatprep.subr.bf16.mxu0 0
      %689 = vmatpush1.bf16.msra.mxu0 0
      %690 = vmatprep.subr.bf16.mxu0 0
      %691 = vmatpush1.bf16.msra.mxu0 0
      %692 = vmatprep.subr.bf16.mxu0 0
      %693 = vmatpush1.bf16.msra.mxu0 0
      %694 = vmatprep.subr.bf16.mxu0 0
      %695 = vmatpush1.bf16.msra.mxu0 0
      %696 = vmatprep.subr.bf16.mxu0 0
      %697 = vmatpush1.bf16.msra.mxu0 0
      %698 = vmatprep.subr.bf16.mxu0 0
      %699 = vmatpush1.bf16.msra.mxu0 0
      %700 = vmatprep.subr.bf16.mxu0 0
      %701 = vmatpush1.bf16.msra.mxu0 %v622
      %702 = vmatprep.subr.bf16.mxu0 0
      %703 = vmatpush1.bf16.msra.mxu0 %v621
      %704 = vmatprep.subr.bf16.mxu0 0
      %705 = vmatpush2.bf16.msra.mxu0 0
      %706 = vmatprep.subr.bf16.mxu0 0
      %707 = vmatpush2.bf16.msra.mxu0 0
      %708 = vmatprep.subr.bf16.mxu0 0
      %709 = vmatpush2.bf16.msra.mxu0 0
      %710 = vmatprep.subr.bf16.mxu0 0
      %711 = vmatpush2.bf16.msra.mxu0 0
      %712 = vmatprep.subr.bf16.mxu0 0
      %713 = vmatpush2.bf16.msra.mxu0 0
      %714 = vmatprep.subr.bf16.mxu0 0
      %715 = vmatpush2.bf16.msra.mxu0 0
      %716 = vmatprep.subr.bf16.mxu0 0
      %717 = vmatpush2.bf16.msra.mxu0 0
      %718 = vmatprep.subr.bf16.mxu0 0
      %719 = vmatpush2.bf16.msra.mxu0 0
      %720 = vmatprep.mubr.bf16.mxu0 0
      %721 = vmatmul.mubr.bf16.gmra.mxu0 %v665
      %v722 = vpop.f32.mrf.mxu0
      %v723 = vadd.f32 0.0, %v722
      %v724 = vpop.f32.mrf.mxu0
      %v725 = vpop.f32.mrf.mxu0
      %v726 = vadd.f32 0.0, %v725
      %v727 = vpop.f32.mrf.mxu0
      %728 = vmatprep.mubr.bf16.mxu0 0
      %729 = vmatmul.mubr.bf16.gmra.mxu0 %v668
      %v730 = vpop.f32.mrf.mxu0
      %v731 = vadd.f32 0.0, %v730
      %v732 = vpop.f32.mrf.mxu0
      %v733 = vpop.f32.mrf.mxu0
      %v734 = vadd.f32 0.0, %v733
      %v735 = vpop.f32.mrf.mxu0
      %736 = vmatprep.mubr.bf16.mxu0 0
      %737 = vmatmul.mubr.bf16.gmra.mxu0 %v671
      %v738 = vpop.f32.mrf.mxu0
      %v739 = vadd.f32 0.0, %v738
      %v740 = vpop.f32.mrf.mxu0
      %v741 = vpop.f32.mrf.mxu0
      %v742 = vadd.f32 0.0, %v741
      %v743 = vpop.f32.mrf.mxu0
      %744 = vmatprep.mubr.bf16.mxu0 0
      %745 = vmatmul.mubr.bf16.gmra.mxu0 %v674
      %v746 = vpop.f32.mrf.mxu0
      %v747 = vadd.f32 0.0, %v746
      %v748 = vpop.f32.mrf.mxu0
      %v749 = vpop.f32.mrf.mxu0
      %v750 = vadd.f32 0.0, %v749
      %v751 = vpop.f32.mrf.mxu0
      %752 = vmatprep.mubr.bf16.mxu0 0
      %753 = vmatmul.mubr.bf16.gmra.mxu0 %v677
      %v754 = vpop.f32.mrf.mxu0
      %v755 = vadd.f32 0.0, %v754
      %v756 = vpop.f32.mrf.mxu0
      %v757 = vpop.f32.mrf.mxu0
      %v758 = vadd.f32 0.0, %v757
      %v759 = vpop.f32.mrf.mxu0
      %760 = vmatprep.mubr.bf16.mxu0 0
      %761 = vmatmul.mubr.bf16.gmra.mxu0 %v680
      %v762 = vpop.f32.mrf.mxu0
      %v763 = vadd.f32 0.0, %v762
      %v764 = vpop.f32.mrf.mxu0
      %v765 = vpop.f32.mrf.mxu0
      %v766 = vadd.f32 0.0, %v765
      %v767 = vpop.f32.mrf.mxu0
      %768 = vmatprep.mubr.bf16.mxu0 0
      %769 = vmatmul.mubr.bf16.gmra.mxu0 %v683
      %v770 = vpop.f32.mrf.mxu0
      %v771 = vadd.f32 0.0, %v770
      %v772 = vpop.f32.mrf.mxu0
      %v773 = vpop.f32.mrf.mxu0
      %v774 = vadd.f32 0.0, %v773
      %v775 = vpop.f32.mrf.mxu0
      %776 = vmatprep.mubr.bf16.mxu0 0
      %777 = vmatmul.mubr.bf16.gmra.mxu0 %v686
      %v778 = vpop.f32.mrf.mxu0
      %v779 = vadd.f32 0.0, %v778
      %v780 = vpop.f32.mrf.mxu0
      %v781 = vpop.f32.mrf.mxu0
      %v782 = vadd.f32 0.0, %v781
      %v783 = vpop.f32.mrf.mxu0
      %784 = vdwg.mxu0
      %vm785 = vcmask 130048
      %786 = vst.msk [vmem:[%s241] sm:$0xff] %vm785, %v723
      %787 = vst.msk [vmem:[%s241 + $0x8] sm:$0xff] %vm785, %v726
      %788 = vst.msk [vmem:[%s241 + $0x10] sm:$0xff] %vm785, %v731
      %789 = vst.msk [vmem:[%s241 + $0x18] sm:$0xff] %vm785, %v734
      %790 = vst.msk [vmem:[%s241 + $0x20] sm:$0xff] %vm785, %v739
      %791 = vst.msk [vmem:[%s241 + $0x28] sm:$0xff] %vm785, %v742
      %792 = vst.msk [vmem:[%s241 + $0x30] sm:$0xff] %vm785, %v747
      %793 = vst.msk [vmem:[%s241 + $0x38] sm:$0xff] %vm785, %v750
      %794 = vst.msk [vmem:[%s241 + $0x40] sm:$0xff] %vm785, %v755
      %795 = vst.msk [vmem:[%s241 + $0x48] sm:$0xff] %vm785, %v758
      %796 = vst.msk [vmem:[%s241 + $0x50] sm:$0xff] %vm785, %v763
      %797 = vst.msk [vmem:[%s241 + $0x58] sm:$0xff] %vm785, %v766
      %798 = vst.msk [vmem:[%s241 + $0x60] sm:$0xff] %vm785, %v771
      %799 = vst.msk [vmem:[%s241 + $0x68] sm:$0xff] %vm785, %v774
      %800 = vst.msk [vmem:[%s241 + $0x70] sm:$0xff] %vm785, %v779
      %801 = vst.msk [vmem:[%s241 + $0x78] sm:$0xff] %vm785, %v782
      %s802 = smul.u32 16, %s19
      %p803 = scmp.lt.s32.totalorder %s20, 4
      %s804 = scalar_select %p803, %s20, 4
      %p805 = scmp.lt.s32.totalorder %s802, 15
      %s806 = scalar_select %p805, %s802, 15
      %s807 = smul.addr %s804, 16
      %s808 = sadd.s32 %s806, %s807
      %s809 = smul.addr %s808, 8
      %s810 = scalar_lea.vmem %s4, %s809
      // Predicated region
      $region41: #{anisotropic_attention_forward.8} parent=35 // pred_check
        %p811 = pneg %p141
      $region42: #{anisotropic_attention_forward.8} parent=35 // pred_check_branch
        %813 = sbr.rel (%p811) target = $region44
      $region43: #{anisotropic_attention_forward.8} parent=35 // pred_region
        %s814 = smul.u32 16, %s19
      $region44: #{anisotropic_attention_forward.8} parent=35 // pred_fallthru
        _
    $region36: #{anisotropic_attention_forward.8} parent=5 // pred_fallthru
      _
    %p815 = scmp.le.s32.totalorder 2, %s10
    // Predicated region
    $region45: #{anisotropic_attention_forward.8} parent=5 // pred_check
      %p816 = pneg %p815
    $region46: #{anisotropic_attention_forward.8} parent=5 // pred_check_branch
      %818 = sbr.rel (%p816) target = $region48
    $region47: #{anisotropic_attention_forward.8} parent=5 // pred_region
      %s819 = ssub.s32 %s10, 2
      // Predicated region
      $region49: #{anisotropic_attention_forward.8} parent=47 // pred_check
        %p820 = pneg %p147
      $region50: #{anisotropic_attention_forward.8} parent=47 // pred_check_branch
        %822 = sbr.rel (%p820) target = $region52
      $region51: #{anisotropic_attention_forward.8} parent=47 // pred_region
        %s823 = smul.u32 16, %s21
        %p824 = scmp.lt.s32.totalorder %s22, 4
        %s825 = scalar_select %p824, %s22, 4
        %p826 = scmp.lt.s32.totalorder %s823, 15
        %s827 = scalar_select %p826, %s823, 15
        %s828 = smul.addr %s825, 16
        %s829 = sadd.s32 %s827, %s828
        %s830 = smul.addr %s829, 8
        %s831 = scalar_lea.vmem %s4, %s830
      $region52: #{anisotropic_attention_forward.8} parent=47 // pred_fallthru
        _
    $region48: #{anisotropic_attention_forward.8} parent=5 // pred_fallthru
      _
  $region6: #{anisotropic_attention_forward.8} parent=0 // loop_footer
    %s14 = sadd.s32 1, %s10
  $region7: #{anisotropic_attention_forward.8} parent=0 // loop_footer_branch
    %9 = sbr.rel target = $region3
  $region8: #{anisotropic_attention_forward.8} parent=0 // loop_exit
    _

// kernel: anisotropic_attention_forward.10
$region0: #{anisotropic_attention_forward.10}
  #allocation0 [shape = 'u32[]', space=smem, size = 0x4, offset = 0x4, fixed_abs, tag = 'smem constant byte address 0x4 - core index']
  #allocation1 [shape = 'u32[144,128]{1,0:T(1,128)}', space=vmem, size = 0x12000, scoped, tag = 'internal scratch']
  %s0 = inlined_call_operand.vmem [shape: f32[2,10,10,16], index: 0, kind: input, shape index: {}]
  %s1 = inlined_call_operand.vmem [shape: f32[3,3,16], index: 1, kind: input, shape index: {}]
  %s2 = inlined_call_operand.vmem [shape: f32[1,16], index: 2, kind: input, shape index: {}]
  %s3 = inlined_call_operand.vmem [shape: f32[2,8,8,16], index: 3, kind: output, shape index: {}]
  %s4 = sld [smem:[#allocation0]]
  $region45: #{anisotropic_attention_forward.10} parent=0
    _
  %s6 = ssub.s32 1, %s4
  %s7 = scalar_select 0, %s6, %s4
  loop: start=0, step=1, limit=4
  $region2: #{anisotropic_attention_forward.10} parent=0 // loop_pre_header
    _
  $region3: #{anisotropic_attention_forward.10} parent=0 // loop_header
    %s9 = sphi 0, %s13
    %p10 = scmp.ge.s32.totalorder %s9, 4
    %s19 = sphi 0, %s21
    %s22 = sphi 0, %s19
    %s23 = sphi 0, %s22
    %s39 = sphi 0, %s23
    %s43 = sphi 0, %s43
    %s45 = sphi 0, %s43
    %s46 = sphi 0, %s45
    %s60 = sphi 0, %s46
    %s64 = sphi 0, %s64
    %s66 = sphi 0, %s64
    %s67 = sphi 0, %s66
    %s81 = sphi 0, %s67
    %s87 = sphi 0, %s89
    %s90 = sphi 0, %s87
    %s91 = sphi 0, %s90
    %s107 = sphi 0, %s91
  $region4: #{anisotropic_attention_forward.10} parent=0 // loop_header_branch
    %12 = sbr.rel (%p10) target = $region8
  $region5: #{anisotropic_attention_forward.10} parent=0 // loop_body
    %s14 = ssub.s32 %s9, 1
    %s15 = ssub.s32 %s9, 2
    %s16 = sadd.s32 %s9, 1
    %s17 = ssub.s32 %s9, %s16
    %p18 = scmp.eq.s32.totalorder %s17, 0
    %s20 = sadd.s32 %s19, 1
    %s21 = scalar_select %p18, %s19, %s20
    %p24 = pneg %p18
    %p25 = scmp.eq.s32.totalorder %s9, 1
    %p26 = por %p24, %p25
    %p27 = scmp.ne.s32.totalorder %s19, %s22
    %p28 = scmp.eq.s32.totalorder %s9, 0
    %p29 = por %p27, %p28
    %p30 = scmp.ne.s32.totalorder %s19, %s22
    %p31 = scmp.eq.s32.totalorder %s14, 1
    %p32 = por %p30, %p31
    %p33 = scmp.ne.s32.totalorder %s22, %s23
    %p34 = scmp.eq.s32.totalorder %s14, 0
    %p35 = por %p33, %p34
    %p36 = scmp.ne.s32.totalorder %s22, %s23
    %p37 = scmp.eq.s32.totalorder %s15, 1
    %p38 = por %p36, %p37
    %p40 = scmp.ne.s32.totalorder %s23, %s39
    %p41 = scmp.eq.s32.totalorder %s15, 0
    %p42 = por %p40, %p41
    %s44 = sadd.s32 %s43, 1
    %p47 = scmp.eq.s32.totalorder %s9, 1
    %p48 = scmp.ne.s32.totalorder %s43, %s45
    %p49 = scmp.eq.s32.totalorder %s9, 0
    %p50 = por %p48, %p49
    %p51 = scmp.ne.s32.totalorder %s43, %s45
    %p52 = scmp.eq.s32.totalorder %s14, 1
    %p53 = por %p51, %p52
    %p54 = scmp.ne.s32.totalorder %s45, %s46
    %p55 = scmp.eq.s32.totalorder %s14, 0
    %p56 = por %p54, %p55
    %p57 = scmp.ne.s32.totalorder %s45, %s46
    %p58 = scmp.eq.s32.totalorder %s15, 1
    %p59 = por %p57, %p58
    %p61 = scmp.ne.s32.totalorder %s46, %s60
    %p62 = scmp.eq.s32.totalorder %s15, 0
    %p63 = por %p61, %p62
    %s65 = sadd.s32 %s64, 1
    %p68 = scmp.eq.s32.totalorder %s9, 1
    %p69 = scmp.ne.s32.totalorder %s64, %s66
    %p70 = scmp.eq.s32.totalorder %s9, 0
    %p71 = por %p69, %p70
    %p72 = scmp.ne.s32.totalorder %s64, %s66
    %p73 = scmp.eq.s32.totalorder %s14, 1
    %p74 = por %p72, %p73
    %p75 = scmp.ne.s32.totalorder %s66, %s67
    %p76 = scmp.eq.s32.totalorder %s14, 0
    %p77 = por %p75, %p76
    %p78 = scmp.ne.s32.totalorder %s66, %s67
    %p79 = scmp.eq.s32.totalorder %s15, 1
    %p80 = por %p78, %p79
    %p82 = scmp.ne.s32.totalorder %s67, %s81
    %p83 = scmp.eq.s32.totalorder %s15, 0
    %p84 = por %p82, %p83
    %s85 = ssub.s32 %s9, %s16
    %p86 = scmp.eq.s32.totalorder %s85, 0
    %s88 = sadd.s32 %s87, 1
    %s89 = scalar_select %p86, %s87, %s88
    %p92 = pneg %p86
    %p93 = scmp.eq.s32.totalorder %s9, 1
    %p94 = por %p92, %p93
    %p95 = scmp.ne.s32.totalorder %s87, %s90
    %p96 = scmp.eq.s32.totalorder %s9, 0
    %p97 = por %p95, %p96
    %p98 = scmp.ne.s32.totalorder %s87, %s90
    %p99 = scmp.eq.s32.totalorder %s14, 1
    %p100 = por %p98, %p99
    %p101 = scmp.ne.s32.totalorder %s90, %s91
    %p102 = scmp.eq.s32.totalorder %s14, 0
    %p103 = por %p101, %p102
    %p104 = scmp.ne.s32.totalorder %s90, %s91
    %p105 = scmp.eq.s32.totalorder %s15, 1
    %p106 = por %p104, %p105
    %p108 = scmp.ne.s32.totalorder %s91, %s107
    %p109 = scmp.eq.s32.totalorder %s15, 0
    %p110 = por %p108, %p109
    %p111 = scmp.le.s32.totalorder 1, %s9
    %p112 = scmp.lt.s32.totalorder %s9, 3
    %p113 = pnand %p111, %p112
    %p114 = pneg %p113
    // Predicated region
    $region9: #{anisotropic_attention_forward.10} parent=5 // pred_check
      _
    $region10: #{anisotropic_attention_forward.10} parent=5 // pred_check_branch
      %116 = sbr.rel (%p113) target = $region12
    $region11: #{anisotropic_attention_forward.10} parent=5 // pred_region
      %s117 = ssub.s32 %s9, 1
      // Predicated region
      $region13: #{anisotropic_attention_forward.10} parent=11 // pred_check
        %p118 = pneg %p56
      $region14: #{anisotropic_attention_forward.10} parent=11 // pred_check_branch
        %120 = sbr.rel (%p118) target = $region16
      $region15: #{anisotropic_attention_forward.10} parent=11 // pred_region
        _
      $region16: #{anisotropic_attention_forward.10} parent=11 // pred_fallthru
        _
      // Predicated region
      $region17: #{anisotropic_attention_forward.10} parent=11 // pred_check
        %p121 = pneg %p77
      $region18: #{anisotropic_attention_forward.10} parent=11 // pred_check_branch
        %123 = sbr.rel (%p121) target = $region20
      $region19: #{anisotropic_attention_forward.10} parent=11 // pred_region
        _
      $region20: #{anisotropic_attention_forward.10} parent=11 // pred_fallthru
        _
    $region12: #{anisotropic_attention_forward.10} parent=5 // pred_fallthru
      _
    %p124 = scmp.lt.s32.totalorder %s9, 2
    // Predicated region
    $region21: #{anisotropic_attention_forward.10} parent=5 // pred_check
      %p125 = pneg %p124
    $region22: #{anisotropic_attention_forward.10} parent=5 // pred_check_branch
      %127 = sbr.rel (%p125) target = $region24
    $region23: #{anisotropic_attention_forward.10} parent=5 // pred_region
      // Predicated region
      $region25: #{anisotropic_attention_forward.10} parent=23 // pred_check
        %p128 = pneg %p29
      $region26: #{anisotropic_attention_forward.10} parent=23 // pred_check_branch
        %130 = sbr.rel (%p128) target = $region28
      $region27: #{anisotropic_attention_forward.10} parent=23 // pred_region
        %p131 = scmp.lt.s32.totalorder %s9, 1
        %s132 = scalar_select %p131, %s9, 1
        %s133 = smul.addr %s132, 20
        %s134 = smul.addr %s133, 8
        %s135 = scalar_lea.vmem %s0, %s134
      $region28: #{anisotropic_attention_forward.10} parent=23 // pred_fallthru
        _
    $region24: #{anisotropic_attention_forward.10} parent=5 // pred_fallthru
      _
    %p136 = scmp.le.s32.totalorder 1, %s9
    %p137 = scmp.lt.s32.totalorder %s9, 3
    %p138 = pnand %p136, %p137
    %p139 = pneg %p138
    // Predicated region
    $region29: #{anisotropic_attention_forward.10} parent=5 // pred_check
      _
    $region30: #{anisotropic_attention_forward.10} parent=5 // pred_check_branch
      %141 = sbr.rel (%p138) target = $region32
    $region31: #{anisotropic_attention_forward.10} parent=5 // pred_region
      %s142 = ssub.s32 %s9, 1
      %p143 = scmp.lt.s32.totalorder %s14, 1
      %s144 = scalar_select %p143, %s14, 1
      %s145 = smul.addr %s144, 20
      %s146 = smul.addr %s145, 8
      %s147 = scalar_lea.vmem %s0, %s146
      %p148 = pneg %p35
      %p149 = pneg %p32
      %p150 = pneg %p56
      %p151 = pneg %p53
      %p152 = pneg %p77
      %p153 = pneg %p74
      %p154 = pneg %p103
      %p155 = pneg %p100
      %p156 = scmp.lt.s32.totalorder %s14, 1
      %s157 = scalar_select %p156, %s14, 1
      %s158 = smul.addr %s157, 8
      %s159 = smul.addr %s158, 8
      %s160 = scalar_lea.vmem %s3, %s159
      %p161 = scmp.lt.s32.totalorder %s14, 1
      %s162 = scalar_select %p161, %s14, 1
      %s163 = smul.addr %s162, 20
      %s164 = smul.addr %s163, 8
      %s165 = scalar_lea.vmem %s0, %s164
      %p166 = scmp.lt.s32.totalorder %s14, 1
      %s167 = scalar_select %p166, %s14, 1
      %s168 = smul.addr %s167, 8
      %s169 = smul.addr %s168, 8
      %s170 = scalar_lea.vmem %s3, %s169
      %v171 = vld [vmem:[%s165] sm:$0xff]
      %v172 = vld [vmem:[%s165 + $0x8] sm:$0x3]
      %v173 = vld [vmem:[%s165 + $0x10] sm:$0xff]
      %v174 = vld [vmem:[%s165 + $0x18] sm:$0x3]
      %v175 = vld [vmem:[%s165 + $0x20] sm:$0xff]
      %v176 = vld [vmem:[%s165 + $0x28] sm:$0x3]
      %v177 = vld [vmem:[%s165 + $0x30] sm:$0xff]
      %v178 = vld [vmem:[%s165 + $0x38] sm:$0x3]
      %v179 = vld [vmem:[%s165 + $0x40] sm:$0xff]
      %v180 = vld [vmem:[%s165 + $0x48] sm:$0x3]
      %v181 = vld [vmem:[%s165 + $0x50] sm:$0xff]
      %v182 = vld [vmem:[%s165 + $0x58] sm:$0x3]
      %v183 = vld [vmem:[%s165 + $0x60] sm:$0xff]
      %v184 = vld [vmem:[%s165 + $0x68] sm:$0x3]
      %v185 = vld [vmem:[%s165 + $0x70] sm:$0xff]
      %v186 = vld [vmem:[%s165 + $0x78] sm:$0x3]
      %v187 = vld [vmem:[%s1] sm:$0x1]
      %v188 = vlaneseq
      %v189 = vshrl.u32 %v188, 7
      %v190 = vsub.s32 0, %v189
      %v191 = vrot.slane %v187, %v190
      %v192 = vmul.f32 %v171, %v191
      %v193 = vmul.f32 %v173, %v191
      %v194 = vmul.f32 %v175, %v191
      %v195 = vmul.f32 %v177, %v191
      %v196 = vmul.f32 %v179, %v191
      %v197 = vmul.f32 %v181, %v191
      %v198 = vmul.f32 %v183, %v191
      %v199 = vmul.f32 %v185, %v191
      %v200 = vadd.f32 %v192, 0.0
      %v201 = vadd.f32 %v193, 0.0
      %v202 = vadd.f32 %v194, 0.0
      %v203 = vadd.f32 %v195, 0.0
      %v204 = vadd.f32 %v196, 0.0
      %v205 = vadd.f32 %v197, 0.0
      %v206 = vadd.f32 %v198, 0.0
      %v207 = vadd.f32 %v199, 0.0
      %v208 = vld [vmem:[%s1 + $0x1] sm:$0x1]
      %v209 = vlaneseq
      %v210 = vshrl.u32 %v209, 7
      %v211 = vsub.s32 0, %v210
      %v212 = vrot.slane %v208, %v211
      %v213 = vmul.f32 %v171, %v212
      %v214 = vmul.f32 %v172, %v212
      %v215 = vmul.f32 %v173, %v212
      %v216 = vmul.f32 %v174, %v212
      %v217 = vmul.f32 %v175, %v212
      %v218 = vmul.f32 %v176, %v212
      %v219 = vmul.f32 %v177, %v212
      %v220 = vmul.f32 %v178, %v212
      %v221 = vmul.f32 %v179, %v212
      %v222 = vmul.f32 %v180, %v212
      %v223 = vmul.f32 %v181, %v212
      %v224 = vmul.f32 %v182, %v212
      %v225 = vmul.f32 %v183, %v212
      %v226 = vmul.f32 %v184, %v212
      %v227 = vmul.f32 %v185, %v212
      %v228 = vmul.f32 %v186, %v212
      %vm245 = vcmask 1046528
      %v246 = vrot.slane %v213, 1
      %v247 = vrot.slane %v214, 1
      %v248 = vsel %vm245, %v246, %v247
      %v249 = vrot.slane %v215, 1
      %v250 = vrot.slane %v216, 1
      %v251 = vsel %vm245, %v249, %v250
      %v252 = vrot.slane %v217, 1
      %v253 = vrot.slane %v218, 1
      %v254 = vsel %vm245, %v252, %v253
      %v255 = vrot.slane %v219, 1
      %v256 = vrot.slane %v220, 1
      %v257 = vsel %vm245, %v255, %v256
      %v258 = vrot.slane %v221, 1
      %v259 = vrot.slane %v222, 1
      %v260 = vsel %vm245, %v258, %v259
      %v261 = vrot.slane %v223, 1
      %v262 = vrot.slane %v224, 1
      %v263 = vsel %vm245, %v261, %v262
      %v264 = vrot.slane %v225, 1
      %v265 = vrot.slane %v226, 1
      %v266 = vsel %vm245, %v264, %v265
      %v267 = vrot.slane %v227, 1
      %v268 = vrot.slane %v228, 1
      %v269 = vsel %vm245, %v267, %v268
      %v278 = vadd.f32 %v200, %v248
      %v279 = vadd.f32 %v201, %v251
      %v280 = vadd.f32 %v202, %v254
      %v281 = vadd.f32 %v203, %v257
      %v282 = vadd.f32 %v204, %v260
      %v283 = vadd.f32 %v205, %v263
      %v284 = vadd.f32 %v206, %v266
      %v285 = vadd.f32 %v207, %v269
      %v286 = vld [vmem:[%s1 + $0x2] sm:$0x1]
      %v287 = vlaneseq
      %v288 = vshrl.u32 %v287, 7
      %v289 = vsub.s32 0, %v288
      %v290 = vrot.slane %v286, %v289
      %v291 = vmul.f32 %v171, %v290
      %v292 = vmul.f32 %v172, %v290
      %v293 = vmul.f32 %v173, %v290
      %v294 = vmul.f32 %v174, %v290
      %v295 = vmul.f32 %v175, %v290
      %v296 = vmul.f32 %v176, %v290
      %v297 = vmul.f32 %v177, %v290
      %v298 = vmul.f32 %v178, %v290
      %v299 = vmul.f32 %v179, %v290
      %v300 = vmul.f32 %v180, %v290
      %v301 = vmul.f32 %v181, %v290
      %v302 = vmul.f32 %v182, %v290
      %v303 = vmul.f32 %v183, %v290
      %v304 = vmul.f32 %v184, %v290
      %v305 = vmul.f32 %v185, %v290
      %v306 = vmul.f32 %v186, %v290
      %vm323 = vcmask 1045504
      %v324 = vrot.slane %v291, 2
      %v325 = vrot.slane %v292, 2
      %v326 = vsel %vm323, %v324, %v325
      %v327 = vrot.slane %v293, 2
      %v328 = vrot.slane %v294, 2
      %v329 = vsel %vm323, %v327, %v328
      %v330 = vrot.slane %v295, 2
      %v331 = vrot.slane %v296, 2
      %v332 = vsel %vm323, %v330, %v331
      %v333 = vrot.slane %v297, 2
      %v334 = vrot.slane %v298, 2
      %v335 = vsel %vm323, %v333, %v334
      %v336 = vrot.slane %v299, 2
      %v337 = vrot.slane %v300, 2
      %v338 = vsel %vm323, %v336, %v337
      %v339 = vrot.slane %v301, 2
      %v340 = vrot.slane %v302, 2
      %v341 = vsel %vm323, %v339, %v340
      %v342 = vrot.slane %v303, 2
      %v343 = vrot.slane %v304, 2
      %v344 = vsel %vm323, %v342, %v343
      %v345 = vrot.slane %v305, 2
      %v346 = vrot.slane %v306, 2
      %v347 = vsel %vm323, %v345, %v346
      %v356 = vadd.f32 %v278, %v326
      %v357 = vadd.f32 %v279, %v329
      %v358 = vadd.f32 %v280, %v332
      %v359 = vadd.f32 %v281, %v335
      %v360 = vadd.f32 %v282, %v338
      %v361 = vadd.f32 %v283, %v341
      %v362 = vadd.f32 %v284, %v344
      %v363 = vadd.f32 %v285, %v347
      %s364 = scalar_lea.vmem %s165, 16
      %v365 = vld [vmem:[%s364] sm:$0xff]
      %v366 = vld [vmem:[%s364 + $0x8] sm:$0x3]
      %v367 = vld [vmem:[%s364 + $0x10] sm:$0xff]
      %v368 = vld [vmem:[%s364 + $0x18] sm:$0x3]
      %v369 = vld [vmem:[%s364 + $0x20] sm:$0xff]
      %v370 = vld [vmem:[%s364 + $0x28] sm:$0x3]
      %v371 = vld [vmem:[%s364 + $0x30] sm:$0xff]
      %v372 = vld [vmem:[%s364 + $0x38] sm:$0x3]
      %v373 = vld [vmem:[%s364 + $0x40] sm:$0xff]
      %v374 = vld [vmem:[%s364 + $0x48] sm:$0x3]
      %v375 = vld [vmem:[%s364 + $0x50] sm:$0xff]
      %v376 = vld [vmem:[%s364 + $0x58] sm:$0x3]
      %v377 = vld [vmem:[%s364 + $0x60] sm:$0xff]
      %v378 = vld [vmem:[%s364 + $0x68] sm:$0x3]
      %v379 = vld [vmem:[%s364 + $0x70] sm:$0xff]
      %v380 = vld [vmem:[%s364 + $0x78] sm:$0x3]
      %s381 = scalar_lea.vmem %s1, 4
      %v382 = vld [vmem:[%s381] sm:$0x1]
      %v383 = vlaneseq
      %v384 = vshrl.u32 %v383, 7
      %v385 = vsub.s32 0, %v384
      %v386 = vrot.slane %v382, %v385
      %v387 = vmul.f32 %v365, %v386
      %v388 = vmul.f32 %v367, %v386
      %v389 = vmul.f32 %v369, %v386
      %v390 = vmul.f32 %v371, %v386
      %v391 = vmul.f32 %v373, %v386
      %v392 = vmul.f32 %v375, %v386
      %v393 = vmul.f32 %v377, %v386
      %v394 = vmul.f32 %v379, %v386
      %v395 = vadd.f32 %v356, %v387
      %v396 = vadd.f32 %v357, %v388
      %v397 = vadd.f32 %v358, %v389
      %v398 = vadd.f32 %v359, %v390
      %v399 = vadd.f32 %v360, %v391
      %v400 = vadd.f32 %v361, %v392
      %v401 = vadd.f32 %v362, %v393
      %v402 = vadd.f32 %v363, %v394
      %v403 = vld [vmem:[%s381 + $0x1] sm:$0x1]
      %v404 = vlaneseq
      %v405 = vshrl.u32 %v404, 7
      %v406 = vsub.s32 0, %v405
      %v407 = vrot.slane %v403, %v406
      %v408 = vmul.f32 %v365, %v407
      %v409 = vmul.f32 %v366, %v407
      %v410 = vmul.f32 %v367, %v407
      %v411 = vmul.f32 %v368, %v407
      %v412 = vmul.f32 %v369, %v407
      %v413 = vmul.f32 %v370, %v407
      %v414 = vmul.f32 %v371, %v407
      %v415 = vmul.f32 %v372, %v407
      %v416 = vmul.f32 %v373, %v407
      %v417 = vmul.f32 %v374, %v407
      %v418 = vmul.f32 %v375, %v407
      %v419 = vmul.f32 %v376, %v407
      %v420 = vmul.f32 %v377, %v407
      %v421 = vmul.f32 %v378, %v407
      %v422 = vmul.f32 %v379, %v407
      %v423 = vmul.f32 %v380, %v407
      %v440 = vrot.slane %v408, 1
      %v441 = vrot.slane %v409, 1
      %v442 = vsel %vm245, %v440, %v441
      %v443 = vrot.slane %v410, 1
      %v444 = vrot.slane %v411, 1
      %v445 = vsel %vm245, %v443, %v444
      %v446 = vrot.slane %v412, 1
      %v447 = vrot.slane %v413, 1
      %v448 = vsel %vm245, %v446, %v447
      %v449 = vrot.slane %v414, 1
      %v450 = vrot.slane %v415, 1
      %v451 = vsel %vm245, %v449, %v450
      %v452 = vrot.slane %v416, 1
      %v453 = vrot.slane %v417, 1
      %v454 = vsel %vm245, %v452, %v453
      %v455 = vrot.slane %v418, 1
      %v456 = vrot.slane %v419, 1
      %v457 = vsel %vm245, %v455, %v456
      %v458 = vrot.slane %v420, 1
      %v459 = vrot.slane %v421, 1
      %v460 = vsel %vm245, %v458, %v459
      %v461 = vrot.slane %v422, 1
      %v462 = vrot.slane %v423, 1
      %v463 = vsel %vm245, %v461, %v462
      %v472 = vadd.f32 %v395, %v442
      %v473 = vadd.f32 %v396, %v445
      %v474 = vadd.f32 %v397, %v448
      %v475 = vadd.f32 %v398, %v451
      %v476 = vadd.f32 %v399, %v454
      %v477 = vadd.f32 %v400, %v457
      %v478 = vadd.f32 %v401, %v460
      %v479 = vadd.f32 %v402, %v463
      %v480 = vld [vmem:[%s381 + $0x2] sm:$0x1]
      %v481 = vlaneseq
      %v482 = vshrl.u32 %v481, 7
      %v483 = vsub.s32 0, %v482
      %v484 = vrot.slane %v480, %v483
      %v485 = vmul.f32 %v365, %v484
      %v486 = vmul.f32 %v366, %v484
      %v487 = vmul.f32 %v367, %v484
      %v488 = vmul.f32 %v368, %v484
      %v489 = vmul.f32 %v369, %v484
      %v490 = vmul.f32 %v370, %v484
      %v491 = vmul.f32 %v371, %v484
      %v492 = vmul.f32 %v372, %v484
      %v493 = vmul.f32 %v373, %v484
      %v494 = vmul.f32 %v374, %v484
      %v495 = vmul.f32 %v375, %v484
      %v496 = vmul.f32 %v376, %v484
      %v497 = vmul.f32 %v377, %v484
      %v498 = vmul.f32 %v378, %v484
      %v499 = vmul.f32 %v379, %v484
      %v500 = vmul.f32 %v380, %v484
      %v517 = vrot.slane %v485, 2
      %v518 = vrot.slane %v486, 2
      %v519 = vsel %vm323, %v517, %v518
      %v520 = vrot.slane %v487, 2
      %v521 = vrot.slane %v488, 2
      %v522 = vsel %vm323, %v520, %v521
      %v523 = vrot.slane %v489, 2
      %v524 = vrot.slane %v490, 2
      %v525 = vsel %vm323, %v523, %v524
      %v526 = vrot.slane %v491, 2
      %v527 = vrot.slane %v492, 2
      %v528 = vsel %vm323, %v526, %v527
      %v529 = vrot.slane %v493, 2
      %v530 = vrot.slane %v494, 2
      %v531 = vsel %vm323, %v529, %v530
      %v532 = vrot.slane %v495, 2
      %v533 = vrot.slane %v496, 2
      %v534 = vsel %vm323, %v532, %v533
      %v535 = vrot.slane %v497, 2
      %v536 = vrot.slane %v498, 2
      %v537 = vsel %vm323, %v535, %v536
      %v538 = vrot.slane %v499, 2
      %v539 = vrot.slane %v500, 2
      %v540 = vsel %vm323, %v538, %v539
      %v549 = vadd.f32 %v472, %v519
      %v550 = vadd.f32 %v473, %v522
      %v551 = vadd.f32 %v474, %v525
      %v552 = vadd.f32 %v475, %v528
      %v553 = vadd.f32 %v476, %v531
      %v554 = vadd.f32 %v477, %v534
      %v555 = vadd.f32 %v478, %v537
      %v556 = vadd.f32 %v479, %v540
      %s557 = scalar_lea.vmem %s165, 32
      %v558 = vld [vmem:[%s557] sm:$0xff]
      %v559 = vld [vmem:[%s557 + $0x8] sm:$0x3]
      %v560 = vld [vmem:[%s557 + $0x10] sm:$0xff]
      %v561 = vld [vmem:[%s557 + $0x18] sm:$0x3]
      %v562 = vld [vmem:[%s557 + $0x20] sm:$0xff]
      %v563 = vld [vmem:[%s557 + $0x28] sm:$0x3]
      %v564 = vld [vmem:[%s557 + $0x30] sm:$0xff]
      %v565 = vld [vmem:[%s557 + $0x38] sm:$0x3]
      %v566 = vld [vmem:[%s557 + $0x40] sm:$0xff]
      %v567 = vld [vmem:[%s557 + $0x48] sm:$0x3]
      %v568 = vld [vmem:[%s557 + $0x50] sm:$0xff]
      %v569 = vld [vmem:[%s557 + $0x58] sm:$0x3]
      %v570 = vld [vmem:[%s557 + $0x60] sm:$0xff]
      %v571 = vld [vmem:[%s557 + $0x68] sm:$0x3]
      %v572 = vld [vmem:[%s557 + $0x70] sm:$0xff]
      %v573 = vld [vmem:[%s557 + $0x78] sm:$0x3]
      %s574 = scalar_lea.vmem %s1, 8
      %v575 = vld [vmem:[%s574] sm:$0x1]
      %v576 = vlaneseq
      %v577 = vshrl.u32 %v576, 7
      %v578 = vsub.s32 0, %v577
      %v579 = vrot.slane %v575, %v578
      %v580 = vmul.f32 %v558, %v579
      %v581 = vmul.f32 %v560, %v579
      %v582 = vmul.f32 %v562, %v579
      %v583 = vmul.f32 %v564, %v579
      %v584 = vmul.f32 %v566, %v579
      %v585 = vmul.f32 %v568, %v579
      %v586 = vmul.f32 %v570, %v579
      %v587 = vmul.f32 %v572, %v579
      %v588 = vadd.f32 %v549, %v580
      %v589 = vadd.f32 %v550, %v581
      %v590 = vadd.f32 %v551, %v582
      %v591 = vadd.f32 %v552, %v583
      %v592 = vadd.f32 %v553, %v584
      %v593 = vadd.f32 %v554, %v585
      %v594 = vadd.f32 %v555, %v586
      %v595 = vadd.f32 %v556, %v587
      %v596 = vld [vmem:[%s574 + $0x1] sm:$0x1]
      %v597 = vlaneseq
      %v598 = vshrl.u32 %v597, 7
      %v599 = vsub.s32 0, %v598
      %v600 = vrot.slane %v596, %v599
      %v601 = vmul.f32 %v558, %v600
      %v602 = vmul.f32 %v559, %v600
      %v603 = vmul.f32 %v560, %v600
      %v604 = vmul.f32 %v561, %v600
      %v605 = vmul.f32 %v562, %v600
      %v606 = vmul.f32 %v563, %v600
      %v607 = vmul.f32 %v564, %v600
      %v608 = vmul.f32 %v565, %v600
      %v609 = vmul.f32 %v566, %v600
      %v610 = vmul.f32 %v567, %v600
      %v611 = vmul.f32 %v568, %v600
      %v612 = vmul.f32 %v569, %v600
      %v613 = vmul.f32 %v570, %v600
      %v614 = vmul.f32 %v571, %v600
      %v615 = vmul.f32 %v572, %v600
      %v616 = vmul.f32 %v573, %v600
      %v633 = vrot.slane %v601, 1
      %v634 = vrot.slane %v602, 1
      %v635 = vsel %vm245, %v633, %v634
      %v636 = vrot.slane %v603, 1
      %v637 = vrot.slane %v604, 1
      %v638 = vsel %vm245, %v636, %v637
      %v639 = vrot.slane %v605, 1
      %v640 = vrot.slane %v606, 1
      %v641 = vsel %vm245, %v639, %v640
      %v642 = vrot.slane %v607, 1
      %v643 = vrot.slane %v608, 1
      %v644 = vsel %vm245, %v642, %v643
      %v645 = vrot.slane %v609, 1
      %v646 = vrot.slane %v610, 1
      %v647 = vsel %vm245, %v645, %v646
      %v648 = vrot.slane %v611, 1
      %v649 = vrot.slane %v612, 1
      %v650 = vsel %vm245, %v648, %v649
      %v651 = vrot.slane %v613, 1
      %v652 = vrot.slane %v614, 1
      %v653 = vsel %vm245, %v651, %v652
      %v654 = vrot.slane %v615, 1
      %v655 = vrot.slane %v616, 1
      %v656 = vsel %vm245, %v654, %v655
      %v665 = vadd.f32 %v588, %v635
      %v666 = vadd.f32 %v589, %v638
      %v667 = vadd.f32 %v590, %v641
      %v668 = vadd.f32 %v591, %v644
      %v669 = vadd.f32 %v592, %v647
      %v670 = vadd.f32 %v593, %v650
      %v671 = vadd.f32 %v594, %v653
      %v672 = vadd.f32 %v595, %v656
      %v673 = vld [vmem:[%s574 + $0x2] sm:$0x1]
      %v674 = vlaneseq
      %v675 = vshrl.u32 %v674, 7
      %v676 = vsub.s32 0, %v675
      %v677 = vrot.slane %v673, %v676
      %v678 = vmul.f32 %v558, %v677
      %v679 = vmul.f32 %v559, %v677
      %v680 = vmul.f32 %v560, %v677
      %v681 = vmul.f32 %v561, %v677
      %v682 = vmul.f32 %v562, %v677
      %v683 = vmul.f32 %v563, %v677
      %v684 = vmul.f32 %v564, %v677
      %v685 = vmul.f32 %v565, %v677
      %v686 = vmul.f32 %v566, %v677
      %v687 = vmul.f32 %v567, %v677
      %v688 = vmul.f32 %v568, %v677
      %v689 = vmul.f32 %v569, %v677
      %v690 = vmul.f32 %v570, %v677
      %v691 = vmul.f32 %v571, %v677
      %v692 = vmul.f32 %v572, %v677
      %v693 = vmul.f32 %v573, %v677
      %v710 = vrot.slane %v678, 2
      %v711 = vrot.slane %v679, 2
      %v712 = vsel %vm323, %v710, %v711
      %v713 = vrot.slane %v680, 2
      %v714 = vrot.slane %v681, 2
      %v715 = vsel %vm323, %v713, %v714
      %v716 = vrot.slane %v682, 2
      %v717 = vrot.slane %v683, 2
      %v718 = vsel %vm323, %v716, %v717
      %v719 = vrot.slane %v684, 2
      %v720 = vrot.slane %v685, 2
      %v721 = vsel %vm323, %v719, %v720
      %v722 = vrot.slane %v686, 2
      %v723 = vrot.slane %v687, 2
      %v724 = vsel %vm323, %v722, %v723
      %v725 = vrot.slane %v688, 2
      %v726 = vrot.slane %v689, 2
      %v727 = vsel %vm323, %v725, %v726
      %v728 = vrot.slane %v690, 2
      %v729 = vrot.slane %v691, 2
      %v730 = vsel %vm323, %v728, %v729
      %v731 = vrot.slane %v692, 2
      %v732 = vrot.slane %v693, 2
      %v733 = vsel %vm323, %v731, %v732
      %v742 = vadd.f32 %v665, %v712
      %v743 = vadd.f32 %v666, %v715
      %v744 = vadd.f32 %v667, %v718
      %v745 = vadd.f32 %v668, %v721
      %v746 = vadd.f32 %v669, %v724
      %v747 = vadd.f32 %v670, %v727
      %v748 = vadd.f32 %v671, %v730
      %v749 = vadd.f32 %v672, %v733
      %v750 = vld [vmem:[%s2] sm:$0x1]
      %v752 = vlaneseq
      %v753 = vshrl.u32 %v752, 7
      %v754 = vsub.s32 0, %v753
      %v755 = vrot.slane %v750, %v754
      %v757 = vadd.f32 %v742, %v755
      %v758 = vadd.f32 %v743, %v755
      %v759 = vadd.f32 %v744, %v755
      %v760 = vadd.f32 %v745, %v755
      %v761 = vadd.f32 %v746, %v755
      %v762 = vadd.f32 %v747, %v755
      %v763 = vadd.f32 %v748, %v755
      %v764 = vadd.f32 %v749, %v755
      %vm765 = vcmask 130048
      %766 = vst.msk [vmem:[%s170] sm:$0xff] %vm765, %v757
      %767 = vst.msk [vmem:[%s170 + $0x8] sm:$0xff] %vm765, %v758
      %768 = vst.msk [vmem:[%s170 + $0x10] sm:$0xff] %vm765, %v759
      %769 = vst.msk [vmem:[%s170 + $0x18] sm:$0xff] %vm765, %v760
      %770 = vst.msk [vmem:[%s170 + $0x20] sm:$0xff] %vm765, %v761
      %771 = vst.msk [vmem:[%s170 + $0x28] sm:$0xff] %vm765, %v762
      %772 = vst.msk [vmem:[%s170 + $0x30] sm:$0xff] %vm765, %v763
      %773 = vst.msk [vmem:[%s170 + $0x38] sm:$0xff] %vm765, %v764
      %p774 = scmp.lt.s32.totalorder %s14, 1
      %s775 = scalar_select %p774, %s14, 1
      %s776 = smul.addr %s775, 8
      %s777 = smul.addr %s776, 8
      %s778 = scalar_lea.vmem %s3, %s777
      // Predicated region
      $region33: #{anisotropic_attention_forward.10} parent=31 // pred_check
        %p779 = pneg %p100
      $region34: #{anisotropic_attention_forward.10} parent=31 // pred_check_branch
        %781 = sbr.rel (%p779) target = $region36
      $region35: #{anisotropic_attention_forward.10} parent=31 // pred_region
        _
      $region36: #{anisotropic_attention_forward.10} parent=31 // pred_fallthru
        _
    $region32: #{anisotropic_attention_forward.10} parent=5 // pred_fallthru
      _
    %p782 = scmp.le.s32.totalorder 2, %s9
    // Predicated region
    $region37: #{anisotropic_attention_forward.10} parent=5 // pred_check
      %p783 = pneg %p782
    $region38: #{anisotropic_attention_forward.10} parent=5 // pred_check_branch
      %785 = sbr.rel (%p783) target = $region40
    $region39: #{anisotropic_attention_forward.10} parent=5 // pred_region
      %s786 = ssub.s32 %s9, 2
      // Predicated region
      $region41: #{anisotropic_attention_forward.10} parent=39 // pred_check
        %p787 = pneg %p106
      $region42: #{anisotropic_attention_forward.10} parent=39 // pred_check_branch
        %789 = sbr.rel (%p787) target = $region44
      $region43: #{anisotropic_attention_forward.10} parent=39 // pred_region
        %p790 = scmp.lt.s32.totalorder %s15, 1
        %s791 = scalar_select %p790, %s15, 1
        %s792 = smul.addr %s791, 8
        %s793 = smul.addr %s792, 8
        %s794 = scalar_lea.vmem %s3, %s793
      $region44: #{anisotropic_attention_forward.10} parent=39 // pred_fallthru
        _
    $region40: #{anisotropic_attention_forward.10} parent=5 // pred_fallthru
      _
  $region6: #{anisotropic_attention_forward.10} parent=0 // loop_footer
    %s13 = sadd.s32 1, %s9
  $region7: #{anisotropic_attention_forward.10} parent=0 // loop_footer_branch
    %8 = sbr.rel target = $region3
  $region8: #{anisotropic_attention_forward.10} parent=0 // loop_exit
    _

// kernel: anisotropic_attention_forward.12
$region0: #{anisotropic_attention_forward.12}
  #allocation0 [shape = 'u32[]', space=smem, size = 0x4, offset = 0x4, fixed_abs, tag = 'smem constant byte address 0x4 - core index']
  #allocation1 [shape = 'u32[144,128]{1,0:T(1,128)}', space=vmem, size = 0x12000, scoped, tag = 'internal scratch']
  %s0 = inlined_call_operand.vmem [shape: f32[5,4,32,16], index: 0, kind: input, shape index: {}, may-alias: {0,1,2}]
  %s1 = inlined_call_operand.vmem [shape: f32[5,4,32,16], index: 1, kind: input, shape index: {}, may-alias: {0,1,2}]
  %s2 = inlined_call_operand.vmem [shape: f32[5,4,32,16], index: 2, kind: input, shape index: {}, may-alias: {0,1,2}]
  %s3 = inlined_call_operand.vmem [shape: f32[4,32,16], index: 3, kind: input, shape index: {}]
  %s4 = inlined_call_operand.vmem [shape: f32[4,32,16], index: 4, kind: output, shape index: {}]
  %s5 = sld [smem:[#allocation0]]
  $region49: #{anisotropic_attention_forward.12} parent=0
    _
  %s7 = ssub.s32 1, %s5
  %s8 = scalar_select 0, %s7, %s5
  loop: start=0, step=1, limit=6
  $region2: #{anisotropic_attention_forward.12} parent=0 // loop_pre_header
    _
  $region3: #{anisotropic_attention_forward.12} parent=0 // loop_header
    %s10 = sphi 0, %s14
    %p11 = scmp.ge.s32.totalorder %s10, 6
    %s20 = sphi 0, %s22
    %s23 = sphi 0, %s20
    %s24 = sphi 0, %s23
    %s40 = sphi 0, %s24
    %s46 = sphi 0, %s48
    %s49 = sphi 0, %s46
    %s50 = sphi 0, %s49
    %s66 = sphi 0, %s50
    %s72 = sphi 0, %s74
    %s75 = sphi 0, %s72
    %s76 = sphi 0, %s75
    %s92 = sphi 0, %s76
    %s98 = sphi 0, %s100
    %s101 = sphi 0, %s98
    %s102 = sphi 0, %s101
    %s118 = sphi 0, %s102
    %s124 = sphi 0, %s126
    %s127 = sphi 0, %s124
    %s128 = sphi 0, %s127
    %s144 = sphi 0, %s128
  $region4: #{anisotropic_attention_forward.12} parent=0 // loop_header_branch
    %13 = sbr.rel (%p11) target = $region8
  $region5: #{anisotropic_attention_forward.12} parent=0 // loop_body
    %s15 = ssub.s32 %s10, 1
    %s16 = ssub.s32 %s10, 2
    %s17 = sadd.s32 %s10, 1
    %s18 = ssub.s32 %s10, %s17
    %p19 = scmp.eq.s32.totalorder %s18, 0
    %s21 = sadd.s32 %s20, 1
    %s22 = scalar_select %p19, %s20, %s21
    %p25 = pneg %p19
    %p26 = scmp.eq.s32.totalorder %s10, 3
    %p27 = por %p25, %p26
    %p28 = scmp.ne.s32.totalorder %s20, %s23
    %p29 = scmp.eq.s32.totalorder %s10, 0
    %p30 = por %p28, %p29
    %p31 = scmp.ne.s32.totalorder %s20, %s23
    %p32 = scmp.eq.s32.totalorder %s15, 3
    %p33 = por %p31, %p32
    %p34 = scmp.ne.s32.totalorder %s23, %s24
    %p35 = scmp.eq.s32.totalorder %s15, 0
    %p36 = por %p34, %p35
    %p37 = scmp.ne.s32.totalorder %s23, %s24
    %p38 = scmp.eq.s32.totalorder %s16, 3
    %p39 = por %p37, %p38
    %p41 = scmp.ne.s32.totalorder %s24, %s40
    %p42 = scmp.eq.s32.totalorder %s16, 0
    %p43 = por %p41, %p42
    %s44 = ssub.s32 %s10, %s17
    %p45 = scmp.eq.s32.totalorder %s44, 0
    %s47 = sadd.s32 %s46, 1
    %s48 = scalar_select %p45, %s46, %s47
    %p51 = pneg %p45
    %p52 = scmp.eq.s32.totalorder %s10, 3
    %p53 = por %p51, %p52
    %p54 = scmp.ne.s32.totalorder %s46, %s49
    %p55 = scmp.eq.s32.totalorder %s10, 0
    %p56 = por %p54, %p55
    %p57 = scmp.ne.s32.totalorder %s46, %s49
    %p58 = scmp.eq.s32.totalorder %s15, 3
    %p59 = por %p57, %p58
    %p60 = scmp.ne.s32.totalorder %s49, %s50
    %p61 = scmp.eq.s32.totalorder %s15, 0
    %p62 = por %p60, %p61
    %p63 = scmp.ne.s32.totalorder %s49, %s50
    %p64 = scmp.eq.s32.totalorder %s16, 3
    %p65 = por %p63, %p64
    %p67 = scmp.ne.s32.totalorder %s50, %s66
    %p68 = scmp.eq.s32.totalorder %s16, 0
    %p69 = por %p67, %p68
    %s70 = ssub.s32 %s10, %s17
    %p71 = scmp.eq.s32.totalorder %s70, 0
    %s73 = sadd.s32 %s72, 1
    %s74 = scalar_select %p71, %s72, %s73
    %p77 = pneg %p71
    %p78 = scmp.eq.s32.totalorder %s10, 3
    %p79 = por %p77, %p78
    %p80 = scmp.ne.s32.totalorder %s72, %s75
    %p81 = scmp.eq.s32.totalorder %s10, 0
    %p82 = por %p80, %p81
    %p83 = scmp.ne.s32.totalorder %s72, %s75
    %p84 = scmp.eq.s32.totalorder %s15, 3
    %p85 = por %p83, %p84
    %p86 = scmp.ne.s32.totalorder %s75, %s76
    %p87 = scmp.eq.s32.totalorder %s15, 0
    %p88 = por %p86, %p87
    %p89 = scmp.ne.s32.totalorder %s75, %s76
    %p90 = scmp.eq.s32.totalorder %s16, 3
    %p91 = por %p89, %p90
    %p93 = scmp.ne.s32.totalorder %s76, %s92
    %p94 = scmp.eq.s32.totalorder %s16, 0
    %p95 = por %p93, %p94
    %s96 = ssub.s32 %s10, %s17
    %p97 = scmp.eq.s32.totalorder %s96, 0
    %s99 = sadd.s32 %s98, 1
    %s100 = scalar_select %p97, %s98, %s99
    %p103 = pneg %p97
    %p104 = scmp.eq.s32.totalorder %s10, 3
    %p105 = por %p103, %p104
    %p106 = scmp.ne.s32.totalorder %s98, %s101
    %p107 = scmp.eq.s32.totalorder %s10, 0
    %p108 = por %p106, %p107
    %p109 = scmp.ne.s32.totalorder %s98, %s101
    %p110 = scmp.eq.s32.totalorder %s15, 3
    %p111 = por %p109, %p110
    %p112 = scmp.ne.s32.totalorder %s101, %s102
    %p113 = scmp.eq.s32.totalorder %s15, 0
    %p114 = por %p112, %p113
    %p115 = scmp.ne.s32.totalorder %s101, %s102
    %p116 = scmp.eq.s32.totalorder %s16, 3
    %p117 = por %p115, %p116
    %p119 = scmp.ne.s32.totalorder %s102, %s118
    %p120 = scmp.eq.s32.totalorder %s16, 0
    %p121 = por %p119, %p120
    %s122 = ssub.s32 %s10, %s17
    %p123 = scmp.eq.s32.totalorder %s122, 0
    %s125 = sadd.s32 %s124, 1
    %s126 = scalar_select %p123, %s124, %s125
    %p129 = pneg %p123
    %p130 = scmp.eq.s32.totalorder %s10, 3
    %p131 = por %p129, %p130
    %p132 = scmp.ne.s32.totalorder %s124, %s127
    %p133 = scmp.eq.s32.totalorder %s10, 0
    %p134 = por %p132, %p133
    %p135 = scmp.ne.s32.totalorder %s124, %s127
    %p136 = scmp.eq.s32.totalorder %s15, 3
    %p137 = por %p135, %p136
    %p138 = scmp.ne.s32.totalorder %s127, %s128
    %p139 = scmp.eq.s32.totalorder %s15, 0
    %p140 = por %p138, %p139
    %p141 = scmp.ne.s32.totalorder %s127, %s128
    %p142 = scmp.eq.s32.totalorder %s16, 3
    %p143 = por %p141, %p142
    %p145 = scmp.ne.s32.totalorder %s128, %s144
    %p146 = scmp.eq.s32.totalorder %s16, 0
    %p147 = por %p145, %p146
    %p148 = scmp.le.s32.totalorder 1, %s10
    %p149 = scmp.lt.s32.totalorder %s10, 5
    %p150 = pnand %p148, %p149
    %p151 = pneg %p150
    // Predicated region
    $region9: #{anisotropic_attention_forward.12} parent=5 // pred_check
      _
    $region10: #{anisotropic_attention_forward.12} parent=5 // pred_check_branch
      %153 = sbr.rel (%p150) target = $region12
    $region11: #{anisotropic_attention_forward.12} parent=5 // pred_region
      %s154 = ssub.s32 %s10, 1
    $region12: #{anisotropic_attention_forward.12} parent=5 // pred_fallthru
      _
    %p155 = scmp.lt.s32.totalorder %s10, 4
    // Predicated region
    $region13: #{anisotropic_attention_forward.12} parent=5 // pred_check
      %p156 = pneg %p155
    $region14: #{anisotropic_attention_forward.12} parent=5 // pred_check_branch
      %158 = sbr.rel (%p156) target = $region16
    $region15: #{anisotropic_attention_forward.12} parent=5 // pred_region
      // Predicated region
      $region17: #{anisotropic_attention_forward.12} parent=15 // pred_check
        %p159 = pneg %p30
      $region18: #{anisotropic_attention_forward.12} parent=15 // pred_check_branch
        %161 = sbr.rel (%p159) target = $region20
      $region19: #{anisotropic_attention_forward.12} parent=15 // pred_region
        %p162 = scmp.lt.s32.totalorder %s10, 3
        %s163 = scalar_select %p162, %s10, 3
        %s164 = smul.addr %s163, 4
        %s165 = sadd.s32 %s164, 32
        %s166 = smul.addr %s165, 8
        %s167 = scalar_lea.vmem %s0, %s166
      $region20: #{anisotropic_attention_forward.12} parent=15 // pred_fallthru
        _
      // Predicated region
      $region21: #{anisotropic_attention_forward.12} parent=15 // pred_check
        %p168 = pneg %p56
      $region22: #{anisotropic_attention_forward.12} parent=15 // pred_check_branch
        %170 = sbr.rel (%p168) target = $region24
      $region23: #{anisotropic_attention_forward.12} parent=15 // pred_region
        %p171 = scmp.lt.s32.totalorder %s10, 3
        %s172 = scalar_select %p171, %s10, 3
        %s173 = smul.addr %s172, 4
        %s174 = sadd.s32 %s173, 48
        %s175 = smul.addr %s174, 8
        %s176 = scalar_lea.vmem %s1, %s175
      $region24: #{anisotropic_attention_forward.12} parent=15 // pred_fallthru
        _
      // Predicated region
      $region25: #{anisotropic_attention_forward.12} parent=15 // pred_check
        %p177 = pneg %p82
      $region26: #{anisotropic_attention_forward.12} parent=15 // pred_check_branch
        %179 = sbr.rel (%p177) target = $region28
      $region27: #{anisotropic_attention_forward.12} parent=15 // pred_region
        %p180 = scmp.lt.s32.totalorder %s10, 3
        %s181 = scalar_select %p180, %s10, 3
        %s182 = smul.addr %s181, 4
        %s183 = sadd.s32 %s182, 64
        %s184 = smul.addr %s183, 8
        %s185 = scalar_lea.vmem %s2, %s184
      $region28: #{anisotropic_attention_forward.12} parent=15 // pred_fallthru
        _
      // Predicated region
      $region29: #{anisotropic_attention_forward.12} parent=15 // pred_check
        %p186 = pneg %p108
      $region30: #{anisotropic_attention_forward.12} parent=15 // pred_check_branch
        %188 = sbr.rel (%p186) target = $region32
      $region31: #{anisotropic_attention_forward.12} parent=15 // pred_region
        %p189 = scmp.lt.s32.totalorder %s10, 3
        %s190 = scalar_select %p189, %s10, 3
        %s191 = smul.addr %s190, 4
        %s192 = smul.addr %s191, 8
        %s193 = scalar_lea.vmem %s3, %s192
      $region32: #{anisotropic_attention_forward.12} parent=15 // pred_fallthru
        _
    $region16: #{anisotropic_attention_forward.12} parent=5 // pred_fallthru
      _
    %p194 = scmp.le.s32.totalorder 1, %s10
    %p195 = scmp.lt.s32.totalorder %s10, 5
    %p196 = pnand %p194, %p195
    %p197 = pneg %p196
    // Predicated region
    $region33: #{anisotropic_attention_forward.12} parent=5 // pred_check
      _
    $region34: #{anisotropic_attention_forward.12} parent=5 // pred_check_branch
      %199 = sbr.rel (%p196) target = $region36
    $region35: #{anisotropic_attention_forward.12} parent=5 // pred_region
      %s200 = ssub.s32 %s10, 1
      %p201 = scmp.lt.s32.totalorder %s15, 3
      %s202 = scalar_select %p201, %s15, 3
      %s203 = smul.addr %s202, 4
      %s204 = sadd.s32 %s203, 32
      %s205 = smul.addr %s204, 8
      %s206 = scalar_lea.vmem %s0, %s205
      %p207 = pneg %p36
      %p208 = pneg %p33
      %p209 = scmp.lt.s32.totalorder %s15, 3
      %s210 = scalar_select %p209, %s15, 3
      %s211 = smul.addr %s210, 4
      %s212 = sadd.s32 %s211, 48
      %s213 = smul.addr %s212, 8
      %s214 = scalar_lea.vmem %s1, %s213
      %p215 = pneg %p62
      %p216 = pneg %p59
      %p217 = scmp.lt.s32.totalorder %s15, 3
      %s218 = scalar_select %p217, %s15, 3
      %s219 = smul.addr %s218, 4
      %s220 = sadd.s32 %s219, 64
      %s221 = smul.addr %s220, 8
      %s222 = scalar_lea.vmem %s2, %s221
      %p223 = pneg %p88
      %p224 = pneg %p85
      %p225 = scmp.lt.s32.totalorder %s15, 3
      %s226 = scalar_select %p225, %s15, 3
      %s227 = smul.addr %s226, 4
      %s228 = smul.addr %s227, 8
      %s229 = scalar_lea.vmem %s3, %s228
      %p230 = pneg %p114
      %p231 = pneg %p111
      %p232 = pneg %p140
      %p233 = pneg %p137
      %p234 = scmp.lt.s32.totalorder %s15, 3
      %s235 = scalar_select %p234, %s15, 3
      %s236 = smul.addr %s235, 4
      %s237 = smul.addr %s236, 8
      %s238 = scalar_lea.vmem %s4, %s237
      %p239 = scmp.lt.s32.totalorder %s15, 3
      %s240 = scalar_select %p239, %s15, 3
      %s241 = smul.addr %s240, 4
      %s242 = sadd.s32 %s241, 32
      %s243 = smul.addr %s242, 8
      %s244 = scalar_lea.vmem %s0, %s243
      %p245 = scmp.lt.s32.totalorder %s15, 3
      %s246 = scalar_select %p245, %s15, 3
      %s247 = smul.addr %s246, 4
      %s248 = sadd.s32 %s247, 48
      %s249 = smul.addr %s248, 8
      %s250 = scalar_lea.vmem %s1, %s249
      %p251 = scmp.lt.s32.totalorder %s15, 3
      %s252 = scalar_select %p251, %s15, 3
      %s253 = smul.addr %s252, 4
      %s254 = sadd.s32 %s253, 64
      %s255 = smul.addr %s254, 8
      %s256 = scalar_lea.vmem %s2, %s255
      %p257 = scmp.lt.s32.totalorder %s15, 3
      %s258 = scalar_select %p257, %s15, 3
      %s259 = smul.addr %s258, 4
      %s260 = smul.addr %s259, 8
      %s261 = scalar_lea.vmem %s3, %s260
      %p262 = scmp.lt.s32.totalorder %s15, 3
      %s263 = scalar_select %p262, %s15, 3
      %s264 = smul.addr %s263, 4
      %s265 = smul.addr %s264, 8
      %s266 = scalar_lea.vmem %s4, %s265
      %v268 = vld [vmem:[%s244] sm:$0xff]
      %v269 = vld [vmem:[%s244 + $0x8] sm:$0xff]
      %v270 = vld [vmem:[%s244 + $0x10] sm:$0xff]
      %v271 = vld [vmem:[%s244 + $0x18] sm:$0xff]
      %v272 = vld [vmem:[%s250] sm:$0xff]
      %v273 = vld [vmem:[%s250 + $0x8] sm:$0xff]
      %v274 = vld [vmem:[%s250 + $0x10] sm:$0xff]
      %v275 = vld [vmem:[%s250 + $0x18] sm:$0xff]
      %v276 = vld [vmem:[%s256] sm:$0xff]
      %v277 = vld [vmem:[%s256 + $0x8] sm:$0xff]
      %v278 = vld [vmem:[%s256 + $0x10] sm:$0xff]
      %v279 = vld [vmem:[%s256 + $0x18] sm:$0xff]
      %v280 = vld [vmem:[%s261] sm:$0xff]
      %v281 = vld [vmem:[%s261 + $0x8] sm:$0xff]
      %v282 = vld [vmem:[%s261 + $0x10] sm:$0xff]
      %v283 = vld [vmem:[%s261 + $0x18] sm:$0xff]
      %v284 = vpack.c.bf16 %v269, %v268
      %v285 = vpack.c.bf16 %v271, %v270
      %v286 = vpack.c.bf16 %v273, %v272
      %v287 = vpack.c.bf16 %v275, %v274
      %v288 = vpack.c.bf16 %v277, %v276
      %v289 = vpack.c.bf16 %v279, %v278
      %vm290 = vcmask 64512
      %v292 = vsel %vm290, %v284, 0
      %v295 = vsel %vm290, %v285, 0
      %v298 = vsel %vm290, %v286, 0
      %v301 = vsel %vm290, %v287, 0
      %303 = vmatprep.subr.bf16.mxu0 0
      %304 = vmatpush1.bf16.xpose.msra.mxu0 0
      %305 = vmatprep.subr.bf16.mxu0 0
      %306 = vmatpush1.bf16.xpose.msra.mxu0 0
      %307 = vmatprep.subr.bf16.mxu0 0
      %308 = vmatpush1.bf16.xpose.msra.mxu0 0
      %309 = vmatprep.subr.bf16.mxu0 0
      %310 = vmatpush1.bf16.xpose.msra.mxu0 0
      %311 = vmatprep.subr.bf16.mxu0 0
      %312 = vmatpush1.bf16.xpose.msra.mxu0 0
      %313 = vmatprep.subr.bf16.mxu0 0
      %314 = vmatpush1.bf16.xpose.msra.mxu0 0
      %315 = vmatprep.subr.bf16.mxu0 0
      %316 = vmatpush1.bf16.xpose.msra.mxu0 %v301
      %317 = vmatprep.subr.bf16.mxu0 0
      %318 = vmatpush1.bf16.xpose.msra.mxu0 %v298
      %319 = vmatprep.subr.bf16.mxu0 0
      %320 = vmatpush2.bf16.xpose.msra.mxu0 0
      %321 = vmatprep.subr.bf16.mxu0 0
      %322 = vmatpush2.bf16.xpose.msra.mxu0 0
      %323 = vmatprep.subr.bf16.mxu0 0
      %324 = vmatpush2.bf16.xpose.msra.mxu0 0
      %325 = vmatprep.subr.bf16.mxu0 0
      %326 = vmatpush2.bf16.xpose.msra.mxu0 0
      %327 = vmatprep.subr.bf16.mxu0 0
      %328 = vmatpush2.bf16.xpose.msra.mxu0 0
      %329 = vmatprep.subr.bf16.mxu0 0
      %330 = vmatpush2.bf16.xpose.msra.mxu0 0
      %331 = vmatprep.subr.bf16.mxu0 0
      %332 = vmatpush2.bf16.xpose.msra.mxu0 0
      %333 = vmatprep.subr.bf16.mxu0 0
      %334 = vmatpush2.bf16.xpose.msra.mxu0 0
      %335 = vmatprep.mubr.bf16.mxu0 0
      %336 = vmatmul.mubr.bf16.gmra.mxu0 %v292
      %v337 = vpop.f32.mrf.mxu0
      %v338 = vadd.f32 0.0, %v337
      %v339 = vpop.f32.mrf.mxu0
      %v340 = vpop.f32.mrf.mxu0
      %v341 = vadd.f32 0.0, %v340
      %v342 = vpop.f32.mrf.mxu0
      %343 = vmatprep.mubr.bf16.mxu0 0
      %344 = vmatmul.mubr.bf16.gmra.mxu0 %v295
      %v345 = vpop.f32.mrf.mxu0
      %v346 = vadd.f32 0.0, %v345
      %v347 = vpop.f32.mrf.mxu0
      %v348 = vpop.f32.mrf.mxu0
      %v349 = vadd.f32 0.0, %v348
      %v350 = vpop.f32.mrf.mxu0
      %351 = vdwg.mxu0
      %v352 = vmul.f32 %v338, 0.35355338
      %v353 = vmul.f32 %v341, 0.35355338
      %v354 = vmul.f32 %v346, 0.35355338
      %v355 = vmul.f32 %v349, 0.35355338
      %vm356 = vcmask 261120
      %v357 = vsel %vm356, %v352, -inf
      %358 = vmax.xlane.f32.xlu0 %v357
      %v359 = vpop.xlane.xlu0 %358
      %v360 = vsel %vm356, %v353, -inf
      %361 = vmax.xlane.f32.xlu0 %v360
      %v362 = vpop.xlane.xlu0 %361
      %v363 = vsel %vm356, %v354, -inf
      %364 = vmax.xlane.f32.xlu0 %v363
      %v365 = vpop.xlane.xlu0 %364
      %v366 = vsel %vm356, %v355, -inf
      %367 = vmax.xlane.f32.xlu0 %v366
      %v368 = vpop.xlane.xlu0 %367
      %v369 = vsub.f32 %v352, %v359
      %v370 = vsub.f32 %v353, %v362
      %v371 = vsub.f32 %v354, %v365
      %v372 = vsub.f32 %v355, %v368
      %v373 = vmul.f32 %v369, 1.442695
      %v374 = vpow.pop %v373
      %v375 = vmul.f32 %v370, 1.442695
      %v376 = vpow.pop %v375
      %v377 = vmul.f32 %v371, 1.442695
      %v378 = vpow.pop %v377
      %v379 = vmul.f32 %v372, 1.442695
      %v380 = vpow.pop %v379
      %v381 = vsel %vm356, %v374, 0.0
      %382 = vadd.xlane.f32.xlu0 %v381
      %v383 = vpop.xlane.xlu0 %382
      %v384 = vsel %vm356, %v376, 0.0
      %385 = vadd.xlane.f32.xlu0 %v384
      %v386 = vpop.xlane.xlu0 %385
      %v387 = vsel %vm356, %v378, 0.0
      %388 = vadd.xlane.f32.xlu0 %v387
      %v389 = vpop.xlane.xlu0 %388
      %v390 = vsel %vm356, %v380, 0.0
      %391 = vadd.xlane.f32.xlu0 %v390
      %v392 = vpop.xlane.xlu0 %391
      %v393 = vrcp.pop %v383
      %v394 = vrcp.pop %v386
      %v395 = vrcp.pop %v389
      %v396 = vrcp.pop %v392
      %v397 = vmul.f32 %v374, %v393
      %v398 = vmul.f32 %v376, %v394
      %v399 = vmul.f32 %v378, %v395
      %v400 = vmul.f32 %v380, %v396
      %v401 = vpack.c.bf16 %v398, %v397
      %v402 = vpack.c.bf16 %v400, %v399
      %v404 = vsel %vm356, %v401, 0
      %v407 = vsel %vm356, %v402, 0
      %409 = vmatprep.subr.bf16.mxu0 0
      %410 = vmatpush1.bf16.msra.mxu0 0
      %411 = vmatprep.subr.bf16.mxu0 0
      %412 = vmatpush1.bf16.msra.mxu0 0
      %413 = vmatprep.subr.bf16.mxu0 0
      %414 = vmatpush1.bf16.msra.mxu0 0
      %415 = vmatprep.subr.bf16.mxu0 0
      %416 = vmatpush1.bf16.msra.mxu0 0
      %417 = vmatprep.subr.bf16.mxu0 0
      %418 = vmatpush1.bf16.msra.mxu0 0
      %419 = vmatprep.subr.bf16.mxu0 0
      %420 = vmatpush1.bf16.msra.mxu0 0
      %421 = vmatprep.subr.bf16.mxu0 0
      %422 = vmatpush1.bf16.msra.mxu0 %v289
      %423 = vmatprep.subr.bf16.mxu0 0
      %424 = vmatpush1.bf16.msra.mxu0 %v288
      %425 = vmatprep.subr.bf16.mxu0 0
      %426 = vmatpush2.bf16.msra.mxu0 0
      %427 = vmatprep.subr.bf16.mxu0 0
      %428 = vmatpush2.bf16.msra.mxu0 0
      %429 = vmatprep.subr.bf16.mxu0 0
      %430 = vmatpush2.bf16.msra.mxu0 0
      %431 = vmatprep.subr.bf16.mxu0 0
      %432 = vmatpush2.bf16.msra.mxu0 0
      %433 = vmatprep.subr.bf16.mxu0 0
      %434 = vmatpush2.bf16.msra.mxu0 0
      %435 = vmatprep.subr.bf16.mxu0 0
      %436 = vmatpush2.bf16.msra.mxu0 0
      %437 = vmatprep.subr.bf16.mxu0 0
      %438 = vmatpush2.bf16.msra.mxu0 0
      %439 = vmatprep.subr.bf16.mxu0 0
      %440 = vmatpush2.bf16.msra.mxu0 0
      %441 = vmatprep.mubr.bf16.mxu0 0
      %442 = vmatmul.mubr.bf16.gmra.mxu0 %v404
      %v443 = vpop.f32.mrf.mxu0
      %v444 = vadd.f32 %v280, %v443
      %v445 = vpop.f32.mrf.mxu0
      %v446 = vpop.f32.mrf.mxu0
      %v447 = vadd.f32 %v281, %v446
      %v448 = vpop.f32.mrf.mxu0
      %449 = vmatprep.mubr.bf16.mxu0 0
      %450 = vmatmul.mubr.bf16.gmra.mxu0 %v407
      %v451 = vpop.f32.mrf.mxu0
      %v452 = vadd.f32 %v282, %v451
      %v453 = vpop.f32.mrf.mxu0
      %v454 = vpop.f32.mrf.mxu0
      %v455 = vadd.f32 %v283, %v454
      %v456 = vpop.f32.mrf.mxu0
      %457 = vdwg.mxu0
      %460 = vrot.lane.b32.xlu0 %v284, 120
      %v461 = vpop.permute.xlu0 %460
      %462 = vrot.lane.b32.xlu0 %v285, 120
      %v463 = vpop.permute.xlu0 %462
      %466 = vrot.lane.b32.xlu0 %v286, 120
      %v467 = vpop.permute.xlu0 %466
      %468 = vrot.lane.b32.xlu0 %v287, 120
      %v469 = vpop.permute.xlu0 %468
      %v471 = vsel %vm290, %v461, 0
      %v474 = vsel %vm290, %v463, 0
      %v477 = vsel %vm290, %v467, 0
      %v480 = vsel %vm290, %v469, 0
      %482 = vmatprep.subr.bf16.mxu0 0
      %483 = vmatpush1.bf16.xpose.msra.mxu0 0
      %484 = vmatprep.subr.bf16.mxu0 0
      %485 = vmatpush1.bf16.xpose.msra.mxu0 0
      %486 = vmatprep.subr.bf16.mxu0 0
      %487 = vmatpush1.bf16.xpose.msra.mxu0 0
      %488 = vmatprep.subr.bf16.mxu0 0
      %489 = vmatpush1.bf16.xpose.msra.mxu0 0
      %490 = vmatprep.subr.bf16.mxu0 0
      %491 = vmatpush1.bf16.xpose.msra.mxu0 0
      %492 = vmatprep.subr.bf16.mxu0 0
      %493 = vmatpush1.bf16.xpose.msra.mxu0 0
      %494 = vmatprep.subr.bf16.mxu0 0
      %495 = vmatpush1.bf16.xpose.msra.mxu0 %v480
      %496 = vmatprep.subr.bf16.mxu0 0
      %497 = vmatpush1.bf16.xpose.msra.mxu0 %v477
      %498 = vmatprep.subr.bf16.mxu0 0
      %499 = vmatpush2.bf16.xpose.msra.mxu0 0
      %500 = vmatprep.subr.bf16.mxu0 0
      %501 = vmatpush2.bf16.xpose.msra.mxu0 0
      %502 = vmatprep.subr.bf16.mxu0 0
      %503 = vmatpush2.bf16.xpose.msra.mxu0 0
      %504 = vmatprep.subr.bf16.mxu0 0
      %505 = vmatpush2.bf16.xpose.msra.mxu0 0
      %506 = vmatprep.subr.bf16.mxu0 0
      %507 = vmatpush2.bf16.xpose.msra.mxu0 0
      %508 = vmatprep.subr.bf16.mxu0 0
      %509 = vmatpush2.bf16.xpose.msra.mxu0 0
      %510 = vmatprep.subr.bf16.mxu0 0
      %511 = vmatpush2.bf16.xpose.msra.mxu0 0
      %512 = vmatprep.subr.bf16.mxu0 0
      %513 = vmatpush2.bf16.xpose.msra.mxu0 0
      %514 = vmatprep.mubr.bf16.mxu0 0
      %515 = vmatmul.mubr.bf16.gmra.mxu0 %v471
      %v516 = vpop.f32.mrf.mxu0
      %v517 = vadd.f32 0.0, %v516
      %v518 = vpop.f32.mrf.mxu0
      %v519 = vpop.f32.mrf.mxu0
      %v520 = vadd.f32 0.0, %v519
      %v521 = vpop.f32.mrf.mxu0
      %522 = vmatprep.mubr.bf16.mxu0 0
      %523 = vmatmul.mubr.bf16.gmra.mxu0 %v474
      %v524 = vpop.f32.mrf.mxu0
      %v525 = vadd.f32 0.0, %v524
      %v526 = vpop.f32.mrf.mxu0
      %v527 = vpop.f32.mrf.mxu0
      %v528 = vadd.f32 0.0, %v527
      %v529 = vpop.f32.mrf.mxu0
      %530 = vdwg.mxu0
      %v531 = vmul.f32 %v517, 0.35355338
      %v532 = vmul.f32 %v520, 0.35355338
      %v533 = vmul.f32 %v525, 0.35355338
      %v534 = vmul.f32 %v528, 0.35355338
      %v535 = vsel %vm356, %v531, -inf
      %536 = vmax.xlane.f32.xlu0 %v535
      %v537 = vpop.xlane.xlu0 %536
      %v538 = vsel %vm356, %v532, -inf
      %539 = vmax.xlane.f32.xlu0 %v538
      %v540 = vpop.xlane.xlu0 %539
      %v541 = vsel %vm356, %v533, -inf
      %542 = vmax.xlane.f32.xlu0 %v541
      %v543 = vpop.xlane.xlu0 %542
      %v544 = vsel %vm356, %v534, -inf
      %545 = vmax.xlane.f32.xlu0 %v544
      %v546 = vpop.xlane.xlu0 %545
      %v547 = vsub.f32 %v531, %v537
      %v548 = vsub.f32 %v532, %v540
      %v549 = vsub.f32 %v533, %v543
      %v550 = vsub.f32 %v534, %v546
      %v551 = vmul.f32 %v547, 1.442695
      %v552 = vpow.pop %v551
      %v553 = vmul.f32 %v548, 1.442695
      %v554 = vpow.pop %v553
      %v555 = vmul.f32 %v549, 1.442695
      %v556 = vpow.pop %v555
      %v557 = vmul.f32 %v550, 1.442695
      %v558 = vpow.pop %v557
      %v559 = vsel %vm356, %v552, 0.0
      %560 = vadd.xlane.f32.xlu0 %v559
      %v561 = vpop.xlane.xlu0 %560
      %v562 = vsel %vm356, %v554, 0.0
      %563 = vadd.xlane.f32.xlu0 %v562
      %v564 = vpop.xlane.xlu0 %563
      %v565 = vsel %vm356, %v556, 0.0
      %566 = vadd.xlane.f32.xlu0 %v565
      %v567 = vpop.xlane.xlu0 %566
      %v568 = vsel %vm356, %v558, 0.0
      %569 = vadd.xlane.f32.xlu0 %v568
      %v570 = vpop.xlane.xlu0 %569
      %v571 = vrcp.pop %v561
      %v572 = vrcp.pop %v564
      %v573 = vrcp.pop %v567
      %v574 = vrcp.pop %v570
      %v575 = vmul.f32 %v552, %v571
      %v576 = vmul.f32 %v554, %v572
      %v577 = vmul.f32 %v556, %v573
      %v578 = vmul.f32 %v558, %v574
      %v579 = vpack.c.bf16 %v576, %v575
      %v580 = vpack.c.bf16 %v578, %v577
      %583 = vrot.lane.b32.xlu0 %v288, 120
      %v584 = vpop.permute.xlu0 %583
      %585 = vrot.lane.b32.xlu0 %v289, 120
      %v586 = vpop.permute.xlu0 %585
      %593 = vrot.lane.b32.xlu0 %v280, 120
      %v594 = vpop.permute.xlu0 %593
      %595 = vrot.lane.b32.xlu0 %v281, 120
      %v596 = vpop.permute.xlu0 %595
      %597 = vrot.lane.b32.xlu0 %v282, 120
      %v598 = vpop.permute.xlu0 %597
      %599 = vrot.lane.b32.xlu0 %v283, 120
      %v600 = vpop.permute.xlu0 %599
      %v606 = vsel %vm356, %v579, 0
      %v609 = vsel %vm356, %v580, 0
      %611 = vmatprep.subr.bf16.mxu0 0
      %612 = vmatpush1.bf16.msra.mxu0 0
      %613 = vmatprep.subr.bf16.mxu0 0
      %614 = vmatpush1.bf16.msra.mxu0 0
      %615 = vmatprep.subr.bf16.mxu0 0
      %616 = vmatpush1.bf16.msra.mxu0 0
      %617 = vmatprep.subr.bf16.mxu0 0
      %618 = vmatpush1.bf16.msra.mxu0 0
      %619 = vmatprep.subr.bf16.mxu0 0
      %620 = vmatpush1.bf16.msra.mxu0 0
      %621 = vmatprep.subr.bf16.mxu0 0
      %622 = vmatpush1.bf16.msra.mxu0 0
      %623 = vmatprep.subr.bf16.mxu0 0
      %624 = vmatpush1.bf16.msra.mxu0 %v586
      %625 = vmatprep.subr.bf16.mxu0 0
      %626 = vmatpush1.bf16.msra.mxu0 %v584
      %627 = vmatprep.subr.bf16.mxu0 0
      %628 = vmatpush2.bf16.msra.mxu0 0
      %629 = vmatprep.subr.bf16.mxu0 0
      %630 = vmatpush2.bf16.msra.mxu0 0
      %631 = vmatprep.subr.bf16.mxu0 0
      %632 = vmatpush2.bf16.msra.mxu0 0
      %633 = vmatprep.subr.bf16.mxu0 0
      %634 = vmatpush2.bf16.msra.mxu0 0
      %635 = vmatprep.subr.bf16.mxu0 0
      %636 = vmatpush2.bf16.msra.mxu0 0
      %637 = vmatprep.subr.bf16.mxu0 0
      %638 = vmatpush2.bf16.msra.mxu0 0
      %639 = vmatprep.subr.bf16.mxu0 0
      %640 = vmatpush2.bf16.msra.mxu0 0
      %641 = vmatprep.subr.bf16.mxu0 0
      %642 = vmatpush2.bf16.msra.mxu0 0
      %643 = vmatprep.mubr.bf16.mxu0 0
      %644 = vmatmul.mubr.bf16.gmra.mxu0 %v606
      %v645 = vpop.f32.mrf.mxu0
      %v646 = vadd.f32 %v594, %v645
      %v647 = vpop.f32.mrf.mxu0
      %v648 = vpop.f32.mrf.mxu0
      %v649 = vadd.f32 %v596, %v648
      %v650 = vpop.f32.mrf.mxu0
      %651 = vmatprep.mubr.bf16.mxu0 0
      %652 = vmatmul.mubr.bf16.gmra.mxu0 %v609
      %v653 = vpop.f32.mrf.mxu0
      %v654 = vadd.f32 %v598, %v653
      %v655 = vpop.f32.mrf.mxu0
      %v656 = vpop.f32.mrf.mxu0
      %v657 = vadd.f32 %v600, %v656
      %v658 = vpop.f32.mrf.mxu0
      %659 = vdwg.mxu0
      %664 = vrot.lane.b32.xlu0 %v646, 8
      %v665 = vpop.permute.xlu0 %664
      %666 = vrot.lane.b32.xlu0 %v649, 8
      %v667 = vpop.permute.xlu0 %666
      %668 = vrot.lane.b32.xlu0 %v654, 8
      %v669 = vpop.permute.xlu0 %668
      %670 = vrot.lane.b32.xlu0 %v657, 8
      %v671 = vpop.permute.xlu0 %670
      %v676 = vsel %vm290, %v444, %v665
      %v677 = vsel %vm290, %v447, %v667
      %v678 = vsel %vm290, %v452, %v669
      %v679 = vsel %vm290, %v455, %v671
      %vm680 = vcmask 130048
      %681 = vst.msk [vmem:[%s266] sm:$0xff] %vm680, %v676
      %682 = vst.msk [vmem:[%s266 + $0x8] sm:$0xff] %vm680, %v677
      %683 = vst.msk [vmem:[%s266 + $0x10] sm:$0xff] %vm680, %v678
      %684 = vst.msk [vmem:[%s266 + $0x18] sm:$0xff] %vm680, %v679
      %p685 = scmp.lt.s32.totalorder %s15, 3
      %s686 = scalar_select %p685, %s15, 3
      %s687 = smul.addr %s686, 4
      %s688 = smul.addr %s687, 8
      %s689 = scalar_lea.vmem %s4, %s688
      // Predicated region
      $region37: #{anisotropic_attention_forward.12} parent=35 // pred_check
        %p690 = pneg %p137
      $region38: #{anisotropic_attention_forward.12} parent=35 // pred_check_branch
        %692 = sbr.rel (%p690) target = $region40
      $region39: #{anisotropic_attention_forward.12} parent=35 // pred_region
        _
      $region40: #{anisotropic_attention_forward.12} parent=35 // pred_fallthru
        _
    $region36: #{anisotropic_attention_forward.12} parent=5 // pred_fallthru
      _
    %p693 = scmp.le.s32.totalorder 2, %s10
    // Predicated region
    $region41: #{anisotropic_attention_forward.12} parent=5 // pred_check
      %p694 = pneg %p693
    $region42: #{anisotropic_attention_forward.12} parent=5 // pred_check_branch
      %696 = sbr.rel (%p694) target = $region44
    $region43: #{anisotropic_attention_forward.12} parent=5 // pred_region
      %s697 = ssub.s32 %s10, 2
      // Predicated region
      $region45: #{anisotropic_attention_forward.12} parent=43 // pred_check
        %p698 = pneg %p143
      $region46: #{anisotropic_attention_forward.12} parent=43 // pred_check_branch
        %700 = sbr.rel (%p698) target = $region48
      $region47: #{anisotropic_attention_forward.12} parent=43 // pred_region
        %p701 = scmp.lt.s32.totalorder %s16, 3
        %s702 = scalar_select %p701, %s16, 3
        %s703 = smul.addr %s702, 4
        %s704 = smul.addr %s703, 8
        %s705 = scalar_lea.vmem %s4, %s704
      $region48: #{anisotropic_attention_forward.12} parent=43 // pred_fallthru
        _
    $region44: #{anisotropic_attention_forward.12} parent=5 // pred_fallthru
      _
  $region6: #{anisotropic_attention_forward.12} parent=0 // loop_footer
    %s14 = sadd.s32 1, %s10
  $region7: #{anisotropic_attention_forward.12} parent=0 // loop_footer_branch
    %9 = sbr.rel target = $region3
  $region8: #{anisotropic_attention_forward.12} parent=0 // loop_exit
    _

// kernel: anisotropic_attention_forward.11
$region0: #{anisotropic_attention_forward.11}
  #allocation0 [shape = 'u32[]', space=smem, size = 0x4, offset = 0x4, fixed_abs, tag = 'smem constant byte address 0x4 - core index']
  #allocation1 [shape = 'u32[144,128]{1,0:T(1,128)}', space=vmem, size = 0x12000, scoped, tag = 'internal scratch']
  %s0 = inlined_call_operand.vmem [shape: f32[5,2,8,2,4,16], index: 0, kind: input, shape index: {}, may-alias: {0,1,2}]
  %s1 = inlined_call_operand.vmem [shape: f32[5,2,8,2,4,16], index: 1, kind: input, shape index: {}, may-alias: {0,1,2}]
  %s2 = inlined_call_operand.vmem [shape: f32[5,2,8,2,4,16], index: 2, kind: input, shape index: {}, may-alias: {0,1,2}]
  %s3 = inlined_call_operand.vmem [shape: f32[2,8,2,4,16], index: 3, kind: input, shape index: {}]
  %s4 = inlined_call_operand.vmem [shape: f32[2,2,32,16], index: 4, kind: output, shape index: {}]
  %s5 = sld [smem:[#allocation0]]
  $region213: #{anisotropic_attention_forward.11} parent=0
    _
  %s7 = ssub.s32 1, %s5
  %s8 = scalar_select 0, %s7, %s5
  $region1: #{anisotropic_attention_forward.11} parent=0
    #allocation2 [shape = 'u8[32768]{0}', space=vmem, size = 0x8000, scoped, tag = 'input window, operand 0']
    #allocation3 [shape = 'u8[32768]{0}', space=vmem, size = 0x8000, scoped, tag = 'input window, operand 1']
    #allocation4 [shape = 'u8[32768]{0}', space=vmem, size = 0x8000, scoped, tag = 'input window, operand 2']
    #allocation5 [shape = 'u8[32768]{0}', space=vmem, size = 0x8000, scoped, tag = 'input window, operand 3']
    loop: start=0, step=1, limit=6
    $region2: #{anisotropic_attention_forward.11} parent=1 // loop_pre_header
      _
    $region3: #{anisotropic_attention_forward.11} parent=1 // loop_header
      %s10 = sphi 0, %s14
      %p11 = scmp.ge.s32.totalorder %s10, 6
      %s17 = sphi 0, %s29
      %s18 = sphi 0, %s25
      %s19 = sphi 0, %s17
      %s20 = sphi 0, %s18
      %s21 = sphi 0, %s19
      %s22 = sphi 0, %s20
      %s34 = sphi 0, %s36
      %s37 = sphi 0, %s34
      %s38 = sphi 0, %s37
      %s54 = sphi 0, %s38
      %s62 = sphi 0, %s64
      %s65 = sphi 0, %s62
      %s66 = sphi 0, %s65
      %s82 = sphi 0, %s66
      %s90 = sphi 0, %s92
      %s93 = sphi 0, %s90
      %s94 = sphi 0, %s93
      %s110 = sphi 0, %s94
      %s118 = sphi 0, %s120
      %s121 = sphi 0, %s118
      %s122 = sphi 0, %s121
      %s138 = sphi 0, %s122
      %s146 = sphi 0, %s148
      %s149 = sphi 0, %s146
      %s150 = sphi 0, %s149
      %s166 = sphi 0, %s150
    $region4: #{anisotropic_attention_forward.11} parent=1 // loop_header_branch
      %13 = sbr.rel (%p11) target = $region8
    $region5: #{anisotropic_attention_forward.11} parent=1 // loop_body
      %s15 = ssub.s32 %s10, 1
      %s16 = ssub.s32 %s10, 2
      %s23 = sadd.s32 1, %s18
      %p24 = scmp.ge.s32.totalorder %s23, 2
      %s25 = scalar_select %p24, 0, %s23
      %s26 = sadd.s32 1, %s17
      %s27 = scalar_select %p24, %s26, %s17
      %p28 = scmp.ge.s32.totalorder %s27, 2
      %s29 = scalar_select %p28, 0, %s27
      %s30 = ssub.s32 %s17, %s29
      %s31 = ssub.s32 %s18, %s25
      %s32 = sor.u32 %s30, %s31
      %p33 = scmp.eq.s32.totalorder %s32, 0
      %s35 = sadd.s32 %s34, 1
      %s36 = scalar_select %p33, %s34, %s35
      %p39 = pneg %p33
      %p40 = scmp.eq.s32.totalorder %s10, 3
      %p41 = por %p39, %p40
      %p42 = scmp.ne.s32.totalorder %s34, %s37
      %p43 = scmp.eq.s32.totalorder %s10, 0
      %p44 = por %p42, %p43
      %p45 = scmp.ne.s32.totalorder %s34, %s37
      %p46 = scmp.eq.s32.totalorder %s15, 3
      %p47 = por %p45, %p46
      %p48 = scmp.ne.s32.totalorder %s37, %s38
      %p49 = scmp.eq.s32.totalorder %s15, 0
      %p50 = por %p48, %p49
      %p51 = scmp.ne.s32.totalorder %s37, %s38
      %p52 = scmp.eq.s32.totalorder %s16, 3
      %p53 = por %p51, %p52
      %p55 = scmp.ne.s32.totalorder %s38, %s54
      %p56 = scmp.eq.s32.totalorder %s16, 0
      %p57 = por %p55, %p56
      %s58 = ssub.s32 %s17, %s29
      %s59 = ssub.s32 %s18, %s25
      %s60 = sor.u32 %s58, %s59
      %p61 = scmp.eq.s32.totalorder %s60, 0
      %s63 = sadd.s32 %s62, 1
      %s64 = scalar_select %p61, %s62, %s63
      %p67 = pneg %p61
      %p68 = scmp.eq.s32.totalorder %s10, 3
      %p69 = por %p67, %p68
      %p70 = scmp.ne.s32.totalorder %s62, %s65
      %p71 = scmp.eq.s32.totalorder %s10, 0
      %p72 = por %p70, %p71
      %p73 = scmp.ne.s32.totalorder %s62, %s65
      %p74 = scmp.eq.s32.totalorder %s15, 3
      %p75 = por %p73, %p74
      %p76 = scmp.ne.s32.totalorder %s65, %s66
      %p77 = scmp.eq.s32.totalorder %s15, 0
      %p78 = por %p76, %p77
      %p79 = scmp.ne.s32.totalorder %s65, %s66
      %p80 = scmp.eq.s32.totalorder %s16, 3
      %p81 = por %p79, %p80
      %p83 = scmp.ne.s32.totalorder %s66, %s82
      %p84 = scmp.eq.s32.totalorder %s16, 0
      %p85 = por %p83, %p84
      %s86 = ssub.s32 %s17, %s29
      %s87 = ssub.s32 %s18, %s25
      %s88 = sor.u32 %s86, %s87
      %p89 = scmp.eq.s32.totalorder %s88, 0
      %s91 = sadd.s32 %s90, 1
      %s92 = scalar_select %p89, %s90, %s91
      %p95 = pneg %p89
      %p96 = scmp.eq.s32.totalorder %s10, 3
      %p97 = por %p95, %p96
      %p98 = scmp.ne.s32.totalorder %s90, %s93
      %p99 = scmp.eq.s32.totalorder %s10, 0
      %p100 = por %p98, %p99
      %p101 = scmp.ne.s32.totalorder %s90, %s93
      %p102 = scmp.eq.s32.totalorder %s15, 3
      %p103 = por %p101, %p102
      %p104 = scmp.ne.s32.totalorder %s93, %s94
      %p105 = scmp.eq.s32.totalorder %s15, 0
      %p106 = por %p104, %p105
      %p107 = scmp.ne.s32.totalorder %s93, %s94
      %p108 = scmp.eq.s32.totalorder %s16, 3
      %p109 = por %p107, %p108
      %p111 = scmp.ne.s32.totalorder %s94, %s110
      %p112 = scmp.eq.s32.totalorder %s16, 0
      %p113 = por %p111, %p112
      %s114 = ssub.s32 %s17, %s29
      %s115 = ssub.s32 %s18, %s25
      %s116 = sor.u32 %s114, %s115
      %p117 = scmp.eq.s32.totalorder %s116, 0
      %s119 = sadd.s32 %s118, 1
      %s120 = scalar_select %p117, %s118, %s119
      %p123 = pneg %p117
      %p124 = scmp.eq.s32.totalorder %s10, 3
      %p125 = por %p123, %p124
      %p126 = scmp.ne.s32.totalorder %s118, %s121
      %p127 = scmp.eq.s32.totalorder %s10, 0
      %p128 = por %p126, %p127
      %p129 = scmp.ne.s32.totalorder %s118, %s121
      %p130 = scmp.eq.s32.totalorder %s15, 3
      %p131 = por %p129, %p130
      %p132 = scmp.ne.s32.totalorder %s121, %s122
      %p133 = scmp.eq.s32.totalorder %s15, 0
      %p134 = por %p132, %p133
      %p135 = scmp.ne.s32.totalorder %s121, %s122
      %p136 = scmp.eq.s32.totalorder %s16, 3
      %p137 = por %p135, %p136
      %p139 = scmp.ne.s32.totalorder %s122, %s138
      %p140 = scmp.eq.s32.totalorder %s16, 0
      %p141 = por %p139, %p140
      %s142 = ssub.s32 %s17, %s29
      %s143 = ssub.s32 %s18, %s25
      %s144 = sor.u32 %s142, %s143
      %p145 = scmp.eq.s32.totalorder %s144, 0
      %s147 = sadd.s32 %s146, 1
      %s148 = scalar_select %p145, %s146, %s147
      %p151 = pneg %p145
      %p152 = scmp.eq.s32.totalorder %s10, 3
      %p153 = por %p151, %p152
      %p154 = scmp.ne.s32.totalorder %s146, %s149
      %p155 = scmp.eq.s32.totalorder %s10, 0
      %p156 = por %p154, %p155
      %p157 = scmp.ne.s32.totalorder %s146, %s149
      %p158 = scmp.eq.s32.totalorder %s15, 3
      %p159 = por %p157, %p158
      %p160 = scmp.ne.s32.totalorder %s149, %s150
      %p161 = scmp.eq.s32.totalorder %s15, 0
      %p162 = por %p160, %p161
      %p163 = scmp.ne.s32.totalorder %s149, %s150
      %p164 = scmp.eq.s32.totalorder %s16, 3
      %p165 = por %p163, %p164
      %p167 = scmp.ne.s32.totalorder %s150, %s166
      %p168 = scmp.eq.s32.totalorder %s16, 0
      %p169 = por %p167, %p168
      %p170 = scmp.le.s32.totalorder 1, %s10
      %p171 = scmp.lt.s32.totalorder %s10, 5
      %p172 = pnand %p170, %p171
      %p173 = pneg %p172
      // Predicated region
      $region9: #{anisotropic_attention_forward.11} parent=5 // pred_check
        _
      $region10: #{anisotropic_attention_forward.11} parent=5 // pred_check_branch
        %175 = sbr.rel (%p172) target = $region12
      $region11: #{anisotropic_attention_forward.11} parent=5 // pred_region
        %s176 = ssub.s32 %s10, 1
      $region12: #{anisotropic_attention_forward.11} parent=5 // pred_fallthru
        _
      %p177 = scmp.lt.s32.totalorder %s10, 4
      // Predicated region
      $region13: #{anisotropic_attention_forward.11} parent=5 // pred_check
        %p178 = pneg %p177
      $region14: #{anisotropic_attention_forward.11} parent=5 // pred_check_branch
        %180 = sbr.rel (%p178) target = $region16
      $region15: #{anisotropic_attention_forward.11} parent=5 // pred_region
        // Predicated region
        $region17: #{anisotropic_attention_forward.11} parent=15 // pred_check
          %p181 = pneg %p44
        $region18: #{anisotropic_attention_forward.11} parent=15 // pred_check_branch
          %183 = sbr.rel (%p181) target = $region20
        $region19: #{anisotropic_attention_forward.11} parent=15 // pred_region
          %s184 = sand.u32 %s34, 1
          %s185 = sand.u32 %s34, 1
          %s186 = smul.addr %s185, 32
          %s187 = scalar_lea.vmem [#allocation2], %s186
          %s188 = smul.addr %s17, 16
          %s189 = sadd.s32 %s18, %s188
          %s190 = smul.addr %s189, 4
          %s191 = scalar_lea.vmem %s0, %s190
          // Predicated region
          $region21: #{anisotropic_attention_forward.11} parent=19 // pred_check
            _
          $region22: #{anisotropic_attention_forward.11} parent=19 // pred_check_branch
            %193 = sbr.rel (0) target = $region24
          $region23: #{anisotropic_attention_forward.11} parent=19 // pred_region
            // Predicated region
            $region25: #{anisotropic_attention_forward.11} parent=23 // pred_check
              _
            $region26: #{anisotropic_attention_forward.11} parent=23 // pred_check_branch
              %195 = sbr.rel target = $region28
            $region27: #{anisotropic_attention_forward.11} parent=23 // pred_region
              // Predicated region
              $region40: #{anisotropic_attention_forward.11} parent=27 // pred_check
                _
              $region41: #{anisotropic_attention_forward.11} parent=27 // pred_check_branch
                %225 = sbr.rel (0) target = $region43
              $region42: #{anisotropic_attention_forward.11} parent=27 // pred_region
                loop: start=0, step=1, limit=1
                $region44: #{anisotropic_attention_forward.11} parent=42 // loop_pre_header
                  _
                $region45: #{anisotropic_attention_forward.11} parent=42 // loop_header
                  %s227 = sphi 0, %s231
                  %p228 = scmp.ge.s32.totalorder %s227, 1
                  %s232 = sphi %s191, %s191
                  %s233 = sphi %s187, %s187
                $region46: #{anisotropic_attention_forward.11} parent=42 // loop_header_branch
                  %230 = sbr.rel (%p228) target = $region50
                $region47: #{anisotropic_attention_forward.11} parent=42 // loop_body
                  _
                $region48: #{anisotropic_attention_forward.11} parent=42 // loop_footer
                  %s231 = sadd.s32 1, %s227
                $region49: #{anisotropic_attention_forward.11} parent=42 // loop_footer_branch
                  %226 = sbr.rel target = $region45
                $region50: #{anisotropic_attention_forward.11} parent=42 // loop_exit
                  _
                %s235 = ssub.s32 16, 1
                loop: start=0, step=1, limit=1
                $region51: #{anisotropic_attention_forward.11} parent=42 // loop_pre_header
                  _
                $region52: #{anisotropic_attention_forward.11} parent=42 // loop_header
                  %s237 = sphi 0, %s241
                  %p238 = scmp.ge.s32.totalorder %s237, 1
                  %s242 = sphi %s191, %s191
                  %s243 = sphi %s187, %s187
                $region53: #{anisotropic_attention_forward.11} parent=42 // loop_header_branch
                  %240 = sbr.rel (%p238) target = $region57
                $region54: #{anisotropic_attention_forward.11} parent=42 // loop_body
                  %v244 = vld [vmem:[%s242] sm:%s235]
                  %245 = vst [vmem:[%s243] sm:%s235] %v244
                  %v246 = vld [vmem:[%s242 + $0x8] sm:%s235]
                  %247 = vst [vmem:[%s243 + $0x4] sm:%s235] %v246
                  %v248 = vld [vmem:[%s242 + $0x10] sm:%s235]
                  %249 = vst [vmem:[%s243 + $0x8] sm:%s235] %v248
                  %v250 = vld [vmem:[%s242 + $0x18] sm:%s235]
                  %251 = vst [vmem:[%s243 + $0xc] sm:%s235] %v250
                  %v252 = vld [vmem:[%s242 + $0x20] sm:%s235]
                  %253 = vst [vmem:[%s243 + $0x10] sm:%s235] %v252
                  %v254 = vld [vmem:[%s242 + $0x28] sm:%s235]
                  %255 = vst [vmem:[%s243 + $0x14] sm:%s235] %v254
                  %v256 = vld [vmem:[%s242 + $0x30] sm:%s235]
                  %257 = vst [vmem:[%s243 + $0x18] sm:%s235] %v256
                  %v258 = vld [vmem:[%s242 + $0x38] sm:%s235]
                  %259 = vst [vmem:[%s243 + $0x1c] sm:%s235] %v258
                $region55: #{anisotropic_attention_forward.11} parent=42 // loop_footer
                  %s241 = sadd.s32 1, %s237
                $region56: #{anisotropic_attention_forward.11} parent=42 // loop_footer_branch
                  %236 = sbr.rel target = $region52
                $region57: #{anisotropic_attention_forward.11} parent=42 // loop_exit
                  _
              $region43: #{anisotropic_attention_forward.11} parent=27 // pred_fallthru
                _
            $region28: #{anisotropic_attention_forward.11} parent=23 // pred_fallthru
              _
            // Predicated region
            $region29: #{anisotropic_attention_forward.11} parent=23 // pred_check
              _
            $region30: #{anisotropic_attention_forward.11} parent=23 // pred_check_branch
              %197 = sbr.rel (0) target = $region32
            $region31: #{anisotropic_attention_forward.11} parent=23 // pred_region
              %s199 = ssub.s32 16, 1
              loop: start=0, step=1, limit=1
              $region33: #{anisotropic_attention_forward.11} parent=31 // loop_pre_header
                _
              $region34: #{anisotropic_attention_forward.11} parent=31 // loop_header
                %s201 = sphi 0, %s205
                %p202 = scmp.ge.s32.totalorder %s201, 1
                %s206 = sphi %s191, %s191
                %s207 = sphi %s187, %s187
              $region35: #{anisotropic_attention_forward.11} parent=31 // loop_header_branch
                %204 = sbr.rel (%p202) target = $region39
              $region36: #{anisotropic_attention_forward.11} parent=31 // loop_body
                %v208 = vld [vmem:[%s206] sm:%s199]
                %209 = vst [vmem:[%s207] sm:%s199] %v208
                %v210 = vld [vmem:[%s206 + $0x8] sm:%s199]
                %211 = vst [vmem:[%s207 + $0x4] sm:%s199] %v210
                %v212 = vld [vmem:[%s206 + $0x10] sm:%s199]
                %213 = vst [vmem:[%s207 + $0x8] sm:%s199] %v212
                %v214 = vld [vmem:[%s206 + $0x18] sm:%s199]
                %215 = vst [vmem:[%s207 + $0xc] sm:%s199] %v214
                %v216 = vld [vmem:[%s206 + $0x20] sm:%s199]
                %217 = vst [vmem:[%s207 + $0x10] sm:%s199] %v216
                %v218 = vld [vmem:[%s206 + $0x28] sm:%s199]
                %219 = vst [vmem:[%s207 + $0x14] sm:%s199] %v218
                %v220 = vld [vmem:[%s206 + $0x30] sm:%s199]
                %221 = vst [vmem:[%s207 + $0x18] sm:%s199] %v220
                %v222 = vld [vmem:[%s206 + $0x38] sm:%s199]
                %223 = vst [vmem:[%s207 + $0x1c] sm:%s199] %v222
              $region37: #{anisotropic_attention_forward.11} parent=31 // loop_footer
                %s205 = sadd.s32 1, %s201
              $region38: #{anisotropic_attention_forward.11} parent=31 // loop_footer_branch
                %200 = sbr.rel target = $region34
              $region39: #{anisotropic_attention_forward.11} parent=31 // loop_exit
                _
            $region32: #{anisotropic_attention_forward.11} parent=23 // pred_fallthru
              _
          $region24: #{anisotropic_attention_forward.11} parent=19 // pred_fallthru
            _
          %260 = vnop
        $region20: #{anisotropic_attention_forward.11} parent=15 // pred_fallthru
          _
        // Predicated region
        $region58: #{anisotropic_attention_forward.11} parent=15 // pred_check
          %p261 = pneg %p72
        $region59: #{anisotropic_attention_forward.11} parent=15 // pred_check_branch
          %263 = sbr.rel (%p261) target = $region61
        $region60: #{anisotropic_attention_forward.11} parent=15 // pred_region
          %s264 = sand.u32 %s62, 1
          %s265 = sand.u32 %s62, 1
          %s266 = smul.addr %s265, 32
          %s267 = scalar_lea.vmem [#allocation3], %s266
          %s268 = smul.addr %s17, 16
          %s269 = sadd.s32 %s18, %s268
          %s270 = sadd.s32 %s269, 32
          %s271 = smul.addr %s270, 4
          %s272 = scalar_lea.vmem %s1, %s271
          // Predicated region
          $region62: #{anisotropic_attention_forward.11} parent=60 // pred_check
            _
          $region63: #{anisotropic_attention_forward.11} parent=60 // pred_check_branch
            %274 = sbr.rel (0) target = $region65
          $region64: #{anisotropic_attention_forward.11} parent=60 // pred_region
            // Predicated region
            $region66: #{anisotropic_attention_forward.11} parent=64 // pred_check
              _
            $region67: #{anisotropic_attention_forward.11} parent=64 // pred_check_branch
              %276 = sbr.rel target = $region69
            $region68: #{anisotropic_attention_forward.11} parent=64 // pred_region
              // Predicated region
              $region81: #{anisotropic_attention_forward.11} parent=68 // pred_check
                _
              $region82: #{anisotropic_attention_forward.11} parent=68 // pred_check_branch
                %306 = sbr.rel (0) target = $region84
              $region83: #{anisotropic_attention_forward.11} parent=68 // pred_region
                loop: start=0, step=1, limit=1
                $region85: #{anisotropic_attention_forward.11} parent=83 // loop_pre_header
                  _
                $region86: #{anisotropic_attention_forward.11} parent=83 // loop_header
                  %s308 = sphi 0, %s312
                  %p309 = scmp.ge.s32.totalorder %s308, 1
                  %s313 = sphi %s272, %s272
                  %s314 = sphi %s267, %s267
                $region87: #{anisotropic_attention_forward.11} parent=83 // loop_header_branch
                  %311 = sbr.rel (%p309) target = $region91
                $region88: #{anisotropic_attention_forward.11} parent=83 // loop_body
                  _
                $region89: #{anisotropic_attention_forward.11} parent=83 // loop_footer
                  %s312 = sadd.s32 1, %s308
                $region90: #{anisotropic_attention_forward.11} parent=83 // loop_footer_branch
                  %307 = sbr.rel target = $region86
                $region91: #{anisotropic_attention_forward.11} parent=83 // loop_exit
                  _
                %s316 = ssub.s32 16, 1
                loop: start=0, step=1, limit=1
                $region92: #{anisotropic_attention_forward.11} parent=83 // loop_pre_header
                  _
                $region93: #{anisotropic_attention_forward.11} parent=83 // loop_header
                  %s318 = sphi 0, %s322
                  %p319 = scmp.ge.s32.totalorder %s318, 1
                  %s323 = sphi %s272, %s272
                  %s324 = sphi %s267, %s267
                $region94: #{anisotropic_attention_forward.11} parent=83 // loop_header_branch
                  %321 = sbr.rel (%p319) target = $region98
                $region95: #{anisotropic_attention_forward.11} parent=83 // loop_body
                  %v325 = vld [vmem:[%s323] sm:%s316]
                  %326 = vst [vmem:[%s324] sm:%s316] %v325
                  %v327 = vld [vmem:[%s323 + $0x8] sm:%s316]
                  %328 = vst [vmem:[%s324 + $0x4] sm:%s316] %v327
                  %v329 = vld [vmem:[%s323 + $0x10] sm:%s316]
                  %330 = vst [vmem:[%s324 + $0x8] sm:%s316] %v329
                  %v331 = vld [vmem:[%s323 + $0x18] sm:%s316]
                  %332 = vst [vmem:[%s324 + $0xc] sm:%s316] %v331
                  %v333 = vld [vmem:[%s323 + $0x20] sm:%s316]
                  %334 = vst [vmem:[%s324 + $0x10] sm:%s316] %v333
                  %v335 = vld [vmem:[%s323 + $0x28] sm:%s316]
                  %336 = vst [vmem:[%s324 + $0x14] sm:%s316] %v335
                  %v337 = vld [vmem:[%s323 + $0x30] sm:%s316]
                  %338 = vst [vmem:[%s324 + $0x18] sm:%s316] %v337
                  %v339 = vld [vmem:[%s323 + $0x38] sm:%s316]
                  %340 = vst [vmem:[%s324 + $0x1c] sm:%s316] %v339
                $region96: #{anisotropic_attention_forward.11} parent=83 // loop_footer
                  %s322 = sadd.s32 1, %s318
                $region97: #{anisotropic_attention_forward.11} parent=83 // loop_footer_branch
                  %317 = sbr.rel target = $region93
                $region98: #{anisotropic_attention_forward.11} parent=83 // loop_exit
                  _
              $region84: #{anisotropic_attention_forward.11} parent=68 // pred_fallthru
                _
            $region69: #{anisotropic_attention_forward.11} parent=64 // pred_fallthru
              _
            // Predicated region
            $region70: #{anisotropic_attention_forward.11} parent=64 // pred_check
              _
            $region71: #{anisotropic_attention_forward.11} parent=64 // pred_check_branch
              %278 = sbr.rel (0) target = $region73
            $region72: #{anisotropic_attention_forward.11} parent=64 // pred_region
              %s280 = ssub.s32 16, 1
              loop: start=0, step=1, limit=1
              $region74: #{anisotropic_attention_forward.11} parent=72 // loop_pre_header
                _
              $region75: #{anisotropic_attention_forward.11} parent=72 // loop_header
                %s282 = sphi 0, %s286
                %p283 = scmp.ge.s32.totalorder %s282, 1
                %s287 = sphi %s272, %s272
                %s288 = sphi %s267, %s267
              $region76: #{anisotropic_attention_forward.11} parent=72 // loop_header_branch
                %285 = sbr.rel (%p283) target = $region80
              $region77: #{anisotropic_attention_forward.11} parent=72 // loop_body
                %v289 = vld [vmem:[%s287] sm:%s280]
                %290 = vst [vmem:[%s288] sm:%s280] %v289
                %v291 = vld [vmem:[%s287 + $0x8] sm:%s280]
                %292 = vst [vmem:[%s288 + $0x4] sm:%s280] %v291
                %v293 = vld [vmem:[%s287 + $0x10] sm:%s280]
                %294 = vst [vmem:[%s288 + $0x8] sm:%s280] %v293
                %v295 = vld [vmem:[%s287 + $0x18] sm:%s280]
                %296 = vst [vmem:[%s288 + $0xc] sm:%s280] %v295
                %v297 = vld [vmem:[%s287 + $0x20] sm:%s280]
                %298 = vst [vmem:[%s288 + $0x10] sm:%s280] %v297
                %v299 = vld [vmem:[%s287 + $0x28] sm:%s280]
                %300 = vst [vmem:[%s288 + $0x14] sm:%s280] %v299
                %v301 = vld [vmem:[%s287 + $0x30] sm:%s280]
                %302 = vst [vmem:[%s288 + $0x18] sm:%s280] %v301
                %v303 = vld [vmem:[%s287 + $0x38] sm:%s280]
                %304 = vst [vmem:[%s288 + $0x1c] sm:%s280] %v303
              $region78: #{anisotropic_attention_forward.11} parent=72 // loop_footer
                %s286 = sadd.s32 1, %s282
              $region79: #{anisotropic_attention_forward.11} parent=72 // loop_footer_branch
                %281 = sbr.rel target = $region75
              $region80: #{anisotropic_attention_forward.11} parent=72 // loop_exit
                _
            $region73: #{anisotropic_attention_forward.11} parent=64 // pred_fallthru
              _
          $region65: #{anisotropic_attention_forward.11} parent=60 // pred_fallthru
            _
          %341 = vnop
        $region61: #{anisotropic_attention_forward.11} parent=15 // pred_fallthru
          _
        // Predicated region
        $region99: #{anisotropic_attention_forward.11} parent=15 // pred_check
          %p342 = pneg %p100
        $region100: #{anisotropic_attention_forward.11} parent=15 // pred_check_branch
          %344 = sbr.rel (%p342) target = $region102
        $region101: #{anisotropic_attention_forward.11} parent=15 // pred_region
          %s345 = sand.u32 %s90, 1
          %s346 = sand.u32 %s90, 1
          %s347 = smul.addr %s346, 32
          %s348 = scalar_lea.vmem [#allocation4], %s347
          %s349 = smul.addr %s17, 16
          %s350 = sadd.s32 %s18, %s349
          %s351 = sadd.s32 %s350, 128
          %s352 = smul.addr %s351, 4
          %s353 = scalar_lea.vmem %s2, %s352
          // Predicated region
          $region103: #{anisotropic_attention_forward.11} parent=101 // pred_check
            _
          $region104: #{anisotropic_attention_forward.11} parent=101 // pred_check_branch
            %355 = sbr.rel (0) target = $region106
          $region105: #{anisotropic_attention_forward.11} parent=101 // pred_region
            // Predicated region
            $region107: #{anisotropic_attention_forward.11} parent=105 // pred_check
              _
            $region108: #{anisotropic_attention_forward.11} parent=105 // pred_check_branch
              %357 = sbr.rel target = $region110
            $region109: #{anisotropic_attention_forward.11} parent=105 // pred_region
              // Predicated region
              $region122: #{anisotropic_attention_forward.11} parent=109 // pred_check
                _
              $region123: #{anisotropic_attention_forward.11} parent=109 // pred_check_branch
                %387 = sbr.rel (0) target = $region125
              $region124: #{anisotropic_attention_forward.11} parent=109 // pred_region
                loop: start=0, step=1, limit=1
                $region126: #{anisotropic_attention_forward.11} parent=124 // loop_pre_header
                  _
                $region127: #{anisotropic_attention_forward.11} parent=124 // loop_header
                  %s389 = sphi 0, %s393
                  %p390 = scmp.ge.s32.totalorder %s389, 1
                  %s394 = sphi %s353, %s353
                  %s395 = sphi %s348, %s348
                $region128: #{anisotropic_attention_forward.11} parent=124 // loop_header_branch
                  %392 = sbr.rel (%p390) target = $region132
                $region129: #{anisotropic_attention_forward.11} parent=124 // loop_body
                  _
                $region130: #{anisotropic_attention_forward.11} parent=124 // loop_footer
                  %s393 = sadd.s32 1, %s389
                $region131: #{anisotropic_attention_forward.11} parent=124 // loop_footer_branch
                  %388 = sbr.rel target = $region127
                $region132: #{anisotropic_attention_forward.11} parent=124 // loop_exit
                  _
                %s397 = ssub.s32 16, 1
                loop: start=0, step=1, limit=1
                $region133: #{anisotropic_attention_forward.11} parent=124 // loop_pre_header
                  _
                $region134: #{anisotropic_attention_forward.11} parent=124 // loop_header
                  %s399 = sphi 0, %s403
                  %p400 = scmp.ge.s32.totalorder %s399, 1
                  %s404 = sphi %s353, %s353
                  %s405 = sphi %s348, %s348
                $region135: #{anisotropic_attention_forward.11} parent=124 // loop_header_branch
                  %402 = sbr.rel (%p400) target = $region139
                $region136: #{anisotropic_attention_forward.11} parent=124 // loop_body
                  %v406 = vld [vmem:[%s404] sm:%s397]
                  %407 = vst [vmem:[%s405] sm:%s397] %v406
                  %v408 = vld [vmem:[%s404 + $0x8] sm:%s397]
                  %409 = vst [vmem:[%s405 + $0x4] sm:%s397] %v408
                  %v410 = vld [vmem:[%s404 + $0x10] sm:%s397]
                  %411 = vst [vmem:[%s405 + $0x8] sm:%s397] %v410
                  %v412 = vld [vmem:[%s404 + $0x18] sm:%s397]
                  %413 = vst [vmem:[%s405 + $0xc] sm:%s397] %v412
                  %v414 = vld [vmem:[%s404 + $0x20] sm:%s397]
                  %415 = vst [vmem:[%s405 + $0x10] sm:%s397] %v414
                  %v416 = vld [vmem:[%s404 + $0x28] sm:%s397]
                  %417 = vst [vmem:[%s405 + $0x14] sm:%s397] %v416
                  %v418 = vld [vmem:[%s404 + $0x30] sm:%s397]
                  %419 = vst [vmem:[%s405 + $0x18] sm:%s397] %v418
                  %v420 = vld [vmem:[%s404 + $0x38] sm:%s397]
                  %421 = vst [vmem:[%s405 + $0x1c] sm:%s397] %v420
                $region137: #{anisotropic_attention_forward.11} parent=124 // loop_footer
                  %s403 = sadd.s32 1, %s399
                $region138: #{anisotropic_attention_forward.11} parent=124 // loop_footer_branch
                  %398 = sbr.rel target = $region134
                $region139: #{anisotropic_attention_forward.11} parent=124 // loop_exit
                  _
              $region125: #{anisotropic_attention_forward.11} parent=109 // pred_fallthru
                _
            $region110: #{anisotropic_attention_forward.11} parent=105 // pred_fallthru
              _
            // Predicated region
            $region111: #{anisotropic_attention_forward.11} parent=105 // pred_check
              _
            $region112: #{anisotropic_attention_forward.11} parent=105 // pred_check_branch
              %359 = sbr.rel (0) target = $region114
            $region113: #{anisotropic_attention_forward.11} parent=105 // pred_region
              %s361 = ssub.s32 16, 1
              loop: start=0, step=1, limit=1
              $region115: #{anisotropic_attention_forward.11} parent=113 // loop_pre_header
                _
              $region116: #{anisotropic_attention_forward.11} parent=113 // loop_header
                %s363 = sphi 0, %s367
                %p364 = scmp.ge.s32.totalorder %s363, 1
                %s368 = sphi %s353, %s353
                %s369 = sphi %s348, %s348
              $region117: #{anisotropic_attention_forward.11} parent=113 // loop_header_branch
                %366 = sbr.rel (%p364) target = $region121
              $region118: #{anisotropic_attention_forward.11} parent=113 // loop_body
                %v370 = vld [vmem:[%s368] sm:%s361]
                %371 = vst [vmem:[%s369] sm:%s361] %v370
                %v372 = vld [vmem:[%s368 + $0x8] sm:%s361]
                %373 = vst [vmem:[%s369 + $0x4] sm:%s361] %v372
                %v374 = vld [vmem:[%s368 + $0x10] sm:%s361]
                %375 = vst [vmem:[%s369 + $0x8] sm:%s361] %v374
                %v376 = vld [vmem:[%s368 + $0x18] sm:%s361]
                %377 = vst [vmem:[%s369 + $0xc] sm:%s361] %v376
                %v378 = vld [vmem:[%s368 + $0x20] sm:%s361]
                %379 = vst [vmem:[%s369 + $0x10] sm:%s361] %v378
                %v380 = vld [vmem:[%s368 + $0x28] sm:%s361]
                %381 = vst [vmem:[%s369 + $0x14] sm:%s361] %v380
                %v382 = vld [vmem:[%s368 + $0x30] sm:%s361]
                %383 = vst [vmem:[%s369 + $0x18] sm:%s361] %v382
                %v384 = vld [vmem:[%s368 + $0x38] sm:%s361]
                %385 = vst [vmem:[%s369 + $0x1c] sm:%s361] %v384
              $region119: #{anisotropic_attention_forward.11} parent=113 // loop_footer
                %s367 = sadd.s32 1, %s363
              $region120: #{anisotropic_attention_forward.11} parent=113 // loop_footer_branch
                %362 = sbr.rel target = $region116
              $region121: #{anisotropic_attention_forward.11} parent=113 // loop_exit
                _
            $region114: #{anisotropic_attention_forward.11} parent=105 // pred_fallthru
              _
          $region106: #{anisotropic_attention_forward.11} parent=101 // pred_fallthru
            _
          %422 = vnop
        $region102: #{anisotropic_attention_forward.11} parent=15 // pred_fallthru
          _
        // Predicated region
        $region140: #{anisotropic_attention_forward.11} parent=15 // pred_check
          %p423 = pneg %p128
        $region141: #{anisotropic_attention_forward.11} parent=15 // pred_check_branch
          %425 = sbr.rel (%p423) target = $region143
        $region142: #{anisotropic_attention_forward.11} parent=15 // pred_region
          %s426 = sand.u32 %s118, 1
          %s427 = sand.u32 %s118, 1
          %s428 = smul.addr %s427, 32
          %s429 = scalar_lea.vmem [#allocation5], %s428
          %s430 = smul.addr %s17, 16
          %s431 = sadd.s32 %s18, %s430
          %s432 = smul.addr %s431, 4
          %s433 = scalar_lea.vmem %s3, %s432
          // Predicated region
          $region144: #{anisotropic_attention_forward.11} parent=142 // pred_check
            _
          $region145: #{anisotropic_attention_forward.11} parent=142 // pred_check_branch
            %435 = sbr.rel (0) target = $region147
          $region146: #{anisotropic_attention_forward.11} parent=142 // pred_region
            // Predicated region
            $region148: #{anisotropic_attention_forward.11} parent=146 // pred_check
              _
            $region149: #{anisotropic_attention_forward.11} parent=146 // pred_check_branch
              %437 = sbr.rel target = $region151
            $region150: #{anisotropic_attention_forward.11} parent=146 // pred_region
              // Predicated region
              $region163: #{anisotropic_attention_forward.11} parent=150 // pred_check
                _
              $region164: #{anisotropic_attention_forward.11} parent=150 // pred_check_branch
                %467 = sbr.rel (0) target = $region166
              $region165: #{anisotropic_attention_forward.11} parent=150 // pred_region
                loop: start=0, step=1, limit=1
                $region167: #{anisotropic_attention_forward.11} parent=165 // loop_pre_header
                  _
                $region168: #{anisotropic_attention_forward.11} parent=165 // loop_header
                  %s469 = sphi 0, %s473
                  %p470 = scmp.ge.s32.totalorder %s469, 1
                  %s474 = sphi %s433, %s433
                  %s475 = sphi %s429, %s429
                $region169: #{anisotropic_attention_forward.11} parent=165 // loop_header_branch
                  %472 = sbr.rel (%p470) target = $region173
                $region170: #{anisotropic_attention_forward.11} parent=165 // loop_body
                  _
                $region171: #{anisotropic_attention_forward.11} parent=165 // loop_footer
                  %s473 = sadd.s32 1, %s469
                $region172: #{anisotropic_attention_forward.11} parent=165 // loop_footer_branch
                  %468 = sbr.rel target = $region168
                $region173: #{anisotropic_attention_forward.11} parent=165 // loop_exit
                  _
                %s477 = ssub.s32 16, 1
                loop: start=0, step=1, limit=1
                $region174: #{anisotropic_attention_forward.11} parent=165 // loop_pre_header
                  _
                $region175: #{anisotropic_attention_forward.11} parent=165 // loop_header
                  %s479 = sphi 0, %s483
                  %p480 = scmp.ge.s32.totalorder %s479, 1
                  %s484 = sphi %s433, %s433
                  %s485 = sphi %s429, %s429
                $region176: #{anisotropic_attention_forward.11} parent=165 // loop_header_branch
                  %482 = sbr.rel (%p480) target = $region180
                $region177: #{anisotropic_attention_forward.11} parent=165 // loop_body
                  %v486 = vld [vmem:[%s484] sm:%s477]
                  %487 = vst [vmem:[%s485] sm:%s477] %v486
                  %v488 = vld [vmem:[%s484 + $0x8] sm:%s477]
                  %489 = vst [vmem:[%s485 + $0x4] sm:%s477] %v488
                  %v490 = vld [vmem:[%s484 + $0x10] sm:%s477]
                  %491 = vst [vmem:[%s485 + $0x8] sm:%s477] %v490
                  %v492 = vld [vmem:[%s484 + $0x18] sm:%s477]
                  %493 = vst [vmem:[%s485 + $0xc] sm:%s477] %v492
                  %v494 = vld [vmem:[%s484 + $0x20] sm:%s477]
                  %495 = vst [vmem:[%s485 + $0x10] sm:%s477] %v494
                  %v496 = vld [vmem:[%s484 + $0x28] sm:%s477]
                  %497 = vst [vmem:[%s485 + $0x14] sm:%s477] %v496
                  %v498 = vld [vmem:[%s484 + $0x30] sm:%s477]
                  %499 = vst [vmem:[%s485 + $0x18] sm:%s477] %v498
                  %v500 = vld [vmem:[%s484 + $0x38] sm:%s477]
                  %501 = vst [vmem:[%s485 + $0x1c] sm:%s477] %v500
                $region178: #{anisotropic_attention_forward.11} parent=165 // loop_footer
                  %s483 = sadd.s32 1, %s479
                $region179: #{anisotropic_attention_forward.11} parent=165 // loop_footer_branch
                  %478 = sbr.rel target = $region175
                $region180: #{anisotropic_attention_forward.11} parent=165 // loop_exit
                  _
              $region166: #{anisotropic_attention_forward.11} parent=150 // pred_fallthru
                _
            $region151: #{anisotropic_attention_forward.11} parent=146 // pred_fallthru
              _
            // Predicated region
            $region152: #{anisotropic_attention_forward.11} parent=146 // pred_check
              _
            $region153: #{anisotropic_attention_forward.11} parent=146 // pred_check_branch
              %439 = sbr.rel (0) target = $region155
            $region154: #{anisotropic_attention_forward.11} parent=146 // pred_region
              %s441 = ssub.s32 16, 1
              loop: start=0, step=1, limit=1
              $region156: #{anisotropic_attention_forward.11} parent=154 // loop_pre_header
                _
              $region157: #{anisotropic_attention_forward.11} parent=154 // loop_header
                %s443 = sphi 0, %s447
                %p444 = scmp.ge.s32.totalorder %s443, 1
                %s448 = sphi %s433, %s433
                %s449 = sphi %s429, %s429
              $region158: #{anisotropic_attention_forward.11} parent=154 // loop_header_branch
                %446 = sbr.rel (%p444) target = $region162
              $region159: #{anisotropic_attention_forward.11} parent=154 // loop_body
                %v450 = vld [vmem:[%s448] sm:%s441]
                %451 = vst [vmem:[%s449] sm:%s441] %v450
                %v452 = vld [vmem:[%s448 + $0x8] sm:%s441]
                %453 = vst [vmem:[%s449 + $0x4] sm:%s441] %v452
                %v454 = vld [vmem:[%s448 + $0x10] sm:%s441]
                %455 = vst [vmem:[%s449 + $0x8] sm:%s441] %v454
                %v456 = vld [vmem:[%s448 + $0x18] sm:%s441]
                %457 = vst [vmem:[%s449 + $0xc] sm:%s441] %v456
                %v458 = vld [vmem:[%s448 + $0x20] sm:%s441]
                %459 = vst [vmem:[%s449 + $0x10] sm:%s441] %v458
                %v460 = vld [vmem:[%s448 + $0x28] sm:%s441]
                %461 = vst [vmem:[%s449 + $0x14] sm:%s441] %v460
                %v462 = vld [vmem:[%s448 + $0x30] sm:%s441]
                %463 = vst [vmem:[%s449 + $0x18] sm:%s441] %v462
                %v464 = vld [vmem:[%s448 + $0x38] sm:%s441]
                %465 = vst [vmem:[%s449 + $0x1c] sm:%s441] %v464
              $region160: #{anisotropic_attention_forward.11} parent=154 // loop_footer
                %s447 = sadd.s32 1, %s443
              $region161: #{anisotropic_attention_forward.11} parent=154 // loop_footer_branch
                %442 = sbr.rel target = $region157
              $region162: #{anisotropic_attention_forward.11} parent=154 // loop_exit
                _
            $region155: #{anisotropic_attention_forward.11} parent=146 // pred_fallthru
              _
          $region147: #{anisotropic_attention_forward.11} parent=142 // pred_fallthru
            _
          %502 = vnop
        $region143: #{anisotropic_attention_forward.11} parent=15 // pred_fallthru
          _
      $region16: #{anisotropic_attention_forward.11} parent=5 // pred_fallthru
        _
      %p503 = scmp.le.s32.totalorder 1, %s10
      %p504 = scmp.lt.s32.totalorder %s10, 5
      %p505 = pnand %p503, %p504
      %p506 = pneg %p505
      // Predicated region
      $region181: #{anisotropic_attention_forward.11} parent=5 // pred_check
        _
      $region182: #{anisotropic_attention_forward.11} parent=5 // pred_check_branch
        %508 = sbr.rel (%p505) target = $region184
      $region183: #{anisotropic_attention_forward.11} parent=5 // pred_region
        %s509 = ssub.s32 %s10, 1
        %s510 = sand.u32 %s37, 1
        %s511 = sand.u32 %s37, 1
        %s512 = smul.addr %s511, 32
        %s513 = scalar_lea.vmem [#allocation2], %s512
        // Predicated region
        $region185: #{anisotropic_attention_forward.11} parent=183 // pred_check
          %p514 = pneg %p50
        $region186: #{anisotropic_attention_forward.11} parent=183 // pred_check_branch
          %516 = sbr.rel (%p514) target = $region188
        $region187: #{anisotropic_attention_forward.11} parent=183 // pred_region
          _
        $region188: #{anisotropic_attention_forward.11} parent=183 // pred_fallthru
          _
        %s517 = sand.u32 %s65, 1
        %s518 = sand.u32 %s65, 1
        %s519 = smul.addr %s518, 32
        %s520 = scalar_lea.vmem [#allocation3], %s519
        // Predicated region
        $region189: #{anisotropic_attention_forward.11} parent=183 // pred_check
          %p521 = pneg %p78
        $region190: #{anisotropic_attention_forward.11} parent=183 // pred_check_branch
          %523 = sbr.rel (%p521) target = $region192
        $region191: #{anisotropic_attention_forward.11} parent=183 // pred_region
          _
        $region192: #{anisotropic_attention_forward.11} parent=183 // pred_fallthru
          _
        %s524 = sand.u32 %s93, 1
        %s525 = sand.u32 %s93, 1
        %s526 = smul.addr %s525, 32
        %s527 = scalar_lea.vmem [#allocation4], %s526
        // Predicated region
        $region193: #{anisotropic_attention_forward.11} parent=183 // pred_check
          %p528 = pneg %p106
        $region194: #{anisotropic_attention_forward.11} parent=183 // pred_check_branch
          %530 = sbr.rel (%p528) target = $region196
        $region195: #{anisotropic_attention_forward.11} parent=183 // pred_region
          _
        $region196: #{anisotropic_attention_forward.11} parent=183 // pred_fallthru
          _
        %s531 = sand.u32 %s121, 1
        %s532 = sand.u32 %s121, 1
        %s533 = smul.addr %s532, 32
        %s534 = scalar_lea.vmem [#allocation5], %s533
        // Predicated region
        $region197: #{anisotropic_attention_forward.11} parent=183 // pred_check
          %p535 = pneg %p134
        $region198: #{anisotropic_attention_forward.11} parent=183 // pred_check_branch
          %537 = sbr.rel (%p535) target = $region200
        $region199: #{anisotropic_attention_forward.11} parent=183 // pred_region
          _
        $region200: #{anisotropic_attention_forward.11} parent=183 // pred_fallthru
          _
        %s538 = sand.u32 %s37, 1
        %s539 = sand.u32 %s37, 1
        %s540 = smul.addr %s539, 32
        %s541 = scalar_lea.vmem [#allocation2], %s540
        %p542 = pneg %p50
        %p543 = pneg %p47
        %s544 = sand.u32 %s65, 1
        %s545 = sand.u32 %s65, 1
        %s546 = smul.addr %s545, 32
        %s547 = scalar_lea.vmem [#allocation3], %s546
        %p548 = pneg %p78
        %p549 = pneg %p75
        %s550 = sand.u32 %s93, 1
        %s551 = sand.u32 %s93, 1
        %s552 = smul.addr %s551, 32
        %s553 = scalar_lea.vmem [#allocation4], %s552
        %p554 = pneg %p106
        %p555 = pneg %p103
        %s556 = sand.u32 %s121, 1
        %s557 = sand.u32 %s121, 1
        %s558 = smul.addr %s557, 32
        %s559 = scalar_lea.vmem [#allocation5], %s558
        %p560 = pneg %p134
        %p561 = pneg %p131
        %p562 = pneg %p162
        %p563 = pneg %p159
        %p564 = scmp.lt.s32.totalorder %s19, 1
        %s565 = scalar_select %p564, %s19, 1
        %p566 = scmp.lt.s32.totalorder %s20, 1
        %s567 = scalar_select %p566, %s20, 1
        %s568 = smul.addr %s567, 4
        %s569 = smul.addr %s565, 8
        %s570 = sadd.s32 %s568, %s569
        %s571 = smul.addr %s570, 8
        %s572 = scalar_lea.vmem %s4, %s571
        %p573 = scmp.lt.s32.totalorder %s19, 1
        %s574 = scalar_select %p573, %s19, 1
        %p575 = scmp.lt.s32.totalorder %s20, 1
        %s576 = scalar_select %p575, %s20, 1
        %s577 = smul.addr %s576, 4
        %s578 = smul.addr %s574, 8
        %s579 = sadd.s32 %s577, %s578
        %s580 = smul.addr %s579, 8
        %s581 = scalar_lea.vmem %s4, %s580
        %v583 = vld [vmem:[%s513] sm:$0x1]
        %v584 = vld [vmem:[%s513 + $0x4] sm:$0x1]
        %v585 = vld [vmem:[%s513 + $0x8] sm:$0x1]
        %v586 = vld [vmem:[%s513 + $0xc] sm:$0x1]
        %v587 = vld [vmem:[%s513 + $0x10] sm:$0x1]
        %v588 = vld [vmem:[%s513 + $0x14] sm:$0x1]
        %v589 = vld [vmem:[%s513 + $0x18] sm:$0x1]
        %v590 = vld [vmem:[%s513 + $0x1c] sm:$0x1]
        %v591 = vld [vmem:[%s513 + $0x1] sm:$0x1]
        %v592 = vld [vmem:[%s513 + $0x5] sm:$0x1]
        %v593 = vld [vmem:[%s513 + $0x9] sm:$0x1]
        %v594 = vld [vmem:[%s513 + $0xd] sm:$0x1]
        %v595 = vld [vmem:[%s513 + $0x11] sm:$0x1]
        %v596 = vld [vmem:[%s513 + $0x15] sm:$0x1]
        %v597 = vld [vmem:[%s513 + $0x19] sm:$0x1]
        %v598 = vld [vmem:[%s513 + $0x1d] sm:$0x1]
        %v599 = vld [vmem:[%s513 + $0x2] sm:$0x1]
        %v600 = vld [vmem:[%s513 + $0x6] sm:$0x1]
        %v601 = vld [vmem:[%s513 + $0xa] sm:$0x1]
        %v602 = vld [vmem:[%s513 + $0xe] sm:$0x1]
        %v603 = vld [vmem:[%s513 + $0x12] sm:$0x1]
        %v604 = vld [vmem:[%s513 + $0x16] sm:$0x1]
        %v605 = vld [vmem:[%s513 + $0x1a] sm:$0x1]
        %v606 = vld [vmem:[%s513 + $0x1e] sm:$0x1]
        %v607 = vld [vmem:[%s513 + $0x3] sm:$0x1]
        %v608 = vld [vmem:[%s513 + $0x7] sm:$0x1]
        %v609 = vld [vmem:[%s513 + $0xb] sm:$0x1]
        %v610 = vld [vmem:[%s513 + $0xf] sm:$0x1]
        %v611 = vld [vmem:[%s513 + $0x13] sm:$0x1]
        %v612 = vld [vmem:[%s513 + $0x17] sm:$0x1]
        %v613 = vld [vmem:[%s513 + $0x1b] sm:$0x1]
        %v614 = vld [vmem:[%s513 + $0x1f] sm:$0x1]
        %v623 = vrot.slane %v584, 7
        %vm624 = vcmask 1041409
        %v625 = vsel %vm624, %v623, %v583
        %v626 = vrot.slane %v585, 6
        %vm627 = vcmask 1042434
        %v628 = vsel %vm627, %v626, %v625
        %v629 = vrot.slane %v586, 5
        %vm630 = vcmask 1043459
        %v631 = vsel %vm630, %v629, %v628
        %v632 = vrot.slane %v587, 4
        %vm633 = vcmask 1044484
        %v634 = vsel %vm633, %v632, %v631
        %v635 = vrot.slane %v588, 3
        %vm636 = vcmask 1045509
        %v637 = vsel %vm636, %v635, %v634
        %v638 = vrot.slane %v589, 2
        %vm639 = vcmask 1046534
        %v640 = vsel %vm639, %v638, %v637
        %v641 = vrot.slane %v590, 1
        %vm642 = vcmask 1047559
        %v643 = vsel %vm642, %v641, %v640
        %v653 = vrot.slane %v592, 7
        %v654 = vsel %vm624, %v653, %v591
        %v655 = vrot.slane %v593, 6
        %v656 = vsel %vm627, %v655, %v654
        %v657 = vrot.slane %v594, 5
        %v658 = vsel %vm630, %v657, %v656
        %v659 = vrot.slane %v595, 4
        %v660 = vsel %vm633, %v659, %v658
        %v661 = vrot.slane %v596, 3
        %v662 = vsel %vm636, %v661, %v660
        %v663 = vrot.slane %v597, 2
        %v664 = vsel %vm639, %v663, %v662
        %v665 = vrot.slane %v598, 1
        %v666 = vsel %vm642, %v665, %v664
        %v676 = vrot.slane %v600, 7
        %v677 = vsel %vm624, %v676, %v599
        %v678 = vrot.slane %v601, 6
        %v679 = vsel %vm627, %v678, %v677
        %v680 = vrot.slane %v602, 5
        %v681 = vsel %vm630, %v680, %v679
        %v682 = vrot.slane %v603, 4
        %v683 = vsel %vm633, %v682, %v681
        %v684 = vrot.slane %v604, 3
        %v685 = vsel %vm636, %v684, %v683
        %v686 = vrot.slane %v605, 2
        %v687 = vsel %vm639, %v686, %v685
        %v688 = vrot.slane %v606, 1
        %v689 = vsel %vm642, %v688, %v687
        %v699 = vrot.slane %v608, 7
        %v700 = vsel %vm624, %v699, %v607
        %v701 = vrot.slane %v609, 6
        %v702 = vsel %vm627, %v701, %v700
        %v703 = vrot.slane %v610, 5
        %v704 = vsel %vm630, %v703, %v702
        %v705 = vrot.slane %v611, 4
        %v706 = vsel %vm633, %v705, %v704
        %v707 = vrot.slane %v612, 3
        %v708 = vsel %vm636, %v707, %v706
        %v709 = vrot.slane %v613, 2
        %v710 = vsel %vm639, %v709, %v708
        %v711 = vrot.slane %v614, 1
        %v712 = vsel %vm642, %v711, %v710
        %v714 = vld [vmem:[%s520] sm:$0x1]
        %v715 = vld [vmem:[%s520 + $0x4] sm:$0x1]
        %v716 = vld [vmem:[%s520 + $0x8] sm:$0x1]
        %v717 = vld [vmem:[%s520 + $0xc] sm:$0x1]
        %v718 = vld [vmem:[%s520 + $0x10] sm:$0x1]
        %v719 = vld [vmem:[%s520 + $0x14] sm:$0x1]
        %v720 = vld [vmem:[%s520 + $0x18] sm:$0x1]
        %v721 = vld [vmem:[%s520 + $0x1c] sm:$0x1]
        %v722 = vld [vmem:[%s520 + $0x1] sm:$0x1]
        %v723 = vld [vmem:[%s520 + $0x5] sm:$0x1]
        %v724 = vld [vmem:[%s520 + $0x9] sm:$0x1]
        %v725 = vld [vmem:[%s520 + $0xd] sm:$0x1]
        %v726 = vld [vmem:[%s520 + $0x11] sm:$0x1]
        %v727 = vld [vmem:[%s520 + $0x15] sm:$0x1]
        %v728 = vld [vmem:[%s520 + $0x19] sm:$0x1]
        %v729 = vld [vmem:[%s520 + $0x1d] sm:$0x1]
        %v730 = vld [vmem:[%s520 + $0x2] sm:$0x1]
        %v731 = vld [vmem:[%s520 + $0x6] sm:$0x1]
        %v732 = vld [vmem:[%s520 + $0xa] sm:$0x1]
        %v733 = vld [vmem:[%s520 + $0xe] sm:$0x1]
        %v734 = vld [vmem:[%s520 + $0x12] sm:$0x1]
        %v735 = vld [vmem:[%s520 + $0x16] sm:$0x1]
        %v736 = vld [vmem:[%s520 + $0x1a] sm:$0x1]
        %v737 = vld [vmem:[%s520 + $0x1e] sm:$0x1]
        %v738 = vld [vmem:[%s520 + $0x3] sm:$0x1]
        %v739 = vld [vmem:[%s520 + $0x7] sm:$0x1]
        %v740 = vld [vmem:[%s520 + $0xb] sm:$0x1]
        %v741 = vld [vmem:[%s520 + $0xf] sm:$0x1]
        %v742 = vld [vmem:[%s520 + $0x13] sm:$0x1]
        %v743 = vld [vmem:[%s520 + $0x17] sm:$0x1]
        %v744 = vld [vmem:[%s520 + $0x1b] sm:$0x1]
        %v745 = vld [vmem:[%s520 + $0x1f] sm:$0x1]
        %v754 = vrot.slane %v715, 7
        %v755 = vsel %vm624, %v754, %v714
        %v756 = vrot.slane %v716, 6
        %v757 = vsel %vm627, %v756, %v755
        %v758 = vrot.slane %v717, 5
        %v759 = vsel %vm630, %v758, %v757
        %v760 = vrot.slane %v718, 4
        %v761 = vsel %vm633, %v760, %v759
        %v762 = vrot.slane %v719, 3
        %v763 = vsel %vm636, %v762, %v761
        %v764 = vrot.slane %v720, 2
        %v765 = vsel %vm639, %v764, %v763
        %v766 = vrot.slane %v721, 1
        %v767 = vsel %vm642, %v766, %v765
        %v777 = vrot.slane %v723, 7
        %v778 = vsel %vm624, %v777, %v722
        %v779 = vrot.slane %v724, 6
        %v780 = vsel %vm627, %v779, %v778
        %v781 = vrot.slane %v725, 5
        %v782 = vsel %vm630, %v781, %v780
        %v783 = vrot.slane %v726, 4
        %v784 = vsel %vm633, %v783, %v782
        %v785 = vrot.slane %v727, 3
        %v786 = vsel %vm636, %v785, %v784
        %v787 = vrot.slane %v728, 2
        %v788 = vsel %vm639, %v787, %v786
        %v789 = vrot.slane %v729, 1
        %v790 = vsel %vm642, %v789, %v788
        %v800 = vrot.slane %v731, 7
        %v801 = vsel %vm624, %v800, %v730
        %v802 = vrot.slane %v732, 6
        %v803 = vsel %vm627, %v802, %v801
        %v804 = vrot.slane %v733, 5
        %v805 = vsel %vm630, %v804, %v803
        %v806 = vrot.slane %v734, 4
        %v807 = vsel %vm633, %v806, %v805
        %v808 = vrot.slane %v735, 3
        %v809 = vsel %vm636, %v808, %v807
        %v810 = vrot.slane %v736, 2
        %v811 = vsel %vm639, %v810, %v809
        %v812 = vrot.slane %v737, 1
        %v813 = vsel %vm642, %v812, %v811
        %v823 = vrot.slane %v739, 7
        %v824 = vsel %vm624, %v823, %v738
        %v825 = vrot.slane %v740, 6
        %v826 = vsel %vm627, %v825, %v824
        %v827 = vrot.slane %v741, 5
        %v828 = vsel %vm630, %v827, %v826
        %v829 = vrot.slane %v742, 4
        %v830 = vsel %vm633, %v829, %v828
        %v831 = vrot.slane %v743, 3
        %v832 = vsel %vm636, %v831, %v830
        %v833 = vrot.slane %v744, 2
        %v834 = vsel %vm639, %v833, %v832
        %v835 = vrot.slane %v745, 1
        %v836 = vsel %vm642, %v835, %v834
        %v838 = vld [vmem:[%s527] sm:$0x1]
        %v839 = vld [vmem:[%s527 + $0x4] sm:$0x1]
        %v840 = vld [vmem:[%s527 + $0x8] sm:$0x1]
        %v841 = vld [vmem:[%s527 + $0xc] sm:$0x1]
        %v842 = vld [vmem:[%s527 + $0x10] sm:$0x1]
        %v843 = vld [vmem:[%s527 + $0x14] sm:$0x1]
        %v844 = vld [vmem:[%s527 + $0x18] sm:$0x1]
        %v845 = vld [vmem:[%s527 + $0x1c] sm:$0x1]
        %v846 = vld [vmem:[%s527 + $0x1] sm:$0x1]
        %v847 = vld [vmem:[%s527 + $0x5] sm:$0x1]
        %v848 = vld [vmem:[%s527 + $0x9] sm:$0x1]
        %v849 = vld [vmem:[%s527 + $0xd] sm:$0x1]
        %v850 = vld [vmem:[%s527 + $0x11] sm:$0x1]
        %v851 = vld [vmem:[%s527 + $0x15] sm:$0x1]
        %v852 = vld [vmem:[%s527 + $0x19] sm:$0x1]
        %v853 = vld [vmem:[%s527 + $0x1d] sm:$0x1]
        %v854 = vld [vmem:[%s527 + $0x2] sm:$0x1]
        %v855 = vld [vmem:[%s527 + $0x6] sm:$0x1]
        %v856 = vld [vmem:[%s527 + $0xa] sm:$0x1]
        %v857 = vld [vmem:[%s527 + $0xe] sm:$0x1]
        %v858 = vld [vmem:[%s527 + $0x12] sm:$0x1]
        %v859 = vld [vmem:[%s527 + $0x16] sm:$0x1]
        %v860 = vld [vmem:[%s527 + $0x1a] sm:$0x1]
        %v861 = vld [vmem:[%s527 + $0x1e] sm:$0x1]
        %v862 = vld [vmem:[%s527 + $0x3] sm:$0x1]
        %v863 = vld [vmem:[%s527 + $0x7] sm:$0x1]
        %v864 = vld [vmem:[%s527 + $0xb] sm:$0x1]
        %v865 = vld [vmem:[%s527 + $0xf] sm:$0x1]
        %v866 = vld [vmem:[%s527 + $0x13] sm:$0x1]
        %v867 = vld [vmem:[%s527 + $0x17] sm:$0x1]
        %v868 = vld [vmem:[%s527 + $0x1b] sm:$0x1]
        %v869 = vld [vmem:[%s527 + $0x1f] sm:$0x1]
        %v878 = vrot.slane %v839, 7
        %v879 = vsel %vm624, %v878, %v838
        %v880 = vrot.slane %v840, 6
        %v881 = vsel %vm627, %v880, %v879
        %v882 = vrot.slane %v841, 5
        %v883 = vsel %vm630, %v882, %v881
        %v884 = vrot.slane %v842, 4
        %v885 = vsel %vm633, %v884, %v883
        %v886 = vrot.slane %v843, 3
        %v887 = vsel %vm636, %v886, %v885
        %v888 = vrot.slane %v844, 2
        %v889 = vsel %vm639, %v888, %v887
        %v890 = vrot.slane %v845, 1
        %v891 = vsel %vm642, %v890, %v889
        %v901 = vrot.slane %v847, 7
        %v902 = vsel %vm624, %v901, %v846
        %v903 = vrot.slane %v848, 6
        %v904 = vsel %vm627, %v903, %v902
        %v905 = vrot.slane %v849, 5
        %v906 = vsel %vm630, %v905, %v904
        %v907 = vrot.slane %v850, 4
        %v908 = vsel %vm633, %v907, %v906
        %v909 = vrot.slane %v851, 3
        %v910 = vsel %vm636, %v909, %v908
        %v911 = vrot.slane %v852, 2
        %v912 = vsel %vm639, %v911, %v910
        %v913 = vrot.slane %v853, 1
        %v914 = vsel %vm642, %v913, %v912
        %v924 = vrot.slane %v855, 7
        %v925 = vsel %vm624, %v924, %v854
        %v926 = vrot.slane %v856, 6
        %v927 = vsel %vm627, %v926, %v925
        %v928 = vrot.slane %v857, 5
        %v929 = vsel %vm630, %v928, %v927
        %v930 = vrot.slane %v858, 4
        %v931 = vsel %vm633, %v930, %v929
        %v932 = vrot.slane %v859, 3
        %v933 = vsel %vm636, %v932, %v931
        %v934 = vrot.slane %v860, 2
        %v935 = vsel %vm639, %v934, %v933
        %v936 = vrot.slane %v861, 1
        %v937 = vsel %vm642, %v936, %v935
        %v947 = vrot.slane %v863, 7
        %v948 = vsel %vm624, %v947, %v862
        %v949 = vrot.slane %v864, 6
        %v950 = vsel %vm627, %v949, %v948
        %v951 = vrot.slane %v865, 5
        %v952 = vsel %vm630, %v951, %v950
        %v953 = vrot.slane %v866, 4
        %v954 = vsel %vm633, %v953, %v952
        %v955 = vrot.slane %v867, 3
        %v956 = vsel %vm636, %v955, %v954
        %v957 = vrot.slane %v868, 2
        %v958 = vsel %vm639, %v957, %v956
        %v959 = vrot.slane %v869, 1
        %v960 = vsel %vm642, %v959, %v958
        %v962 = vld [vmem:[%s534] sm:$0x1]
        %v963 = vld [vmem:[%s534 + $0x4] sm:$0x1]
        %v964 = vld [vmem:[%s534 + $0x8] sm:$0x1]
        %v965 = vld [vmem:[%s534 + $0xc] sm:$0x1]
        %v966 = vld [vmem:[%s534 + $0x10] sm:$0x1]
        %v967 = vld [vmem:[%s534 + $0x14] sm:$0x1]
        %v968 = vld [vmem:[%s534 + $0x18] sm:$0x1]
        %v969 = vld [vmem:[%s534 + $0x1c] sm:$0x1]
        %v970 = vld [vmem:[%s534 + $0x1] sm:$0x1]
        %v971 = vld [vmem:[%s534 + $0x5] sm:$0x1]
        %v972 = vld [vmem:[%s534 + $0x9] sm:$0x1]
        %v973 = vld [vmem:[%s534 + $0xd] sm:$0x1]
        %v974 = vld [vmem:[%s534 + $0x11] sm:$0x1]
        %v975 = vld [vmem:[%s534 + $0x15] sm:$0x1]
        %v976 = vld [vmem:[%s534 + $0x19] sm:$0x1]
        %v977 = vld [vmem:[%s534 + $0x1d] sm:$0x1]
        %v978 = vld [vmem:[%s534 + $0x2] sm:$0x1]
        %v979 = vld [vmem:[%s534 + $0x6] sm:$0x1]
        %v980 = vld [vmem:[%s534 + $0xa] sm:$0x1]
        %v981 = vld [vmem:[%s534 + $0xe] sm:$0x1]
        %v982 = vld [vmem:[%s534 + $0x12] sm:$0x1]
        %v983 = vld [vmem:[%s534 + $0x16] sm:$0x1]
        %v984 = vld [vmem:[%s534 + $0x1a] sm:$0x1]
        %v985 = vld [vmem:[%s534 + $0x1e] sm:$0x1]
        %v986 = vld [vmem:[%s534 + $0x3] sm:$0x1]
        %v987 = vld [vmem:[%s534 + $0x7] sm:$0x1]
        %v988 = vld [vmem:[%s534 + $0xb] sm:$0x1]
        %v989 = vld [vmem:[%s534 + $0xf] sm:$0x1]
        %v990 = vld [vmem:[%s534 + $0x13] sm:$0x1]
        %v991 = vld [vmem:[%s534 + $0x17] sm:$0x1]
        %v992 = vld [vmem:[%s534 + $0x1b] sm:$0x1]
        %v993 = vld [vmem:[%s534 + $0x1f] sm:$0x1]
        %v1002 = vrot.slane %v963, 7
        %v1003 = vsel %vm624, %v1002, %v962
        %v1004 = vrot.slane %v964, 6
        %v1005 = vsel %vm627, %v1004, %v1003
        %v1006 = vrot.slane %v965, 5
        %v1007 = vsel %vm630, %v1006, %v1005
        %v1008 = vrot.slane %v966, 4
        %v1009 = vsel %vm633, %v1008, %v1007
        %v1010 = vrot.slane %v967, 3
        %v1011 = vsel %vm636, %v1010, %v1009
        %v1012 = vrot.slane %v968, 2
        %v1013 = vsel %vm639, %v1012, %v1011
        %v1014 = vrot.slane %v969, 1
        %v1015 = vsel %vm642, %v1014, %v1013
        %v1025 = vrot.slane %v971, 7
        %v1026 = vsel %vm624, %v1025, %v970
        %v1027 = vrot.slane %v972, 6
        %v1028 = vsel %vm627, %v1027, %v1026
        %v1029 = vrot.slane %v973, 5
        %v1030 = vsel %vm630, %v1029, %v1028
        %v1031 = vrot.slane %v974, 4
        %v1032 = vsel %vm633, %v1031, %v1030
        %v1033 = vrot.slane %v975, 3
        %v1034 = vsel %vm636, %v1033, %v1032
        %v1035 = vrot.slane %v976, 2
        %v1036 = vsel %vm639, %v1035, %v1034
        %v1037 = vrot.slane %v977, 1
        %v1038 = vsel %vm642, %v1037, %v1036
        %v1048 = vrot.slane %v979, 7
        %v1049 = vsel %vm624, %v1048, %v978
        %v1050 = vrot.slane %v980, 6
        %v1051 = vsel %vm627, %v1050, %v1049
        %v1052 = vrot.slane %v981, 5
        %v1053 = vsel %vm630, %v1052, %v1051
        %v1054 = vrot.slane %v982, 4
        %v1055 = vsel %vm633, %v1054, %v1053
        %v1056 = vrot.slane %v983, 3
        %v1057 = vsel %vm636, %v1056, %v1055
        %v1058 = vrot.slane %v984, 2
        %v1059 = vsel %vm639, %v1058, %v1057
        %v1060 = vrot.slane %v985, 1
        %v1061 = vsel %vm642, %v1060, %v1059
        %v1071 = vrot.slane %v987, 7
        %v1072 = vsel %vm624, %v1071, %v986
        %v1073 = vrot.slane %v988, 6
        %v1074 = vsel %vm627, %v1073, %v1072
        %v1075 = vrot.slane %v989, 5
        %v1076 = vsel %vm630, %v1075, %v1074
        %v1077 = vrot.slane %v990, 4
        %v1078 = vsel %vm633, %v1077, %v1076
        %v1079 = vrot.slane %v991, 3
        %v1080 = vsel %vm636, %v1079, %v1078
        %v1081 = vrot.slane %v992, 2
        %v1082 = vsel %vm639, %v1081, %v1080
        %v1083 = vrot.slane %v993, 1
        %v1084 = vsel %vm642, %v1083, %v1082
        %v1086 = vpack.c.bf16 %v666, %v643
        %v1087 = vpack.c.bf16 %v712, %v689
        %v1088 = vpack.c.bf16 %v790, %v767
        %v1089 = vpack.c.bf16 %v836, %v813
        %v1090 = vpack.c.bf16 %v914, %v891
        %v1091 = vpack.c.bf16 %v960, %v937
        %vm1092 = vcmask 64512
        %v1094 = vsel %vm1092, %v1086, 0
        %v1097 = vsel %vm1092, %v1087, 0
        %v1100 = vsel %vm1092, %v1088, 0
        %v1103 = vsel %vm1092, %v1089, 0
        %1105 = vmatprep.subr.bf16.mxu0 0
        %1106 = vmatpush1.bf16.xpose.msra.mxu0 0
        %1107 = vmatprep.subr.bf16.mxu0 0
        %1108 = vmatpush1.bf16.xpose.msra.mxu0 0
        %1109 = vmatprep.subr.bf16.mxu0 0
        %1110 = vmatpush1.bf16.xpose.msra.mxu0 0
        %1111 = vmatprep.subr.bf16.mxu0 0
        %1112 = vmatpush1.bf16.xpose.msra.mxu0 0
        %1113 = vmatprep.subr.bf16.mxu0 0
        %1114 = vmatpush1.bf16.xpose.msra.mxu0 0
        %1115 = vmatprep.subr.bf16.mxu0 0
        %1116 = vmatpush1.bf16.xpose.msra.mxu0 0
        %1117 = vmatprep.subr.bf16.mxu0 0
        %1118 = vmatpush1.bf16.xpose.msra.mxu0 %v1103
        %1119 = vmatprep.subr.bf16.mxu0 0
        %1120 = vmatpush1.bf16.xpose.msra.mxu0 %v1100
        %1121 = vmatprep.subr.bf16.mxu0 0
        %1122 = vmatpush2.bf16.xpose.msra.mxu0 0
        %1123 = vmatprep.subr.bf16.mxu0 0
        %1124 = vmatpush2.bf16.xpose.msra.mxu0 0
        %1125 = vmatprep.subr.bf16.mxu0 0
        %1126 = vmatpush2.bf16.xpose.msra.mxu0 0
        %1127 = vmatprep.subr.bf16.mxu0 0
        %1128 = vmatpush2.bf16.xpose.msra.mxu0 0
        %1129 = vmatprep.subr.bf16.mxu0 0
        %1130 = vmatpush2.bf16.xpose.msra.mxu0 0
        %1131 = vmatprep.subr.bf16.mxu0 0
        %1132 = vmatpush2.bf16.xpose.msra.mxu0 0
        %1133 = vmatprep.subr.bf16.mxu0 0
        %1134 = vmatpush2.bf16.xpose.msra.mxu0 0
        %1135 = vmatprep.subr.bf16.mxu0 0
        %1136 = vmatpush2.bf16.xpose.msra.mxu0 0
        %1137 = vmatprep.mubr.bf16.mxu0 0
        %1138 = vmatmul.mubr.bf16.gmra.mxu0 %v1094
        %v1139 = vpop.f32.mrf.mxu0
        %v1140 = vadd.f32 0.0, %v1139
        %v1141 = vpop.f32.mrf.mxu0
        %v1142 = vpop.f32.mrf.mxu0
        %v1143 = vadd.f32 0.0, %v1142
        %v1144 = vpop.f32.mrf.mxu0
        %1145 = vmatprep.mubr.bf16.mxu0 0
        %1146 = vmatmul.mubr.bf16.gmra.mxu0 %v1097
        %v1147 = vpop.f32.mrf.mxu0
        %v1148 = vadd.f32 0.0, %v1147
        %v1149 = vpop.f32.mrf.mxu0
        %v1150 = vpop.f32.mrf.mxu0
        %v1151 = vadd.f32 0.0, %v1150
        %v1152 = vpop.f32.mrf.mxu0
        %1153 = vdwg.mxu0
        %v1154 = vmul.f32 %v1140, 0.35355338
        %v1155 = vmul.f32 %v1143, 0.35355338
        %v1156 = vmul.f32 %v1148, 0.35355338
        %v1157 = vmul.f32 %v1151, 0.35355338
        %vm1158 = vcmask 261120
        %v1159 = vsel %vm1158, %v1154, -inf
        %1160 = vmax.xlane.f32.xlu0 %v1159
        %v1161 = vpop.xlane.xlu0 %1160
        %v1162 = vsel %vm1158, %v1155, -inf
        %1163 = vmax.xlane.f32.xlu0 %v1162
        %v1164 = vpop.xlane.xlu0 %1163
        %v1165 = vsel %vm1158, %v1156, -inf
        %1166 = vmax.xlane.f32.xlu0 %v1165
        %v1167 = vpop.xlane.xlu0 %1166
        %v1168 = vsel %vm1158, %v1157, -inf
        %1169 = vmax.xlane.f32.xlu0 %v1168
        %v1170 = vpop.xlane.xlu0 %1169
        %v1171 = vsub.f32 %v1154, %v1161
        %v1172 = vsub.f32 %v1155, %v1164
        %v1173 = vsub.f32 %v1156, %v1167
        %v1174 = vsub.f32 %v1157, %v1170
        %v1175 = vmul.f32 %v1171, 1.442695
        %v1176 = vpow.pop %v1175
        %v1177 = vmul.f32 %v1172, 1.442695
        %v1178 = vpow.pop %v1177
        %v1179 = vmul.f32 %v1173, 1.442695
        %v1180 = vpow.pop %v1179
        %v1181 = vmul.f32 %v1174, 1.442695
        %v1182 = vpow.pop %v1181
        %v1183 = vsel %vm1158, %v1176, 0.0
        %1184 = vadd.xlane.f32.xlu0 %v1183
        %v1185 = vpop.xlane.xlu0 %1184
        %v1186 = vsel %vm1158, %v1178, 0.0
        %1187 = vadd.xlane.f32.xlu0 %v1186
        %v1188 = vpop.xlane.xlu0 %1187
        %v1189 = vsel %vm1158, %v1180, 0.0
        %1190 = vadd.xlane.f32.xlu0 %v1189
        %v1191 = vpop.xlane.xlu0 %1190
        %v1192 = vsel %vm1158, %v1182, 0.0
        %1193 = vadd.xlane.f32.xlu0 %v1192
        %v1194 = vpop.xlane.xlu0 %1193
        %v1195 = vrcp.pop %v1185
        %v1196 = vrcp.pop %v1188
        %v1197 = vrcp.pop %v1191
        %v1198 = vrcp.pop %v1194
        %v1199 = vmul.f32 %v1176, %v1195
        %v1200 = vmul.f32 %v1178, %v1196
        %v1201 = vmul.f32 %v1180, %v1197
        %v1202 = vmul.f32 %v1182, %v1198
        %v1203 = vpack.c.bf16 %v1200, %v1199
        %v1204 = vpack.c.bf16 %v1202, %v1201
        %v1206 = vsel %vm1158, %v1203, 0
        %v1209 = vsel %vm1158, %v1204, 0
        %1211 = vmatprep.subr.bf16.mxu0 0
        %1212 = vmatpush1.bf16.msra.mxu0 0
        %1213 = vmatprep.subr.bf16.mxu0 0
        %1214 = vmatpush1.bf16.msra.mxu0 0
        %1215 = vmatprep.subr.bf16.mxu0 0
        %1216 = vmatpush1.bf16.msra.mxu0 0
        %1217 = vmatprep.subr.bf16.mxu0 0
        %1218 = vmatpush1.bf16.msra.mxu0 0
        %1219 = vmatprep.subr.bf16.mxu0 0
        %1220 = vmatpush1.bf16.msra.mxu0 0
        %1221 = vmatprep.subr.bf16.mxu0 0
        %1222 = vmatpush1.bf16.msra.mxu0 0
        %1223 = vmatprep.subr.bf16.mxu0 0
        %1224 = vmatpush1.bf16.msra.mxu0 %v1091
        %1225 = vmatprep.subr.bf16.mxu0 0
        %1226 = vmatpush1.bf16.msra.mxu0 %v1090
        %1227 = vmatprep.subr.bf16.mxu0 0
        %1228 = vmatpush2.bf16.msra.mxu0 0
        %1229 = vmatprep.subr.bf16.mxu0 0
        %1230 = vmatpush2.bf16.msra.mxu0 0
        %1231 = vmatprep.subr.bf16.mxu0 0
        %1232 = vmatpush2.bf16.msra.mxu0 0
        %1233 = vmatprep.subr.bf16.mxu0 0
        %1234 = vmatpush2.bf16.msra.mxu0 0
        %1235 = vmatprep.subr.bf16.mxu0 0
        %1236 = vmatpush2.bf16.msra.mxu0 0
        %1237 = vmatprep.subr.bf16.mxu0 0
        %1238 = vmatpush2.bf16.msra.mxu0 0
        %1239 = vmatprep.subr.bf16.mxu0 0
        %1240 = vmatpush2.bf16.msra.mxu0 0
        %1241 = vmatprep.subr.bf16.mxu0 0
        %1242 = vmatpush2.bf16.msra.mxu0 0
        %1243 = vmatprep.mubr.bf16.mxu0 0
        %1244 = vmatmul.mubr.bf16.gmra.mxu0 %v1206
        %v1245 = vpop.f32.mrf.mxu0
        %v1246 = vadd.f32 %v1015, %v1245
        %v1247 = vpop.f32.mrf.mxu0
        %v1248 = vpop.f32.mrf.mxu0
        %v1249 = vadd.f32 %v1038, %v1248
        %v1250 = vpop.f32.mrf.mxu0
        %1251 = vmatprep.mubr.bf16.mxu0 0
        %1252 = vmatmul.mubr.bf16.gmra.mxu0 %v1209
        %v1253 = vpop.f32.mrf.mxu0
        %v1254 = vadd.f32 %v1061, %v1253
        %v1255 = vpop.f32.mrf.mxu0
        %v1256 = vpop.f32.mrf.mxu0
        %v1257 = vadd.f32 %v1084, %v1256
        %v1258 = vpop.f32.mrf.mxu0
        %1259 = vdwg.mxu0
        %1262 = vrot.lane.b32.xlu0 %v1086, 120
        %v1263 = vpop.permute.xlu0 %1262
        %1264 = vrot.lane.b32.xlu0 %v1087, 120
        %v1265 = vpop.permute.xlu0 %1264
        %1268 = vrot.lane.b32.xlu0 %v1088, 120
        %v1269 = vpop.permute.xlu0 %1268
        %1270 = vrot.lane.b32.xlu0 %v1089, 120
        %v1271 = vpop.permute.xlu0 %1270
        %v1273 = vsel %vm1092, %v1263, 0
        %v1276 = vsel %vm1092, %v1265, 0
        %v1279 = vsel %vm1092, %v1269, 0
        %v1282 = vsel %vm1092, %v1271, 0
        %1284 = vmatprep.subr.bf16.mxu0 0
        %1285 = vmatpush1.bf16.xpose.msra.mxu0 0
        %1286 = vmatprep.subr.bf16.mxu0 0
        %1287 = vmatpush1.bf16.xpose.msra.mxu0 0
        %1288 = vmatprep.subr.bf16.mxu0 0
        %1289 = vmatpush1.bf16.xpose.msra.mxu0 0
        %1290 = vmatprep.subr.bf16.mxu0 0
        %1291 = vmatpush1.bf16.xpose.msra.mxu0 0
        %1292 = vmatprep.subr.bf16.mxu0 0
        %1293 = vmatpush1.bf16.xpose.msra.mxu0 0
        %1294 = vmatprep.subr.bf16.mxu0 0
        %1295 = vmatpush1.bf16.xpose.msra.mxu0 0
        %1296 = vmatprep.subr.bf16.mxu0 0
        %1297 = vmatpush1.bf16.xpose.msra.mxu0 %v1282
        %1298 = vmatprep.subr.bf16.mxu0 0
        %1299 = vmatpush1.bf16.xpose.msra.mxu0 %v1279
        %1300 = vmatprep.subr.bf16.mxu0 0
        %1301 = vmatpush2.bf16.xpose.msra.mxu0 0
        %1302 = vmatprep.subr.bf16.mxu0 0
        %1303 = vmatpush2.bf16.xpose.msra.mxu0 0
        %1304 = vmatprep.subr.bf16.mxu0 0
        %1305 = vmatpush2.bf16.xpose.msra.mxu0 0
        %1306 = vmatprep.subr.bf16.mxu0 0
        %1307 = vmatpush2.bf16.xpose.msra.mxu0 0
        %1308 = vmatprep.subr.bf16.mxu0 0
        %1309 = vmatpush2.bf16.xpose.msra.mxu0 0
        %1310 = vmatprep.subr.bf16.mxu0 0
        %1311 = vmatpush2.bf16.xpose.msra.mxu0 0
        %1312 = vmatprep.subr.bf16.mxu0 0
        %1313 = vmatpush2.bf16.xpose.msra.mxu0 0
        %1314 = vmatprep.subr.bf16.mxu0 0
        %1315 = vmatpush2.bf16.xpose.msra.mxu0 0
        %1316 = vmatprep.mubr.bf16.mxu0 0
        %1317 = vmatmul.mubr.bf16.gmra.mxu0 %v1273
        %v1318 = vpop.f32.mrf.mxu0
        %v1319 = vadd.f32 0.0, %v1318
        %v1320 = vpop.f32.mrf.mxu0
        %v1321 = vpop.f32.mrf.mxu0
        %v1322 = vadd.f32 0.0, %v1321
        %v1323 = vpop.f32.mrf.mxu0
        %1324 = vmatprep.mubr.bf16.mxu0 0
        %1325 = vmatmul.mubr.bf16.gmra.mxu0 %v1276
        %v1326 = vpop.f32.mrf.mxu0
        %v1327 = vadd.f32 0.0, %v1326
        %v1328 = vpop.f32.mrf.mxu0
        %v1329 = vpop.f32.mrf.mxu0
        %v1330 = vadd.f32 0.0, %v1329
        %v1331 = vpop.f32.mrf.mxu0
        %1332 = vdwg.mxu0
        %v1333 = vmul.f32 %v1319, 0.35355338
        %v1334 = vmul.f32 %v1322, 0.35355338
        %v1335 = vmul.f32 %v1327, 0.35355338
        %v1336 = vmul.f32 %v1330, 0.35355338
        %v1337 = vsel %vm1158, %v1333, -inf
        %1338 = vmax.xlane.f32.xlu0 %v1337
        %v1339 = vpop.xlane.xlu0 %1338
        %v1340 = vsel %vm1158, %v1334, -inf
        %1341 = vmax.xlane.f32.xlu0 %v1340
        %v1342 = vpop.xlane.xlu0 %1341
        %v1343 = vsel %vm1158, %v1335, -inf
        %1344 = vmax.xlane.f32.xlu0 %v1343
        %v1345 = vpop.xlane.xlu0 %1344
        %v1346 = vsel %vm1158, %v1336, -inf
        %1347 = vmax.xlane.f32.xlu0 %v1346
        %v1348 = vpop.xlane.xlu0 %1347
        %v1349 = vsub.f32 %v1333, %v1339
        %v1350 = vsub.f32 %v1334, %v1342
        %v1351 = vsub.f32 %v1335, %v1345
        %v1352 = vsub.f32 %v1336, %v1348
        %v1353 = vmul.f32 %v1349, 1.442695
        %v1354 = vpow.pop %v1353
        %v1355 = vmul.f32 %v1350, 1.442695
        %v1356 = vpow.pop %v1355
        %v1357 = vmul.f32 %v1351, 1.442695
        %v1358 = vpow.pop %v1357
        %v1359 = vmul.f32 %v1352, 1.442695
        %v1360 = vpow.pop %v1359
        %v1361 = vsel %vm1158, %v1354, 0.0
        %1362 = vadd.xlane.f32.xlu0 %v1361
        %v1363 = vpop.xlane.xlu0 %1362
        %v1364 = vsel %vm1158, %v1356, 0.0
        %1365 = vadd.xlane.f32.xlu0 %v1364
        %v1366 = vpop.xlane.xlu0 %1365
        %v1367 = vsel %vm1158, %v1358, 0.0
        %1368 = vadd.xlane.f32.xlu0 %v1367
        %v1369 = vpop.xlane.xlu0 %1368
        %v1370 = vsel %vm1158, %v1360, 0.0
        %1371 = vadd.xlane.f32.xlu0 %v1370
        %v1372 = vpop.xlane.xlu0 %1371
        %v1373 = vrcp.pop %v1363
        %v1374 = vrcp.pop %v1366
        %v1375 = vrcp.pop %v1369
        %v1376 = vrcp.pop %v1372
        %v1377 = vmul.f32 %v1354, %v1373
        %v1378 = vmul.f32 %v1356, %v1374
        %v1379 = vmul.f32 %v1358, %v1375
        %v1380 = vmul.f32 %v1360, %v1376
        %v1381 = vpack.c.bf16 %v1378, %v1377
        %v1382 = vpack.c.bf16 %v1380, %v1379
        %1385 = vrot.lane.b32.xlu0 %v1090, 120
        %v1386 = vpop.permute.xlu0 %1385
        %1387 = vrot.lane.b32.xlu0 %v1091, 120
        %v1388 = vpop.permute.xlu0 %1387
        %1391 = vrot.lane.b32.xlu0 %v1015, 120
        %v1392 = vpop.permute.xlu0 %1391
        %1393 = vrot.lane.b32.xlu0 %v1038, 120
        %v1394 = vpop.permute.xlu0 %1393
        %1395 = vrot.lane.b32.xlu0 %v1061, 120
        %v1396 = vpop.permute.xlu0 %1395
        %1397 = vrot.lane.b32.xlu0 %v1084, 120
        %v1398 = vpop.permute.xlu0 %1397
        %v1404 = vsel %vm1158, %v1381, 0
        %v1407 = vsel %vm1158, %v1382, 0
        %1409 = vmatprep.subr.bf16.mxu0 0
        %1410 = vmatpush1.bf16.msra.mxu0 0
        %1411 = vmatprep.subr.bf16.mxu0 0
        %1412 = vmatpush1.bf16.msra.mxu0 0
        %1413 = vmatprep.subr.bf16.mxu0 0
        %1414 = vmatpush1.bf16.msra.mxu0 0
        %1415 = vmatprep.subr.bf16.mxu0 0
        %1416 = vmatpush1.bf16.msra.mxu0 0
        %1417 = vmatprep.subr.bf16.mxu0 0
        %1418 = vmatpush1.bf16.msra.mxu0 0
        %1419 = vmatprep.subr.bf16.mxu0 0
        %1420 = vmatpush1.bf16.msra.mxu0 0
        %1421 = vmatprep.subr.bf16.mxu0 0
        %1422 = vmatpush1.bf16.msra.mxu0 %v1388
        %1423 = vmatprep.subr.bf16.mxu0 0
        %1424 = vmatpush1.bf16.msra.mxu0 %v1386
        %1425 = vmatprep.subr.bf16.mxu0 0
        %1426 = vmatpush2.bf16.msra.mxu0 0
        %1427 = vmatprep.subr.bf16.mxu0 0
        %1428 = vmatpush2.bf16.msra.mxu0 0
        %1429 = vmatprep.subr.bf16.mxu0 0
        %1430 = vmatpush2.bf16.msra.mxu0 0
        %1431 = vmatprep.subr.bf16.mxu0 0
        %1432 = vmatpush2.bf16.msra.mxu0 0
        %1433 = vmatprep.subr.bf16.mxu0 0
        %1434 = vmatpush2.bf16.msra.mxu0 0
        %1435 = vmatprep.subr.bf16.mxu0 0
        %1436 = vmatpush2.bf16.msra.mxu0 0
        %1437 = vmatprep.subr.bf16.mxu0 0
        %1438 = vmatpush2.bf16.msra.mxu0 0
        %1439 = vmatprep.subr.bf16.mxu0 0
        %1440 = vmatpush2.bf16.msra.mxu0 0
        %1441 = vmatprep.mubr.bf16.mxu0 0
        %1442 = vmatmul.mubr.bf16.gmra.mxu0 %v1404
        %v1443 = vpop.f32.mrf.mxu0
        %v1444 = vadd.f32 %v1392, %v1443
        %v1445 = vpop.f32.mrf.mxu0
        %v1446 = vpop.f32.mrf.mxu0
        %v1447 = vadd.f32 %v1394, %v1446
        %v1448 = vpop.f32.mrf.mxu0
        %1449 = vmatprep.mubr.bf16.mxu0 0
        %1450 = vmatmul.mubr.bf16.gmra.mxu0 %v1407
        %v1451 = vpop.f32.mrf.mxu0
        %v1452 = vadd.f32 %v1396, %v1451
        %v1453 = vpop.f32.mrf.mxu0
        %v1454 = vpop.f32.mrf.mxu0
        %v1455 = vadd.f32 %v1398, %v1454
        %v1456 = vpop.f32.mrf.mxu0
        %1457 = vdwg.mxu0
        %1462 = vrot.lane.b32.xlu0 %v1444, 8
        %v1463 = vpop.permute.xlu0 %1462
        %1464 = vrot.lane.b32.xlu0 %v1447, 8
        %v1465 = vpop.permute.xlu0 %1464
        %1466 = vrot.lane.b32.xlu0 %v1452, 8
        %v1467 = vpop.permute.xlu0 %1466
        %1468 = vrot.lane.b32.xlu0 %v1455, 8
        %v1469 = vpop.permute.xlu0 %1468
        %v1474 = vsel %vm1092, %v1246, %v1463
        %v1475 = vsel %vm1092, %v1249, %v1465
        %v1476 = vsel %vm1092, %v1254, %v1467
        %v1477 = vsel %vm1092, %v1257, %v1469
        %vm1478 = vcmask 130048
        %1479 = vst.msk [vmem:[%s581] sm:$0xff] %vm1478, %v1474
        %1480 = vst.msk [vmem:[%s581 + $0x8] sm:$0xff] %vm1478, %v1475
        %1481 = vst.msk [vmem:[%s581 + $0x10] sm:$0xff] %vm1478, %v1476
        %1482 = vst.msk [vmem:[%s581 + $0x18] sm:$0xff] %vm1478, %v1477
        %p1483 = scmp.lt.s32.totalorder %s19, 1
        %s1484 = scalar_select %p1483, %s19, 1
        %p1485 = scmp.lt.s32.totalorder %s20, 1
        %s1486 = scalar_select %p1485, %s20, 1
        %s1487 = smul.addr %s1486, 4
        %s1488 = smul.addr %s1484, 8
        %s1489 = sadd.s32 %s1487, %s1488
        %s1490 = smul.addr %s1489, 8
        %s1491 = scalar_lea.vmem %s4, %s1490
        // Predicated region
        $region201: #{anisotropic_attention_forward.11} parent=183 // pred_check
          %p1492 = pneg %p159
        $region202: #{anisotropic_attention_forward.11} parent=183 // pred_check_branch
          %1494 = sbr.rel (%p1492) target = $region204
        $region203: #{anisotropic_attention_forward.11} parent=183 // pred_region
          _
        $region204: #{anisotropic_attention_forward.11} parent=183 // pred_fallthru
          _
      $region184: #{anisotropic_attention_forward.11} parent=5 // pred_fallthru
        _
      %p1495 = scmp.le.s32.totalorder 2, %s10
      // Predicated region
      $region205: #{anisotropic_attention_forward.11} parent=5 // pred_check
        %p1496 = pneg %p1495
      $region206: #{anisotropic_attention_forward.11} parent=5 // pred_check_branch
        %1498 = sbr.rel (%p1496) target = $region208
      $region207: #{anisotropic_attention_forward.11} parent=5 // pred_region
        %s1499 = ssub.s32 %s10, 2
        // Predicated region
        $region209: #{anisotropic_attention_forward.11} parent=207 // pred_check
          %p1500 = pneg %p165
        $region210: #{anisotropic_attention_forward.11} parent=207 // pred_check_branch
          %1502 = sbr.rel (%p1500) target = $region212
        $region211: #{anisotropic_attention_forward.11} parent=207 // pred_region
          %p1503 = scmp.lt.s32.totalorder %s21, 1
          %s1504 = scalar_select %p1503, %s21, 1
          %p1505 = scmp.lt.s32.totalorder %s22, 1
          %s1506 = scalar_select %p1505, %s22, 1
          %s1507 = smul.addr %s1506, 4
          %s1508 = smul.addr %s1504, 8
          %s1509 = sadd.s32 %s1507, %s1508
          %s1510 = smul.addr %s1509, 8
          %s1511 = scalar_lea.vmem %s4, %s1510
        $region212: #{anisotropic_attention_forward.11} parent=207 // pred_fallthru
          _
      $region208: #{anisotropic_attention_forward.11} parent=5 // pred_fallthru
        _
    $region6: #{anisotropic_attention_forward.11} parent=1 // loop_footer
      %s14 = sadd.s32 1, %s10
    $region7: #{anisotropic_attention_forward.11} parent=1 // loop_footer_branch
      %9 = sbr.rel target = $region3
    $region8: #{anisotropic_attention_forward.11} parent=1 // loop_exit
      _

// kernel: anisotropic_attention_forward.13
$region0: #{anisotropic_attention_forward.13}
  #allocation0 [shape = 'u32[]', space=smem, size = 0x4, offset = 0x4, fixed_abs, tag = 'smem constant byte address 0x4 - core index']
  #allocation1 [shape = 'u32[144,128]{1,0:T(1,128)}', space=vmem, size = 0x12000, scoped, tag = 'internal scratch']
  %s0 = inlined_call_operand.vmem [shape: f32[128,16], index: 0, kind: input, shape index: {}]
  %s1 = inlined_call_operand.vmem [shape: f32[128,16], index: 1, kind: input, shape index: {}]
  %s2 = inlined_call_operand.vmem [shape: f32[2,16,32], index: 2, kind: input, shape index: {}, may-alias: {2,3}]
  %s3 = inlined_call_operand.vmem [shape: f32[2,16,32], index: 3, kind: input, shape index: {}, may-alias: {2,3}]
  %s4 = inlined_call_operand.vmem [shape: f32[1,32], index: 4, kind: input, shape index: {}]
  %s5 = inlined_call_operand.vmem [shape: f32[128,32], index: 5, kind: input, shape index: {}]
  %s6 = inlined_call_operand.vmem [shape: f32[128,32], index: 6, kind: output, shape index: {}]
  %s7 = sld [smem:[#allocation0]]
  $region34: #{anisotropic_attention_forward.13} parent=0
    _
  %s9 = ssub.s32 1, %s7
  %s10 = scalar_select 0, %s9, %s7
  // Predicated region
  $region2: #{anisotropic_attention_forward.13} parent=0 // pred_check
    _
  $region3: #{anisotropic_attention_forward.13} parent=0 // pred_check_branch
    %12 = sbr.rel (0) target = $region5
  $region4: #{anisotropic_attention_forward.13} parent=0 // pred_region
    _
  $region5: #{anisotropic_attention_forward.13} parent=0 // pred_fallthru
    _
  // Predicated region
  $region6: #{anisotropic_attention_forward.13} parent=0 // pred_check
    _
  $region7: #{anisotropic_attention_forward.13} parent=0 // pred_check_branch
    %14 = sbr.rel (0) target = $region9
  $region8: #{anisotropic_attention_forward.13} parent=0 // pred_region
    _
  $region9: #{anisotropic_attention_forward.13} parent=0 // pred_fallthru
    _
  // Predicated region
  $region10: #{anisotropic_attention_forward.13} parent=0 // pred_check
    _
  $region11: #{anisotropic_attention_forward.13} parent=0 // pred_check_branch
    %16 = sbr.rel (0) target = $region13
  $region12: #{anisotropic_attention_forward.13} parent=0 // pred_region
    _
  $region13: #{anisotropic_attention_forward.13} parent=0 // pred_fallthru
    _
  // Predicated region
  $region14: #{anisotropic_attention_forward.13} parent=0 // pred_check
    _
  $region15: #{anisotropic_attention_forward.13} parent=0 // pred_check_branch
    %18 = sbr.rel (0) target = $region17
  $region16: #{anisotropic_attention_forward.13} parent=0 // pred_region
    %s19 = scalar_lea.vmem %s3, 16
  $region17: #{anisotropic_attention_forward.13} parent=0 // pred_fallthru
    _
  // Predicated region
  $region18: #{anisotropic_attention_forward.13} parent=0 // pred_check
    _
  $region19: #{anisotropic_attention_forward.13} parent=0 // pred_check_branch
    %21 = sbr.rel (0) target = $region21
  $region20: #{anisotropic_attention_forward.13} parent=0 // pred_region
    _
  $region21: #{anisotropic_attention_forward.13} parent=0 // pred_fallthru
    _
  // Predicated region
  $region22: #{anisotropic_attention_forward.13} parent=0 // pred_check
    _
  $region23: #{anisotropic_attention_forward.13} parent=0 // pred_check_branch
    %23 = sbr.rel (0) target = $region25
  $region24: #{anisotropic_attention_forward.13} parent=0 // pred_region
    _
  $region25: #{anisotropic_attention_forward.13} parent=0 // pred_fallthru
    _
  %s24 = scalar_lea.vmem %s3, 16
  %s25 = scalar_lea.vmem %s3, 16
  %v27 = vld [vmem:[%s0] sm:$0xff]
  %v28 = vld [vmem:[%s0 + $0x8] sm:$0xff]
  %v29 = vld [vmem:[%s0 + $0x10] sm:$0xff]
  %v30 = vld [vmem:[%s0 + $0x18] sm:$0xff]
  %v31 = vld [vmem:[%s0 + $0x20] sm:$0xff]
  %v32 = vld [vmem:[%s0 + $0x28] sm:$0xff]
  %v33 = vld [vmem:[%s0 + $0x30] sm:$0xff]
  %v34 = vld [vmem:[%s0 + $0x38] sm:$0xff]
  %v35 = vld [vmem:[%s0 + $0x40] sm:$0xff]
  %v36 = vld [vmem:[%s0 + $0x48] sm:$0xff]
  %v37 = vld [vmem:[%s0 + $0x50] sm:$0xff]
  %v38 = vld [vmem:[%s0 + $0x58] sm:$0xff]
  %v39 = vld [vmem:[%s0 + $0x60] sm:$0xff]
  %v40 = vld [vmem:[%s0 + $0x68] sm:$0xff]
  %v41 = vld [vmem:[%s0 + $0x70] sm:$0xff]
  %v42 = vld [vmem:[%s0 + $0x78] sm:$0xff]
  %v43 = vpack.c.bf16 %v28, %v27
  %v44 = vpack.c.bf16 %v30, %v29
  %v45 = vpack.c.bf16 %v32, %v31
  %v46 = vpack.c.bf16 %v34, %v33
  %v47 = vpack.c.bf16 %v36, %v35
  %v48 = vpack.c.bf16 %v38, %v37
  %v49 = vpack.c.bf16 %v40, %v39
  %v50 = vpack.c.bf16 %v42, %v41
  %v51 = vld [vmem:[%s2] sm:$0xff]
  %v52 = vld [vmem:[%s2 + $0x8] sm:$0xff]
  %v53 = vpack.c.bf16 %v52, %v51
  %v54 = vld [vmem:[%s1] sm:$0xff]
  %v55 = vld [vmem:[%s1 + $0x8] sm:$0xff]
  %v56 = vld [vmem:[%s1 + $0x10] sm:$0xff]
  %v57 = vld [vmem:[%s1 + $0x18] sm:$0xff]
  %v58 = vld [vmem:[%s1 + $0x20] sm:$0xff]
  %v59 = vld [vmem:[%s1 + $0x28] sm:$0xff]
  %v60 = vld [vmem:[%s1 + $0x30] sm:$0xff]
  %v61 = vld [vmem:[%s1 + $0x38] sm:$0xff]
  %v62 = vld [vmem:[%s1 + $0x40] sm:$0xff]
  %v63 = vld [vmem:[%s1 + $0x48] sm:$0xff]
  %v64 = vld [vmem:[%s1 + $0x50] sm:$0xff]
  %v65 = vld [vmem:[%s1 + $0x58] sm:$0xff]
  %v66 = vld [vmem:[%s1 + $0x60] sm:$0xff]
  %v67 = vld [vmem:[%s1 + $0x68] sm:$0xff]
  %v68 = vld [vmem:[%s1 + $0x70] sm:$0xff]
  %v69 = vld [vmem:[%s1 + $0x78] sm:$0xff]
  %v70 = vpack.c.bf16 %v55, %v54
  %v71 = vpack.c.bf16 %v57, %v56
  %v72 = vpack.c.bf16 %v59, %v58
  %v73 = vpack.c.bf16 %v61, %v60
  %v74 = vpack.c.bf16 %v63, %v62
  %v75 = vpack.c.bf16 %v65, %v64
  %v76 = vpack.c.bf16 %v67, %v66
  %v77 = vpack.c.bf16 %v69, %v68
  %v78 = vld [vmem:[%s25] sm:$0xff]
  %v79 = vld [vmem:[%s25 + $0x8] sm:$0xff]
  %v80 = vpack.c.bf16 %v79, %v78
  %vm81 = vcmask 130048
  %v83 = vsel %vm81, %v70, 0
  %v86 = vsel %vm81, %v71, 0
  %v89 = vsel %vm81, %v72, 0
  %v92 = vsel %vm81, %v73, 0
  %v95 = vsel %vm81, %v74, 0
  %v98 = vsel %vm81, %v75, 0
  %v101 = vsel %vm81, %v76, 0
  %v104 = vsel %vm81, %v77, 0
  %106 = vmatprep.subr.bf16.mxu0 0
  %107 = vmatpush1.bf16.msra.mxu0 0
  %108 = vmatprep.subr.bf16.mxu0 0
  %109 = vmatpush1.bf16.msra.mxu0 0
  %110 = vmatprep.subr.bf16.mxu0 0
  %111 = vmatpush1.bf16.msra.mxu0 0
  %112 = vmatprep.subr.bf16.mxu0 0
  %113 = vmatpush1.bf16.msra.mxu0 0
  %114 = vmatprep.subr.bf16.mxu0 0
  %115 = vmatpush1.bf16.msra.mxu0 0
  %116 = vmatprep.subr.bf16.mxu0 0
  %117 = vmatpush1.bf16.msra.mxu0 0
  %118 = vmatprep.subr.bf16.mxu0 0
  %119 = vmatpush1.bf16.msra.mxu0 0
  %120 = vmatprep.subr.bf16.mxu0 0
  %121 = vmatpush1.bf16.msra.mxu0 %v80
  %122 = vmatprep.subr.bf16.mxu0 0
  %123 = vmatpush2.bf16.msra.mxu0 0
  %124 = vmatprep.subr.bf16.mxu0 0
  %125 = vmatpush2.bf16.msra.mxu0 0
  %126 = vmatprep.subr.bf16.mxu0 0
  %127 = vmatpush2.bf16.msra.mxu0 0
  %128 = vmatprep.subr.bf16.mxu0 0
  %129 = vmatpush2.bf16.msra.mxu0 0
  %130 = vmatprep.subr.bf16.mxu0 0
  %131 = vmatpush2.bf16.msra.mxu0 0
  %132 = vmatprep.subr.bf16.mxu0 0
  %133 = vmatpush2.bf16.msra.mxu0 0
  %134 = vmatprep.subr.bf16.mxu0 0
  %135 = vmatpush2.bf16.msra.mxu0 0
  %136 = vmatprep.subr.bf16.mxu0 0
  %137 = vmatpush2.bf16.msra.mxu0 0
  %138 = vmatprep.mubr.bf16.mxu0 0
  %139 = vmatmul.mubr.bf16.gmra.mxu0 %v83
  %v140 = vpop.f32.mrf.mxu0
  %v141 = vadd.f32 0.0, %v140
  %v142 = vpop.f32.mrf.mxu0
  %v143 = vpop.f32.mrf.mxu0
  %v144 = vadd.f32 0.0, %v143
  %v145 = vpop.f32.mrf.mxu0
  %146 = vmatprep.mubr.bf16.mxu0 0
  %147 = vmatmul.mubr.bf16.gmra.mxu0 %v86
  %v148 = vpop.f32.mrf.mxu0
  %v149 = vadd.f32 0.0, %v148
  %v150 = vpop.f32.mrf.mxu0
  %v151 = vpop.f32.mrf.mxu0
  %v152 = vadd.f32 0.0, %v151
  %v153 = vpop.f32.mrf.mxu0
  %154 = vmatprep.mubr.bf16.mxu0 0
  %155 = vmatmul.mubr.bf16.gmra.mxu0 %v89
  %v156 = vpop.f32.mrf.mxu0
  %v157 = vadd.f32 0.0, %v156
  %v158 = vpop.f32.mrf.mxu0
  %v159 = vpop.f32.mrf.mxu0
  %v160 = vadd.f32 0.0, %v159
  %v161 = vpop.f32.mrf.mxu0
  %162 = vmatprep.mubr.bf16.mxu0 0
  %163 = vmatmul.mubr.bf16.gmra.mxu0 %v92
  %v164 = vpop.f32.mrf.mxu0
  %v165 = vadd.f32 0.0, %v164
  %v166 = vpop.f32.mrf.mxu0
  %v167 = vpop.f32.mrf.mxu0
  %v168 = vadd.f32 0.0, %v167
  %v169 = vpop.f32.mrf.mxu0
  %170 = vmatprep.mubr.bf16.mxu0 0
  %171 = vmatmul.mubr.bf16.gmra.mxu0 %v95
  %v172 = vpop.f32.mrf.mxu0
  %v173 = vadd.f32 0.0, %v172
  %v174 = vpop.f32.mrf.mxu0
  %v175 = vpop.f32.mrf.mxu0
  %v176 = vadd.f32 0.0, %v175
  %v177 = vpop.f32.mrf.mxu0
  %178 = vmatprep.mubr.bf16.mxu0 0
  %179 = vmatmul.mubr.bf16.gmra.mxu0 %v98
  %v180 = vpop.f32.mrf.mxu0
  %v181 = vadd.f32 0.0, %v180
  %v182 = vpop.f32.mrf.mxu0
  %v183 = vpop.f32.mrf.mxu0
  %v184 = vadd.f32 0.0, %v183
  %v185 = vpop.f32.mrf.mxu0
  %186 = vmatprep.mubr.bf16.mxu0 0
  %187 = vmatmul.mubr.bf16.gmra.mxu0 %v101
  %v188 = vpop.f32.mrf.mxu0
  %v189 = vadd.f32 0.0, %v188
  %v190 = vpop.f32.mrf.mxu0
  %v191 = vpop.f32.mrf.mxu0
  %v192 = vadd.f32 0.0, %v191
  %v193 = vpop.f32.mrf.mxu0
  %194 = vmatprep.mubr.bf16.mxu0 0
  %195 = vmatmul.mubr.bf16.gmra.mxu0 %v104
  %v196 = vpop.f32.mrf.mxu0
  %v197 = vadd.f32 0.0, %v196
  %v198 = vpop.f32.mrf.mxu0
  %v199 = vpop.f32.mrf.mxu0
  %v200 = vadd.f32 0.0, %v199
  %v201 = vpop.f32.mrf.mxu0
  %202 = vdwg.mxu0
  %v204 = vsel %vm81, %v43, 0
  %v207 = vsel %vm81, %v44, 0
  %v210 = vsel %vm81, %v45, 0
  %v213 = vsel %vm81, %v46, 0
  %v216 = vsel %vm81, %v47, 0
  %v219 = vsel %vm81, %v48, 0
  %v222 = vsel %vm81, %v49, 0
  %v225 = vsel %vm81, %v50, 0
  %227 = vmatprep.subr.bf16.mxu0 0
  %228 = vmatpush1.bf16.msra.mxu0 0
  %229 = vmatprep.subr.bf16.mxu0 0
  %230 = vmatpush1.bf16.msra.mxu0 0
  %231 = vmatprep.subr.bf16.mxu0 0
  %232 = vmatpush1.bf16.msra.mxu0 0
  %233 = vmatprep.subr.bf16.mxu0 0
  %234 = vmatpush1.bf16.msra.mxu0 0
  %235 = vmatprep.subr.bf16.mxu0 0
  %236 = vmatpush1.bf16.msra.mxu0 0
  %237 = vmatprep.subr.bf16.mxu0 0
  %238 = vmatpush1.bf16.msra.mxu0 0
  %239 = vmatprep.subr.bf16.mxu0 0
  %240 = vmatpush1.bf16.msra.mxu0 0
  %241 = vmatprep.subr.bf16.mxu0 0
  %242 = vmatpush1.bf16.msra.mxu0 %v53
  %243 = vmatprep.subr.bf16.mxu0 0
  %244 = vmatpush2.bf16.msra.mxu0 0
  %245 = vmatprep.subr.bf16.mxu0 0
  %246 = vmatpush2.bf16.msra.mxu0 0
  %247 = vmatprep.subr.bf16.mxu0 0
  %248 = vmatpush2.bf16.msra.mxu0 0
  %249 = vmatprep.subr.bf16.mxu0 0
  %250 = vmatpush2.bf16.msra.mxu0 0
  %251 = vmatprep.subr.bf16.mxu0 0
  %252 = vmatpush2.bf16.msra.mxu0 0
  %253 = vmatprep.subr.bf16.mxu0 0
  %254 = vmatpush2.bf16.msra.mxu0 0
  %255 = vmatprep.subr.bf16.mxu0 0
  %256 = vmatpush2.bf16.msra.mxu0 0
  %257 = vmatprep.subr.bf16.mxu0 0
  %258 = vmatpush2.bf16.msra.mxu0 0
  %259 = vmatprep.mubr.bf16.mxu0 0
  %260 = vmatmul.mubr.bf16.gmra.mxu0 %v204
  %v261 = vpop.f32.mrf.mxu0
  %v262 = vadd.f32 %v141, %v261
  %v263 = vpop.f32.mrf.mxu0
  %v264 = vpop.f32.mrf.mxu0
  %v265 = vadd.f32 %v144, %v264
  %v266 = vpop.f32.mrf.mxu0
  %267 = vmatprep.mubr.bf16.mxu0 0
  %268 = vmatmul.mubr.bf16.gmra.mxu0 %v207
  %v269 = vpop.f32.mrf.mxu0
  %v270 = vadd.f32 %v149, %v269
  %v271 = vpop.f32.mrf.mxu0
  %v272 = vpop.f32.mrf.mxu0
  %v273 = vadd.f32 %v152, %v272
  %v274 = vpop.f32.mrf.mxu0
  %275 = vmatprep.mubr.bf16.mxu0 0
  %276 = vmatmul.mubr.bf16.gmra.mxu0 %v210
  %v277 = vpop.f32.mrf.mxu0
  %v278 = vadd.f32 %v157, %v277
  %v279 = vpop.f32.mrf.mxu0
  %v280 = vpop.f32.mrf.mxu0
  %v281 = vadd.f32 %v160, %v280
  %v282 = vpop.f32.mrf.mxu0
  %283 = vmatprep.mubr.bf16.mxu0 0
  %284 = vmatmul.mubr.bf16.gmra.mxu0 %v213
  %v285 = vpop.f32.mrf.mxu0
  %v286 = vadd.f32 %v165, %v285
  %v287 = vpop.f32.mrf.mxu0
  %v288 = vpop.f32.mrf.mxu0
  %v289 = vadd.f32 %v168, %v288
  %v290 = vpop.f32.mrf.mxu0
  %291 = vmatprep.mubr.bf16.mxu0 0
  %292 = vmatmul.mubr.bf16.gmra.mxu0 %v216
  %v293 = vpop.f32.mrf.mxu0
  %v294 = vadd.f32 %v173, %v293
  %v295 = vpop.f32.mrf.mxu0
  %v296 = vpop.f32.mrf.mxu0
  %v297 = vadd.f32 %v176, %v296
  %v298 = vpop.f32.mrf.mxu0
  %299 = vmatprep.mubr.bf16.mxu0 0
  %300 = vmatmul.mubr.bf16.gmra.mxu0 %v219
  %v301 = vpop.f32.mrf.mxu0
  %v302 = vadd.f32 %v181, %v301
  %v303 = vpop.f32.mrf.mxu0
  %v304 = vpop.f32.mrf.mxu0
  %v305 = vadd.f32 %v184, %v304
  %v306 = vpop.f32.mrf.mxu0
  %307 = vmatprep.mubr.bf16.mxu0 0
  %308 = vmatmul.mubr.bf16.gmra.mxu0 %v222
  %v309 = vpop.f32.mrf.mxu0
  %v310 = vadd.f32 %v189, %v309
  %v311 = vpop.f32.mrf.mxu0
  %v312 = vpop.f32.mrf.mxu0
  %v313 = vadd.f32 %v192, %v312
  %v314 = vpop.f32.mrf.mxu0
  %315 = vmatprep.mubr.bf16.mxu0 0
  %316 = vmatmul.mubr.bf16.gmra.mxu0 %v225
  %v317 = vpop.f32.mrf.mxu0
  %v318 = vadd.f32 %v197, %v317
  %v319 = vpop.f32.mrf.mxu0
  %v320 = vpop.f32.mrf.mxu0
  %v321 = vadd.f32 %v200, %v320
  %v322 = vpop.f32.mrf.mxu0
  %323 = vdwg.mxu0
  %v324 = vld [vmem:[%s4] sm:$0x1]
  %v326 = vlaneseq
  %v327 = vshrl.u32 %v326, 7
  %v328 = vsub.s32 0, %v327
  %v329 = vrot.slane %v324, %v328
  %v331 = vadd.f32 %v262, %v329
  %v332 = vadd.f32 %v265, %v329
  %v333 = vadd.f32 %v270, %v329
  %v334 = vadd.f32 %v273, %v329
  %v335 = vadd.f32 %v278, %v329
  %v336 = vadd.f32 %v281, %v329
  %v337 = vadd.f32 %v286, %v329
  %v338 = vadd.f32 %v289, %v329
  %v339 = vadd.f32 %v294, %v329
  %v340 = vadd.f32 %v297, %v329
  %v341 = vadd.f32 %v302, %v329
  %v342 = vadd.f32 %v305, %v329
  %v343 = vadd.f32 %v310, %v329
  %v344 = vadd.f32 %v313, %v329
  %v345 = vadd.f32 %v318, %v329
  %v346 = vadd.f32 %v321, %v329
  %v347 = vld [vmem:[%s5] sm:$0xff]
  %v348 = vld [vmem:[%s5 + $0x8] sm:$0xff]
  %v349 = vld [vmem:[%s5 + $0x10] sm:$0xff]
  %v350 = vld [vmem:[%s5 + $0x18] sm:$0xff]
  %v351 = vld [vmem:[%s5 + $0x20] sm:$0xff]
  %v352 = vld [vmem:[%s5 + $0x28] sm:$0xff]
  %v353 = vld [vmem:[%s5 + $0x30] sm:$0xff]
  %v354 = vld [vmem:[%s5 + $0x38] sm:$0xff]
  %v355 = vld [vmem:[%s5 + $0x40] sm:$0xff]
  %v356 = vld [vmem:[%s5 + $0x48] sm:$0xff]
  %v357 = vld [vmem:[%s5 + $0x50] sm:$0xff]
  %v358 = vld [vmem:[%s5 + $0x58] sm:$0xff]
  %v359 = vld [vmem:[%s5 + $0x60] sm:$0xff]
  %v360 = vld [vmem:[%s5 + $0x68] sm:$0xff]
  %v361 = vld [vmem:[%s5 + $0x70] sm:$0xff]
  %v362 = vld [vmem:[%s5 + $0x78] sm:$0xff]
  %v363 = vadd.f32 %v331, %v347
  %v364 = vadd.f32 %v332, %v348
  %v365 = vadd.f32 %v333, %v349
  %v366 = vadd.f32 %v334, %v350
  %v367 = vadd.f32 %v335, %v351
  %v368 = vadd.f32 %v336, %v352
  %v369 = vadd.f32 %v337, %v353
  %v370 = vadd.f32 %v338, %v354
  %v371 = vadd.f32 %v339, %v355
  %v372 = vadd.f32 %v340, %v356
  %v373 = vadd.f32 %v341, %v357
  %v374 = vadd.f32 %v342, %v358
  %v375 = vadd.f32 %v343, %v359
  %v376 = vadd.f32 %v344, %v360
  %v377 = vadd.f32 %v345, %v361
  %v378 = vadd.f32 %v346, %v362
  %vm379 = vcmask 261120
  %380 = vst.msk [vmem:[%s6] sm:$0xff] %vm379, %v363
  %381 = vst.msk [vmem:[%s6 + $0x8] sm:$0xff] %vm379, %v364
  %382 = vst.msk [vmem:[%s6 + $0x10] sm:$0xff] %vm379, %v365
  %383 = vst.msk [vmem:[%s6 + $0x18] sm:$0xff] %vm379, %v366
  %384 = vst.msk [vmem:[%s6 + $0x20] sm:$0xff] %vm379, %v367
  %385 = vst.msk [vmem:[%s6 + $0x28] sm:$0xff] %vm379, %v368
  %386 = vst.msk [vmem:[%s6 + $0x30] sm:$0xff] %vm379, %v369
  %387 = vst.msk [vmem:[%s6 + $0x38] sm:$0xff] %vm379, %v370
  %388 = vst.msk [vmem:[%s6 + $0x40] sm:$0xff] %vm379, %v371
  %389 = vst.msk [vmem:[%s6 + $0x48] sm:$0xff] %vm379, %v372
  %390 = vst.msk [vmem:[%s6 + $0x50] sm:$0xff] %vm379, %v373
  %391 = vst.msk [vmem:[%s6 + $0x58] sm:$0xff] %vm379, %v374
  %392 = vst.msk [vmem:[%s6 + $0x60] sm:$0xff] %vm379, %v375
  %393 = vst.msk [vmem:[%s6 + $0x68] sm:$0xff] %vm379, %v376
  %394 = vst.msk [vmem:[%s6 + $0x70] sm:$0xff] %vm379, %v377
  %395 = vst.msk [vmem:[%s6 + $0x78] sm:$0xff] %vm379, %v378
  // Predicated region
  $region26: #{anisotropic_attention_forward.13} parent=0 // pred_check
    _
  $region27: #{anisotropic_attention_forward.13} parent=0 // pred_check_branch
    %397 = sbr.rel (0) target = $region29
  $region28: #{anisotropic_attention_forward.13} parent=0 // pred_region
    _
  $region29: #{anisotropic_attention_forward.13} parent=0 // pred_fallthru
    _
  // Predicated region
  $region30: #{anisotropic_attention_forward.13} parent=0 // pred_check
    _
  $region31: #{anisotropic_attention_forward.13} parent=0 // pred_check_branch
    %399 = sbr.rel (0) target = $region33
  $region32: #{anisotropic_attention_forward.13} parent=0 // pred_region
    _
  $region33: #{anisotropic_attention_forward.13} parent=0 // pred_fallthru
    _

// kernel: anisotropic_attention_forward.15
$region0: #{anisotropic_attention_forward.15}
  #allocation0 [shape = 'u32[]', space=smem, size = 0x4, offset = 0x4, fixed_abs, tag = 'smem constant byte address 0x4 - core index']
  #allocation1 [shape = 'u32[144,128]{1,0:T(1,128)}', space=vmem, size = 0x12000, scoped, tag = 'internal scratch']
  #allocation2 [shape = 'f32[128,32]{1,0:T(8,128)}', space=vmem, size = 0x10000, scoped, tag = 'scratch operand']
  %s0 = inlined_call_operand.vmem [shape: f32[128,128], index: 0, kind: input, shape index: {}]
  %s1 = inlined_call_operand.vmem [shape: f32[128,32], index: 1, kind: input, shape index: {}]
  %s2 = inlined_call_operand.vmem [shape: f32[1,32], index: 2, kind: input, shape index: {}]
  %s3 = inlined_call_operand.vmem [shape: f32[128,32], index: 3, kind: input, shape index: {}]
  %s4 = inlined_call_operand.hbm [shape: f32[128,32], index: 4, kind: output, shape index: {}]
  %s5 = sld [smem:[#allocation0]]
  $region34: #{anisotropic_attention_forward.15} parent=0
    _
  %s7 = ssub.s32 1, %s5
  %s8 = scalar_select 0, %s7, %s5
  $region1: #{anisotropic_attention_forward.15} parent=0
    #allocation3 [shape = 'u8[65536]{0}', space=vmem, size = 0x10000, scoped, tag = 'output window, operand 0, single buffered']
    #allocation4 [shape = 's32[1]{0}', space=sflag, size = 0x4, scoped, tag = 'scoped memory for anisotropic_attention_forward.15']
    %9 = vsyncpa [#allocation4], 0
    // Predicated region
    $region2: #{anisotropic_attention_forward.15} parent=1 // pred_check
      _
    $region3: #{anisotropic_attention_forward.15} parent=1 // pred_check_branch
      %11 = sbr.rel (0) target = $region5
    $region4: #{anisotropic_attention_forward.15} parent=1 // pred_region
      _
    $region5: #{anisotropic_attention_forward.15} parent=1 // pred_fallthru
      _
    // Predicated region
    $region6: #{anisotropic_attention_forward.15} parent=1 // pred_check
      _
    $region7: #{anisotropic_attention_forward.15} parent=1 // pred_check_branch
      %13 = sbr.rel (0) target = $region9
    $region8: #{anisotropic_attention_forward.15} parent=1 // pred_region
      _
    $region9: #{anisotropic_attention_forward.15} parent=1 // pred_fallthru
      _
    // Predicated region
    $region10: #{anisotropic_attention_forward.15} parent=1 // pred_check
      _
    $region11: #{anisotropic_attention_forward.15} parent=1 // pred_check_branch
      %15 = sbr.rel (0) target = $region13
    $region12: #{anisotropic_attention_forward.15} parent=1 // pred_region
      _
    $region13: #{anisotropic_attention_forward.15} parent=1 // pred_fallthru
      _
    // Predicated region
    $region14: #{anisotropic_attention_forward.15} parent=1 // pred_check
      _
    $region15: #{anisotropic_attention_forward.15} parent=1 // pred_check_branch
      %17 = sbr.rel (0) target = $region17
    $region16: #{anisotropic_attention_forward.15} parent=1 // pred_region
      _
    $region17: #{anisotropic_attention_forward.15} parent=1 // pred_fallthru
      _
    %p19 = scmp.eq.s32.totalorder 0, 0
    // Predicated region
    $region18: #{anisotropic_attention_forward.15} parent=1 // pred_check
      %p20 = pneg %p19
    $region19: #{anisotropic_attention_forward.15} parent=1 // pred_check_branch
      %22 = sbr.rel (%p20) target = $region21
    $region20: #{anisotropic_attention_forward.15} parent=1 // pred_region
      %vm23 = vcmask 261120
      %24 = vst.msk [vmem:[#allocation2] sm:$0xff] %vm23, 0.0
      %25 = vst.msk [vmem:[#allocation2 + $0x8] sm:$0xff] %vm23, 0.0
      %26 = vst.msk [vmem:[#allocation2 + $0x10] sm:$0xff] %vm23, 0.0
      %27 = vst.msk [vmem:[#allocation2 + $0x18] sm:$0xff] %vm23, 0.0
      %28 = vst.msk [vmem:[#allocation2 + $0x20] sm:$0xff] %vm23, 0.0
      %29 = vst.msk [vmem:[#allocation2 + $0x28] sm:$0xff] %vm23, 0.0
      %30 = vst.msk [vmem:[#allocation2 + $0x30] sm:$0xff] %vm23, 0.0
      %31 = vst.msk [vmem:[#allocation2 + $0x38] sm:$0xff] %vm23, 0.0
      %32 = vst.msk [vmem:[#allocation2 + $0x40] sm:$0xff] %vm23, 0.0
      %33 = vst.msk [vmem:[#allocation2 + $0x48] sm:$0xff] %vm23, 0.0
      %34 = vst.msk [vmem:[#allocation2 + $0x50] sm:$0xff] %vm23, 0.0
      %35 = vst.msk [vmem:[#allocation2 + $0x58] sm:$0xff] %vm23, 0.0
      %36 = vst.msk [vmem:[#allocation2 + $0x60] sm:$0xff] %vm23, 0.0
      %37 = vst.msk [vmem:[#allocation2 + $0x68] sm:$0xff] %vm23, 0.0
      %38 = vst.msk [vmem:[#allocation2 + $0x70] sm:$0xff] %vm23, 0.0
      %39 = vst.msk [vmem:[#allocation2 + $0x78] sm:$0xff] %vm23, 0.0
    $region21: #{anisotropic_attention_forward.15} parent=1 // pred_fallthru
      _
    %v40 = vld [vmem:[#allocation2] sm:$0xff]
    %v41 = vld [vmem:[#allocation2 + $0x8] sm:$0xff]
    %v42 = vld [vmem:[#allocation2 + $0x10] sm:$0xff]
    %v43 = vld [vmem:[#allocation2 + $0x18] sm:$0xff]
    %v44 = vld [vmem:[#allocation2 + $0x20] sm:$0xff]
    %v45 = vld [vmem:[#allocation2 + $0x28] sm:$0xff]
    %v46 = vld [vmem:[#allocation2 + $0x30] sm:$0xff]
    %v47 = vld [vmem:[#allocation2 + $0x38] sm:$0xff]
    %v48 = vld [vmem:[#allocation2 + $0x40] sm:$0xff]
    %v49 = vld [vmem:[#allocation2 + $0x48] sm:$0xff]
    %v50 = vld [vmem:[#allocation2 + $0x50] sm:$0xff]
    %v51 = vld [vmem:[#allocation2 + $0x58] sm:$0xff]
    %v52 = vld [vmem:[#allocation2 + $0x60] sm:$0xff]
    %v53 = vld [vmem:[#allocation2 + $0x68] sm:$0xff]
    %v54 = vld [vmem:[#allocation2 + $0x70] sm:$0xff]
    %v55 = vld [vmem:[#allocation2 + $0x78] sm:$0xff]
    %v56 = vld [vmem:[%s0] sm:$0xff]
    %v57 = vld [vmem:[%s0 + $0x8] sm:$0xff]
    %v58 = vld [vmem:[%s0 + $0x10] sm:$0xff]
    %v59 = vld [vmem:[%s0 + $0x18] sm:$0xff]
    %v60 = vld [vmem:[%s0 + $0x20] sm:$0xff]
    %v61 = vld [vmem:[%s0 + $0x28] sm:$0xff]
    %v62 = vld [vmem:[%s0 + $0x30] sm:$0xff]
    %v63 = vld [vmem:[%s0 + $0x38] sm:$0xff]
    %v64 = vld [vmem:[%s0 + $0x40] sm:$0xff]
    %v65 = vld [vmem:[%s0 + $0x48] sm:$0xff]
    %v66 = vld [vmem:[%s0 + $0x50] sm:$0xff]
    %v67 = vld [vmem:[%s0 + $0x58] sm:$0xff]
    %v68 = vld [vmem:[%s0 + $0x60] sm:$0xff]
    %v69 = vld [vmem:[%s0 + $0x68] sm:$0xff]
    %v70 = vld [vmem:[%s0 + $0x70] sm:$0xff]
    %v71 = vld [vmem:[%s0 + $0x78] sm:$0xff]
    %v72 = vpack.c.bf16 %v57, %v56
    %v73 = vpack.c.bf16 %v59, %v58
    %v74 = vpack.c.bf16 %v61, %v60
    %v75 = vpack.c.bf16 %v63, %v62
    %v76 = vpack.c.bf16 %v65, %v64
    %v77 = vpack.c.bf16 %v67, %v66
    %v78 = vpack.c.bf16 %v69, %v68
    %v79 = vpack.c.bf16 %v71, %v70
    %v80 = vld [vmem:[%s1] sm:$0xff]
    %v81 = vld [vmem:[%s1 + $0x8] sm:$0xff]
    %v82 = vld [vmem:[%s1 + $0x10] sm:$0xff]
    %v83 = vld [vmem:[%s1 + $0x18] sm:$0xff]
    %v84 = vld [vmem:[%s1 + $0x20] sm:$0xff]
    %v85 = vld [vmem:[%s1 + $0x28] sm:$0xff]
    %v86 = vld [vmem:[%s1 + $0x30] sm:$0xff]
    %v87 = vld [vmem:[%s1 + $0x38] sm:$0xff]
    %v88 = vld [vmem:[%s1 + $0x40] sm:$0xff]
    %v89 = vld [vmem:[%s1 + $0x48] sm:$0xff]
    %v90 = vld [vmem:[%s1 + $0x50] sm:$0xff]
    %v91 = vld [vmem:[%s1 + $0x58] sm:$0xff]
    %v92 = vld [vmem:[%s1 + $0x60] sm:$0xff]
    %v93 = vld [vmem:[%s1 + $0x68] sm:$0xff]
    %v94 = vld [vmem:[%s1 + $0x70] sm:$0xff]
    %v95 = vld [vmem:[%s1 + $0x78] sm:$0xff]
    %v96 = vpack.c.bf16 %v81, %v80
    %v97 = vpack.c.bf16 %v83, %v82
    %v98 = vpack.c.bf16 %v85, %v84
    %v99 = vpack.c.bf16 %v87, %v86
    %v100 = vpack.c.bf16 %v89, %v88
    %v101 = vpack.c.bf16 %v91, %v90
    %v102 = vpack.c.bf16 %v93, %v92
    %v103 = vpack.c.bf16 %v95, %v94
    %104 = vmatprep.subr.bf16.mxu0 0
    %105 = vmatpush1.bf16.msra.mxu0 %v103
    %106 = vmatprep.subr.bf16.mxu0 0
    %107 = vmatpush1.bf16.msra.mxu0 %v102
    %108 = vmatprep.subr.bf16.mxu0 0
    %109 = vmatpush1.bf16.msra.mxu0 %v101
    %110 = vmatprep.subr.bf16.mxu0 0
    %111 = vmatpush1.bf16.msra.mxu0 %v100
    %112 = vmatprep.subr.bf16.mxu0 0
    %113 = vmatpush1.bf16.msra.mxu0 %v99
    %114 = vmatprep.subr.bf16.mxu0 0
    %115 = vmatpush1.bf16.msra.mxu0 %v98
    %116 = vmatprep.subr.bf16.mxu0 0
    %117 = vmatpush1.bf16.msra.mxu0 %v97
    %118 = vmatprep.subr.bf16.mxu0 0
    %119 = vmatpush1.bf16.msra.mxu0 %v96
    %120 = vmatprep.subr.bf16.mxu0 0
    %121 = vmatpush2.bf16.msra.mxu0 0
    %122 = vmatprep.subr.bf16.mxu0 0
    %123 = vmatpush2.bf16.msra.mxu0 0
    %124 = vmatprep.subr.bf16.mxu0 0
    %125 = vmatpush2.bf16.msra.mxu0 0
    %126 = vmatprep.subr.bf16.mxu0 0
    %127 = vmatpush2.bf16.msra.mxu0 0
    %128 = vmatprep.subr.bf16.mxu0 0
    %129 = vmatpush2.bf16.msra.mxu0 0
    %130 = vmatprep.subr.bf16.mxu0 0
    %131 = vmatpush2.bf16.msra.mxu0 0
    %132 = vmatprep.subr.bf16.mxu0 0
    %133 = vmatpush2.bf16.msra.mxu0 0
    %134 = vmatprep.subr.bf16.mxu0 0
    %135 = vmatpush2.bf16.msra.mxu0 0
    %136 = vmatprep.mubr.bf16.mxu0 0
    %137 = vmatmul.mubr.bf16.gmra.mxu0 %v72
    %v138 = vpop.f32.mrf.mxu0
    %v139 = vadd.f32 0.0, %v138
    %v140 = vpop.f32.mrf.mxu0
    %v141 = vpop.f32.mrf.mxu0
    %v142 = vadd.f32 0.0, %v141
    %v143 = vpop.f32.mrf.mxu0
    %144 = vmatprep.mubr.bf16.mxu0 0
    %145 = vmatmul.mubr.bf16.gmra.mxu0 %v73
    %v146 = vpop.f32.mrf.mxu0
    %v147 = vadd.f32 0.0, %v146
    %v148 = vpop.f32.mrf.mxu0
    %v149 = vpop.f32.mrf.mxu0
    %v150 = vadd.f32 0.0, %v149
    %v151 = vpop.f32.mrf.mxu0
    %152 = vmatprep.mubr.bf16.mxu0 0
    %153 = vmatmul.mubr.bf16.gmra.mxu0 %v74
    %v154 = vpop.f32.mrf.mxu0
    %v155 = vadd.f32 0.0, %v154
    %v156 = vpop.f32.mrf.mxu0
    %v157 = vpop.f32.mrf.mxu0
    %v158 = vadd.f32 0.0, %v157
    %v159 = vpop.f32.mrf.mxu0
    %160 = vmatprep.mubr.bf16.mxu0 0
    %161 = vmatmul.mubr.bf16.gmra.mxu0 %v75
    %v162 = vpop.f32.mrf.mxu0
    %v163 = vadd.f32 0.0, %v162
    %v164 = vpop.f32.mrf.mxu0
    %v165 = vpop.f32.mrf.mxu0
    %v166 = vadd.f32 0.0, %v165
    %v167 = vpop.f32.mrf.mxu0
    %168 = vmatprep.mubr.bf16.mxu0 0
    %169 = vmatmul.mubr.bf16.gmra.mxu0 %v76
    %v170 = vpop.f32.mrf.mxu0
    %v171 = vadd.f32 0.0, %v170
    %v172 = vpop.f32.mrf.mxu0
    %v173 = vpop.f32.mrf.mxu0
    %v174 = vadd.f32 0.0, %v173
    %v175 = vpop.f32.mrf.mxu0
    %176 = vmatprep.mubr.bf16.mxu0 0
    %177 = vmatmul.mubr.bf16.gmra.mxu0 %v77
    %v178 = vpop.f32.mrf.mxu0
    %v179 = vadd.f32 0.0, %v178
    %v180 = vpop.f32.mrf.mxu0
    %v181 = vpop.f32.mrf.mxu0
    %v182 = vadd.f32 0.0, %v181
    %v183 = vpop.f32.mrf.mxu0
    %184 = vmatprep.mubr.bf16.mxu0 0
    %185 = vmatmul.mubr.bf16.gmra.mxu0 %v78
    %v186 = vpop.f32.mrf.mxu0
    %v187 = vadd.f32 0.0, %v186
    %v188 = vpop.f32.mrf.mxu0
    %v189 = vpop.f32.mrf.mxu0
    %v190 = vadd.f32 0.0, %v189
    %v191 = vpop.f32.mrf.mxu0
    %192 = vmatprep.mubr.bf16.mxu0 0
    %193 = vmatmul.mubr.bf16.gmra.mxu0 %v79
    %v194 = vpop.f32.mrf.mxu0
    %v195 = vadd.f32 0.0, %v194
    %v196 = vpop.f32.mrf.mxu0
    %v197 = vpop.f32.mrf.mxu0
    %v198 = vadd.f32 0.0, %v197
    %v199 = vpop.f32.mrf.mxu0
    %200 = vdwg.mxu0
    %v201 = vadd.f32 %v40, %v139
    %v202 = vadd.f32 %v41, %v142
    %v203 = vadd.f32 %v42, %v147
    %v204 = vadd.f32 %v43, %v150
    %v205 = vadd.f32 %v44, %v155
    %v206 = vadd.f32 %v45, %v158
    %v207 = vadd.f32 %v46, %v163
    %v208 = vadd.f32 %v47, %v166
    %v209 = vadd.f32 %v48, %v171
    %v210 = vadd.f32 %v49, %v174
    %v211 = vadd.f32 %v50, %v179
    %v212 = vadd.f32 %v51, %v182
    %v213 = vadd.f32 %v52, %v187
    %v214 = vadd.f32 %v53, %v190
    %v215 = vadd.f32 %v54, %v195
    %v216 = vadd.f32 %v55, %v198
    %vm217 = vcmask 261120
    %218 = vst.msk [vmem:[#allocation2] sm:$0xff] %vm217, %v201
    %219 = vst.msk [vmem:[#allocation2 + $0x8] sm:$0xff] %vm217, %v202
    %220 = vst.msk [vmem:[#allocation2 + $0x10] sm:$0xff] %vm217, %v203
    %221 = vst.msk [vmem:[#allocation2 + $0x18] sm:$0xff] %vm217, %v204
    %222 = vst.msk [vmem:[#allocation2 + $0x20] sm:$0xff] %vm217, %v205
    %223 = vst.msk [vmem:[#allocation2 + $0x28] sm:$0xff] %vm217, %v206
    %224 = vst.msk [vmem:[#allocation2 + $0x30] sm:$0xff] %vm217, %v207
    %225 = vst.msk [vmem:[#allocation2 + $0x38] sm:$0xff] %vm217, %v208
    %226 = vst.msk [vmem:[#allocation2 + $0x40] sm:$0xff] %vm217, %v209
    %227 = vst.msk [vmem:[#allocation2 + $0x48] sm:$0xff] %vm217, %v210
    %228 = vst.msk [vmem:[#allocation2 + $0x50] sm:$0xff] %vm217, %v211
    %229 = vst.msk [vmem:[#allocation2 + $0x58] sm:$0xff] %vm217, %v212
    %230 = vst.msk [vmem:[#allocation2 + $0x60] sm:$0xff] %vm217, %v213
    %231 = vst.msk [vmem:[#allocation2 + $0x68] sm:$0xff] %vm217, %v214
    %232 = vst.msk [vmem:[#allocation2 + $0x70] sm:$0xff] %vm217, %v215
    %233 = vst.msk [vmem:[#allocation2 + $0x78] sm:$0xff] %vm217, %v216
    // Predicated region
    $region22: #{anisotropic_attention_forward.15} parent=1 // pred_check
      %p234 = pneg %p19
    $region23: #{anisotropic_attention_forward.15} parent=1 // pred_check_branch
      %236 = sbr.rel (%p234) target = $region25
    $region24: #{anisotropic_attention_forward.15} parent=1 // pred_region
      %v237 = vld [vmem:[#allocation2] sm:$0xff]
      %v238 = vld [vmem:[#allocation2 + $0x8] sm:$0xff]
      %v239 = vld [vmem:[#allocation2 + $0x10] sm:$0xff]
      %v240 = vld [vmem:[#allocation2 + $0x18] sm:$0xff]
      %v241 = vld [vmem:[#allocation2 + $0x20] sm:$0xff]
      %v242 = vld [vmem:[#allocation2 + $0x28] sm:$0xff]
      %v243 = vld [vmem:[#allocation2 + $0x30] sm:$0xff]
      %v244 = vld [vmem:[#allocation2 + $0x38] sm:$0xff]
      %v245 = vld [vmem:[#allocation2 + $0x40] sm:$0xff]
      %v246 = vld [vmem:[#allocation2 + $0x48] sm:$0xff]
      %v247 = vld [vmem:[#allocation2 + $0x50] sm:$0xff]
      %v248 = vld [vmem:[#allocation2 + $0x58] sm:$0xff]
      %v249 = vld [vmem:[#allocation2 + $0x60] sm:$0xff]
      %v250 = vld [vmem:[#allocation2 + $0x68] sm:$0xff]
      %v251 = vld [vmem:[#allocation2 + $0x70] sm:$0xff]
      %v252 = vld [vmem:[#allocation2 + $0x78] sm:$0xff]
      %v253 = vld [vmem:[%s2] sm:$0x1]
      %v255 = vlaneseq
      %v256 = vshrl.u32 %v255, 7
      %v257 = vsub.s32 0, %v256
      %v258 = vrot.slane %v253, %v257
      %v260 = vadd.f32 %v237, %v258
      %v261 = vadd.f32 %v238, %v258
      %v262 = vadd.f32 %v239, %v258
      %v263 = vadd.f32 %v240, %v258
      %v264 = vadd.f32 %v241, %v258
      %v265 = vadd.f32 %v242, %v258
      %v266 = vadd.f32 %v243, %v258
      %v267 = vadd.f32 %v244, %v258
      %v268 = vadd.f32 %v245, %v258
      %v269 = vadd.f32 %v246, %v258
      %v270 = vadd.f32 %v247, %v258
      %v271 = vadd.f32 %v248, %v258
      %v272 = vadd.f32 %v249, %v258
      %v273 = vadd.f32 %v250, %v258
      %v274 = vadd.f32 %v251, %v258
      %v275 = vadd.f32 %v252, %v258
      %v276 = vld [vmem:[%s3] sm:$0xff]
      %v277 = vld [vmem:[%s3 + $0x8] sm:$0xff]
      %v278 = vld [vmem:[%s3 + $0x10] sm:$0xff]
      %v279 = vld [vmem:[%s3 + $0x18] sm:$0xff]
      %v280 = vld [vmem:[%s3 + $0x20] sm:$0xff]
      %v281 = vld [vmem:[%s3 + $0x28] sm:$0xff]
      %v282 = vld [vmem:[%s3 + $0x30] sm:$0xff]
      %v283 = vld [vmem:[%s3 + $0x38] sm:$0xff]
      %v284 = vld [vmem:[%s3 + $0x40] sm:$0xff]
      %v285 = vld [vmem:[%s3 + $0x48] sm:$0xff]
      %v286 = vld [vmem:[%s3 + $0x50] sm:$0xff]
      %v287 = vld [vmem:[%s3 + $0x58] sm:$0xff]
      %v288 = vld [vmem:[%s3 + $0x60] sm:$0xff]
      %v289 = vld [vmem:[%s3 + $0x68] sm:$0xff]
      %v290 = vld [vmem:[%s3 + $0x70] sm:$0xff]
      %v291 = vld [vmem:[%s3 + $0x78] sm:$0xff]
      %v292 = vadd.f32 %v260, %v276
      %v293 = vadd.f32 %v261, %v277
      %v294 = vadd.f32 %v262, %v278
      %v295 = vadd.f32 %v263, %v279
      %v296 = vadd.f32 %v264, %v280
      %v297 = vadd.f32 %v265, %v281
      %v298 = vadd.f32 %v266, %v282
      %v299 = vadd.f32 %v267, %v283
      %v300 = vadd.f32 %v268, %v284
      %v301 = vadd.f32 %v269, %v285
      %v302 = vadd.f32 %v270, %v286
      %v303 = vadd.f32 %v271, %v287
      %v304 = vadd.f32 %v272, %v288
      %v305 = vadd.f32 %v273, %v289
      %v306 = vadd.f32 %v274, %v290
      %v307 = vadd.f32 %v275, %v291
      %308 = vst.msk [vmem:[#allocation3] sm:$0xff] %vm217, %v292
      %309 = vst.msk [vmem:[#allocation3 + $0x8] sm:$0xff] %vm217, %v293
      %310 = vst.msk [vmem:[#allocation3 + $0x10] sm:$0xff] %vm217, %v294
      %311 = vst.msk [vmem:[#allocation3 + $0x18] sm:$0xff] %vm217, %v295
      %312 = vst.msk [vmem:[#allocation3 + $0x20] sm:$0xff] %vm217, %v296
      %313 = vst.msk [vmem:[#allocation3 + $0x28] sm:$0xff] %vm217, %v297
      %314 = vst.msk [vmem:[#allocation3 + $0x30] sm:$0xff] %vm217, %v298
      %315 = vst.msk [vmem:[#allocation3 + $0x38] sm:$0xff] %vm217, %v299
      %316 = vst.msk [vmem:[#allocation3 + $0x40] sm:$0xff] %vm217, %v300
      %317 = vst.msk [vmem:[#allocation3 + $0x48] sm:$0xff] %vm217, %v301
      %318 = vst.msk [vmem:[#allocation3 + $0x50] sm:$0xff] %vm217, %v302
      %319 = vst.msk [vmem:[#allocation3 + $0x58] sm:$0xff] %vm217, %v303
      %320 = vst.msk [vmem:[#allocation3 + $0x60] sm:$0xff] %vm217, %v304
      %321 = vst.msk [vmem:[#allocation3 + $0x68] sm:$0xff] %vm217, %v305
      %322 = vst.msk [vmem:[#allocation3 + $0x70] sm:$0xff] %vm217, %v306
      %323 = vst.msk [vmem:[#allocation3 + $0x78] sm:$0xff] %vm217, %v307
    $region25: #{anisotropic_attention_forward.15} parent=1 // pred_fallthru
      _
    // Predicated region
    $region26: #{anisotropic_attention_forward.15} parent=1 // pred_check
      _
    $region27: #{anisotropic_attention_forward.15} parent=1 // pred_check_branch
      %325 = sbr.rel (0) target = $region29
    $region28: #{anisotropic_attention_forward.15} parent=1 // pred_region
      %s327 = ssub.s32 2048, 2048
      %328 = vsyncadd [#allocation4], %s327
      %s329 = sshll.u32 [#allocation3], 4
      %s330 = int_to_ptr.vmem [resolvable:$true] %s329
      %335 = dma.vmem_to_hbm [thread:$0]  %s330, 2048, %s4, [#allocation4], 128, 128, 8
    $region29: #{anisotropic_attention_forward.15} parent=1 // pred_fallthru
      _
    // Predicated region
    $region30: #{anisotropic_attention_forward.15} parent=1 // pred_check
      _
    $region31: #{anisotropic_attention_forward.15} parent=1 // pred_check_branch
      %337 = sbr.rel (0) target = $region33
    $region32: #{anisotropic_attention_forward.15} parent=1 // pred_region
      %338 = dma.done [#allocation4], 2048
    $region33: #{anisotropic_attention_forward.15} parent=1 // pred_fallthru
      _
    %339 = vsyncpa [#allocation4], 1

// kernel: anisotropic_attention_forward.14
$region0: #{anisotropic_attention_forward.14}
  #allocation0 [shape = 'u32[]', space=smem, size = 0x4, offset = 0x4, fixed_abs, tag = 'smem constant byte address 0x4 - core index']
  #allocation1 [shape = 'u32[144,128]{1,0:T(1,128)}', space=vmem, size = 0x12000, scoped, tag = 'internal scratch']
  #allocation2 [shape = 'bf16[128,32]{1,0:T(8,128)(2,1)}', space=vmem, size = 0x8000, scoped, tag = 'scratch operand']
  %s0 = inlined_call_operand.vmem [shape: f32[128,32], index: 0, kind: input, shape index: {}]
  %s1 = inlined_call_operand.vmem [shape: f32[1,32], index: 1, kind: input, shape index: {}]
  %s2 = inlined_call_operand.vmem [shape: f32[1,32], index: 2, kind: input, shape index: {}]
  %s3 = inlined_call_operand.vmem [shape: f32[32,128], index: 3, kind: input, shape index: {}]
  %s4 = inlined_call_operand.vmem [shape: f32[1,128], index: 4, kind: input, shape index: {}]
  %s5 = inlined_call_operand.vmem [shape: f32[128,128], index: 5, kind: output, shape index: {}]
  %s6 = sld [smem:[#allocation0]]
  $region34: #{anisotropic_attention_forward.14} parent=0
    _
  %s8 = ssub.s32 1, %s6
  %s9 = scalar_select 0, %s8, %s6
  // Predicated region
  $region2: #{anisotropic_attention_forward.14} parent=0 // pred_check
    _
  $region3: #{anisotropic_attention_forward.14} parent=0 // pred_check_branch
    %11 = sbr.rel (0) target = $region5
  $region4: #{anisotropic_attention_forward.14} parent=0 // pred_region
    _
  $region5: #{anisotropic_attention_forward.14} parent=0 // pred_fallthru
    _
  // Predicated region
  $region6: #{anisotropic_attention_forward.14} parent=0 // pred_check
    _
  $region7: #{anisotropic_attention_forward.14} parent=0 // pred_check_branch
    %13 = sbr.rel (0) target = $region9
  $region8: #{anisotropic_attention_forward.14} parent=0 // pred_region
    _
  $region9: #{anisotropic_attention_forward.14} parent=0 // pred_fallthru
    _
  // Predicated region
  $region10: #{anisotropic_attention_forward.14} parent=0 // pred_check
    _
  $region11: #{anisotropic_attention_forward.14} parent=0 // pred_check_branch
    %15 = sbr.rel (0) target = $region13
  $region12: #{anisotropic_attention_forward.14} parent=0 // pred_region
    _
  $region13: #{anisotropic_attention_forward.14} parent=0 // pred_fallthru
    _
  // Predicated region
  $region14: #{anisotropic_attention_forward.14} parent=0 // pred_check
    _
  $region15: #{anisotropic_attention_forward.14} parent=0 // pred_check_branch
    %17 = sbr.rel (0) target = $region17
  $region16: #{anisotropic_attention_forward.14} parent=0 // pred_region
    _
  $region17: #{anisotropic_attention_forward.14} parent=0 // pred_fallthru
    _
  // Predicated region
  $region18: #{anisotropic_attention_forward.14} parent=0 // pred_check
    _
  $region19: #{anisotropic_attention_forward.14} parent=0 // pred_check_branch
    %19 = sbr.rel (0) target = $region21
  $region20: #{anisotropic_attention_forward.14} parent=0 // pred_region
    _
  $region21: #{anisotropic_attention_forward.14} parent=0 // pred_fallthru
    _
  %p21 = scmp.eq.s32.totalorder 0, 0
  // Predicated region
  $region22: #{anisotropic_attention_forward.14} parent=0 // pred_check
    %p22 = pneg %p21
  $region23: #{anisotropic_attention_forward.14} parent=0 // pred_check_branch
    %24 = sbr.rel (%p22) target = $region25
  $region24: #{anisotropic_attention_forward.14} parent=0 // pred_region
    %v25 = vld [vmem:[%s0] sm:$0xff]
    %v26 = vld [vmem:[%s0 + $0x8] sm:$0xff]
    %v27 = vld [vmem:[%s0 + $0x10] sm:$0xff]
    %v28 = vld [vmem:[%s0 + $0x18] sm:$0xff]
    %v29 = vld [vmem:[%s0 + $0x20] sm:$0xff]
    %v30 = vld [vmem:[%s0 + $0x28] sm:$0xff]
    %v31 = vld [vmem:[%s0 + $0x30] sm:$0xff]
    %v32 = vld [vmem:[%s0 + $0x38] sm:$0xff]
    %v33 = vld [vmem:[%s0 + $0x40] sm:$0xff]
    %v34 = vld [vmem:[%s0 + $0x48] sm:$0xff]
    %v35 = vld [vmem:[%s0 + $0x50] sm:$0xff]
    %v36 = vld [vmem:[%s0 + $0x58] sm:$0xff]
    %v37 = vld [vmem:[%s0 + $0x60] sm:$0xff]
    %v38 = vld [vmem:[%s0 + $0x68] sm:$0xff]
    %v39 = vld [vmem:[%s0 + $0x70] sm:$0xff]
    %v40 = vld [vmem:[%s0 + $0x78] sm:$0xff]
    %vm41 = vcmask 261120
    %v42 = vsel %vm41, %v25, 0.0
    %43 = vadd.xlane.f32.xlu0 %v42
    %v44 = vpop.xlane.xlu0 %43
    %v45 = vsel %vm41, %v26, 0.0
    %46 = vadd.xlane.f32.xlu0 %v45
    %v47 = vpop.xlane.xlu0 %46
    %v48 = vsel %vm41, %v27, 0.0
    %49 = vadd.xlane.f32.xlu0 %v48
    %v50 = vpop.xlane.xlu0 %49
    %v51 = vsel %vm41, %v28, 0.0
    %52 = vadd.xlane.f32.xlu0 %v51
    %v53 = vpop.xlane.xlu0 %52
    %v54 = vsel %vm41, %v29, 0.0
    %55 = vadd.xlane.f32.xlu0 %v54
    %v56 = vpop.xlane.xlu0 %55
    %v57 = vsel %vm41, %v30, 0.0
    %58 = vadd.xlane.f32.xlu0 %v57
    %v59 = vpop.xlane.xlu0 %58
    %v60 = vsel %vm41, %v31, 0.0
    %61 = vadd.xlane.f32.xlu0 %v60
    %v62 = vpop.xlane.xlu0 %61
    %v63 = vsel %vm41, %v32, 0.0
    %64 = vadd.xlane.f32.xlu0 %v63
    %v65 = vpop.xlane.xlu0 %64
    %v66 = vsel %vm41, %v33, 0.0
    %67 = vadd.xlane.f32.xlu0 %v66
    %v68 = vpop.xlane.xlu0 %67
    %v69 = vsel %vm41, %v34, 0.0
    %70 = vadd.xlane.f32.xlu0 %v69
    %v71 = vpop.xlane.xlu0 %70
    %v72 = vsel %vm41, %v35, 0.0
    %73 = vadd.xlane.f32.xlu0 %v72
    %v74 = vpop.xlane.xlu0 %73
    %v75 = vsel %vm41, %v36, 0.0
    %76 = vadd.xlane.f32.xlu0 %v75
    %v77 = vpop.xlane.xlu0 %76
    %v78 = vsel %vm41, %v37, 0.0
    %79 = vadd.xlane.f32.xlu0 %v78
    %v80 = vpop.xlane.xlu0 %79
    %v81 = vsel %vm41, %v38, 0.0
    %82 = vadd.xlane.f32.xlu0 %v81
    %v83 = vpop.xlane.xlu0 %82
    %v84 = vsel %vm41, %v39, 0.0
    %85 = vadd.xlane.f32.xlu0 %v84
    %v86 = vpop.xlane.xlu0 %85
    %v87 = vsel %vm41, %v40, 0.0
    %88 = vadd.xlane.f32.xlu0 %v87
    %v89 = vpop.xlane.xlu0 %88
    %v90 = vrcp.pop 32.0
    %v91 = vmul.f32 %v44, %v90
    %v92 = vmul.f32 %v47, %v90
    %v93 = vmul.f32 %v50, %v90
    %v94 = vmul.f32 %v53, %v90
    %v95 = vmul.f32 %v56, %v90
    %v96 = vmul.f32 %v59, %v90
    %v97 = vmul.f32 %v62, %v90
    %v98 = vmul.f32 %v65, %v90
    %v99 = vmul.f32 %v68, %v90
    %v100 = vmul.f32 %v71, %v90
    %v101 = vmul.f32 %v74, %v90
    %v102 = vmul.f32 %v77, %v90
    %v103 = vmul.f32 %v80, %v90
    %v104 = vmul.f32 %v83, %v90
    %v105 = vmul.f32 %v86, %v90
    %v106 = vmul.f32 %v89, %v90
    %v107 = vsub.f32 %v25, %v91
    %v108 = vsub.f32 %v26, %v92
    %v109 = vsub.f32 %v27, %v93
    %v110 = vsub.f32 %v28, %v94
    %v111 = vsub.f32 %v29, %v95
    %v112 = vsub.f32 %v30, %v96
    %v113 = vsub.f32 %v31, %v97
    %v114 = vsub.f32 %v32, %v98
    %v115 = vsub.f32 %v33, %v99
    %v116 = vsub.f32 %v34, %v100
    %v117 = vsub.f32 %v35, %v101
    %v118 = vsub.f32 %v36, %v102
    %v119 = vsub.f32 %v37, %v103
    %v120 = vsub.f32 %v38, %v104
    %v121 = vsub.f32 %v39, %v105
    %v122 = vsub.f32 %v40, %v106
    %v123 = vmul.f32 %v107, %v107
    %v124 = vmul.f32 %v108, %v108
    %v125 = vmul.f32 %v109, %v109
    %v126 = vmul.f32 %v110, %v110
    %v127 = vmul.f32 %v111, %v111
    %v128 = vmul.f32 %v112, %v112
    %v129 = vmul.f32 %v113, %v113
    %v130 = vmul.f32 %v114, %v114
    %v131 = vmul.f32 %v115, %v115
    %v132 = vmul.f32 %v116, %v116
    %v133 = vmul.f32 %v117, %v117
    %v134 = vmul.f32 %v118, %v118
    %v135 = vmul.f32 %v119, %v119
    %v136 = vmul.f32 %v120, %v120
    %v137 = vmul.f32 %v121, %v121
    %v138 = vmul.f32 %v122, %v122
    %v139 = vsel %vm41, %v123, 0.0
    %140 = vadd.xlane.f32.xlu0 %v139
    %v141 = vpop.xlane.xlu0 %140
    %v142 = vsel %vm41, %v124, 0.0
    %143 = vadd.xlane.f32.xlu0 %v142
    %v144 = vpop.xlane.xlu0 %143
    %v145 = vsel %vm41, %v125, 0.0
    %146 = vadd.xlane.f32.xlu0 %v145
    %v147 = vpop.xlane.xlu0 %146
    %v148 = vsel %vm41, %v126, 0.0
    %149 = vadd.xlane.f32.xlu0 %v148
    %v150 = vpop.xlane.xlu0 %149
    %v151 = vsel %vm41, %v127, 0.0
    %152 = vadd.xlane.f32.xlu0 %v151
    %v153 = vpop.xlane.xlu0 %152
    %v154 = vsel %vm41, %v128, 0.0
    %155 = vadd.xlane.f32.xlu0 %v154
    %v156 = vpop.xlane.xlu0 %155
    %v157 = vsel %vm41, %v129, 0.0
    %158 = vadd.xlane.f32.xlu0 %v157
    %v159 = vpop.xlane.xlu0 %158
    %v160 = vsel %vm41, %v130, 0.0
    %161 = vadd.xlane.f32.xlu0 %v160
    %v162 = vpop.xlane.xlu0 %161
    %v163 = vsel %vm41, %v131, 0.0
    %164 = vadd.xlane.f32.xlu0 %v163
    %v165 = vpop.xlane.xlu0 %164
    %v166 = vsel %vm41, %v132, 0.0
    %167 = vadd.xlane.f32.xlu0 %v166
    %v168 = vpop.xlane.xlu0 %167
    %v169 = vsel %vm41, %v133, 0.0
    %170 = vadd.xlane.f32.xlu0 %v169
    %v171 = vpop.xlane.xlu0 %170
    %v172 = vsel %vm41, %v134, 0.0
    %173 = vadd.xlane.f32.xlu0 %v172
    %v174 = vpop.xlane.xlu0 %173
    %v175 = vsel %vm41, %v135, 0.0
    %176 = vadd.xlane.f32.xlu0 %v175
    %v177 = vpop.xlane.xlu0 %176
    %v178 = vsel %vm41, %v136, 0.0
    %179 = vadd.xlane.f32.xlu0 %v178
    %v180 = vpop.xlane.xlu0 %179
    %v181 = vsel %vm41, %v137, 0.0
    %182 = vadd.xlane.f32.xlu0 %v181
    %v183 = vpop.xlane.xlu0 %182
    %v184 = vsel %vm41, %v138, 0.0
    %185 = vadd.xlane.f32.xlu0 %v184
    %v186 = vpop.xlane.xlu0 %185
    %v187 = vmul.f32 %v141, %v90
    %v188 = vmul.f32 %v144, %v90
    %v189 = vmul.f32 %v147, %v90
    %v190 = vmul.f32 %v150, %v90
    %v191 = vmul.f32 %v153, %v90
    %v192 = vmul.f32 %v156, %v90
    %v193 = vmul.f32 %v159, %v90
    %v194 = vmul.f32 %v162, %v90
    %v195 = vmul.f32 %v165, %v90
    %v196 = vmul.f32 %v168, %v90
    %v197 = vmul.f32 %v171, %v90
    %v198 = vmul.f32 %v174, %v90
    %v199 = vmul.f32 %v177, %v90
    %v200 = vmul.f32 %v180, %v90
    %v201 = vmul.f32 %v183, %v90
    %v202 = vmul.f32 %v186, %v90
    %v203 = vadd.f32 %v187, 1e-05
    %v204 = vadd.f32 %v188, 1e-05
    %v205 = vadd.f32 %v189, 1e-05
    %v206 = vadd.f32 %v190, 1e-05
    %v207 = vadd.f32 %v191, 1e-05
    %v208 = vadd.f32 %v192, 1e-05
    %v209 = vadd.f32 %v193, 1e-05
    %v210 = vadd.f32 %v194, 1e-05
    %v211 = vadd.f32 %v195, 1e-05
    %v212 = vadd.f32 %v196, 1e-05
    %v213 = vadd.f32 %v197, 1e-05
    %v214 = vadd.f32 %v198, 1e-05
    %v215 = vadd.f32 %v199, 1e-05
    %v216 = vadd.f32 %v200, 1e-05
    %v217 = vadd.f32 %v201, 1e-05
    %v218 = vadd.f32 %v202, 1e-05
    %v219 = vrsqrt.pop %v203
    %v220 = vrsqrt.pop %v204
    %v221 = vrsqrt.pop %v205
    %v222 = vrsqrt.pop %v206
    %v223 = vrsqrt.pop %v207
    %v224 = vrsqrt.pop %v208
    %v225 = vrsqrt.pop %v209
    %v226 = vrsqrt.pop %v210
    %v227 = vrsqrt.pop %v211
    %v228 = vrsqrt.pop %v212
    %v229 = vrsqrt.pop %v213
    %v230 = vrsqrt.pop %v214
    %v231 = vrsqrt.pop %v215
    %v232 = vrsqrt.pop %v216
    %v233 = vrsqrt.pop %v217
    %v234 = vrsqrt.pop %v218
    %v235 = vmul.f32 %v107, %v219
    %v236 = vmul.f32 %v108, %v220
    %v237 = vmul.f32 %v109, %v221
    %v238 = vmul.f32 %v110, %v222
    %v239 = vmul.f32 %v111, %v223
    %v240 = vmul.f32 %v112, %v224
    %v241 = vmul.f32 %v113, %v225
    %v242 = vmul.f32 %v114, %v226
    %v243 = vmul.f32 %v115, %v227
    %v244 = vmul.f32 %v116, %v228
    %v245 = vmul.f32 %v117, %v229
    %v246 = vmul.f32 %v118, %v230
    %v247 = vmul.f32 %v119, %v231
    %v248 = vmul.f32 %v120, %v232
    %v249 = vmul.f32 %v121, %v233
    %v250 = vmul.f32 %v122, %v234
    %v251 = vld [vmem:[%s1] sm:$0x1]
    %v253 = vlaneseq
    %v254 = vshrl.u32 %v253, 7
    %v255 = vsub.s32 0, %v254
    %v256 = vrot.slane %v251, %v255
    %v258 = vmul.f32 %v235, %v256
    %v259 = vmul.f32 %v236, %v256
    %v260 = vmul.f32 %v237, %v256
    %v261 = vmul.f32 %v238, %v256
    %v262 = vmul.f32 %v239, %v256
    %v263 = vmul.f32 %v240, %v256
    %v264 = vmul.f32 %v241, %v256
    %v265 = vmul.f32 %v242, %v256
    %v266 = vmul.f32 %v243, %v256
    %v267 = vmul.f32 %v244, %v256
    %v268 = vmul.f32 %v245, %v256
    %v269 = vmul.f32 %v246, %v256
    %v270 = vmul.f32 %v247, %v256
    %v271 = vmul.f32 %v248, %v256
    %v272 = vmul.f32 %v249, %v256
    %v273 = vmul.f32 %v250, %v256
    %v274 = vld [vmem:[%s2] sm:$0x1]
    %v276 = vlaneseq
    %v277 = vshrl.u32 %v276, 7
    %v278 = vsub.s32 0, %v277
    %v279 = vrot.slane %v274, %v278
    %v281 = vadd.f32 %v258, %v279
    %v282 = vadd.f32 %v259, %v279
    %v283 = vadd.f32 %v260, %v279
    %v284 = vadd.f32 %v261, %v279
    %v285 = vadd.f32 %v262, %v279
    %v286 = vadd.f32 %v263, %v279
    %v287 = vadd.f32 %v264, %v279
    %v288 = vadd.f32 %v265, %v279
    %v289 = vadd.f32 %v266, %v279
    %v290 = vadd.f32 %v267, %v279
    %v291 = vadd.f32 %v268, %v279
    %v292 = vadd.f32 %v269, %v279
    %v293 = vadd.f32 %v270, %v279
    %v294 = vadd.f32 %v271, %v279
    %v295 = vadd.f32 %v272, %v279
    %v296 = vadd.f32 %v273, %v279
    %v297 = vpack.c.bf16 %v282, %v281
    %v298 = vpack.c.bf16 %v284, %v283
    %v299 = vpack.c.bf16 %v286, %v285
    %v300 = vpack.c.bf16 %v288, %v287
    %v301 = vpack.c.bf16 %v290, %v289
    %v302 = vpack.c.bf16 %v292, %v291
    %v303 = vpack.c.bf16 %v294, %v293
    %v304 = vpack.c.bf16 %v296, %v295
    %v313 = vunpack.c.l.b16 %v297
    %v314 = vunpack.c.h.b16 %v297
    %v315 = vunpack.c.l.b16 %v298
    %v316 = vunpack.c.h.b16 %v298
    %v317 = vunpack.c.l.b16 %v299
    %v318 = vunpack.c.h.b16 %v299
    %v319 = vunpack.c.l.b16 %v300
    %v320 = vunpack.c.h.b16 %v300
    %v321 = vunpack.c.l.b16 %v301
    %v322 = vunpack.c.h.b16 %v301
    %v323 = vunpack.c.l.b16 %v302
    %v324 = vunpack.c.h.b16 %v302
    %v325 = vunpack.c.l.b16 %v303
    %v326 = vunpack.c.h.b16 %v303
    %v327 = vunpack.c.l.b16 %v304
    %v328 = vunpack.c.h.b16 %v304
    %v329 = vpack.c.b16 %v313, %v313
    %v330 = vpack.c.b16 %v314, %v314
    %v331 = vpack.c.b16 %v315, %v315
    %v332 = vpack.c.b16 %v316, %v316
    %v333 = vpack.c.b16 %v317, %v317
    %v334 = vpack.c.b16 %v318, %v318
    %v335 = vpack.c.b16 %v319, %v319
    %v336 = vpack.c.b16 %v320, %v320
    %v337 = vpack.c.b16 %v321, %v321
    %v338 = vpack.c.b16 %v322, %v322
    %v339 = vpack.c.b16 %v323, %v323
    %v340 = vpack.c.b16 %v324, %v324
    %v341 = vpack.c.b16 %v325, %v325
    %v342 = vpack.c.b16 %v326, %v326
    %v343 = vpack.c.b16 %v327, %v327
    %v344 = vpack.c.b16 %v328, %v328
    %vm361 = vcmask 257024
    %362 = vst.msk [vmem:[#allocation2] sm:$0xf] %vm361, %v329
    %363 = vst.msk [vmem:[#allocation2 + $0x4] sm:$0xf] %vm361, %v330
    %364 = vst.msk [vmem:[#allocation2 + $0x8] sm:$0xf] %vm361, %v331
    %365 = vst.msk [vmem:[#allocation2 + $0xc] sm:$0xf] %vm361, %v332
    %366 = vst.msk [vmem:[#allocation2 + $0x10] sm:$0xf] %vm361, %v333
    %367 = vst.msk [vmem:[#allocation2 + $0x14] sm:$0xf] %vm361, %v334
    %368 = vst.msk [vmem:[#allocation2 + $0x18] sm:$0xf] %vm361, %v335
    %369 = vst.msk [vmem:[#allocation2 + $0x1c] sm:$0xf] %vm361, %v336
    %370 = vst.msk [vmem:[#allocation2 + $0x20] sm:$0xf] %vm361, %v337
    %371 = vst.msk [vmem:[#allocation2 + $0x24] sm:$0xf] %vm361, %v338
    %372 = vst.msk [vmem:[#allocation2 + $0x28] sm:$0xf] %vm361, %v339
    %373 = vst.msk [vmem:[#allocation2 + $0x2c] sm:$0xf] %vm361, %v340
    %374 = vst.msk [vmem:[#allocation2 + $0x30] sm:$0xf] %vm361, %v341
    %375 = vst.msk [vmem:[#allocation2 + $0x34] sm:$0xf] %vm361, %v342
    %376 = vst.msk [vmem:[#allocation2 + $0x38] sm:$0xf] %vm361, %v343
    %377 = vst.msk [vmem:[#allocation2 + $0x3c] sm:$0xf] %vm361, %v344
  $region25: #{anisotropic_attention_forward.14} parent=0 // pred_fallthru
    _
  %v378 = vld [vmem:[#allocation2] sm:$0xf]
  %v379 = vld [vmem:[#allocation2 + $0x4] sm:$0xf]
  %v380 = vld [vmem:[#allocation2 + $0x8] sm:$0xf]
  %v381 = vld [vmem:[#allocation2 + $0xc] sm:$0xf]
  %v382 = vld [vmem:[#allocation2 + $0x10] sm:$0xf]
  %v383 = vld [vmem:[#allocation2 + $0x14] sm:$0xf]
  %v384 = vld [vmem:[#allocation2 + $0x18] sm:$0xf]
  %v385 = vld [vmem:[#allocation2 + $0x1c] sm:$0xf]
  %v386 = vld [vmem:[#allocation2 + $0x20] sm:$0xf]
  %v387 = vld [vmem:[#allocation2 + $0x24] sm:$0xf]
  %v388 = vld [vmem:[#allocation2 + $0x28] sm:$0xf]
  %v389 = vld [vmem:[#allocation2 + $0x2c] sm:$0xf]
  %v390 = vld [vmem:[#allocation2 + $0x30] sm:$0xf]
  %v391 = vld [vmem:[#allocation2 + $0x34] sm:$0xf]
  %v392 = vld [vmem:[#allocation2 + $0x38] sm:$0xf]
  %v393 = vld [vmem:[#allocation2 + $0x3c] sm:$0xf]
  %v394 = vld [vmem:[%s3] sm:$0xff]
  %v395 = vld [vmem:[%s3 + $0x8] sm:$0xff]
  %v396 = vld [vmem:[%s3 + $0x10] sm:$0xff]
  %v397 = vld [vmem:[%s3 + $0x18] sm:$0xff]
  %v398 = vpack.c.bf16 %v395, %v394
  %v399 = vpack.c.bf16 %v397, %v396
  %v400 = vld [vmem:[%s4] sm:$0x1]
  %v402 = vlaneseq
  %v403 = vshrl.u32 %v402, 7
  %v404 = vsub.s32 0, %v403
  %v405 = vrot.slane %v400, %v404
  %v423 = vunpack.c.l.b16 %v378
  %v424 = vunpack.c.l.b16 %v379
  %v425 = vunpack.c.l.b16 %v380
  %v426 = vunpack.c.l.b16 %v381
  %v427 = vunpack.c.l.b16 %v382
  %v428 = vunpack.c.l.b16 %v383
  %v429 = vunpack.c.l.b16 %v384
  %v430 = vunpack.c.l.b16 %v385
  %v431 = vunpack.c.l.b16 %v386
  %v432 = vunpack.c.l.b16 %v387
  %v433 = vunpack.c.l.b16 %v388
  %v434 = vunpack.c.l.b16 %v389
  %v435 = vunpack.c.l.b16 %v390
  %v436 = vunpack.c.l.b16 %v391
  %v437 = vunpack.c.l.b16 %v392
  %v438 = vunpack.c.l.b16 %v393
  %v439 = vpack.c.b16 %v424, %v423
  %v440 = vpack.c.b16 %v426, %v425
  %v441 = vpack.c.b16 %v428, %v427
  %v442 = vpack.c.b16 %v430, %v429
  %v443 = vpack.c.b16 %v432, %v431
  %v444 = vpack.c.b16 %v434, %v433
  %v445 = vpack.c.b16 %v436, %v435
  %v446 = vpack.c.b16 %v438, %v437
  %vm447 = vcmask 261120
  %v449 = vsel %vm447, %v439, 0
  %v452 = vsel %vm447, %v440, 0
  %v455 = vsel %vm447, %v441, 0
  %v458 = vsel %vm447, %v442, 0
  %v461 = vsel %vm447, %v443, 0
  %v464 = vsel %vm447, %v444, 0
  %v467 = vsel %vm447, %v445, 0
  %v470 = vsel %vm447, %v446, 0
  %472 = vmatprep.subr.bf16.mxu0 0
  %473 = vmatpush1.bf16.msra.mxu0 0
  %474 = vmatprep.subr.bf16.mxu0 0
  %475 = vmatpush1.bf16.msra.mxu0 0
  %476 = vmatprep.subr.bf16.mxu0 0
  %477 = vmatpush1.bf16.msra.mxu0 0
  %478 = vmatprep.subr.bf16.mxu0 0
  %479 = vmatpush1.bf16.msra.mxu0 0
  %480 = vmatprep.subr.bf16.mxu0 0
  %481 = vmatpush1.bf16.msra.mxu0 0
  %482 = vmatprep.subr.bf16.mxu0 0
  %483 = vmatpush1.bf16.msra.mxu0 0
  %484 = vmatprep.subr.bf16.mxu0 0
  %485 = vmatpush1.bf16.msra.mxu0 %v399
  %486 = vmatprep.subr.bf16.mxu0 0
  %487 = vmatpush1.bf16.msra.mxu0 %v398
  %488 = vmatprep.subr.bf16.mxu0 0
  %489 = vmatpush2.bf16.msra.mxu0 0
  %490 = vmatprep.subr.bf16.mxu0 0
  %491 = vmatpush2.bf16.msra.mxu0 0
  %492 = vmatprep.subr.bf16.mxu0 0
  %493 = vmatpush2.bf16.msra.mxu0 0
  %494 = vmatprep.subr.bf16.mxu0 0
  %495 = vmatpush2.bf16.msra.mxu0 0
  %496 = vmatprep.subr.bf16.mxu0 0
  %497 = vmatpush2.bf16.msra.mxu0 0
  %498 = vmatprep.subr.bf16.mxu0 0
  %499 = vmatpush2.bf16.msra.mxu0 0
  %500 = vmatprep.subr.bf16.mxu0 0
  %501 = vmatpush2.bf16.msra.mxu0 0
  %502 = vmatprep.subr.bf16.mxu0 0
  %503 = vmatpush2.bf16.msra.mxu0 0
  %504 = vmatprep.mubr.bf16.mxu0 0
  %505 = vmatmul.mubr.bf16.gmra.mxu0 %v449
  %v506 = vpop.f32.mrf.mxu0
  %v507 = vadd.f32 %v405, %v506
  %v508 = vpop.f32.mrf.mxu0
  %v509 = vpop.f32.mrf.mxu0
  %v510 = vadd.f32 %v405, %v509
  %v511 = vpop.f32.mrf.mxu0
  %512 = vmatprep.mubr.bf16.mxu0 0
  %513 = vmatmul.mubr.bf16.gmra.mxu0 %v452
  %v514 = vpop.f32.mrf.mxu0
  %v515 = vadd.f32 %v405, %v514
  %v516 = vpop.f32.mrf.mxu0
  %v517 = vpop.f32.mrf.mxu0
  %v518 = vadd.f32 %v405, %v517
  %v519 = vpop.f32.mrf.mxu0
  %520 = vmatprep.mubr.bf16.mxu0 0
  %521 = vmatmul.mubr.bf16.gmra.mxu0 %v455
  %v522 = vpop.f32.mrf.mxu0
  %v523 = vadd.f32 %v405, %v522
  %v524 = vpop.f32.mrf.mxu0
  %v525 = vpop.f32.mrf.mxu0
  %v526 = vadd.f32 %v405, %v525
  %v527 = vpop.f32.mrf.mxu0
  %528 = vmatprep.mubr.bf16.mxu0 0
  %529 = vmatmul.mubr.bf16.gmra.mxu0 %v458
  %v530 = vpop.f32.mrf.mxu0
  %v531 = vadd.f32 %v405, %v530
  %v532 = vpop.f32.mrf.mxu0
  %v533 = vpop.f32.mrf.mxu0
  %v534 = vadd.f32 %v405, %v533
  %v535 = vpop.f32.mrf.mxu0
  %536 = vmatprep.mubr.bf16.mxu0 0
  %537 = vmatmul.mubr.bf16.gmra.mxu0 %v461
  %v538 = vpop.f32.mrf.mxu0
  %v539 = vadd.f32 %v405, %v538
  %v540 = vpop.f32.mrf.mxu0
  %v541 = vpop.f32.mrf.mxu0
  %v542 = vadd.f32 %v405, %v541
  %v543 = vpop.f32.mrf.mxu0
  %544 = vmatprep.mubr.bf16.mxu0 0
  %545 = vmatmul.mubr.bf16.gmra.mxu0 %v464
  %v546 = vpop.f32.mrf.mxu0
  %v547 = vadd.f32 %v405, %v546
  %v548 = vpop.f32.mrf.mxu0
  %v549 = vpop.f32.mrf.mxu0
  %v550 = vadd.f32 %v405, %v549
  %v551 = vpop.f32.mrf.mxu0
  %552 = vmatprep.mubr.bf16.mxu0 0
  %553 = vmatmul.mubr.bf16.gmra.mxu0 %v467
  %v554 = vpop.f32.mrf.mxu0
  %v555 = vadd.f32 %v405, %v554
  %v556 = vpop.f32.mrf.mxu0
  %v557 = vpop.f32.mrf.mxu0
  %v558 = vadd.f32 %v405, %v557
  %v559 = vpop.f32.mrf.mxu0
  %560 = vmatprep.mubr.bf16.mxu0 0
  %561 = vmatmul.mubr.bf16.gmra.mxu0 %v470
  %v562 = vpop.f32.mrf.mxu0
  %v563 = vadd.f32 %v405, %v562
  %v564 = vpop.f32.mrf.mxu0
  %v565 = vpop.f32.mrf.mxu0
  %v566 = vadd.f32 %v405, %v565
  %v567 = vpop.f32.mrf.mxu0
  %568 = vdwg.mxu0
  %v569 = vmul.f32 %v507, %v507
  %v570 = vmul.f32 %v510, %v510
  %v571 = vmul.f32 %v515, %v515
  %v572 = vmul.f32 %v518, %v518
  %v573 = vmul.f32 %v523, %v523
  %v574 = vmul.f32 %v526, %v526
  %v575 = vmul.f32 %v531, %v531
  %v576 = vmul.f32 %v534, %v534
  %v577 = vmul.f32 %v539, %v539
  %v578 = vmul.f32 %v542, %v542
  %v579 = vmul.f32 %v547, %v547
  %v580 = vmul.f32 %v550, %v550
  %v581 = vmul.f32 %v555, %v555
  %v582 = vmul.f32 %v558, %v558
  %v583 = vmul.f32 %v563, %v563
  %v584 = vmul.f32 %v566, %v566
  %v585 = vmul.f32 %v507, %v569
  %v586 = vmul.f32 %v510, %v570
  %v587 = vmul.f32 %v515, %v571
  %v588 = vmul.f32 %v518, %v572
  %v589 = vmul.f32 %v523, %v573
  %v590 = vmul.f32 %v526, %v574
  %v591 = vmul.f32 %v531, %v575
  %v592 = vmul.f32 %v534, %v576
  %v593 = vmul.f32 %v539, %v577
  %v594 = vmul.f32 %v542, %v578
  %v595 = vmul.f32 %v547, %v579
  %v596 = vmul.f32 %v550, %v580
  %v597 = vmul.f32 %v555, %v581
  %v598 = vmul.f32 %v558, %v582
  %v599 = vmul.f32 %v563, %v583
  %v600 = vmul.f32 %v566, %v584
  %v601 = vmul.f32 %v585, 0.044715
  %v602 = vmul.f32 %v586, 0.044715
  %v603 = vmul.f32 %v587, 0.044715
  %v604 = vmul.f32 %v588, 0.044715
  %v605 = vmul.f32 %v589, 0.044715
  %v606 = vmul.f32 %v590, 0.044715
  %v607 = vmul.f32 %v591, 0.044715
  %v608 = vmul.f32 %v592, 0.044715
  %v609 = vmul.f32 %v593, 0.044715
  %v610 = vmul.f32 %v594, 0.044715
  %v611 = vmul.f32 %v595, 0.044715
  %v612 = vmul.f32 %v596, 0.044715
  %v613 = vmul.f32 %v597, 0.044715
  %v614 = vmul.f32 %v598, 0.044715
  %v615 = vmul.f32 %v599, 0.044715
  %v616 = vmul.f32 %v600, 0.044715
  %v617 = vadd.f32 %v507, %v601
  %v618 = vadd.f32 %v510, %v602
  %v619 = vadd.f32 %v515, %v603
  %v620 = vadd.f32 %v518, %v604
  %v621 = vadd.f32 %v523, %v605
  %v622 = vadd.f32 %v526, %v606
  %v623 = vadd.f32 %v531, %v607
  %v624 = vadd.f32 %v534, %v608
  %v625 = vadd.f32 %v539, %v609
  %v626 = vadd.f32 %v542, %v610
  %v627 = vadd.f32 %v547, %v611
  %v628 = vadd.f32 %v550, %v612
  %v629 = vadd.f32 %v555, %v613
  %v630 = vadd.f32 %v558, %v614
  %v631 = vadd.f32 %v563, %v615
  %v632 = vadd.f32 %v566, %v616
  %v633 = vmul.f32 %v617, 0.7978846
  %v634 = vmul.f32 %v618, 0.7978846
  %v635 = vmul.f32 %v619, 0.7978846
  %v636 = vmul.f32 %v620, 0.7978846
  %v637 = vmul.f32 %v621, 0.7978846
  %v638 = vmul.f32 %v622, 0.7978846
  %v639 = vmul.f32 %v623, 0.7978846
  %v640 = vmul.f32 %v624, 0.7978846
  %v641 = vmul.f32 %v625, 0.7978846
  %v642 = vmul.f32 %v626, 0.7978846
  %v643 = vmul.f32 %v627, 0.7978846
  %v644 = vmul.f32 %v628, 0.7978846
  %v645 = vmul.f32 %v629, 0.7978846
  %v646 = vmul.f32 %v630, 0.7978846
  %v647 = vmul.f32 %v631, 0.7978846
  %v648 = vmul.f32 %v632, 0.7978846
  %v649 = vtanh.pop %v633
  %v650 = vtanh.pop %v634
  %v651 = vtanh.pop %v635
  %v652 = vtanh.pop %v636
  %v653 = vtanh.pop %v637
  %v654 = vtanh.pop %v638
  %v655 = vtanh.pop %v639
  %v656 = vtanh.pop %v640
  %v657 = vtanh.pop %v641
  %v658 = vtanh.pop %v642
  %v659 = vtanh.pop %v643
  %v660 = vtanh.pop %v644
  %v661 = vtanh.pop %v645
  %v662 = vtanh.pop %v646
  %v663 = vtanh.pop %v647
  %v664 = vtanh.pop %v648
  %v665 = vadd.f32 %v649, 1.0
  %v666 = vadd.f32 %v650, 1.0
  %v667 = vadd.f32 %v651, 1.0
  %v668 = vadd.f32 %v652, 1.0
  %v669 = vadd.f32 %v653, 1.0
  %v670 = vadd.f32 %v654, 1.0
  %v671 = vadd.f32 %v655, 1.0
  %v672 = vadd.f32 %v656, 1.0
  %v673 = vadd.f32 %v657, 1.0
  %v674 = vadd.f32 %v658, 1.0
  %v675 = vadd.f32 %v659, 1.0
  %v676 = vadd.f32 %v660, 1.0
  %v677 = vadd.f32 %v661, 1.0
  %v678 = vadd.f32 %v662, 1.0
  %v679 = vadd.f32 %v663, 1.0
  %v680 = vadd.f32 %v664, 1.0
  %v681 = vmul.f32 %v665, 0.5
  %v682 = vmul.f32 %v666, 0.5
  %v683 = vmul.f32 %v667, 0.5
  %v684 = vmul.f32 %v668, 0.5
  %v685 = vmul.f32 %v669, 0.5
  %v686 = vmul.f32 %v670, 0.5
  %v687 = vmul.f32 %v671, 0.5
  %v688 = vmul.f32 %v672, 0.5
  %v689 = vmul.f32 %v673, 0.5
  %v690 = vmul.f32 %v674, 0.5
  %v691 = vmul.f32 %v675, 0.5
  %v692 = vmul.f32 %v676, 0.5
  %v693 = vmul.f32 %v677, 0.5
  %v694 = vmul.f32 %v678, 0.5
  %v695 = vmul.f32 %v679, 0.5
  %v696 = vmul.f32 %v680, 0.5
  %v697 = vmul.f32 %v507, %v681
  %v698 = vmul.f32 %v510, %v682
  %v699 = vmul.f32 %v515, %v683
  %v700 = vmul.f32 %v518, %v684
  %v701 = vmul.f32 %v523, %v685
  %v702 = vmul.f32 %v526, %v686
  %v703 = vmul.f32 %v531, %v687
  %v704 = vmul.f32 %v534, %v688
  %v705 = vmul.f32 %v539, %v689
  %v706 = vmul.f32 %v542, %v690
  %v707 = vmul.f32 %v547, %v691
  %v708 = vmul.f32 %v550, %v692
  %v709 = vmul.f32 %v555, %v693
  %v710 = vmul.f32 %v558, %v694
  %v711 = vmul.f32 %v563, %v695
  %v712 = vmul.f32 %v566, %v696
  %713 = vst [vmem:[%s5] sm:$0xff] %v697
  %714 = vst [vmem:[%s5 + $0x8] sm:$0xff] %v698
  %715 = vst [vmem:[%s5 + $0x10] sm:$0xff] %v699
  %716 = vst [vmem:[%s5 + $0x18] sm:$0xff] %v700
  %717 = vst [vmem:[%s5 + $0x20] sm:$0xff] %v701
  %718 = vst [vmem:[%s5 + $0x28] sm:$0xff] %v702
  %719 = vst [vmem:[%s5 + $0x30] sm:$0xff] %v703
  %720 = vst [vmem:[%s5 + $0x38] sm:$0xff] %v704
  %721 = vst [vmem:[%s5 + $0x40] sm:$0xff] %v705
  %722 = vst [vmem:[%s5 + $0x48] sm:$0xff] %v706
  %723 = vst [vmem:[%s5 + $0x50] sm:$0xff] %v707
  %724 = vst [vmem:[%s5 + $0x58] sm:$0xff] %v708
  %725 = vst [vmem:[%s5 + $0x60] sm:$0xff] %v709
  %726 = vst [vmem:[%s5 + $0x68] sm:$0xff] %v710
  %727 = vst [vmem:[%s5 + $0x70] sm:$0xff] %v711
  %728 = vst [vmem:[%s5 + $0x78] sm:$0xff] %v712
  // Predicated region
  $region26: #{anisotropic_attention_forward.14} parent=0 // pred_check
    _
  $region27: #{anisotropic_attention_forward.14} parent=0 // pred_check_branch
    %730 = sbr.rel (0) target = $region29
  $region28: #{anisotropic_attention_forward.14} parent=0 // pred_region
    _
  $region29: #{anisotropic_attention_forward.14} parent=0 // pred_fallthru
    _
  // Predicated region
  $region30: #{anisotropic_attention_forward.14} parent=0 // pred_check
    _
  $region31: #{anisotropic_attention_forward.14} parent=0 // pred_check_branch
    %732 = sbr.rel (0) target = $region33
  $region32: #{anisotropic_attention_forward.14} parent=0 // pred_region
    _
  $region33: #{anisotropic_attention_forward.14} parent=0 // pred_fallthru
    _

</llo_original>
